<compile_context>
chip_gen: v7x
topology: tpu7x:2x2x1
jax: 0.10.0
libtpu: 0.0.40
codegen_flags: <defaults>
</compile_context>

<pallas_src>
import math

import jax
import jax.numpy as jnp
from jax.experimental import pallas as pl
from jax.experimental.pallas import tpu as pltpu

# ---------------------------------------------------------------- model dims
VOCAB     = 16
D_MODEL   = 32
N_HEADS   = 4
D_K       = D_MODEL // N_HEADS      # 8
D_FF      = 64
N_LAYERS  = 2
LN_EPS    = 1e-6                    # Annotated-Transformer LayerNorm eps
ATTN_SCALE = 1.0 / math.sqrt(D_K)


# ---------------------------------------------------------------- in-kernel helpers
def _layer_norm(x, a, b):
    """Annotated-Transformer LayerNorm: a*(x-mean)/(std+eps)+b, unbiased std."""
    mean = jnp.mean(x, axis=-1, keepdims=True)
    xc = x - mean
    var = jnp.sum(xc * xc, axis=-1, keepdims=True) * (1.0 / (D_MODEL - 1))
    std = jnp.sqrt(var)
    return a * xc / (std + LN_EPS) + b


def _split_heads(x):
    """(S, D) -> (H, S, dk) via cheap lane slices + leading-dim concat."""
    S = x.shape[0]
    return jnp.concatenate(
        [x[:, h * D_K:(h + 1) * D_K].reshape(1, S, D_K) for h in range(N_HEADS)],
        axis=0)


def _attention(q, k, v, bias):
    """q:(Sq,D) k,v:(Sk,D), bias broadcastable to (Sq,Sk). Returns (Sq,D)."""
    qh = _split_heads(q)                                   # (H, Sq, dk)
    kh = _split_heads(k)                                   # (H, Sk, dk)
    vh = _split_heads(v)                                   # (H, Sk, dk)
    # One batched matmul over heads for scores, one for the context.
    s = jnp.einsum('hqd,hkd->hqk', qh, kh,
                   preferred_element_type=jnp.float32) + bias
    s = s - jnp.max(s, axis=-1, keepdims=True)
    p = jnp.exp(s)
    p = p * pl.reciprocal(jnp.sum(p, axis=-1, keepdims=True), approx=True)
    o = jnp.einsum('hqk,hkd->hqd', p, vh,
                   preferred_element_type=jnp.float32)     # (H, Sq, dk)
    # Merge heads with a lane concat -> single Wo matmul outside.
    return jnp.concatenate([o[h] for h in range(N_HEADS)], axis=-1)


def _mha_self(x, bias, wqkv, bqkv, wo, bo):
    qkv = jnp.dot(x, wqkv, preferred_element_type=jnp.float32) + bqkv
    q = qkv[:, :D_MODEL] * ATTN_SCALE          # scale Q once per MHA
    k = qkv[:, D_MODEL:2 * D_MODEL]
    v = qkv[:, 2 * D_MODEL:]
    ctx = _attention(q, k, v, bias)
    return jnp.dot(ctx, wo, preferred_element_type=jnp.float32) + bo


def _mha_cross(xq, mem, bias, wqkv, bqkv, wo, bo):
    q = (jnp.dot(xq, wqkv[:, :D_MODEL],
                 preferred_element_type=jnp.float32) + bqkv[:, :D_MODEL]) * ATTN_SCALE
    kv = (jnp.dot(mem, wqkv[:, D_MODEL:],
                  preferred_element_type=jnp.float32) + bqkv[:, D_MODEL:])
    k = kv[:, :D_MODEL]
    v = kv[:, D_MODEL:]
    ctx = _attention(q, k, v, bias)
    return jnp.dot(ctx, wo, preferred_element_type=jnp.float32) + bo


def _ffn(x, w1, b1, w2, b2):
    h = jnp.dot(x, w1, preferred_element_type=jnp.float32) + b1
    h = jnp.maximum(h, 0.0)                    # ReLU
    return jnp.dot(h, w2, preferred_element_type=jnp.float32) + b2


# ---------------------------------------------------------------- fused kernel
def _build_kernel(offsets):
    """offsets: name -> (row0, n_rows, n_cols) static slices into the weight blob."""

    def kernel(xs_ref, xt_ref, sm_ref, tm_ref, w_ref, out_ref):
        def P(name):
            r0, nr, nc = offsets[name]
            return w_ref[r0:r0 + nr, :nc]

        # Additive masks computed in-kernel (VPU): 0 keep / -1e9 masked.
        src_bias = (sm_ref[0] - 1.0) * 1e9          # (1, Ssrc), bcast over q & heads
        tgt_bias = (tm_ref[0] - 1.0) * 1e9          # (Stgt, Stgt)

        # ------------------------------- encoder (pre-norm residual sublayers)
        x = xs_ref[0]                               # (Ssrc, D)
        for l in range(N_LAYERS):
            g = lambda n, l=l: P(f"e{l}_{n}")
            y = _layer_norm(x, g("n1a"), g("n1b"))
            x = x + _mha_self(y, src_bias, g("wqkv"), g("bqkv"), g("wo"), g("bo"))
            y = _layer_norm(x, g("n2a"), g("n2b"))
            x = x + _ffn(y, g("w1"), g("b1"), g("w2"), g("b2"))
        memory = _layer_norm(x, P("e_fa"), P("e_fb"))    # (Ssrc, D)

        # ------------------------------- decoder
        x = xt_ref[0]                               # (Stgt, D)
        for l in range(N_LAYERS):
            g = lambda n, l=l: P(f"d{l}_{n}")
            y = _layer_norm(x, g("n1a"), g("n1b"))
            x = x + _mha_self(y, tgt_bias,
                              g("sa_wqkv"), g("sa_bqkv"), g("sa_wo"), g("sa_bo"))
            y = _layer_norm(x, g("n2a"), g("n2b"))
            x = x + _mha_cross(y, memory, src_bias,
                               g("ca_wqkv"), g("ca_bqkv"), g("ca_wo"), g("ca_bo"))
            y = _layer_norm(x, g("n3a"), g("n3b"))
            x = x + _ffn(y, g("w1"), g("b1"), g("w2"), g("b2"))
        x = _layer_norm(x, P("d_fa"), P("d_fb"))

        out_ref[...] = x[None]                      # (1, Stgt, D)

    return kernel


# ---------------------------------------------------------------- weight packing
def _pack_params(params):
    """Pack every weight/bias/norm tensor into one (R, 128) f32 blob.

    Each entry is 8-row aligned so in-kernel slices start on sublane
    boundaries.  Returns (blob, offsets) where offsets[name] = (row0, rows, cols)
    are static Python ints.
    """
    pieces = []
    offsets = {}
    cursor = 0

    def add(name, arr):
        nonlocal cursor
        a = jnp.asarray(arr, jnp.float32)
        r, c = a.shape
        pad_r = (-r) % 8
        pieces.append(jnp.pad(a, ((0, pad_r), (0, 128 - c))))
        offsets[name] = (cursor, r, c)
        cursor += r + pad_r

    e, d = params["enc"], params["dec"]
    for l in range(N_LAYERS):
        for n in ("wqkv", "bqkv", "wo", "bo", "w1", "b1", "w2", "b2",
                  "n1a", "n1b", "n2a", "n2b"):
            add(f"e{l}_{n}", e[n][l])
    for l in range(N_LAYERS):
        for n in ("sa_wqkv", "sa_bqkv", "sa_wo", "sa_bo",
                  "ca_wqkv", "ca_bqkv", "ca_wo", "ca_bo",
                  "w1", "b1", "w2", "b2",
                  "n1a", "n1b", "n2a", "n2b", "n3a", "n3b"):
            add(f"d{l}_{n}", d[n][l])
    add("e_fa", params["enc_norm_a"])
    add("e_fb", params["enc_norm_b"])
    add("d_fa", params["dec_norm_a"])
    add("d_fb", params["dec_norm_b"])

    blob = jnp.concatenate(pieces, axis=0)
    return blob, offsets


# ---------------------------------------------------------------- wrapper / glue
def positional_encoding(seq_len, d_model):
    pos = jnp.arange(seq_len, dtype=jnp.float32)[:, None]
    div = jnp.exp(jnp.arange(0, d_model, 2, dtype=jnp.float32)
                  * (-math.log(10000.0) / d_model))
    pe = jnp.zeros((seq_len, d_model), jnp.float32)
    pe = pe.at[:, 0::2].set(jnp.sin(pos * div))
    pe = pe.at[:, 1::2].set(jnp.cos(pos * div))
    return pe


def _embed(table, ids):
    # TODO(synk): embedding gather + positional encoding stay in plain JAX.
    S = ids.shape[1]
    x = jnp.take(table, ids, axis=0) * math.sqrt(D_MODEL)
    return x + positional_encoding(S, D_MODEL)[None]


def encoder_decoder_forward(params, src, tgt, src_mask, tgt_mask):
    """EncoderDecoder.forward: decode(encode(src, src_mask), src_mask, tgt, tgt_mask)."""
    B, Ssrc = src.shape
    _, Stgt = tgt.shape

    xs = _embed(params["src_emb"], src)                       # (B, Ssrc, D)
    xt = _embed(params["tgt_emb"], tgt)                       # (B, Stgt, D)

    sm = jnp.broadcast_to(src_mask, (B, 1, Ssrc)).astype(jnp.float32)
    tm = jnp.broadcast_to(tgt_mask, (B, Stgt, Stgt)).astype(jnp.float32)

    wblob, offsets = _pack_params(params)                     # single (R, 128) blob
    R = wblob.shape[0]

    kernel = _build_kernel(offsets)

    grid_spec = pltpu.PrefetchScalarGridSpec(
        num_scalar_prefetch=0,
        grid=(B,),
        in_specs=[
            pl.BlockSpec((1, Ssrc, D_MODEL), lambda b: (b, 0, 0)),   # xs
            pl.BlockSpec((1, Stgt, D_MODEL), lambda b: (b, 0, 0)),   # xt
            pl.BlockSpec((1, 1, Ssrc),       lambda b: (b, 0, 0)),   # src_mask
            pl.BlockSpec((1, Stgt, Stgt),    lambda b: (b, 0, 0)),   # tgt_mask
            pl.BlockSpec((R, 128),           lambda b: (0, 0)),      # weight blob (resident)
        ],
        out_specs=pl.BlockSpec((1, Stgt, D_MODEL), lambda b: (b, 0, 0)),
    )

    return pl.pallas_call(
        kernel,
        out_shape=jax.ShapeDtypeStruct((B, Stgt, D_MODEL), jnp.float32),
        grid_spec=grid_spec,
        compiler_params=pltpu.CompilerParams(
            dimension_semantics=("parallel",)),   # both TCs on v7x; harmless elsewhere
    )(xs, xt, sm, tm, wblob)


# ---------------------------------------------------------------- param init
def init_params(key):
    keys = iter(jax.random.split(key, 512))

    def nrm(shape, scale=0.1):
        return (scale * jax.random.normal(next(keys), shape)).astype(jnp.float32)

    def attn(prefix=""):
        # fused Q|K|V projection weights, stacked over layers
        return {
            prefix + "wqkv": nrm((N_LAYERS, D_MODEL, 3 * D_MODEL)),
            prefix + "bqkv": nrm((N_LAYERS, 1, 3 * D_MODEL), 0.01),
            prefix + "wo":   nrm((N_LAYERS, D_MODEL, D_MODEL)),
            prefix + "bo":   nrm((N_LAYERS, 1, D_MODEL), 0.01),
        }

    def ffn():
        return {
            "w1": nrm((N_LAYERS, D_MODEL, D_FF)),
            "b1": nrm((N_LAYERS, 1, D_FF), 0.01),
            "w2": nrm((N_LAYERS, D_FF, D_MODEL)),
            "b2": nrm((N_LAYERS, 1, D_MODEL), 0.01),
        }

    def norms(names):
        out = {}
        for n in names:
            out[n + "a"] = jnp.ones((N_LAYERS, 1, D_MODEL), jnp.float32)
            out[n + "b"] = jnp.zeros((N_LAYERS, 1, D_MODEL), jnp.float32)
        return out

    enc = {**attn(), **ffn(), **norms(["n1", "n2"])}
    dec = {**attn("sa_"), **attn("ca_"), **ffn(), **norms(["n1", "n2", "n3"])}

    return dict(
        src_emb=nrm((VOCAB, D_MODEL), 1.0),
        tgt_emb=nrm((VOCAB, D_MODEL), 1.0),
        enc=enc, dec=dec,
        enc_norm_a=jnp.ones((1, D_MODEL), jnp.float32),
        enc_norm_b=jnp.zeros((1, D_MODEL), jnp.float32),
        dec_norm_a=jnp.ones((1, D_MODEL), jnp.float32),
        dec_norm_b=jnp.zeros((1, D_MODEL), jnp.float32),
    )


# ---------------------------------------------------------------- main
if __name__ == "__main__":
    B, S_SRC, S_TGT = 2, 8, 8
    key = jax.random.PRNGKey(0)
    k_par, k_src, k_tgt = jax.random.split(key, 3)

    params = init_params(k_par)

    src = jax.random.randint(k_src, (B, S_SRC), 1, VOCAB, dtype=jnp.int32)
    tgt = jax.random.randint(k_tgt, (B, S_TGT), 1, VOCAB, dtype=jnp.int32)

    # src_mask: (B, 1, S_src), 1 = attend, 0 = padding (last 2 tokens of batch 1)
    src_mask = jnp.ones((B, 1, S_SRC), jnp.float32)
    src_mask = src_mask.at[1, 0, -2:].set(0.0)

    # tgt_mask: padding mask & subsequent (causal) mask -> (B, S_tgt, S_tgt)
    tgt_pad = jnp.ones((B, 1, S_TGT), jnp.float32)
    causal = jnp.tril(jnp.ones((S_TGT, S_TGT), jnp.float32))
    tgt_mask = tgt_pad * causal[None]

    fwd = jax.jit(encoder_decoder_forward)
    out = fwd(params, src, tgt, src_mask, tgt_mask)
    out = jax.block_until_ready(out)

    assert out.shape == (B, S_TGT, D_MODEL)
    assert bool(jnp.all(jnp.isfinite(out)))
    print("KERNEL_OK")
</pallas_src>

<mosaic_0001>
module attributes {stable_mosaic.version = 11 : i64} {
  func.func @kernel(%arg0: i32, %arg1: memref<1x8x32xf32, #tpu.memory_space<vmem>>, %arg2: memref<1x8x32xf32, #tpu.memory_space<vmem>>, %arg3: memref<1x1x8xf32, #tpu.memory_space<vmem>>, %arg4: memref<1x8x8xf32, #tpu.memory_space<vmem>>, %arg5: memref<1120x128xf32, #tpu.memory_space<vmem>>, %arg6: memref<1x8x32xf32, #tpu.memory_space<vmem>>) attributes {dimension_semantics = [#tpu.dimension_semantics<parallel>], iteration_bounds = array<i64: 2>, scalar_prefetch = 0 : i64, scratch_operands = 0 : i64, tpu.core_type = #tpu.core_type<tc>, window_params = [{transform_indices = @transform_0, window_bounds = array<i64: 1, 8, 32>}, {transform_indices = @transform_1, window_bounds = array<i64: 1, 8, 32>}, {transform_indices = @transform_2, window_bounds = array<i64: 1, 1, 8>}, {transform_indices = @transform_3, window_bounds = array<i64: 1, 8, 8>}, {pipeline_mode = #tpu.pipeline_mode<synchronous>, transform_indices = @transform_4, window_bounds = array<i64: 1120, 128>}, {transform_indices = @transform_5, window_bounds = array<i64: 1, 8, 32>}]} {
    %c0 = arith.constant 0 : index
    %c0_0 = arith.constant 0 : index
    %c0_1 = arith.constant 0 : index
    %0 = vector.load %arg3[%c0, %c0_0, %c0_1] : memref<1x1x8xf32, #tpu.memory_space<vmem>>, vector<1x1x8xf32>
    %1 = vector.shape_cast %0 : vector<1x1x8xf32> to vector<1x8xf32>
    %cst = arith.constant 1.000000e+00 : f32
    %2 = vector.broadcast %cst : f32 to vector<1x8xf32>
    %3 = arith.subf %1, %2 : vector<1x8xf32>
    %cst_2 = arith.constant 1.000000e+09 : f32
    %4 = vector.broadcast %cst_2 : f32 to vector<1x8xf32>
    %5 = arith.mulf %3, %4 : vector<1x8xf32>
    %c0_3 = arith.constant 0 : index
    %c0_4 = arith.constant 0 : index
    %c0_5 = arith.constant 0 : index
    %6 = vector.load %arg4[%c0_3, %c0_4, %c0_5] : memref<1x8x8xf32, #tpu.memory_space<vmem>>, vector<1x8x8xf32>
    %7 = vector.shape_cast %6 : vector<1x8x8xf32> to vector<8x8xf32>
    %cst_6 = arith.constant 1.000000e+00 : f32
    %8 = vector.broadcast %cst_6 : f32 to vector<8x8xf32>
    %9 = arith.subf %7, %8 : vector<8x8xf32>
    %cst_7 = arith.constant 1.000000e+09 : f32
    %10 = vector.broadcast %cst_7 : f32 to vector<8x8xf32>
    %11 = arith.mulf %9, %10 : vector<8x8xf32>
    %c0_8 = arith.constant 0 : index
    %c0_9 = arith.constant 0 : index
    %c0_10 = arith.constant 0 : index
    %12 = vector.load %arg1[%c0_8, %c0_9, %c0_10] : memref<1x8x32xf32, #tpu.memory_space<vmem>>, vector<1x8x32xf32>
    %13 = vector.shape_cast %12 : vector<1x8x32xf32> to vector<8x32xf32>
    %c192 = arith.constant 192 : index
    %c0_11 = arith.constant 0 : index
    %14 = vector.load %arg5[%c192, %c0_11] : memref<1120x128xf32, #tpu.memory_space<vmem>>, vector<1x32xf32>
    %c200 = arith.constant 200 : index
    %c0_12 = arith.constant 0 : index
    %15 = vector.load %arg5[%c200, %c0_12] : memref<1120x128xf32, #tpu.memory_space<vmem>>, vector<1x32xf32>
    %cst_13 = arith.constant dense<0.000000e+00> : vector<8xf32>
    %16 = vector.multi_reduction <add>, %13, %cst_13 [1] : vector<8x32xf32> to vector<8xf32>
    %17 = vector.shape_cast %16 : vector<8xf32> to vector<8x1xf32>
    %cst_14 = arith.constant 3.200000e+01 : f32
    %18 = vector.broadcast %cst_14 : f32 to vector<8x1xf32>
    %19 = arith.divf %17, %18 : vector<8x1xf32>
    %20 = vector.broadcast %19 : vector<8x1xf32> to vector<8x32xf32>
    %21 = arith.subf %13, %20 : vector<8x32xf32>
    %22 = arith.mulf %21, %21 : vector<8x32xf32>
    %cst_15 = arith.constant dense<0.000000e+00> : vector<8xf32>
    %23 = vector.multi_reduction <add>, %22, %cst_15 [1] : vector<8x32xf32> to vector<8xf32>
    %24 = vector.shape_cast %23 : vector<8xf32> to vector<8x1xf32>
    %cst_16 = arith.constant 0.0322580636 : f32
    %25 = vector.broadcast %cst_16 : f32 to vector<8x1xf32>
    %26 = arith.mulf %24, %25 : vector<8x1xf32>
    %27 = math.sqrt %26 : vector<8x1xf32>
    %28 = vector.broadcast %14 : vector<1x32xf32> to vector<8x32xf32>
    %29 = arith.mulf %28, %21 : vector<8x32xf32>
    %cst_17 = arith.constant 9.99999997E-7 : f32
    %30 = vector.broadcast %cst_17 : f32 to vector<8x1xf32>
    %31 = arith.addf %27, %30 : vector<8x1xf32>
    %32 = vector.broadcast %31 : vector<8x1xf32> to vector<8x32xf32>
    %33 = arith.divf %29, %32 : vector<8x32xf32>
    %34 = vector.broadcast %15 : vector<1x32xf32> to vector<8x32xf32>
    %35 = arith.addf %33, %34 : vector<8x32xf32>
    %c0_18 = arith.constant 0 : index
    %c0_19 = arith.constant 0 : index
    %36 = vector.load %arg5[%c0_18, %c0_19] : memref<1120x128xf32, #tpu.memory_space<vmem>>, vector<32x96xf32>
    %c32 = arith.constant 32 : index
    %c0_20 = arith.constant 0 : index
    %37 = vector.load %arg5[%c32, %c0_20] : memref<1120x128xf32, #tpu.memory_space<vmem>>, vector<1x96xf32>
    %c40 = arith.constant 40 : index
    %c0_21 = arith.constant 0 : index
    %38 = vector.load %arg5[%c40, %c0_21] : memref<1120x128xf32, #tpu.memory_space<vmem>>, vector<32x32xf32>
    %c72 = arith.constant 72 : index
    %c0_22 = arith.constant 0 : index
    %39 = vector.load %arg5[%c72, %c0_22] : memref<1120x128xf32, #tpu.memory_space<vmem>>, vector<1x32xf32>
    %cst_23 = arith.constant dense<0.000000e+00> : vector<8x96xf32>
    %40 = tpu.matmul %35, %36, %cst_23 {dimension_numbers = #tpu.dot_dimension_numbers<[1], [0], [0], [1], [0, 0, 1, 1], [], []>} : vector<8x32xf32>, vector<32x96xf32>, vector<8x96xf32> -> vector<8x96xf32>
    %41 = vector.broadcast %37 : vector<1x96xf32> to vector<8x96xf32>
    %42 = arith.addf %40, %41 : vector<8x96xf32>
    %43 = vector.extract_strided_slice %42 {offsets = [0, 0], sizes = [8, 32], strides = [1, 1]} : vector<8x96xf32> to vector<8x32xf32>
    %cst_24 = arith.constant 0.353553385 : f32
    %44 = vector.broadcast %cst_24 : f32 to vector<8x32xf32>
    %45 = arith.mulf %43, %44 : vector<8x32xf32>
    %46 = vector.extract_strided_slice %42 {offsets = [0, 32], sizes = [8, 32], strides = [1, 1]} : vector<8x96xf32> to vector<8x32xf32>
    %47 = vector.extract_strided_slice %42 {offsets = [0, 64], sizes = [8, 32], strides = [1, 1]} : vector<8x96xf32> to vector<8x32xf32>
    %48 = vector.extract_strided_slice %45 {offsets = [0, 0], sizes = [8, 8], strides = [1, 1]} : vector<8x32xf32> to vector<8x8xf32>
    %49 = vector.shape_cast %48 : vector<8x8xf32> to vector<1x8x8xf32>
    %50 = vector.extract_strided_slice %45 {offsets = [0, 8], sizes = [8, 8], strides = [1, 1]} : vector<8x32xf32> to vector<8x8xf32>
    %51 = vector.shape_cast %50 : vector<8x8xf32> to vector<1x8x8xf32>
    %52 = vector.extract_strided_slice %45 {offsets = [0, 16], sizes = [8, 8], strides = [1, 1]} : vector<8x32xf32> to vector<8x8xf32>
    %53 = vector.shape_cast %52 : vector<8x8xf32> to vector<1x8x8xf32>
    %54 = vector.extract_strided_slice %45 {offsets = [0, 24], sizes = [8, 8], strides = [1, 1]} : vector<8x32xf32> to vector<8x8xf32>
    %55 = vector.shape_cast %54 : vector<8x8xf32> to vector<1x8x8xf32>
    %56 = tpu.concatenate %49, %51, %53, %55 in 0 : vector<1x8x8xf32>, vector<1x8x8xf32>, vector<1x8x8xf32>, vector<1x8x8xf32> -> vector<4x8x8xf32>
    %57 = vector.extract_strided_slice %46 {offsets = [0, 0], sizes = [8, 8], strides = [1, 1]} : vector<8x32xf32> to vector<8x8xf32>
    %58 = vector.shape_cast %57 : vector<8x8xf32> to vector<1x8x8xf32>
    %59 = vector.extract_strided_slice %46 {offsets = [0, 8], sizes = [8, 8], strides = [1, 1]} : vector<8x32xf32> to vector<8x8xf32>
    %60 = vector.shape_cast %59 : vector<8x8xf32> to vector<1x8x8xf32>
    %61 = vector.extract_strided_slice %46 {offsets = [0, 16], sizes = [8, 8], strides = [1, 1]} : vector<8x32xf32> to vector<8x8xf32>
    %62 = vector.shape_cast %61 : vector<8x8xf32> to vector<1x8x8xf32>
    %63 = vector.extract_strided_slice %46 {offsets = [0, 24], sizes = [8, 8], strides = [1, 1]} : vector<8x32xf32> to vector<8x8xf32>
    %64 = vector.shape_cast %63 : vector<8x8xf32> to vector<1x8x8xf32>
    %65 = tpu.concatenate %58, %60, %62, %64 in 0 : vector<1x8x8xf32>, vector<1x8x8xf32>, vector<1x8x8xf32>, vector<1x8x8xf32> -> vector<4x8x8xf32>
    %66 = vector.extract_strided_slice %47 {offsets = [0, 0], sizes = [8, 8], strides = [1, 1]} : vector<8x32xf32> to vector<8x8xf32>
    %67 = vector.shape_cast %66 : vector<8x8xf32> to vector<1x8x8xf32>
    %68 = vector.extract_strided_slice %47 {offsets = [0, 8], sizes = [8, 8], strides = [1, 1]} : vector<8x32xf32> to vector<8x8xf32>
    %69 = vector.shape_cast %68 : vector<8x8xf32> to vector<1x8x8xf32>
    %70 = vector.extract_strided_slice %47 {offsets = [0, 16], sizes = [8, 8], strides = [1, 1]} : vector<8x32xf32> to vector<8x8xf32>
    %71 = vector.shape_cast %70 : vector<8x8xf32> to vector<1x8x8xf32>
    %72 = vector.extract_strided_slice %47 {offsets = [0, 24], sizes = [8, 8], strides = [1, 1]} : vector<8x32xf32> to vector<8x8xf32>
    %73 = vector.shape_cast %72 : vector<8x8xf32> to vector<1x8x8xf32>
    %74 = tpu.concatenate %67, %69, %71, %73 in 0 : vector<1x8x8xf32>, vector<1x8x8xf32>, vector<1x8x8xf32>, vector<1x8x8xf32> -> vector<4x8x8xf32>
    "tpu.trace_start"() <{level = 10 : i32, message = "hqd,hkd->hqk"}> : () -> ()
    %cst_25 = arith.constant dense<0.000000e+00> : vector<4x8x8xf32>
    %75 = tpu.matmul %56, %65, %cst_25 {dimension_numbers = #tpu.dot_dimension_numbers<[2], [2], [1], [1], [0, 0, 0, 1, 1, 1], [0], [0]>} : vector<4x8x8xf32>, vector<4x8x8xf32>, vector<4x8x8xf32> -> vector<4x8x8xf32>
    "tpu.trace_stop"() : () -> ()
    %76 = vector.shape_cast %5 : vector<1x8xf32> to vector<1x1x8xf32>
    %77 = vector.broadcast %76 : vector<1x1x8xf32> to vector<4x8x8xf32>
    %78 = arith.addf %75, %77 : vector<4x8x8xf32>
    %cst_26 = arith.constant dense<0xFF800000> : vector<4x8xf32>
    %79 = vector.multi_reduction <maximumf>, %78, %cst_26 [2] : vector<4x8x8xf32> to vector<4x8xf32>
    %80 = vector.shape_cast %79 : vector<4x8xf32> to vector<4x8x1xf32>
    %81 = vector.broadcast %80 : vector<4x8x1xf32> to vector<4x8x8xf32>
    %82 = arith.subf %78, %81 : vector<4x8x8xf32>
    %83 = math.exp %82 : vector<4x8x8xf32>
    %cst_27 = arith.constant dense<0.000000e+00> : vector<4x8xf32>
    %84 = vector.multi_reduction <add>, %83, %cst_27 [2] : vector<4x8x8xf32> to vector<4x8xf32>
    %85 = vector.shape_cast %84 : vector<4x8xf32> to vector<4x8x1xf32>
    %86 = tpu.reciprocal %85 {approx = true} : vector<4x8x1xf32> -> vector<4x8x1xf32>
    %87 = vector.broadcast %86 : vector<4x8x1xf32> to vector<4x8x8xf32>
    %88 = arith.mulf %83, %87 : vector<4x8x8xf32>
    "tpu.trace_start"() <{level = 10 : i32, message = "hqk,hkd->hqd"}> : () -> ()
    %cst_28 = arith.constant dense<0.000000e+00> : vector<4x8x8xf32>
    %89 = tpu.matmul %88, %74, %cst_28 {dimension_numbers = #tpu.dot_dimension_numbers<[2], [1], [1], [2], [0, 0, 0, 1, 1, 2], [0], [0]>} : vector<4x8x8xf32>, vector<4x8x8xf32>, vector<4x8x8xf32> -> vector<4x8x8xf32>
    "tpu.trace_stop"() : () -> ()
    %90 = vector.extract_strided_slice %89 {offsets = [0, 0, 0], sizes = [1, 8, 8], strides = [1, 1, 1]} : vector<4x8x8xf32> to vector<1x8x8xf32>
    %91 = vector.shape_cast %90 : vector<1x8x8xf32> to vector<8x8xf32>
    %92 = vector.extract_strided_slice %89 {offsets = [1, 0, 0], sizes = [1, 8, 8], strides = [1, 1, 1]} : vector<4x8x8xf32> to vector<1x8x8xf32>
    %93 = vector.shape_cast %92 : vector<1x8x8xf32> to vector<8x8xf32>
    %94 = vector.extract_strided_slice %89 {offsets = [2, 0, 0], sizes = [1, 8, 8], strides = [1, 1, 1]} : vector<4x8x8xf32> to vector<1x8x8xf32>
    %95 = vector.shape_cast %94 : vector<1x8x8xf32> to vector<8x8xf32>
    %96 = vector.extract_strided_slice %89 {offsets = [3, 0, 0], sizes = [1, 8, 8], strides = [1, 1, 1]} : vector<4x8x8xf32> to vector<1x8x8xf32>
    %97 = vector.shape_cast %96 : vector<1x8x8xf32> to vector<8x8xf32>
    %98 = tpu.concatenate %91, %93, %95, %97 in 1 : vector<8x8xf32>, vector<8x8xf32>, vector<8x8xf32>, vector<8x8xf32> -> vector<8x32xf32>
    %cst_29 = arith.constant dense<0.000000e+00> : vector<8x32xf32>
    %99 = tpu.matmul %98, %38, %cst_29 {dimension_numbers = #tpu.dot_dimension_numbers<[1], [0], [0], [1], [0, 0, 1, 1], [], []>} : vector<8x32xf32>, vector<32x32xf32>, vector<8x32xf32> -> vector<8x32xf32>
    %100 = vector.broadcast %39 : vector<1x32xf32> to vector<8x32xf32>
    %101 = arith.addf %99, %100 : vector<8x32xf32>
    %102 = arith.addf %13, %101 : vector<8x32xf32>
    %c208 = arith.constant 208 : index
    %c0_30 = arith.constant 0 : index
    %103 = vector.load %arg5[%c208, %c0_30] : memref<1120x128xf32, #tpu.memory_space<vmem>>, vector<1x32xf32>
    %c216 = arith.constant 216 : index
    %c0_31 = arith.constant 0 : index
    %104 = vector.load %arg5[%c216, %c0_31] : memref<1120x128xf32, #tpu.memory_space<vmem>>, vector<1x32xf32>
    %cst_32 = arith.constant dense<0.000000e+00> : vector<8xf32>
    %105 = vector.multi_reduction <add>, %102, %cst_32 [1] : vector<8x32xf32> to vector<8xf32>
    %106 = vector.shape_cast %105 : vector<8xf32> to vector<8x1xf32>
    %cst_33 = arith.constant 3.200000e+01 : f32
    %107 = vector.broadcast %cst_33 : f32 to vector<8x1xf32>
    %108 = arith.divf %106, %107 : vector<8x1xf32>
    %109 = vector.broadcast %108 : vector<8x1xf32> to vector<8x32xf32>
    %110 = arith.subf %102, %109 : vector<8x32xf32>
    %111 = arith.mulf %110, %110 : vector<8x32xf32>
    %cst_34 = arith.constant dense<0.000000e+00> : vector<8xf32>
    %112 = vector.multi_reduction <add>, %111, %cst_34 [1] : vector<8x32xf32> to vector<8xf32>
    %113 = vector.shape_cast %112 : vector<8xf32> to vector<8x1xf32>
    %cst_35 = arith.constant 0.0322580636 : f32
    %114 = vector.broadcast %cst_35 : f32 to vector<8x1xf32>
    %115 = arith.mulf %113, %114 : vector<8x1xf32>
    %116 = math.sqrt %115 : vector<8x1xf32>
    %117 = vector.broadcast %103 : vector<1x32xf32> to vector<8x32xf32>
    %118 = arith.mulf %117, %110 : vector<8x32xf32>
    %cst_36 = arith.constant 9.99999997E-7 : f32
    %119 = vector.broadcast %cst_36 : f32 to vector<8x1xf32>
    %120 = arith.addf %116, %119 : vector<8x1xf32>
    %121 = vector.broadcast %120 : vector<8x1xf32> to vector<8x32xf32>
    %122 = arith.divf %118, %121 : vector<8x32xf32>
    %123 = vector.broadcast %104 : vector<1x32xf32> to vector<8x32xf32>
    %124 = arith.addf %122, %123 : vector<8x32xf32>
    %c80 = arith.constant 80 : index
    %c0_37 = arith.constant 0 : index
    %125 = vector.load %arg5[%c80, %c0_37] : memref<1120x128xf32, #tpu.memory_space<vmem>>, vector<32x64xf32>
    %c112 = arith.constant 112 : index
    %c0_38 = arith.constant 0 : index
    %126 = vector.load %arg5[%c112, %c0_38] : memref<1120x128xf32, #tpu.memory_space<vmem>>, vector<1x64xf32>
    %c120 = arith.constant 120 : index
    %c0_39 = arith.constant 0 : index
    %127 = vector.load %arg5[%c120, %c0_39] : memref<1120x128xf32, #tpu.memory_space<vmem>>, vector<64x32xf32>
    %c184 = arith.constant 184 : index
    %c0_40 = arith.constant 0 : index
    %128 = vector.load %arg5[%c184, %c0_40] : memref<1120x128xf32, #tpu.memory_space<vmem>>, vector<1x32xf32>
    %cst_41 = arith.constant dense<0.000000e+00> : vector<8x64xf32>
    %129 = tpu.matmul %124, %125, %cst_41 {dimension_numbers = #tpu.dot_dimension_numbers<[1], [0], [0], [1], [0, 0, 1, 1], [], []>} : vector<8x32xf32>, vector<32x64xf32>, vector<8x64xf32> -> vector<8x64xf32>
    %130 = vector.broadcast %126 : vector<1x64xf32> to vector<8x64xf32>
    %131 = arith.addf %129, %130 : vector<8x64xf32>
    %cst_42 = arith.constant 0.000000e+00 : f32
    %132 = vector.broadcast %cst_42 : f32 to vector<8x64xf32>
    %133 = arith.maximumf %131, %132 : vector<8x64xf32>
    %cst_43 = arith.constant dense<0.000000e+00> : vector<8x32xf32>
    %134 = tpu.matmul %133, %127, %cst_43 {dimension_numbers = #tpu.dot_dimension_numbers<[1], [0], [0], [1], [0, 0, 1, 1], [], []>} : vector<8x64xf32>, vector<64x32xf32>, vector<8x32xf32> -> vector<8x32xf32>
    %135 = vector.broadcast %128 : vector<1x32xf32> to vector<8x32xf32>
    %136 = arith.addf %134, %135 : vector<8x32xf32>
    %137 = arith.addf %102, %136 : vector<8x32xf32>
    %c416 = arith.constant 416 : index
    %c0_44 = arith.constant 0 : index
    %138 = vector.load %arg5[%c416, %c0_44] : memref<1120x128xf32, #tpu.memory_space<vmem>>, vector<1x32xf32>
    %c424 = arith.constant 424 : index
    %c0_45 = arith.constant 0 : index
    %139 = vector.load %arg5[%c424, %c0_45] : memref<1120x128xf32, #tpu.memory_space<vmem>>, vector<1x32xf32>
    %cst_46 = arith.constant dense<0.000000e+00> : vector<8xf32>
    %140 = vector.multi_reduction <add>, %137, %cst_46 [1] : vector<8x32xf32> to vector<8xf32>
    %141 = vector.shape_cast %140 : vector<8xf32> to vector<8x1xf32>
    %cst_47 = arith.constant 3.200000e+01 : f32
    %142 = vector.broadcast %cst_47 : f32 to vector<8x1xf32>
    %143 = arith.divf %141, %142 : vector<8x1xf32>
    %144 = vector.broadcast %143 : vector<8x1xf32> to vector<8x32xf32>
    %145 = arith.subf %137, %144 : vector<8x32xf32>
    %146 = arith.mulf %145, %145 : vector<8x32xf32>
    %cst_48 = arith.constant dense<0.000000e+00> : vector<8xf32>
    %147 = vector.multi_reduction <add>, %146, %cst_48 [1] : vector<8x32xf32> to vector<8xf32>
    %148 = vector.shape_cast %147 : vector<8xf32> to vector<8x1xf32>
    %cst_49 = arith.constant 0.0322580636 : f32
    %149 = vector.broadcast %cst_49 : f32 to vector<8x1xf32>
    %150 = arith.mulf %148, %149 : vector<8x1xf32>
    %151 = math.sqrt %150 : vector<8x1xf32>
    %152 = vector.broadcast %138 : vector<1x32xf32> to vector<8x32xf32>
    %153 = arith.mulf %152, %145 : vector<8x32xf32>
    %cst_50 = arith.constant 9.99999997E-7 : f32
    %154 = vector.broadcast %cst_50 : f32 to vector<8x1xf32>
    %155 = arith.addf %151, %154 : vector<8x1xf32>
    %156 = vector.broadcast %155 : vector<8x1xf32> to vector<8x32xf32>
    %157 = arith.divf %153, %156 : vector<8x32xf32>
    %158 = vector.broadcast %139 : vector<1x32xf32> to vector<8x32xf32>
    %159 = arith.addf %157, %158 : vector<8x32xf32>
    %c224 = arith.constant 224 : index
    %c0_51 = arith.constant 0 : index
    %160 = vector.load %arg5[%c224, %c0_51] : memref<1120x128xf32, #tpu.memory_space<vmem>>, vector<32x96xf32>
    %c256 = arith.constant 256 : index
    %c0_52 = arith.constant 0 : index
    %161 = vector.load %arg5[%c256, %c0_52] : memref<1120x128xf32, #tpu.memory_space<vmem>>, vector<1x96xf32>
    %c264 = arith.constant 264 : index
    %c0_53 = arith.constant 0 : index
    %162 = vector.load %arg5[%c264, %c0_53] : memref<1120x128xf32, #tpu.memory_space<vmem>>, vector<32x32xf32>
    %c296 = arith.constant 296 : index
    %c0_54 = arith.constant 0 : index
    %163 = vector.load %arg5[%c296, %c0_54] : memref<1120x128xf32, #tpu.memory_space<vmem>>, vector<1x32xf32>
    %cst_55 = arith.constant dense<0.000000e+00> : vector<8x96xf32>
    %164 = tpu.matmul %159, %160, %cst_55 {dimension_numbers = #tpu.dot_dimension_numbers<[1], [0], [0], [1], [0, 0, 1, 1], [], []>} : vector<8x32xf32>, vector<32x96xf32>, vector<8x96xf32> -> vector<8x96xf32>
    %165 = vector.broadcast %161 : vector<1x96xf32> to vector<8x96xf32>
    %166 = arith.addf %164, %165 : vector<8x96xf32>
    %167 = vector.extract_strided_slice %166 {offsets = [0, 0], sizes = [8, 32], strides = [1, 1]} : vector<8x96xf32> to vector<8x32xf32>
    %cst_56 = arith.constant 0.353553385 : f32
    %168 = vector.broadcast %cst_56 : f32 to vector<8x32xf32>
    %169 = arith.mulf %167, %168 : vector<8x32xf32>
    %170 = vector.extract_strided_slice %166 {offsets = [0, 32], sizes = [8, 32], strides = [1, 1]} : vector<8x96xf32> to vector<8x32xf32>
    %171 = vector.extract_strided_slice %166 {offsets = [0, 64], sizes = [8, 32], strides = [1, 1]} : vector<8x96xf32> to vector<8x32xf32>
    %172 = vector.extract_strided_slice %169 {offsets = [0, 0], sizes = [8, 8], strides = [1, 1]} : vector<8x32xf32> to vector<8x8xf32>
    %173 = vector.shape_cast %172 : vector<8x8xf32> to vector<1x8x8xf32>
    %174 = vector.extract_strided_slice %169 {offsets = [0, 8], sizes = [8, 8], strides = [1, 1]} : vector<8x32xf32> to vector<8x8xf32>
    %175 = vector.shape_cast %174 : vector<8x8xf32> to vector<1x8x8xf32>
    %176 = vector.extract_strided_slice %169 {offsets = [0, 16], sizes = [8, 8], strides = [1, 1]} : vector<8x32xf32> to vector<8x8xf32>
    %177 = vector.shape_cast %176 : vector<8x8xf32> to vector<1x8x8xf32>
    %178 = vector.extract_strided_slice %169 {offsets = [0, 24], sizes = [8, 8], strides = [1, 1]} : vector<8x32xf32> to vector<8x8xf32>
    %179 = vector.shape_cast %178 : vector<8x8xf32> to vector<1x8x8xf32>
    %180 = tpu.concatenate %173, %175, %177, %179 in 0 : vector<1x8x8xf32>, vector<1x8x8xf32>, vector<1x8x8xf32>, vector<1x8x8xf32> -> vector<4x8x8xf32>
    %181 = vector.extract_strided_slice %170 {offsets = [0, 0], sizes = [8, 8], strides = [1, 1]} : vector<8x32xf32> to vector<8x8xf32>
    %182 = vector.shape_cast %181 : vector<8x8xf32> to vector<1x8x8xf32>
    %183 = vector.extract_strided_slice %170 {offsets = [0, 8], sizes = [8, 8], strides = [1, 1]} : vector<8x32xf32> to vector<8x8xf32>
    %184 = vector.shape_cast %183 : vector<8x8xf32> to vector<1x8x8xf32>
    %185 = vector.extract_strided_slice %170 {offsets = [0, 16], sizes = [8, 8], strides = [1, 1]} : vector<8x32xf32> to vector<8x8xf32>
    %186 = vector.shape_cast %185 : vector<8x8xf32> to vector<1x8x8xf32>
    %187 = vector.extract_strided_slice %170 {offsets = [0, 24], sizes = [8, 8], strides = [1, 1]} : vector<8x32xf32> to vector<8x8xf32>
    %188 = vector.shape_cast %187 : vector<8x8xf32> to vector<1x8x8xf32>
    %189 = tpu.concatenate %182, %184, %186, %188 in 0 : vector<1x8x8xf32>, vector<1x8x8xf32>, vector<1x8x8xf32>, vector<1x8x8xf32> -> vector<4x8x8xf32>
    %190 = vector.extract_strided_slice %171 {offsets = [0, 0], sizes = [8, 8], strides = [1, 1]} : vector<8x32xf32> to vector<8x8xf32>
    %191 = vector.shape_cast %190 : vector<8x8xf32> to vector<1x8x8xf32>
    %192 = vector.extract_strided_slice %171 {offsets = [0, 8], sizes = [8, 8], strides = [1, 1]} : vector<8x32xf32> to vector<8x8xf32>
    %193 = vector.shape_cast %192 : vector<8x8xf32> to vector<1x8x8xf32>
    %194 = vector.extract_strided_slice %171 {offsets = [0, 16], sizes = [8, 8], strides = [1, 1]} : vector<8x32xf32> to vector<8x8xf32>
    %195 = vector.shape_cast %194 : vector<8x8xf32> to vector<1x8x8xf32>
    %196 = vector.extract_strided_slice %171 {offsets = [0, 24], sizes = [8, 8], strides = [1, 1]} : vector<8x32xf32> to vector<8x8xf32>
    %197 = vector.shape_cast %196 : vector<8x8xf32> to vector<1x8x8xf32>
    %198 = tpu.concatenate %191, %193, %195, %197 in 0 : vector<1x8x8xf32>, vector<1x8x8xf32>, vector<1x8x8xf32>, vector<1x8x8xf32> -> vector<4x8x8xf32>
    "tpu.trace_start"() <{level = 10 : i32, message = "hqd,hkd->hqk"}> : () -> ()
    %cst_57 = arith.constant dense<0.000000e+00> : vector<4x8x8xf32>
    %199 = tpu.matmul %180, %189, %cst_57 {dimension_numbers = #tpu.dot_dimension_numbers<[2], [2], [1], [1], [0, 0, 0, 1, 1, 1], [0], [0]>} : vector<4x8x8xf32>, vector<4x8x8xf32>, vector<4x8x8xf32> -> vector<4x8x8xf32>
    "tpu.trace_stop"() : () -> ()
    %200 = vector.shape_cast %5 : vector<1x8xf32> to vector<1x1x8xf32>
    %201 = vector.broadcast %200 : vector<1x1x8xf32> to vector<4x8x8xf32>
    %202 = arith.addf %199, %201 : vector<4x8x8xf32>
    %cst_58 = arith.constant dense<0xFF800000> : vector<4x8xf32>
    %203 = vector.multi_reduction <maximumf>, %202, %cst_58 [2] : vector<4x8x8xf32> to vector<4x8xf32>
    %204 = vector.shape_cast %203 : vector<4x8xf32> to vector<4x8x1xf32>
    %205 = vector.broadcast %204 : vector<4x8x1xf32> to vector<4x8x8xf32>
    %206 = arith.subf %202, %205 : vector<4x8x8xf32>
    %207 = math.exp %206 : vector<4x8x8xf32>
    %cst_59 = arith.constant dense<0.000000e+00> : vector<4x8xf32>
    %208 = vector.multi_reduction <add>, %207, %cst_59 [2] : vector<4x8x8xf32> to vector<4x8xf32>
    %209 = vector.shape_cast %208 : vector<4x8xf32> to vector<4x8x1xf32>
    %210 = tpu.reciprocal %209 {approx = true} : vector<4x8x1xf32> -> vector<4x8x1xf32>
    %211 = vector.broadcast %210 : vector<4x8x1xf32> to vector<4x8x8xf32>
    %212 = arith.mulf %207, %211 : vector<4x8x8xf32>
    "tpu.trace_start"() <{level = 10 : i32, message = "hqk,hkd->hqd"}> : () -> ()
    %cst_60 = arith.constant dense<0.000000e+00> : vector<4x8x8xf32>
    %213 = tpu.matmul %212, %198, %cst_60 {dimension_numbers = #tpu.dot_dimension_numbers<[2], [1], [1], [2], [0, 0, 0, 1, 1, 2], [0], [0]>} : vector<4x8x8xf32>, vector<4x8x8xf32>, vector<4x8x8xf32> -> vector<4x8x8xf32>
    "tpu.trace_stop"() : () -> ()
    %214 = vector.extract_strided_slice %213 {offsets = [0, 0, 0], sizes = [1, 8, 8], strides = [1, 1, 1]} : vector<4x8x8xf32> to vector<1x8x8xf32>
    %215 = vector.shape_cast %214 : vector<1x8x8xf32> to vector<8x8xf32>
    %216 = vector.extract_strided_slice %213 {offsets = [1, 0, 0], sizes = [1, 8, 8], strides = [1, 1, 1]} : vector<4x8x8xf32> to vector<1x8x8xf32>
    %217 = vector.shape_cast %216 : vector<1x8x8xf32> to vector<8x8xf32>
    %218 = vector.extract_strided_slice %213 {offsets = [2, 0, 0], sizes = [1, 8, 8], strides = [1, 1, 1]} : vector<4x8x8xf32> to vector<1x8x8xf32>
    %219 = vector.shape_cast %218 : vector<1x8x8xf32> to vector<8x8xf32>
    %220 = vector.extract_strided_slice %213 {offsets = [3, 0, 0], sizes = [1, 8, 8], strides = [1, 1, 1]} : vector<4x8x8xf32> to vector<1x8x8xf32>
    %221 = vector.shape_cast %220 : vector<1x8x8xf32> to vector<8x8xf32>
    %222 = tpu.concatenate %215, %217, %219, %221 in 1 : vector<8x8xf32>, vector<8x8xf32>, vector<8x8xf32>, vector<8x8xf32> -> vector<8x32xf32>
    %cst_61 = arith.constant dense<0.000000e+00> : vector<8x32xf32>
    %223 = tpu.matmul %222, %162, %cst_61 {dimension_numbers = #tpu.dot_dimension_numbers<[1], [0], [0], [1], [0, 0, 1, 1], [], []>} : vector<8x32xf32>, vector<32x32xf32>, vector<8x32xf32> -> vector<8x32xf32>
    %224 = vector.broadcast %163 : vector<1x32xf32> to vector<8x32xf32>
    %225 = arith.addf %223, %224 : vector<8x32xf32>
    %226 = arith.addf %137, %225 : vector<8x32xf32>
    %c432 = arith.constant 432 : index
    %c0_62 = arith.constant 0 : index
    %227 = vector.load %arg5[%c432, %c0_62] : memref<1120x128xf32, #tpu.memory_space<vmem>>, vector<1x32xf32>
    %c440 = arith.constant 440 : index
    %c0_63 = arith.constant 0 : index
    %228 = vector.load %arg5[%c440, %c0_63] : memref<1120x128xf32, #tpu.memory_space<vmem>>, vector<1x32xf32>
    %cst_64 = arith.constant dense<0.000000e+00> : vector<8xf32>
    %229 = vector.multi_reduction <add>, %226, %cst_64 [1] : vector<8x32xf32> to vector<8xf32>
    %230 = vector.shape_cast %229 : vector<8xf32> to vector<8x1xf32>
    %cst_65 = arith.constant 3.200000e+01 : f32
    %231 = vector.broadcast %cst_65 : f32 to vector<8x1xf32>
    %232 = arith.divf %230, %231 : vector<8x1xf32>
    %233 = vector.broadcast %232 : vector<8x1xf32> to vector<8x32xf32>
    %234 = arith.subf %226, %233 : vector<8x32xf32>
    %235 = arith.mulf %234, %234 : vector<8x32xf32>
    %cst_66 = arith.constant dense<0.000000e+00> : vector<8xf32>
    %236 = vector.multi_reduction <add>, %235, %cst_66 [1] : vector<8x32xf32> to vector<8xf32>
    %237 = vector.shape_cast %236 : vector<8xf32> to vector<8x1xf32>
    %cst_67 = arith.constant 0.0322580636 : f32
    %238 = vector.broadcast %cst_67 : f32 to vector<8x1xf32>
    %239 = arith.mulf %237, %238 : vector<8x1xf32>
    %240 = math.sqrt %239 : vector<8x1xf32>
    %241 = vector.broadcast %227 : vector<1x32xf32> to vector<8x32xf32>
    %242 = arith.mulf %241, %234 : vector<8x32xf32>
    %cst_68 = arith.constant 9.99999997E-7 : f32
    %243 = vector.broadcast %cst_68 : f32 to vector<8x1xf32>
    %244 = arith.addf %240, %243 : vector<8x1xf32>
    %245 = vector.broadcast %244 : vector<8x1xf32> to vector<8x32xf32>
    %246 = arith.divf %242, %245 : vector<8x32xf32>
    %247 = vector.broadcast %228 : vector<1x32xf32> to vector<8x32xf32>
    %248 = arith.addf %246, %247 : vector<8x32xf32>
    %c304 = arith.constant 304 : index
    %c0_69 = arith.constant 0 : index
    %249 = vector.load %arg5[%c304, %c0_69] : memref<1120x128xf32, #tpu.memory_space<vmem>>, vector<32x64xf32>
    %c336 = arith.constant 336 : index
    %c0_70 = arith.constant 0 : index
    %250 = vector.load %arg5[%c336, %c0_70] : memref<1120x128xf32, #tpu.memory_space<vmem>>, vector<1x64xf32>
    %c344 = arith.constant 344 : index
    %c0_71 = arith.constant 0 : index
    %251 = vector.load %arg5[%c344, %c0_71] : memref<1120x128xf32, #tpu.memory_space<vmem>>, vector<64x32xf32>
    %c408 = arith.constant 408 : index
    %c0_72 = arith.constant 0 : index
    %252 = vector.load %arg5[%c408, %c0_72] : memref<1120x128xf32, #tpu.memory_space<vmem>>, vector<1x32xf32>
    %cst_73 = arith.constant dense<0.000000e+00> : vector<8x64xf32>
    %253 = tpu.matmul %248, %249, %cst_73 {dimension_numbers = #tpu.dot_dimension_numbers<[1], [0], [0], [1], [0, 0, 1, 1], [], []>} : vector<8x32xf32>, vector<32x64xf32>, vector<8x64xf32> -> vector<8x64xf32>
    %254 = vector.broadcast %250 : vector<1x64xf32> to vector<8x64xf32>
    %255 = arith.addf %253, %254 : vector<8x64xf32>
    %cst_74 = arith.constant 0.000000e+00 : f32
    %256 = vector.broadcast %cst_74 : f32 to vector<8x64xf32>
    %257 = arith.maximumf %255, %256 : vector<8x64xf32>
    %cst_75 = arith.constant dense<0.000000e+00> : vector<8x32xf32>
    %258 = tpu.matmul %257, %251, %cst_75 {dimension_numbers = #tpu.dot_dimension_numbers<[1], [0], [0], [1], [0, 0, 1, 1], [], []>} : vector<8x64xf32>, vector<64x32xf32>, vector<8x32xf32> -> vector<8x32xf32>
    %259 = vector.broadcast %252 : vector<1x32xf32> to vector<8x32xf32>
    %260 = arith.addf %258, %259 : vector<8x32xf32>
    %261 = arith.addf %226, %260 : vector<8x32xf32>
    %c1088 = arith.constant 1088 : index
    %c0_76 = arith.constant 0 : index
    %262 = vector.load %arg5[%c1088, %c0_76] : memref<1120x128xf32, #tpu.memory_space<vmem>>, vector<1x32xf32>
    %c1096 = arith.constant 1096 : index
    %c0_77 = arith.constant 0 : index
    %263 = vector.load %arg5[%c1096, %c0_77] : memref<1120x128xf32, #tpu.memory_space<vmem>>, vector<1x32xf32>
    %cst_78 = arith.constant dense<0.000000e+00> : vector<8xf32>
    %264 = vector.multi_reduction <add>, %261, %cst_78 [1] : vector<8x32xf32> to vector<8xf32>
    %265 = vector.shape_cast %264 : vector<8xf32> to vector<8x1xf32>
    %cst_79 = arith.constant 3.200000e+01 : f32
    %266 = vector.broadcast %cst_79 : f32 to vector<8x1xf32>
    %267 = arith.divf %265, %266 : vector<8x1xf32>
    %268 = vector.broadcast %267 : vector<8x1xf32> to vector<8x32xf32>
    %269 = arith.subf %261, %268 : vector<8x32xf32>
    %270 = arith.mulf %269, %269 : vector<8x32xf32>
    %cst_80 = arith.constant dense<0.000000e+00> : vector<8xf32>
    %271 = vector.multi_reduction <add>, %270, %cst_80 [1] : vector<8x32xf32> to vector<8xf32>
    %272 = vector.shape_cast %271 : vector<8xf32> to vector<8x1xf32>
    %cst_81 = arith.constant 0.0322580636 : f32
    %273 = vector.broadcast %cst_81 : f32 to vector<8x1xf32>
    %274 = arith.mulf %272, %273 : vector<8x1xf32>
    %275 = math.sqrt %274 : vector<8x1xf32>
    %276 = vector.broadcast %262 : vector<1x32xf32> to vector<8x32xf32>
    %277 = arith.mulf %276, %269 : vector<8x32xf32>
    %cst_82 = arith.constant 9.99999997E-7 : f32
    %278 = vector.broadcast %cst_82 : f32 to vector<8x1xf32>
    %279 = arith.addf %275, %278 : vector<8x1xf32>
    %280 = vector.broadcast %279 : vector<8x1xf32> to vector<8x32xf32>
    %281 = arith.divf %277, %280 : vector<8x32xf32>
    %282 = vector.broadcast %263 : vector<1x32xf32> to vector<8x32xf32>
    %283 = arith.addf %281, %282 : vector<8x32xf32>
    %c0_83 = arith.constant 0 : index
    %c0_84 = arith.constant 0 : index
    %c0_85 = arith.constant 0 : index
    %284 = vector.load %arg2[%c0_83, %c0_84, %c0_85] : memref<1x8x32xf32, #tpu.memory_space<vmem>>, vector<1x8x32xf32>
    %285 = vector.shape_cast %284 : vector<1x8x32xf32> to vector<8x32xf32>
    %c720 = arith.constant 720 : index
    %c0_86 = arith.constant 0 : index
    %286 = vector.load %arg5[%c720, %c0_86] : memref<1120x128xf32, #tpu.memory_space<vmem>>, vector<1x32xf32>
    %c728 = arith.constant 728 : index
    %c0_87 = arith.constant 0 : index
    %287 = vector.load %arg5[%c728, %c0_87] : memref<1120x128xf32, #tpu.memory_space<vmem>>, vector<1x32xf32>
    %cst_88 = arith.constant dense<0.000000e+00> : vector<8xf32>
    %288 = vector.multi_reduction <add>, %285, %cst_88 [1] : vector<8x32xf32> to vector<8xf32>
    %289 = vector.shape_cast %288 : vector<8xf32> to vector<8x1xf32>
    %cst_89 = arith.constant 3.200000e+01 : f32
    %290 = vector.broadcast %cst_89 : f32 to vector<8x1xf32>
    %291 = arith.divf %289, %290 : vector<8x1xf32>
    %292 = vector.broadcast %291 : vector<8x1xf32> to vector<8x32xf32>
    %293 = arith.subf %285, %292 : vector<8x32xf32>
    %294 = arith.mulf %293, %293 : vector<8x32xf32>
    %cst_90 = arith.constant dense<0.000000e+00> : vector<8xf32>
    %295 = vector.multi_reduction <add>, %294, %cst_90 [1] : vector<8x32xf32> to vector<8xf32>
    %296 = vector.shape_cast %295 : vector<8xf32> to vector<8x1xf32>
    %cst_91 = arith.constant 0.0322580636 : f32
    %297 = vector.broadcast %cst_91 : f32 to vector<8x1xf32>
    %298 = arith.mulf %296, %297 : vector<8x1xf32>
    %299 = math.sqrt %298 : vector<8x1xf32>
    %300 = vector.broadcast %286 : vector<1x32xf32> to vector<8x32xf32>
    %301 = arith.mulf %300, %293 : vector<8x32xf32>
    %cst_92 = arith.constant 9.99999997E-7 : f32
    %302 = vector.broadcast %cst_92 : f32 to vector<8x1xf32>
    %303 = arith.addf %299, %302 : vector<8x1xf32>
    %304 = vector.broadcast %303 : vector<8x1xf32> to vector<8x32xf32>
    %305 = arith.divf %301, %304 : vector<8x32xf32>
    %306 = vector.broadcast %287 : vector<1x32xf32> to vector<8x32xf32>
    %307 = arith.addf %305, %306 : vector<8x32xf32>
    %c448 = arith.constant 448 : index
    %c0_93 = arith.constant 0 : index
    %308 = vector.load %arg5[%c448, %c0_93] : memref<1120x128xf32, #tpu.memory_space<vmem>>, vector<32x96xf32>
    %c480 = arith.constant 480 : index
    %c0_94 = arith.constant 0 : index
    %309 = vector.load %arg5[%c480, %c0_94] : memref<1120x128xf32, #tpu.memory_space<vmem>>, vector<1x96xf32>
    %c488 = arith.constant 488 : index
    %c0_95 = arith.constant 0 : index
    %310 = vector.load %arg5[%c488, %c0_95] : memref<1120x128xf32, #tpu.memory_space<vmem>>, vector<32x32xf32>
    %c520 = arith.constant 520 : index
    %c0_96 = arith.constant 0 : index
    %311 = vector.load %arg5[%c520, %c0_96] : memref<1120x128xf32, #tpu.memory_space<vmem>>, vector<1x32xf32>
    %cst_97 = arith.constant dense<0.000000e+00> : vector<8x96xf32>
    %312 = tpu.matmul %307, %308, %cst_97 {dimension_numbers = #tpu.dot_dimension_numbers<[1], [0], [0], [1], [0, 0, 1, 1], [], []>} : vector<8x32xf32>, vector<32x96xf32>, vector<8x96xf32> -> vector<8x96xf32>
    %313 = vector.broadcast %309 : vector<1x96xf32> to vector<8x96xf32>
    %314 = arith.addf %312, %313 : vector<8x96xf32>
    %315 = vector.extract_strided_slice %314 {offsets = [0, 0], sizes = [8, 32], strides = [1, 1]} : vector<8x96xf32> to vector<8x32xf32>
    %cst_98 = arith.constant 0.353553385 : f32
    %316 = vector.broadcast %cst_98 : f32 to vector<8x32xf32>
    %317 = arith.mulf %315, %316 : vector<8x32xf32>
    %318 = vector.extract_strided_slice %314 {offsets = [0, 32], sizes = [8, 32], strides = [1, 1]} : vector<8x96xf32> to vector<8x32xf32>
    %319 = vector.extract_strided_slice %314 {offsets = [0, 64], sizes = [8, 32], strides = [1, 1]} : vector<8x96xf32> to vector<8x32xf32>
    %320 = vector.extract_strided_slice %317 {offsets = [0, 0], sizes = [8, 8], strides = [1, 1]} : vector<8x32xf32> to vector<8x8xf32>
    %321 = vector.shape_cast %320 : vector<8x8xf32> to vector<1x8x8xf32>
    %322 = vector.extract_strided_slice %317 {offsets = [0, 8], sizes = [8, 8], strides = [1, 1]} : vector<8x32xf32> to vector<8x8xf32>
    %323 = vector.shape_cast %322 : vector<8x8xf32> to vector<1x8x8xf32>
    %324 = vector.extract_strided_slice %317 {offsets = [0, 16], sizes = [8, 8], strides = [1, 1]} : vector<8x32xf32> to vector<8x8xf32>
    %325 = vector.shape_cast %324 : vector<8x8xf32> to vector<1x8x8xf32>
    %326 = vector.extract_strided_slice %317 {offsets = [0, 24], sizes = [8, 8], strides = [1, 1]} : vector<8x32xf32> to vector<8x8xf32>
    %327 = vector.shape_cast %326 : vector<8x8xf32> to vector<1x8x8xf32>
    %328 = tpu.concatenate %321, %323, %325, %327 in 0 : vector<1x8x8xf32>, vector<1x8x8xf32>, vector<1x8x8xf32>, vector<1x8x8xf32> -> vector<4x8x8xf32>
    %329 = vector.extract_strided_slice %318 {offsets = [0, 0], sizes = [8, 8], strides = [1, 1]} : vector<8x32xf32> to vector<8x8xf32>
    %330 = vector.shape_cast %329 : vector<8x8xf32> to vector<1x8x8xf32>
    %331 = vector.extract_strided_slice %318 {offsets = [0, 8], sizes = [8, 8], strides = [1, 1]} : vector<8x32xf32> to vector<8x8xf32>
    %332 = vector.shape_cast %331 : vector<8x8xf32> to vector<1x8x8xf32>
    %333 = vector.extract_strided_slice %318 {offsets = [0, 16], sizes = [8, 8], strides = [1, 1]} : vector<8x32xf32> to vector<8x8xf32>
    %334 = vector.shape_cast %333 : vector<8x8xf32> to vector<1x8x8xf32>
    %335 = vector.extract_strided_slice %318 {offsets = [0, 24], sizes = [8, 8], strides = [1, 1]} : vector<8x32xf32> to vector<8x8xf32>
    %336 = vector.shape_cast %335 : vector<8x8xf32> to vector<1x8x8xf32>
    %337 = tpu.concatenate %330, %332, %334, %336 in 0 : vector<1x8x8xf32>, vector<1x8x8xf32>, vector<1x8x8xf32>, vector<1x8x8xf32> -> vector<4x8x8xf32>
    %338 = vector.extract_strided_slice %319 {offsets = [0, 0], sizes = [8, 8], strides = [1, 1]} : vector<8x32xf32> to vector<8x8xf32>
    %339 = vector.shape_cast %338 : vector<8x8xf32> to vector<1x8x8xf32>
    %340 = vector.extract_strided_slice %319 {offsets = [0, 8], sizes = [8, 8], strides = [1, 1]} : vector<8x32xf32> to vector<8x8xf32>
    %341 = vector.shape_cast %340 : vector<8x8xf32> to vector<1x8x8xf32>
    %342 = vector.extract_strided_slice %319 {offsets = [0, 16], sizes = [8, 8], strides = [1, 1]} : vector<8x32xf32> to vector<8x8xf32>
    %343 = vector.shape_cast %342 : vector<8x8xf32> to vector<1x8x8xf32>
    %344 = vector.extract_strided_slice %319 {offsets = [0, 24], sizes = [8, 8], strides = [1, 1]} : vector<8x32xf32> to vector<8x8xf32>
    %345 = vector.shape_cast %344 : vector<8x8xf32> to vector<1x8x8xf32>
    %346 = tpu.concatenate %339, %341, %343, %345 in 0 : vector<1x8x8xf32>, vector<1x8x8xf32>, vector<1x8x8xf32>, vector<1x8x8xf32> -> vector<4x8x8xf32>
    "tpu.trace_start"() <{level = 10 : i32, message = "hqd,hkd->hqk"}> : () -> ()
    %cst_99 = arith.constant dense<0.000000e+00> : vector<4x8x8xf32>
    %347 = tpu.matmul %328, %337, %cst_99 {dimension_numbers = #tpu.dot_dimension_numbers<[2], [2], [1], [1], [0, 0, 0, 1, 1, 1], [0], [0]>} : vector<4x8x8xf32>, vector<4x8x8xf32>, vector<4x8x8xf32> -> vector<4x8x8xf32>
    "tpu.trace_stop"() : () -> ()
    %348 = vector.shape_cast %11 : vector<8x8xf32> to vector<1x8x8xf32>
    %349 = vector.broadcast %348 : vector<1x8x8xf32> to vector<4x8x8xf32>
    %350 = arith.addf %347, %349 : vector<4x8x8xf32>
    %cst_100 = arith.constant dense<0xFF800000> : vector<4x8xf32>
    %351 = vector.multi_reduction <maximumf>, %350, %cst_100 [2] : vector<4x8x8xf32> to vector<4x8xf32>
    %352 = vector.shape_cast %351 : vector<4x8xf32> to vector<4x8x1xf32>
    %353 = vector.broadcast %352 : vector<4x8x1xf32> to vector<4x8x8xf32>
    %354 = arith.subf %350, %353 : vector<4x8x8xf32>
    %355 = math.exp %354 : vector<4x8x8xf32>
    %cst_101 = arith.constant dense<0.000000e+00> : vector<4x8xf32>
    %356 = vector.multi_reduction <add>, %355, %cst_101 [2] : vector<4x8x8xf32> to vector<4x8xf32>
    %357 = vector.shape_cast %356 : vector<4x8xf32> to vector<4x8x1xf32>
    %358 = tpu.reciprocal %357 {approx = true} : vector<4x8x1xf32> -> vector<4x8x1xf32>
    %359 = vector.broadcast %358 : vector<4x8x1xf32> to vector<4x8x8xf32>
    %360 = arith.mulf %355, %359 : vector<4x8x8xf32>
    "tpu.trace_start"() <{level = 10 : i32, message = "hqk,hkd->hqd"}> : () -> ()
    %cst_102 = arith.constant dense<0.000000e+00> : vector<4x8x8xf32>
    %361 = tpu.matmul %360, %346, %cst_102 {dimension_numbers = #tpu.dot_dimension_numbers<[2], [1], [1], [2], [0, 0, 0, 1, 1, 2], [0], [0]>} : vector<4x8x8xf32>, vector<4x8x8xf32>, vector<4x8x8xf32> -> vector<4x8x8xf32>
    "tpu.trace_stop"() : () -> ()
    %362 = vector.extract_strided_slice %361 {offsets = [0, 0, 0], sizes = [1, 8, 8], strides = [1, 1, 1]} : vector<4x8x8xf32> to vector<1x8x8xf32>
    %363 = vector.shape_cast %362 : vector<1x8x8xf32> to vector<8x8xf32>
    %364 = vector.extract_strided_slice %361 {offsets = [1, 0, 0], sizes = [1, 8, 8], strides = [1, 1, 1]} : vector<4x8x8xf32> to vector<1x8x8xf32>
    %365 = vector.shape_cast %364 : vector<1x8x8xf32> to vector<8x8xf32>
    %366 = vector.extract_strided_slice %361 {offsets = [2, 0, 0], sizes = [1, 8, 8], strides = [1, 1, 1]} : vector<4x8x8xf32> to vector<1x8x8xf32>
    %367 = vector.shape_cast %366 : vector<1x8x8xf32> to vector<8x8xf32>
    %368 = vector.extract_strided_slice %361 {offsets = [3, 0, 0], sizes = [1, 8, 8], strides = [1, 1, 1]} : vector<4x8x8xf32> to vector<1x8x8xf32>
    %369 = vector.shape_cast %368 : vector<1x8x8xf32> to vector<8x8xf32>
    %370 = tpu.concatenate %363, %365, %367, %369 in 1 : vector<8x8xf32>, vector<8x8xf32>, vector<8x8xf32>, vector<8x8xf32> -> vector<8x32xf32>
    %cst_103 = arith.constant dense<0.000000e+00> : vector<8x32xf32>
    %371 = tpu.matmul %370, %310, %cst_103 {dimension_numbers = #tpu.dot_dimension_numbers<[1], [0], [0], [1], [0, 0, 1, 1], [], []>} : vector<8x32xf32>, vector<32x32xf32>, vector<8x32xf32> -> vector<8x32xf32>
    %372 = vector.broadcast %311 : vector<1x32xf32> to vector<8x32xf32>
    %373 = arith.addf %371, %372 : vector<8x32xf32>
    %374 = arith.addf %285, %373 : vector<8x32xf32>
    %c736 = arith.constant 736 : index
    %c0_104 = arith.constant 0 : index
    %375 = vector.load %arg5[%c736, %c0_104] : memref<1120x128xf32, #tpu.memory_space<vmem>>, vector<1x32xf32>
    %c744 = arith.constant 744 : index
    %c0_105 = arith.constant 0 : index
    %376 = vector.load %arg5[%c744, %c0_105] : memref<1120x128xf32, #tpu.memory_space<vmem>>, vector<1x32xf32>
    %cst_106 = arith.constant dense<0.000000e+00> : vector<8xf32>
    %377 = vector.multi_reduction <add>, %374, %cst_106 [1] : vector<8x32xf32> to vector<8xf32>
    %378 = vector.shape_cast %377 : vector<8xf32> to vector<8x1xf32>
    %cst_107 = arith.constant 3.200000e+01 : f32
    %379 = vector.broadcast %cst_107 : f32 to vector<8x1xf32>
    %380 = arith.divf %378, %379 : vector<8x1xf32>
    %381 = vector.broadcast %380 : vector<8x1xf32> to vector<8x32xf32>
    %382 = arith.subf %374, %381 : vector<8x32xf32>
    %383 = arith.mulf %382, %382 : vector<8x32xf32>
    %cst_108 = arith.constant dense<0.000000e+00> : vector<8xf32>
    %384 = vector.multi_reduction <add>, %383, %cst_108 [1] : vector<8x32xf32> to vector<8xf32>
    %385 = vector.shape_cast %384 : vector<8xf32> to vector<8x1xf32>
    %cst_109 = arith.constant 0.0322580636 : f32
    %386 = vector.broadcast %cst_109 : f32 to vector<8x1xf32>
    %387 = arith.mulf %385, %386 : vector<8x1xf32>
    %388 = math.sqrt %387 : vector<8x1xf32>
    %389 = vector.broadcast %375 : vector<1x32xf32> to vector<8x32xf32>
    %390 = arith.mulf %389, %382 : vector<8x32xf32>
    %cst_110 = arith.constant 9.99999997E-7 : f32
    %391 = vector.broadcast %cst_110 : f32 to vector<8x1xf32>
    %392 = arith.addf %388, %391 : vector<8x1xf32>
    %393 = vector.broadcast %392 : vector<8x1xf32> to vector<8x32xf32>
    %394 = arith.divf %390, %393 : vector<8x32xf32>
    %395 = vector.broadcast %376 : vector<1x32xf32> to vector<8x32xf32>
    %396 = arith.addf %394, %395 : vector<8x32xf32>
    %c528 = arith.constant 528 : index
    %c0_111 = arith.constant 0 : index
    %397 = vector.load %arg5[%c528, %c0_111] : memref<1120x128xf32, #tpu.memory_space<vmem>>, vector<32x96xf32>
    %c560 = arith.constant 560 : index
    %c0_112 = arith.constant 0 : index
    %398 = vector.load %arg5[%c560, %c0_112] : memref<1120x128xf32, #tpu.memory_space<vmem>>, vector<1x96xf32>
    %c568 = arith.constant 568 : index
    %c0_113 = arith.constant 0 : index
    %399 = vector.load %arg5[%c568, %c0_113] : memref<1120x128xf32, #tpu.memory_space<vmem>>, vector<32x32xf32>
    %c600 = arith.constant 600 : index
    %c0_114 = arith.constant 0 : index
    %400 = vector.load %arg5[%c600, %c0_114] : memref<1120x128xf32, #tpu.memory_space<vmem>>, vector<1x32xf32>
    %401 = vector.extract_strided_slice %397 {offsets = [0, 0], sizes = [32, 32], strides = [1, 1]} : vector<32x96xf32> to vector<32x32xf32>
    %cst_115 = arith.constant dense<0.000000e+00> : vector<8x32xf32>
    %402 = tpu.matmul %396, %401, %cst_115 {dimension_numbers = #tpu.dot_dimension_numbers<[1], [0], [0], [1], [0, 0, 1, 1], [], []>} : vector<8x32xf32>, vector<32x32xf32>, vector<8x32xf32> -> vector<8x32xf32>
    %403 = vector.extract_strided_slice %398 {offsets = [0, 0], sizes = [1, 32], strides = [1, 1]} : vector<1x96xf32> to vector<1x32xf32>
    %404 = vector.broadcast %403 : vector<1x32xf32> to vector<8x32xf32>
    %405 = arith.addf %402, %404 : vector<8x32xf32>
    %cst_116 = arith.constant 0.353553385 : f32
    %406 = vector.broadcast %cst_116 : f32 to vector<8x32xf32>
    %407 = arith.mulf %405, %406 : vector<8x32xf32>
    %408 = vector.extract_strided_slice %397 {offsets = [0, 32], sizes = [32, 64], strides = [1, 1]} : vector<32x96xf32> to vector<32x64xf32>
    %cst_117 = arith.constant dense<0.000000e+00> : vector<8x64xf32>
    %409 = tpu.matmul %283, %408, %cst_117 {dimension_numbers = #tpu.dot_dimension_numbers<[1], [0], [0], [1], [0, 0, 1, 1], [], []>} : vector<8x32xf32>, vector<32x64xf32>, vector<8x64xf32> -> vector<8x64xf32>
    %410 = vector.extract_strided_slice %398 {offsets = [0, 32], sizes = [1, 64], strides = [1, 1]} : vector<1x96xf32> to vector<1x64xf32>
    %411 = vector.broadcast %410 : vector<1x64xf32> to vector<8x64xf32>
    %412 = arith.addf %409, %411 : vector<8x64xf32>
    %413 = vector.extract_strided_slice %412 {offsets = [0, 0], sizes = [8, 32], strides = [1, 1]} : vector<8x64xf32> to vector<8x32xf32>
    %414 = vector.extract_strided_slice %412 {offsets = [0, 32], sizes = [8, 32], strides = [1, 1]} : vector<8x64xf32> to vector<8x32xf32>
    %415 = vector.extract_strided_slice %407 {offsets = [0, 0], sizes = [8, 8], strides = [1, 1]} : vector<8x32xf32> to vector<8x8xf32>
    %416 = vector.shape_cast %415 : vector<8x8xf32> to vector<1x8x8xf32>
    %417 = vector.extract_strided_slice %407 {offsets = [0, 8], sizes = [8, 8], strides = [1, 1]} : vector<8x32xf32> to vector<8x8xf32>
    %418 = vector.shape_cast %417 : vector<8x8xf32> to vector<1x8x8xf32>
    %419 = vector.extract_strided_slice %407 {offsets = [0, 16], sizes = [8, 8], strides = [1, 1]} : vector<8x32xf32> to vector<8x8xf32>
    %420 = vector.shape_cast %419 : vector<8x8xf32> to vector<1x8x8xf32>
    %421 = vector.extract_strided_slice %407 {offsets = [0, 24], sizes = [8, 8], strides = [1, 1]} : vector<8x32xf32> to vector<8x8xf32>
    %422 = vector.shape_cast %421 : vector<8x8xf32> to vector<1x8x8xf32>
    %423 = tpu.concatenate %416, %418, %420, %422 in 0 : vector<1x8x8xf32>, vector<1x8x8xf32>, vector<1x8x8xf32>, vector<1x8x8xf32> -> vector<4x8x8xf32>
    %424 = vector.extract_strided_slice %413 {offsets = [0, 0], sizes = [8, 8], strides = [1, 1]} : vector<8x32xf32> to vector<8x8xf32>
    %425 = vector.shape_cast %424 : vector<8x8xf32> to vector<1x8x8xf32>
    %426 = vector.extract_strided_slice %413 {offsets = [0, 8], sizes = [8, 8], strides = [1, 1]} : vector<8x32xf32> to vector<8x8xf32>
    %427 = vector.shape_cast %426 : vector<8x8xf32> to vector<1x8x8xf32>
    %428 = vector.extract_strided_slice %413 {offsets = [0, 16], sizes = [8, 8], strides = [1, 1]} : vector<8x32xf32> to vector<8x8xf32>
    %429 = vector.shape_cast %428 : vector<8x8xf32> to vector<1x8x8xf32>
    %430 = vector.extract_strided_slice %413 {offsets = [0, 24], sizes = [8, 8], strides = [1, 1]} : vector<8x32xf32> to vector<8x8xf32>
    %431 = vector.shape_cast %430 : vector<8x8xf32> to vector<1x8x8xf32>
    %432 = tpu.concatenate %425, %427, %429, %431 in 0 : vector<1x8x8xf32>, vector<1x8x8xf32>, vector<1x8x8xf32>, vector<1x8x8xf32> -> vector<4x8x8xf32>
    %433 = vector.extract_strided_slice %414 {offsets = [0, 0], sizes = [8, 8], strides = [1, 1]} : vector<8x32xf32> to vector<8x8xf32>
    %434 = vector.shape_cast %433 : vector<8x8xf32> to vector<1x8x8xf32>
    %435 = vector.extract_strided_slice %414 {offsets = [0, 8], sizes = [8, 8], strides = [1, 1]} : vector<8x32xf32> to vector<8x8xf32>
    %436 = vector.shape_cast %435 : vector<8x8xf32> to vector<1x8x8xf32>
    %437 = vector.extract_strided_slice %414 {offsets = [0, 16], sizes = [8, 8], strides = [1, 1]} : vector<8x32xf32> to vector<8x8xf32>
    %438 = vector.shape_cast %437 : vector<8x8xf32> to vector<1x8x8xf32>
    %439 = vector.extract_strided_slice %414 {offsets = [0, 24], sizes = [8, 8], strides = [1, 1]} : vector<8x32xf32> to vector<8x8xf32>
    %440 = vector.shape_cast %439 : vector<8x8xf32> to vector<1x8x8xf32>
    %441 = tpu.concatenate %434, %436, %438, %440 in 0 : vector<1x8x8xf32>, vector<1x8x8xf32>, vector<1x8x8xf32>, vector<1x8x8xf32> -> vector<4x8x8xf32>
    "tpu.trace_start"() <{level = 10 : i32, message = "hqd,hkd->hqk"}> : () -> ()
    %cst_118 = arith.constant dense<0.000000e+00> : vector<4x8x8xf32>
    %442 = tpu.matmul %423, %432, %cst_118 {dimension_numbers = #tpu.dot_dimension_numbers<[2], [2], [1], [1], [0, 0, 0, 1, 1, 1], [0], [0]>} : vector<4x8x8xf32>, vector<4x8x8xf32>, vector<4x8x8xf32> -> vector<4x8x8xf32>
    "tpu.trace_stop"() : () -> ()
    %443 = vector.shape_cast %5 : vector<1x8xf32> to vector<1x1x8xf32>
    %444 = vector.broadcast %443 : vector<1x1x8xf32> to vector<4x8x8xf32>
    %445 = arith.addf %442, %444 : vector<4x8x8xf32>
    %cst_119 = arith.constant dense<0xFF800000> : vector<4x8xf32>
    %446 = vector.multi_reduction <maximumf>, %445, %cst_119 [2] : vector<4x8x8xf32> to vector<4x8xf32>
    %447 = vector.shape_cast %446 : vector<4x8xf32> to vector<4x8x1xf32>
    %448 = vector.broadcast %447 : vector<4x8x1xf32> to vector<4x8x8xf32>
    %449 = arith.subf %445, %448 : vector<4x8x8xf32>
    %450 = math.exp %449 : vector<4x8x8xf32>
    %cst_120 = arith.constant dense<0.000000e+00> : vector<4x8xf32>
    %451 = vector.multi_reduction <add>, %450, %cst_120 [2] : vector<4x8x8xf32> to vector<4x8xf32>
    %452 = vector.shape_cast %451 : vector<4x8xf32> to vector<4x8x1xf32>
    %453 = tpu.reciprocal %452 {approx = true} : vector<4x8x1xf32> -> vector<4x8x1xf32>
    %454 = vector.broadcast %453 : vector<4x8x1xf32> to vector<4x8x8xf32>
    %455 = arith.mulf %450, %454 : vector<4x8x8xf32>
    "tpu.trace_start"() <{level = 10 : i32, message = "hqk,hkd->hqd"}> : () -> ()
    %cst_121 = arith.constant dense<0.000000e+00> : vector<4x8x8xf32>
    %456 = tpu.matmul %455, %441, %cst_121 {dimension_numbers = #tpu.dot_dimension_numbers<[2], [1], [1], [2], [0, 0, 0, 1, 1, 2], [0], [0]>} : vector<4x8x8xf32>, vector<4x8x8xf32>, vector<4x8x8xf32> -> vector<4x8x8xf32>
    "tpu.trace_stop"() : () -> ()
    %457 = vector.extract_strided_slice %456 {offsets = [0, 0, 0], sizes = [1, 8, 8], strides = [1, 1, 1]} : vector<4x8x8xf32> to vector<1x8x8xf32>
    %458 = vector.shape_cast %457 : vector<1x8x8xf32> to vector<8x8xf32>
    %459 = vector.extract_strided_slice %456 {offsets = [1, 0, 0], sizes = [1, 8, 8], strides = [1, 1, 1]} : vector<4x8x8xf32> to vector<1x8x8xf32>
    %460 = vector.shape_cast %459 : vector<1x8x8xf32> to vector<8x8xf32>
    %461 = vector.extract_strided_slice %456 {offsets = [2, 0, 0], sizes = [1, 8, 8], strides = [1, 1, 1]} : vector<4x8x8xf32> to vector<1x8x8xf32>
    %462 = vector.shape_cast %461 : vector<1x8x8xf32> to vector<8x8xf32>
    %463 = vector.extract_strided_slice %456 {offsets = [3, 0, 0], sizes = [1, 8, 8], strides = [1, 1, 1]} : vector<4x8x8xf32> to vector<1x8x8xf32>
    %464 = vector.shape_cast %463 : vector<1x8x8xf32> to vector<8x8xf32>
    %465 = tpu.concatenate %458, %460, %462, %464 in 1 : vector<8x8xf32>, vector<8x8xf32>, vector<8x8xf32>, vector<8x8xf32> -> vector<8x32xf32>
    %cst_122 = arith.constant dense<0.000000e+00> : vector<8x32xf32>
    %466 = tpu.matmul %465, %399, %cst_122 {dimension_numbers = #tpu.dot_dimension_numbers<[1], [0], [0], [1], [0, 0, 1, 1], [], []>} : vector<8x32xf32>, vector<32x32xf32>, vector<8x32xf32> -> vector<8x32xf32>
    %467 = vector.broadcast %400 : vector<1x32xf32> to vector<8x32xf32>
    %468 = arith.addf %466, %467 : vector<8x32xf32>
    %469 = arith.addf %374, %468 : vector<8x32xf32>
    %c752 = arith.constant 752 : index
    %c0_123 = arith.constant 0 : index
    %470 = vector.load %arg5[%c752, %c0_123] : memref<1120x128xf32, #tpu.memory_space<vmem>>, vector<1x32xf32>
    %c760 = arith.constant 760 : index
    %c0_124 = arith.constant 0 : index
    %471 = vector.load %arg5[%c760, %c0_124] : memref<1120x128xf32, #tpu.memory_space<vmem>>, vector<1x32xf32>
    %cst_125 = arith.constant dense<0.000000e+00> : vector<8xf32>
    %472 = vector.multi_reduction <add>, %469, %cst_125 [1] : vector<8x32xf32> to vector<8xf32>
    %473 = vector.shape_cast %472 : vector<8xf32> to vector<8x1xf32>
    %cst_126 = arith.constant 3.200000e+01 : f32
    %474 = vector.broadcast %cst_126 : f32 to vector<8x1xf32>
    %475 = arith.divf %473, %474 : vector<8x1xf32>
    %476 = vector.broadcast %475 : vector<8x1xf32> to vector<8x32xf32>
    %477 = arith.subf %469, %476 : vector<8x32xf32>
    %478 = arith.mulf %477, %477 : vector<8x32xf32>
    %cst_127 = arith.constant dense<0.000000e+00> : vector<8xf32>
    %479 = vector.multi_reduction <add>, %478, %cst_127 [1] : vector<8x32xf32> to vector<8xf32>
    %480 = vector.shape_cast %479 : vector<8xf32> to vector<8x1xf32>
    %cst_128 = arith.constant 0.0322580636 : f32
    %481 = vector.broadcast %cst_128 : f32 to vector<8x1xf32>
    %482 = arith.mulf %480, %481 : vector<8x1xf32>
    %483 = math.sqrt %482 : vector<8x1xf32>
    %484 = vector.broadcast %470 : vector<1x32xf32> to vector<8x32xf32>
    %485 = arith.mulf %484, %477 : vector<8x32xf32>
    %cst_129 = arith.constant 9.99999997E-7 : f32
    %486 = vector.broadcast %cst_129 : f32 to vector<8x1xf32>
    %487 = arith.addf %483, %486 : vector<8x1xf32>
    %488 = vector.broadcast %487 : vector<8x1xf32> to vector<8x32xf32>
    %489 = arith.divf %485, %488 : vector<8x32xf32>
    %490 = vector.broadcast %471 : vector<1x32xf32> to vector<8x32xf32>
    %491 = arith.addf %489, %490 : vector<8x32xf32>
    %c608 = arith.constant 608 : index
    %c0_130 = arith.constant 0 : index
    %492 = vector.load %arg5[%c608, %c0_130] : memref<1120x128xf32, #tpu.memory_space<vmem>>, vector<32x64xf32>
    %c640 = arith.constant 640 : index
    %c0_131 = arith.constant 0 : index
    %493 = vector.load %arg5[%c640, %c0_131] : memref<1120x128xf32, #tpu.memory_space<vmem>>, vector<1x64xf32>
    %c648 = arith.constant 648 : index
    %c0_132 = arith.constant 0 : index
    %494 = vector.load %arg5[%c648, %c0_132] : memref<1120x128xf32, #tpu.memory_space<vmem>>, vector<64x32xf32>
    %c712 = arith.constant 712 : index
    %c0_133 = arith.constant 0 : index
    %495 = vector.load %arg5[%c712, %c0_133] : memref<1120x128xf32, #tpu.memory_space<vmem>>, vector<1x32xf32>
    %cst_134 = arith.constant dense<0.000000e+00> : vector<8x64xf32>
    %496 = tpu.matmul %491, %492, %cst_134 {dimension_numbers = #tpu.dot_dimension_numbers<[1], [0], [0], [1], [0, 0, 1, 1], [], []>} : vector<8x32xf32>, vector<32x64xf32>, vector<8x64xf32> -> vector<8x64xf32>
    %497 = vector.broadcast %493 : vector<1x64xf32> to vector<8x64xf32>
    %498 = arith.addf %496, %497 : vector<8x64xf32>
    %cst_135 = arith.constant 0.000000e+00 : f32
    %499 = vector.broadcast %cst_135 : f32 to vector<8x64xf32>
    %500 = arith.maximumf %498, %499 : vector<8x64xf32>
    %cst_136 = arith.constant dense<0.000000e+00> : vector<8x32xf32>
    %501 = tpu.matmul %500, %494, %cst_136 {dimension_numbers = #tpu.dot_dimension_numbers<[1], [0], [0], [1], [0, 0, 1, 1], [], []>} : vector<8x64xf32>, vector<64x32xf32>, vector<8x32xf32> -> vector<8x32xf32>
    %502 = vector.broadcast %495 : vector<1x32xf32> to vector<8x32xf32>
    %503 = arith.addf %501, %502 : vector<8x32xf32>
    %504 = arith.addf %469, %503 : vector<8x32xf32>
    %c1040 = arith.constant 1040 : index
    %c0_137 = arith.constant 0 : index
    %505 = vector.load %arg5[%c1040, %c0_137] : memref<1120x128xf32, #tpu.memory_space<vmem>>, vector<1x32xf32>
    %c1048 = arith.constant 1048 : index
    %c0_138 = arith.constant 0 : index
    %506 = vector.load %arg5[%c1048, %c0_138] : memref<1120x128xf32, #tpu.memory_space<vmem>>, vector<1x32xf32>
    %cst_139 = arith.constant dense<0.000000e+00> : vector<8xf32>
    %507 = vector.multi_reduction <add>, %504, %cst_139 [1] : vector<8x32xf32> to vector<8xf32>
    %508 = vector.shape_cast %507 : vector<8xf32> to vector<8x1xf32>
    %cst_140 = arith.constant 3.200000e+01 : f32
    %509 = vector.broadcast %cst_140 : f32 to vector<8x1xf32>
    %510 = arith.divf %508, %509 : vector<8x1xf32>
    %511 = vector.broadcast %510 : vector<8x1xf32> to vector<8x32xf32>
    %512 = arith.subf %504, %511 : vector<8x32xf32>
    %513 = arith.mulf %512, %512 : vector<8x32xf32>
    %cst_141 = arith.constant dense<0.000000e+00> : vector<8xf32>
    %514 = vector.multi_reduction <add>, %513, %cst_141 [1] : vector<8x32xf32> to vector<8xf32>
    %515 = vector.shape_cast %514 : vector<8xf32> to vector<8x1xf32>
    %cst_142 = arith.constant 0.0322580636 : f32
    %516 = vector.broadcast %cst_142 : f32 to vector<8x1xf32>
    %517 = arith.mulf %515, %516 : vector<8x1xf32>
    %518 = math.sqrt %517 : vector<8x1xf32>
    %519 = vector.broadcast %505 : vector<1x32xf32> to vector<8x32xf32>
    %520 = arith.mulf %519, %512 : vector<8x32xf32>
    %cst_143 = arith.constant 9.99999997E-7 : f32
    %521 = vector.broadcast %cst_143 : f32 to vector<8x1xf32>
    %522 = arith.addf %518, %521 : vector<8x1xf32>
    %523 = vector.broadcast %522 : vector<8x1xf32> to vector<8x32xf32>
    %524 = arith.divf %520, %523 : vector<8x32xf32>
    %525 = vector.broadcast %506 : vector<1x32xf32> to vector<8x32xf32>
    %526 = arith.addf %524, %525 : vector<8x32xf32>
    %c768 = arith.constant 768 : index
    %c0_144 = arith.constant 0 : index
    %527 = vector.load %arg5[%c768, %c0_144] : memref<1120x128xf32, #tpu.memory_space<vmem>>, vector<32x96xf32>
    %c800 = arith.constant 800 : index
    %c0_145 = arith.constant 0 : index
    %528 = vector.load %arg5[%c800, %c0_145] : memref<1120x128xf32, #tpu.memory_space<vmem>>, vector<1x96xf32>
    %c808 = arith.constant 808 : index
    %c0_146 = arith.constant 0 : index
    %529 = vector.load %arg5[%c808, %c0_146] : memref<1120x128xf32, #tpu.memory_space<vmem>>, vector<32x32xf32>
    %c840 = arith.constant 840 : index
    %c0_147 = arith.constant 0 : index
    %530 = vector.load %arg5[%c840, %c0_147] : memref<1120x128xf32, #tpu.memory_space<vmem>>, vector<1x32xf32>
    %cst_148 = arith.constant dense<0.000000e+00> : vector<8x96xf32>
    %531 = tpu.matmul %526, %527, %cst_148 {dimension_numbers = #tpu.dot_dimension_numbers<[1], [0], [0], [1], [0, 0, 1, 1], [], []>} : vector<8x32xf32>, vector<32x96xf32>, vector<8x96xf32> -> vector<8x96xf32>
    %532 = vector.broadcast %528 : vector<1x96xf32> to vector<8x96xf32>
    %533 = arith.addf %531, %532 : vector<8x96xf32>
    %534 = vector.extract_strided_slice %533 {offsets = [0, 0], sizes = [8, 32], strides = [1, 1]} : vector<8x96xf32> to vector<8x32xf32>
    %cst_149 = arith.constant 0.353553385 : f32
    %535 = vector.broadcast %cst_149 : f32 to vector<8x32xf32>
    %536 = arith.mulf %534, %535 : vector<8x32xf32>
    %537 = vector.extract_strided_slice %533 {offsets = [0, 32], sizes = [8, 32], strides = [1, 1]} : vector<8x96xf32> to vector<8x32xf32>
    %538 = vector.extract_strided_slice %533 {offsets = [0, 64], sizes = [8, 32], strides = [1, 1]} : vector<8x96xf32> to vector<8x32xf32>
    %539 = vector.extract_strided_slice %536 {offsets = [0, 0], sizes = [8, 8], strides = [1, 1]} : vector<8x32xf32> to vector<8x8xf32>
    %540 = vector.shape_cast %539 : vector<8x8xf32> to vector<1x8x8xf32>
    %541 = vector.extract_strided_slice %536 {offsets = [0, 8], sizes = [8, 8], strides = [1, 1]} : vector<8x32xf32> to vector<8x8xf32>
    %542 = vector.shape_cast %541 : vector<8x8xf32> to vector<1x8x8xf32>
    %543 = vector.extract_strided_slice %536 {offsets = [0, 16], sizes = [8, 8], strides = [1, 1]} : vector<8x32xf32> to vector<8x8xf32>
    %544 = vector.shape_cast %543 : vector<8x8xf32> to vector<1x8x8xf32>
    %545 = vector.extract_strided_slice %536 {offsets = [0, 24], sizes = [8, 8], strides = [1, 1]} : vector<8x32xf32> to vector<8x8xf32>
    %546 = vector.shape_cast %545 : vector<8x8xf32> to vector<1x8x8xf32>
    %547 = tpu.concatenate %540, %542, %544, %546 in 0 : vector<1x8x8xf32>, vector<1x8x8xf32>, vector<1x8x8xf32>, vector<1x8x8xf32> -> vector<4x8x8xf32>
    %548 = vector.extract_strided_slice %537 {offsets = [0, 0], sizes = [8, 8], strides = [1, 1]} : vector<8x32xf32> to vector<8x8xf32>
    %549 = vector.shape_cast %548 : vector<8x8xf32> to vector<1x8x8xf32>
    %550 = vector.extract_strided_slice %537 {offsets = [0, 8], sizes = [8, 8], strides = [1, 1]} : vector<8x32xf32> to vector<8x8xf32>
    %551 = vector.shape_cast %550 : vector<8x8xf32> to vector<1x8x8xf32>
    %552 = vector.extract_strided_slice %537 {offsets = [0, 16], sizes = [8, 8], strides = [1, 1]} : vector<8x32xf32> to vector<8x8xf32>
    %553 = vector.shape_cast %552 : vector<8x8xf32> to vector<1x8x8xf32>
    %554 = vector.extract_strided_slice %537 {offsets = [0, 24], sizes = [8, 8], strides = [1, 1]} : vector<8x32xf32> to vector<8x8xf32>
    %555 = vector.shape_cast %554 : vector<8x8xf32> to vector<1x8x8xf32>
    %556 = tpu.concatenate %549, %551, %553, %555 in 0 : vector<1x8x8xf32>, vector<1x8x8xf32>, vector<1x8x8xf32>, vector<1x8x8xf32> -> vector<4x8x8xf32>
    %557 = vector.extract_strided_slice %538 {offsets = [0, 0], sizes = [8, 8], strides = [1, 1]} : vector<8x32xf32> to vector<8x8xf32>
    %558 = vector.shape_cast %557 : vector<8x8xf32> to vector<1x8x8xf32>
    %559 = vector.extract_strided_slice %538 {offsets = [0, 8], sizes = [8, 8], strides = [1, 1]} : vector<8x32xf32> to vector<8x8xf32>
    %560 = vector.shape_cast %559 : vector<8x8xf32> to vector<1x8x8xf32>
    %561 = vector.extract_strided_slice %538 {offsets = [0, 16], sizes = [8, 8], strides = [1, 1]} : vector<8x32xf32> to vector<8x8xf32>
    %562 = vector.shape_cast %561 : vector<8x8xf32> to vector<1x8x8xf32>
    %563 = vector.extract_strided_slice %538 {offsets = [0, 24], sizes = [8, 8], strides = [1, 1]} : vector<8x32xf32> to vector<8x8xf32>
    %564 = vector.shape_cast %563 : vector<8x8xf32> to vector<1x8x8xf32>
    %565 = tpu.concatenate %558, %560, %562, %564 in 0 : vector<1x8x8xf32>, vector<1x8x8xf32>, vector<1x8x8xf32>, vector<1x8x8xf32> -> vector<4x8x8xf32>
    "tpu.trace_start"() <{level = 10 : i32, message = "hqd,hkd->hqk"}> : () -> ()
    %cst_150 = arith.constant dense<0.000000e+00> : vector<4x8x8xf32>
    %566 = tpu.matmul %547, %556, %cst_150 {dimension_numbers = #tpu.dot_dimension_numbers<[2], [2], [1], [1], [0, 0, 0, 1, 1, 1], [0], [0]>} : vector<4x8x8xf32>, vector<4x8x8xf32>, vector<4x8x8xf32> -> vector<4x8x8xf32>
    "tpu.trace_stop"() : () -> ()
    %567 = vector.shape_cast %11 : vector<8x8xf32> to vector<1x8x8xf32>
    %568 = vector.broadcast %567 : vector<1x8x8xf32> to vector<4x8x8xf32>
    %569 = arith.addf %566, %568 : vector<4x8x8xf32>
    %cst_151 = arith.constant dense<0xFF800000> : vector<4x8xf32>
    %570 = vector.multi_reduction <maximumf>, %569, %cst_151 [2] : vector<4x8x8xf32> to vector<4x8xf32>
    %571 = vector.shape_cast %570 : vector<4x8xf32> to vector<4x8x1xf32>
    %572 = vector.broadcast %571 : vector<4x8x1xf32> to vector<4x8x8xf32>
    %573 = arith.subf %569, %572 : vector<4x8x8xf32>
    %574 = math.exp %573 : vector<4x8x8xf32>
    %cst_152 = arith.constant dense<0.000000e+00> : vector<4x8xf32>
    %575 = vector.multi_reduction <add>, %574, %cst_152 [2] : vector<4x8x8xf32> to vector<4x8xf32>
    %576 = vector.shape_cast %575 : vector<4x8xf32> to vector<4x8x1xf32>
    %577 = tpu.reciprocal %576 {approx = true} : vector<4x8x1xf32> -> vector<4x8x1xf32>
    %578 = vector.broadcast %577 : vector<4x8x1xf32> to vector<4x8x8xf32>
    %579 = arith.mulf %574, %578 : vector<4x8x8xf32>
    "tpu.trace_start"() <{level = 10 : i32, message = "hqk,hkd->hqd"}> : () -> ()
    %cst_153 = arith.constant dense<0.000000e+00> : vector<4x8x8xf32>
    %580 = tpu.matmul %579, %565, %cst_153 {dimension_numbers = #tpu.dot_dimension_numbers<[2], [1], [1], [2], [0, 0, 0, 1, 1, 2], [0], [0]>} : vector<4x8x8xf32>, vector<4x8x8xf32>, vector<4x8x8xf32> -> vector<4x8x8xf32>
    "tpu.trace_stop"() : () -> ()
    %581 = vector.extract_strided_slice %580 {offsets = [0, 0, 0], sizes = [1, 8, 8], strides = [1, 1, 1]} : vector<4x8x8xf32> to vector<1x8x8xf32>
    %582 = vector.shape_cast %581 : vector<1x8x8xf32> to vector<8x8xf32>
    %583 = vector.extract_strided_slice %580 {offsets = [1, 0, 0], sizes = [1, 8, 8], strides = [1, 1, 1]} : vector<4x8x8xf32> to vector<1x8x8xf32>
    %584 = vector.shape_cast %583 : vector<1x8x8xf32> to vector<8x8xf32>
    %585 = vector.extract_strided_slice %580 {offsets = [2, 0, 0], sizes = [1, 8, 8], strides = [1, 1, 1]} : vector<4x8x8xf32> to vector<1x8x8xf32>
    %586 = vector.shape_cast %585 : vector<1x8x8xf32> to vector<8x8xf32>
    %587 = vector.extract_strided_slice %580 {offsets = [3, 0, 0], sizes = [1, 8, 8], strides = [1, 1, 1]} : vector<4x8x8xf32> to vector<1x8x8xf32>
    %588 = vector.shape_cast %587 : vector<1x8x8xf32> to vector<8x8xf32>
    %589 = tpu.concatenate %582, %584, %586, %588 in 1 : vector<8x8xf32>, vector<8x8xf32>, vector<8x8xf32>, vector<8x8xf32> -> vector<8x32xf32>
    %cst_154 = arith.constant dense<0.000000e+00> : vector<8x32xf32>
    %590 = tpu.matmul %589, %529, %cst_154 {dimension_numbers = #tpu.dot_dimension_numbers<[1], [0], [0], [1], [0, 0, 1, 1], [], []>} : vector<8x32xf32>, vector<32x32xf32>, vector<8x32xf32> -> vector<8x32xf32>
    %591 = vector.broadcast %530 : vector<1x32xf32> to vector<8x32xf32>
    %592 = arith.addf %590, %591 : vector<8x32xf32>
    %593 = arith.addf %504, %592 : vector<8x32xf32>
    %c1056 = arith.constant 1056 : index
    %c0_155 = arith.constant 0 : index
    %594 = vector.load %arg5[%c1056, %c0_155] : memref<1120x128xf32, #tpu.memory_space<vmem>>, vector<1x32xf32>
    %c1064 = arith.constant 1064 : index
    %c0_156 = arith.constant 0 : index
    %595 = vector.load %arg5[%c1064, %c0_156] : memref<1120x128xf32, #tpu.memory_space<vmem>>, vector<1x32xf32>
    %cst_157 = arith.constant dense<0.000000e+00> : vector<8xf32>
    %596 = vector.multi_reduction <add>, %593, %cst_157 [1] : vector<8x32xf32> to vector<8xf32>
    %597 = vector.shape_cast %596 : vector<8xf32> to vector<8x1xf32>
    %cst_158 = arith.constant 3.200000e+01 : f32
    %598 = vector.broadcast %cst_158 : f32 to vector<8x1xf32>
    %599 = arith.divf %597, %598 : vector<8x1xf32>
    %600 = vector.broadcast %599 : vector<8x1xf32> to vector<8x32xf32>
    %601 = arith.subf %593, %600 : vector<8x32xf32>
    %602 = arith.mulf %601, %601 : vector<8x32xf32>
    %cst_159 = arith.constant dense<0.000000e+00> : vector<8xf32>
    %603 = vector.multi_reduction <add>, %602, %cst_159 [1] : vector<8x32xf32> to vector<8xf32>
    %604 = vector.shape_cast %603 : vector<8xf32> to vector<8x1xf32>
    %cst_160 = arith.constant 0.0322580636 : f32
    %605 = vector.broadcast %cst_160 : f32 to vector<8x1xf32>
    %606 = arith.mulf %604, %605 : vector<8x1xf32>
    %607 = math.sqrt %606 : vector<8x1xf32>
    %608 = vector.broadcast %594 : vector<1x32xf32> to vector<8x32xf32>
    %609 = arith.mulf %608, %601 : vector<8x32xf32>
    %cst_161 = arith.constant 9.99999997E-7 : f32
    %610 = vector.broadcast %cst_161 : f32 to vector<8x1xf32>
    %611 = arith.addf %607, %610 : vector<8x1xf32>
    %612 = vector.broadcast %611 : vector<8x1xf32> to vector<8x32xf32>
    %613 = arith.divf %609, %612 : vector<8x32xf32>
    %614 = vector.broadcast %595 : vector<1x32xf32> to vector<8x32xf32>
    %615 = arith.addf %613, %614 : vector<8x32xf32>
    %c848 = arith.constant 848 : index
    %c0_162 = arith.constant 0 : index
    %616 = vector.load %arg5[%c848, %c0_162] : memref<1120x128xf32, #tpu.memory_space<vmem>>, vector<32x96xf32>
    %c880 = arith.constant 880 : index
    %c0_163 = arith.constant 0 : index
    %617 = vector.load %arg5[%c880, %c0_163] : memref<1120x128xf32, #tpu.memory_space<vmem>>, vector<1x96xf32>
    %c888 = arith.constant 888 : index
    %c0_164 = arith.constant 0 : index
    %618 = vector.load %arg5[%c888, %c0_164] : memref<1120x128xf32, #tpu.memory_space<vmem>>, vector<32x32xf32>
    %c920 = arith.constant 920 : index
    %c0_165 = arith.constant 0 : index
    %619 = vector.load %arg5[%c920, %c0_165] : memref<1120x128xf32, #tpu.memory_space<vmem>>, vector<1x32xf32>
    %620 = vector.extract_strided_slice %616 {offsets = [0, 0], sizes = [32, 32], strides = [1, 1]} : vector<32x96xf32> to vector<32x32xf32>
    %cst_166 = arith.constant dense<0.000000e+00> : vector<8x32xf32>
    %621 = tpu.matmul %615, %620, %cst_166 {dimension_numbers = #tpu.dot_dimension_numbers<[1], [0], [0], [1], [0, 0, 1, 1], [], []>} : vector<8x32xf32>, vector<32x32xf32>, vector<8x32xf32> -> vector<8x32xf32>
    %622 = vector.extract_strided_slice %617 {offsets = [0, 0], sizes = [1, 32], strides = [1, 1]} : vector<1x96xf32> to vector<1x32xf32>
    %623 = vector.broadcast %622 : vector<1x32xf32> to vector<8x32xf32>
    %624 = arith.addf %621, %623 : vector<8x32xf32>
    %cst_167 = arith.constant 0.353553385 : f32
    %625 = vector.broadcast %cst_167 : f32 to vector<8x32xf32>
    %626 = arith.mulf %624, %625 : vector<8x32xf32>
    %627 = vector.extract_strided_slice %616 {offsets = [0, 32], sizes = [32, 64], strides = [1, 1]} : vector<32x96xf32> to vector<32x64xf32>
    %cst_168 = arith.constant dense<0.000000e+00> : vector<8x64xf32>
    %628 = tpu.matmul %283, %627, %cst_168 {dimension_numbers = #tpu.dot_dimension_numbers<[1], [0], [0], [1], [0, 0, 1, 1], [], []>} : vector<8x32xf32>, vector<32x64xf32>, vector<8x64xf32> -> vector<8x64xf32>
    %629 = vector.extract_strided_slice %617 {offsets = [0, 32], sizes = [1, 64], strides = [1, 1]} : vector<1x96xf32> to vector<1x64xf32>
    %630 = vector.broadcast %629 : vector<1x64xf32> to vector<8x64xf32>
    %631 = arith.addf %628, %630 : vector<8x64xf32>
    %632 = vector.extract_strided_slice %631 {offsets = [0, 0], sizes = [8, 32], strides = [1, 1]} : vector<8x64xf32> to vector<8x32xf32>
    %633 = vector.extract_strided_slice %631 {offsets = [0, 32], sizes = [8, 32], strides = [1, 1]} : vector<8x64xf32> to vector<8x32xf32>
    %634 = vector.extract_strided_slice %626 {offsets = [0, 0], sizes = [8, 8], strides = [1, 1]} : vector<8x32xf32> to vector<8x8xf32>
    %635 = vector.shape_cast %634 : vector<8x8xf32> to vector<1x8x8xf32>
    %636 = vector.extract_strided_slice %626 {offsets = [0, 8], sizes = [8, 8], strides = [1, 1]} : vector<8x32xf32> to vector<8x8xf32>
    %637 = vector.shape_cast %636 : vector<8x8xf32> to vector<1x8x8xf32>
    %638 = vector.extract_strided_slice %626 {offsets = [0, 16], sizes = [8, 8], strides = [1, 1]} : vector<8x32xf32> to vector<8x8xf32>
    %639 = vector.shape_cast %638 : vector<8x8xf32> to vector<1x8x8xf32>
    %640 = vector.extract_strided_slice %626 {offsets = [0, 24], sizes = [8, 8], strides = [1, 1]} : vector<8x32xf32> to vector<8x8xf32>
    %641 = vector.shape_cast %640 : vector<8x8xf32> to vector<1x8x8xf32>
    %642 = tpu.concatenate %635, %637, %639, %641 in 0 : vector<1x8x8xf32>, vector<1x8x8xf32>, vector<1x8x8xf32>, vector<1x8x8xf32> -> vector<4x8x8xf32>
    %643 = vector.extract_strided_slice %632 {offsets = [0, 0], sizes = [8, 8], strides = [1, 1]} : vector<8x32xf32> to vector<8x8xf32>
    %644 = vector.shape_cast %643 : vector<8x8xf32> to vector<1x8x8xf32>
    %645 = vector.extract_strided_slice %632 {offsets = [0, 8], sizes = [8, 8], strides = [1, 1]} : vector<8x32xf32> to vector<8x8xf32>
    %646 = vector.shape_cast %645 : vector<8x8xf32> to vector<1x8x8xf32>
    %647 = vector.extract_strided_slice %632 {offsets = [0, 16], sizes = [8, 8], strides = [1, 1]} : vector<8x32xf32> to vector<8x8xf32>
    %648 = vector.shape_cast %647 : vector<8x8xf32> to vector<1x8x8xf32>
    %649 = vector.extract_strided_slice %632 {offsets = [0, 24], sizes = [8, 8], strides = [1, 1]} : vector<8x32xf32> to vector<8x8xf32>
    %650 = vector.shape_cast %649 : vector<8x8xf32> to vector<1x8x8xf32>
    %651 = tpu.concatenate %644, %646, %648, %650 in 0 : vector<1x8x8xf32>, vector<1x8x8xf32>, vector<1x8x8xf32>, vector<1x8x8xf32> -> vector<4x8x8xf32>
    %652 = vector.extract_strided_slice %633 {offsets = [0, 0], sizes = [8, 8], strides = [1, 1]} : vector<8x32xf32> to vector<8x8xf32>
    %653 = vector.shape_cast %652 : vector<8x8xf32> to vector<1x8x8xf32>
    %654 = vector.extract_strided_slice %633 {offsets = [0, 8], sizes = [8, 8], strides = [1, 1]} : vector<8x32xf32> to vector<8x8xf32>
    %655 = vector.shape_cast %654 : vector<8x8xf32> to vector<1x8x8xf32>
    %656 = vector.extract_strided_slice %633 {offsets = [0, 16], sizes = [8, 8], strides = [1, 1]} : vector<8x32xf32> to vector<8x8xf32>
    %657 = vector.shape_cast %656 : vector<8x8xf32> to vector<1x8x8xf32>
    %658 = vector.extract_strided_slice %633 {offsets = [0, 24], sizes = [8, 8], strides = [1, 1]} : vector<8x32xf32> to vector<8x8xf32>
    %659 = vector.shape_cast %658 : vector<8x8xf32> to vector<1x8x8xf32>
    %660 = tpu.concatenate %653, %655, %657, %659 in 0 : vector<1x8x8xf32>, vector<1x8x8xf32>, vector<1x8x8xf32>, vector<1x8x8xf32> -> vector<4x8x8xf32>
    "tpu.trace_start"() <{level = 10 : i32, message = "hqd,hkd->hqk"}> : () -> ()
    %cst_169 = arith.constant dense<0.000000e+00> : vector<4x8x8xf32>
    %661 = tpu.matmul %642, %651, %cst_169 {dimension_numbers = #tpu.dot_dimension_numbers<[2], [2], [1], [1], [0, 0, 0, 1, 1, 1], [0], [0]>} : vector<4x8x8xf32>, vector<4x8x8xf32>, vector<4x8x8xf32> -> vector<4x8x8xf32>
    "tpu.trace_stop"() : () -> ()
    %662 = vector.shape_cast %5 : vector<1x8xf32> to vector<1x1x8xf32>
    %663 = vector.broadcast %662 : vector<1x1x8xf32> to vector<4x8x8xf32>
    %664 = arith.addf %661, %663 : vector<4x8x8xf32>
    %cst_170 = arith.constant dense<0xFF800000> : vector<4x8xf32>
    %665 = vector.multi_reduction <maximumf>, %664, %cst_170 [2] : vector<4x8x8xf32> to vector<4x8xf32>
    %666 = vector.shape_cast %665 : vector<4x8xf32> to vector<4x8x1xf32>
    %667 = vector.broadcast %666 : vector<4x8x1xf32> to vector<4x8x8xf32>
    %668 = arith.subf %664, %667 : vector<4x8x8xf32>
    %669 = math.exp %668 : vector<4x8x8xf32>
    %cst_171 = arith.constant dense<0.000000e+00> : vector<4x8xf32>
    %670 = vector.multi_reduction <add>, %669, %cst_171 [2] : vector<4x8x8xf32> to vector<4x8xf32>
    %671 = vector.shape_cast %670 : vector<4x8xf32> to vector<4x8x1xf32>
    %672 = tpu.reciprocal %671 {approx = true} : vector<4x8x1xf32> -> vector<4x8x1xf32>
    %673 = vector.broadcast %672 : vector<4x8x1xf32> to vector<4x8x8xf32>
    %674 = arith.mulf %669, %673 : vector<4x8x8xf32>
    "tpu.trace_start"() <{level = 10 : i32, message = "hqk,hkd->hqd"}> : () -> ()
    %cst_172 = arith.constant dense<0.000000e+00> : vector<4x8x8xf32>
    %675 = tpu.matmul %674, %660, %cst_172 {dimension_numbers = #tpu.dot_dimension_numbers<[2], [1], [1], [2], [0, 0, 0, 1, 1, 2], [0], [0]>} : vector<4x8x8xf32>, vector<4x8x8xf32>, vector<4x8x8xf32> -> vector<4x8x8xf32>
    "tpu.trace_stop"() : () -> ()
    %676 = vector.extract_strided_slice %675 {offsets = [0, 0, 0], sizes = [1, 8, 8], strides = [1, 1, 1]} : vector<4x8x8xf32> to vector<1x8x8xf32>
    %677 = vector.shape_cast %676 : vector<1x8x8xf32> to vector<8x8xf32>
    %678 = vector.extract_strided_slice %675 {offsets = [1, 0, 0], sizes = [1, 8, 8], strides = [1, 1, 1]} : vector<4x8x8xf32> to vector<1x8x8xf32>
    %679 = vector.shape_cast %678 : vector<1x8x8xf32> to vector<8x8xf32>
    %680 = vector.extract_strided_slice %675 {offsets = [2, 0, 0], sizes = [1, 8, 8], strides = [1, 1, 1]} : vector<4x8x8xf32> to vector<1x8x8xf32>
    %681 = vector.shape_cast %680 : vector<1x8x8xf32> to vector<8x8xf32>
    %682 = vector.extract_strided_slice %675 {offsets = [3, 0, 0], sizes = [1, 8, 8], strides = [1, 1, 1]} : vector<4x8x8xf32> to vector<1x8x8xf32>
    %683 = vector.shape_cast %682 : vector<1x8x8xf32> to vector<8x8xf32>
    %684 = tpu.concatenate %677, %679, %681, %683 in 1 : vector<8x8xf32>, vector<8x8xf32>, vector<8x8xf32>, vector<8x8xf32> -> vector<8x32xf32>
    %cst_173 = arith.constant dense<0.000000e+00> : vector<8x32xf32>
    %685 = tpu.matmul %684, %618, %cst_173 {dimension_numbers = #tpu.dot_dimension_numbers<[1], [0], [0], [1], [0, 0, 1, 1], [], []>} : vector<8x32xf32>, vector<32x32xf32>, vector<8x32xf32> -> vector<8x32xf32>
    %686 = vector.broadcast %619 : vector<1x32xf32> to vector<8x32xf32>
    %687 = arith.addf %685, %686 : vector<8x32xf32>
    %688 = arith.addf %593, %687 : vector<8x32xf32>
    %c1072 = arith.constant 1072 : index
    %c0_174 = arith.constant 0 : index
    %689 = vector.load %arg5[%c1072, %c0_174] : memref<1120x128xf32, #tpu.memory_space<vmem>>, vector<1x32xf32>
    %c1080 = arith.constant 1080 : index
    %c0_175 = arith.constant 0 : index
    %690 = vector.load %arg5[%c1080, %c0_175] : memref<1120x128xf32, #tpu.memory_space<vmem>>, vector<1x32xf32>
    %cst_176 = arith.constant dense<0.000000e+00> : vector<8xf32>
    %691 = vector.multi_reduction <add>, %688, %cst_176 [1] : vector<8x32xf32> to vector<8xf32>
    %692 = vector.shape_cast %691 : vector<8xf32> to vector<8x1xf32>
    %cst_177 = arith.constant 3.200000e+01 : f32
    %693 = vector.broadcast %cst_177 : f32 to vector<8x1xf32>
    %694 = arith.divf %692, %693 : vector<8x1xf32>
    %695 = vector.broadcast %694 : vector<8x1xf32> to vector<8x32xf32>
    %696 = arith.subf %688, %695 : vector<8x32xf32>
    %697 = arith.mulf %696, %696 : vector<8x32xf32>
    %cst_178 = arith.constant dense<0.000000e+00> : vector<8xf32>
    %698 = vector.multi_reduction <add>, %697, %cst_178 [1] : vector<8x32xf32> to vector<8xf32>
    %699 = vector.shape_cast %698 : vector<8xf32> to vector<8x1xf32>
    %cst_179 = arith.constant 0.0322580636 : f32
    %700 = vector.broadcast %cst_179 : f32 to vector<8x1xf32>
    %701 = arith.mulf %699, %700 : vector<8x1xf32>
    %702 = math.sqrt %701 : vector<8x1xf32>
    %703 = vector.broadcast %689 : vector<1x32xf32> to vector<8x32xf32>
    %704 = arith.mulf %703, %696 : vector<8x32xf32>
    %cst_180 = arith.constant 9.99999997E-7 : f32
    %705 = vector.broadcast %cst_180 : f32 to vector<8x1xf32>
    %706 = arith.addf %702, %705 : vector<8x1xf32>
    %707 = vector.broadcast %706 : vector<8x1xf32> to vector<8x32xf32>
    %708 = arith.divf %704, %707 : vector<8x32xf32>
    %709 = vector.broadcast %690 : vector<1x32xf32> to vector<8x32xf32>
    %710 = arith.addf %708, %709 : vector<8x32xf32>
    %c928 = arith.constant 928 : index
    %c0_181 = arith.constant 0 : index
    %711 = vector.load %arg5[%c928, %c0_181] : memref<1120x128xf32, #tpu.memory_space<vmem>>, vector<32x64xf32>
    %c960 = arith.constant 960 : index
    %c0_182 = arith.constant 0 : index
    %712 = vector.load %arg5[%c960, %c0_182] : memref<1120x128xf32, #tpu.memory_space<vmem>>, vector<1x64xf32>
    %c968 = arith.constant 968 : index
    %c0_183 = arith.constant 0 : index
    %713 = vector.load %arg5[%c968, %c0_183] : memref<1120x128xf32, #tpu.memory_space<vmem>>, vector<64x32xf32>
    %c1032 = arith.constant 1032 : index
    %c0_184 = arith.constant 0 : index
    %714 = vector.load %arg5[%c1032, %c0_184] : memref<1120x128xf32, #tpu.memory_space<vmem>>, vector<1x32xf32>
    %cst_185 = arith.constant dense<0.000000e+00> : vector<8x64xf32>
    %715 = tpu.matmul %710, %711, %cst_185 {dimension_numbers = #tpu.dot_dimension_numbers<[1], [0], [0], [1], [0, 0, 1, 1], [], []>} : vector<8x32xf32>, vector<32x64xf32>, vector<8x64xf32> -> vector<8x64xf32>
    %716 = vector.broadcast %712 : vector<1x64xf32> to vector<8x64xf32>
    %717 = arith.addf %715, %716 : vector<8x64xf32>
    %cst_186 = arith.constant 0.000000e+00 : f32
    %718 = vector.broadcast %cst_186 : f32 to vector<8x64xf32>
    %719 = arith.maximumf %717, %718 : vector<8x64xf32>
    %cst_187 = arith.constant dense<0.000000e+00> : vector<8x32xf32>
    %720 = tpu.matmul %719, %713, %cst_187 {dimension_numbers = #tpu.dot_dimension_numbers<[1], [0], [0], [1], [0, 0, 1, 1], [], []>} : vector<8x64xf32>, vector<64x32xf32>, vector<8x32xf32> -> vector<8x32xf32>
    %721 = vector.broadcast %714 : vector<1x32xf32> to vector<8x32xf32>
    %722 = arith.addf %720, %721 : vector<8x32xf32>
    %723 = arith.addf %688, %722 : vector<8x32xf32>
    %c1104 = arith.constant 1104 : index
    %c0_188 = arith.constant 0 : index
    %724 = vector.load %arg5[%c1104, %c0_188] : memref<1120x128xf32, #tpu.memory_space<vmem>>, vector<1x32xf32>
    %c1112 = arith.constant 1112 : index
    %c0_189 = arith.constant 0 : index
    %725 = vector.load %arg5[%c1112, %c0_189] : memref<1120x128xf32, #tpu.memory_space<vmem>>, vector<1x32xf32>
    %cst_190 = arith.constant dense<0.000000e+00> : vector<8xf32>
    %726 = vector.multi_reduction <add>, %723, %cst_190 [1] : vector<8x32xf32> to vector<8xf32>
    %727 = vector.shape_cast %726 : vector<8xf32> to vector<8x1xf32>
    %cst_191 = arith.constant 3.200000e+01 : f32
    %728 = vector.broadcast %cst_191 : f32 to vector<8x1xf32>
    %729 = arith.divf %727, %728 : vector<8x1xf32>
    %730 = vector.broadcast %729 : vector<8x1xf32> to vector<8x32xf32>
    %731 = arith.subf %723, %730 : vector<8x32xf32>
    %732 = arith.mulf %731, %731 : vector<8x32xf32>
    %cst_192 = arith.constant dense<0.000000e+00> : vector<8xf32>
    %733 = vector.multi_reduction <add>, %732, %cst_192 [1] : vector<8x32xf32> to vector<8xf32>
    %734 = vector.shape_cast %733 : vector<8xf32> to vector<8x1xf32>
    %cst_193 = arith.constant 0.0322580636 : f32
    %735 = vector.broadcast %cst_193 : f32 to vector<8x1xf32>
    %736 = arith.mulf %734, %735 : vector<8x1xf32>
    %737 = math.sqrt %736 : vector<8x1xf32>
    %738 = vector.broadcast %724 : vector<1x32xf32> to vector<8x32xf32>
    %739 = arith.mulf %738, %731 : vector<8x32xf32>
    %cst_194 = arith.constant 9.99999997E-7 : f32
    %740 = vector.broadcast %cst_194 : f32 to vector<8x1xf32>
    %741 = arith.addf %737, %740 : vector<8x1xf32>
    %742 = vector.broadcast %741 : vector<8x1xf32> to vector<8x32xf32>
    %743 = arith.divf %739, %742 : vector<8x32xf32>
    %744 = vector.broadcast %725 : vector<1x32xf32> to vector<8x32xf32>
    %745 = arith.addf %743, %744 : vector<8x32xf32>
    %746 = vector.shape_cast %745 : vector<8x32xf32> to vector<1x8x32xf32>
    %c0_195 = arith.constant 0 : index
    %c0_196 = arith.constant 0 : index
    %c0_197 = arith.constant 0 : index
    %747 = vector.load %arg6[%c0_195, %c0_196, %c0_197] : memref<1x8x32xf32, #tpu.memory_space<vmem>>, vector<1x8x32xf32>
    tpu.vector_store %arg6[%c0_195, %c0_196, %c0_197], %746 {strides = array<i32>} : memref<1x8x32xf32, #tpu.memory_space<vmem>>, vector<1x8x32xf32>,
    return
  }
  func.func @transform_0(%arg0: i32) -> (i32, i32, i32) {
    %c0_i32 = arith.constant 0 : i32
    %c0_i32_0 = arith.constant 0 : i32
    %c0_i32_1 = arith.constant 0 : i32
    return %arg0, %c0_i32, %c0_i32_0 : i32, i32, i32
  }
  func.func @transform_1(%arg0: i32) -> (i32, i32, i32) {
    %c0_i32 = arith.constant 0 : i32
    %c0_i32_0 = arith.constant 0 : i32
    %c0_i32_1 = arith.constant 0 : i32
    return %arg0, %c0_i32, %c0_i32_0 : i32, i32, i32
  }
  func.func @transform_2(%arg0: i32) -> (i32, i32, i32) {
    %c0_i32 = arith.constant 0 : i32
    %c0_i32_0 = arith.constant 0 : i32
    %c0_i32_1 = arith.constant 0 : i32
    return %arg0, %c0_i32, %c0_i32_0 : i32, i32, i32
  }
  func.func @transform_3(%arg0: i32) -> (i32, i32, i32) {
    %c0_i32 = arith.constant 0 : i32
    %c0_i32_0 = arith.constant 0 : i32
    %c0_i32_1 = arith.constant 0 : i32
    return %arg0, %c0_i32, %c0_i32_0 : i32, i32, i32
  }
  func.func @transform_4(%arg0: i32) -> (i32, i32) {
    %c0_i32 = arith.constant 0 : i32
    %c0_i32_0 = arith.constant 0 : i32
    %c0_i32_1 = arith.constant 0 : i32
    return %c0_i32, %c0_i32_0 : i32, i32
  }
  func.func @transform_5(%arg0: i32) -> (i32, i32, i32) {
    %c0_i32 = arith.constant 0 : i32
    %c0_i32_0 = arith.constant 0 : i32
    %c0_i32_1 = arith.constant 0 : i32
    return %arg0, %c0_i32, %c0_i32_0 : i32, i32, i32
  }
}

</mosaic_0001>

<llo_original>
// kernel: encoder_decoder_forward.1
$region0: #{encoder_decoder_forward.1}
  #allocation0 [shape = 'u32[]', space=smem, size = 0x4, offset = 0x4, fixed_abs, tag = 'smem constant byte address 0x4 - core index']
  #allocation1 [shape = 'u32[144,128]{1,0:T(1,128)}', space=vmem, size = 0x12000, scoped, tag = 'internal scratch']
  %s0 = inlined_call_operand.vmem [shape: f32[2,8,32], index: 0, kind: input, shape index: {}]
  %s1 = inlined_call_operand.vmem [shape: f32[2,8,32], index: 1, kind: input, shape index: {}]
  %s2 = inlined_call_operand.vmem [shape: f32[2,1,8], index: 2, kind: input, shape index: {}]
  %s3 = inlined_call_operand.vmem [shape: f32[2,8,8], index: 3, kind: input, shape index: {}]
  %s4 = inlined_call_operand.vmem [shape: f32[1120,128], index: 4, kind: input, shape index: {}]
  %s5 = inlined_call_operand.hbm [shape: f32[2,8,32], index: 5, kind: output, shape index: {}]
  %s6 = sld [smem:[#allocation0]]
  $region53: #{encoder_decoder_forward.1} parent=0
    _
  %s8 = ssub.s32 1, %s6
  %s9 = scalar_select 0, %s8, %s6
  $region1: #{encoder_decoder_forward.1} parent=0
    #allocation2 [shape = 'u8[8192]{0}', space=vmem, size = 0x2000, scoped, tag = 'output window, operand 0']
    #allocation3 [shape = 's32[2]{0}', space=sflag, size = 0x8, scoped, tag = 'scoped memory for encoder_decoder_forward.1']
    %10 = vsyncpa [#allocation3], 0
    %s11 = scalar_lea.sflag [#allocation3], 1
    %12 = vsyncpa %s11, 0
    loop: start=0, step=1, limit=4
    $region2: #{encoder_decoder_forward.1} parent=1 // loop_pre_header
      _
    $region3: #{encoder_decoder_forward.1} parent=1 // loop_header
      %s14 = sphi 0, %s18
      %p15 = scmp.ge.s32.totalorder %s14, 4
      %s24 = sphi 0, %s26
      %s27 = sphi 0, %s24
      %s28 = sphi 0, %s27
      %s44 = sphi 0, %s28
      %s50 = sphi 0, %s52
      %s53 = sphi 0, %s50
      %s54 = sphi 0, %s53
      %s70 = sphi 0, %s54
      %s76 = sphi 0, %s78
      %s79 = sphi 0, %s76
      %s80 = sphi 0, %s79
      %s96 = sphi 0, %s80
      %s102 = sphi 0, %s104
      %s105 = sphi 0, %s102
      %s106 = sphi 0, %s105
      %s122 = sphi 0, %s106
      %s126 = sphi 0, %s126
      %s128 = sphi 0, %s126
      %s129 = sphi 0, %s128
      %s143 = sphi 0, %s129
      %s149 = sphi 0, %s151
      %s152 = sphi 0, %s149
      %s153 = sphi 0, %s152
      %s169 = sphi 0, %s153
    $region4: #{encoder_decoder_forward.1} parent=1 // loop_header_branch
      %17 = sbr.rel (%p15) target = $region8
    $region5: #{encoder_decoder_forward.1} parent=1 // loop_body
      %s19 = ssub.s32 %s14, 1
      %s20 = ssub.s32 %s14, 2
      %s21 = sadd.s32 %s14, 1
      %s22 = ssub.s32 %s14, %s21
      %p23 = scmp.eq.s32.totalorder %s22, 0
      %s25 = sadd.s32 %s24, 1
      %s26 = scalar_select %p23, %s24, %s25
      %p29 = pneg %p23
      %p30 = scmp.eq.s32.totalorder %s14, 1
      %p31 = por %p29, %p30
      %p32 = scmp.ne.s32.totalorder %s24, %s27
      %p33 = scmp.eq.s32.totalorder %s14, 0
      %p34 = por %p32, %p33
      %p35 = scmp.ne.s32.totalorder %s24, %s27
      %p36 = scmp.eq.s32.totalorder %s19, 1
      %p37 = por %p35, %p36
      %p38 = scmp.ne.s32.totalorder %s27, %s28
      %p39 = scmp.eq.s32.totalorder %s19, 0
      %p40 = por %p38, %p39
      %p41 = scmp.ne.s32.totalorder %s27, %s28
      %p42 = scmp.eq.s32.totalorder %s20, 1
      %p43 = por %p41, %p42
      %p45 = scmp.ne.s32.totalorder %s28, %s44
      %p46 = scmp.eq.s32.totalorder %s20, 0
      %p47 = por %p45, %p46
      %s48 = ssub.s32 %s14, %s21
      %p49 = scmp.eq.s32.totalorder %s48, 0
      %s51 = sadd.s32 %s50, 1
      %s52 = scalar_select %p49, %s50, %s51
      %p55 = pneg %p49
      %p56 = scmp.eq.s32.totalorder %s14, 1
      %p57 = por %p55, %p56
      %p58 = scmp.ne.s32.totalorder %s50, %s53
      %p59 = scmp.eq.s32.totalorder %s14, 0
      %p60 = por %p58, %p59
      %p61 = scmp.ne.s32.totalorder %s50, %s53
      %p62 = scmp.eq.s32.totalorder %s19, 1
      %p63 = por %p61, %p62
      %p64 = scmp.ne.s32.totalorder %s53, %s54
      %p65 = scmp.eq.s32.totalorder %s19, 0
      %p66 = por %p64, %p65
      %p67 = scmp.ne.s32.totalorder %s53, %s54
      %p68 = scmp.eq.s32.totalorder %s20, 1
      %p69 = por %p67, %p68
      %p71 = scmp.ne.s32.totalorder %s54, %s70
      %p72 = scmp.eq.s32.totalorder %s20, 0
      %p73 = por %p71, %p72
      %s74 = ssub.s32 %s14, %s21
      %p75 = scmp.eq.s32.totalorder %s74, 0
      %s77 = sadd.s32 %s76, 1
      %s78 = scalar_select %p75, %s76, %s77
      %p81 = pneg %p75
      %p82 = scmp.eq.s32.totalorder %s14, 1
      %p83 = por %p81, %p82
      %p84 = scmp.ne.s32.totalorder %s76, %s79
      %p85 = scmp.eq.s32.totalorder %s14, 0
      %p86 = por %p84, %p85
      %p87 = scmp.ne.s32.totalorder %s76, %s79
      %p88 = scmp.eq.s32.totalorder %s19, 1
      %p89 = por %p87, %p88
      %p90 = scmp.ne.s32.totalorder %s79, %s80
      %p91 = scmp.eq.s32.totalorder %s19, 0
      %p92 = por %p90, %p91
      %p93 = scmp.ne.s32.totalorder %s79, %s80
      %p94 = scmp.eq.s32.totalorder %s20, 1
      %p95 = por %p93, %p94
      %p97 = scmp.ne.s32.totalorder %s80, %s96
      %p98 = scmp.eq.s32.totalorder %s20, 0
      %p99 = por %p97, %p98
      %s100 = ssub.s32 %s14, %s21
      %p101 = scmp.eq.s32.totalorder %s100, 0
      %s103 = sadd.s32 %s102, 1
      %s104 = scalar_select %p101, %s102, %s103
      %p107 = pneg %p101
      %p108 = scmp.eq.s32.totalorder %s14, 1
      %p109 = por %p107, %p108
      %p110 = scmp.ne.s32.totalorder %s102, %s105
      %p111 = scmp.eq.s32.totalorder %s14, 0
      %p112 = por %p110, %p111
      %p113 = scmp.ne.s32.totalorder %s102, %s105
      %p114 = scmp.eq.s32.totalorder %s19, 1
      %p115 = por %p113, %p114
      %p116 = scmp.ne.s32.totalorder %s105, %s106
      %p117 = scmp.eq.s32.totalorder %s19, 0
      %p118 = por %p116, %p117
      %p119 = scmp.ne.s32.totalorder %s105, %s106
      %p120 = scmp.eq.s32.totalorder %s20, 1
      %p121 = por %p119, %p120
      %p123 = scmp.ne.s32.totalorder %s106, %s122
      %p124 = scmp.eq.s32.totalorder %s20, 0
      %p125 = por %p123, %p124
      %s127 = sadd.s32 %s126, 1
      %p130 = scmp.eq.s32.totalorder %s14, 1
      %p131 = scmp.ne.s32.totalorder %s126, %s128
      %p132 = scmp.eq.s32.totalorder %s14, 0
      %p133 = por %p131, %p132
      %p134 = scmp.ne.s32.totalorder %s126, %s128
      %p135 = scmp.eq.s32.totalorder %s19, 1
      %p136 = por %p134, %p135
      %p137 = scmp.ne.s32.totalorder %s128, %s129
      %p138 = scmp.eq.s32.totalorder %s19, 0
      %p139 = por %p137, %p138
      %p140 = scmp.ne.s32.totalorder %s128, %s129
      %p141 = scmp.eq.s32.totalorder %s20, 1
      %p142 = por %p140, %p141
      %p144 = scmp.ne.s32.totalorder %s129, %s143
      %p145 = scmp.eq.s32.totalorder %s20, 0
      %p146 = por %p144, %p145
      %s147 = ssub.s32 %s14, %s21
      %p148 = scmp.eq.s32.totalorder %s147, 0
      %s150 = sadd.s32 %s149, 1
      %s151 = scalar_select %p148, %s149, %s150
      %p154 = pneg %p148
      %p155 = scmp.eq.s32.totalorder %s14, 1
      %p156 = por %p154, %p155
      %p157 = scmp.ne.s32.totalorder %s149, %s152
      %p158 = scmp.eq.s32.totalorder %s14, 0
      %p159 = por %p157, %p158
      %p160 = scmp.ne.s32.totalorder %s149, %s152
      %p161 = scmp.eq.s32.totalorder %s19, 1
      %p162 = por %p160, %p161
      %p163 = scmp.ne.s32.totalorder %s152, %s153
      %p164 = scmp.eq.s32.totalorder %s19, 0
      %p165 = por %p163, %p164
      %p166 = scmp.ne.s32.totalorder %s152, %s153
      %p167 = scmp.eq.s32.totalorder %s20, 1
      %p168 = por %p166, %p167
      %p170 = scmp.ne.s32.totalorder %s153, %s169
      %p171 = scmp.eq.s32.totalorder %s20, 0
      %p172 = por %p170, %p171
      %p173 = scmp.le.s32.totalorder 1, %s14
      %p174 = scmp.lt.s32.totalorder %s14, 3
      %p175 = pnand %p173, %p174
      %p176 = pneg %p175
      // Predicated region
      $region9: #{encoder_decoder_forward.1} parent=5 // pred_check
        _
      $region10: #{encoder_decoder_forward.1} parent=5 // pred_check_branch
        %178 = sbr.rel (%p175) target = $region12
      $region11: #{encoder_decoder_forward.1} parent=5 // pred_region
        %s179 = ssub.s32 %s14, 1
        // Predicated region
        $region13: #{encoder_decoder_forward.1} parent=11 // pred_check
          %p180 = pneg %p139
        $region14: #{encoder_decoder_forward.1} parent=11 // pred_check_branch
          %182 = sbr.rel (%p180) target = $region16
        $region15: #{encoder_decoder_forward.1} parent=11 // pred_region
          _
        $region16: #{encoder_decoder_forward.1} parent=11 // pred_fallthru
          _
      $region12: #{encoder_decoder_forward.1} parent=5 // pred_fallthru
        _
      %p183 = scmp.lt.s32.totalorder %s14, 2
      // Predicated region
      $region17: #{encoder_decoder_forward.1} parent=5 // pred_check
        %p184 = pneg %p183
      $region18: #{encoder_decoder_forward.1} parent=5 // pred_check_branch
        %186 = sbr.rel (%p184) target = $region20
      $region19: #{encoder_decoder_forward.1} parent=5 // pred_region
        // Predicated region
        $region21: #{encoder_decoder_forward.1} parent=19 // pred_check
          %p187 = pneg %p34
        $region22: #{encoder_decoder_forward.1} parent=19 // pred_check_branch
          %189 = sbr.rel (%p187) target = $region24
        $region23: #{encoder_decoder_forward.1} parent=19 // pred_region
          %p190 = scmp.lt.s32.totalorder %s14, 1
          %s191 = scalar_select %p190, %s14, 1
          %s192 = smul.addr %s191, 8
          %s193 = scalar_lea.vmem %s0, %s192
        $region24: #{encoder_decoder_forward.1} parent=19 // pred_fallthru
          _
        // Predicated region
        $region25: #{encoder_decoder_forward.1} parent=19 // pred_check
          %p194 = pneg %p60
        $region26: #{encoder_decoder_forward.1} parent=19 // pred_check_branch
          %196 = sbr.rel (%p194) target = $region28
        $region27: #{encoder_decoder_forward.1} parent=19 // pred_region
          %p197 = scmp.lt.s32.totalorder %s14, 1
          %s198 = scalar_select %p197, %s14, 1
          %s199 = smul.addr %s198, 8
          %s200 = scalar_lea.vmem %s1, %s199
        $region28: #{encoder_decoder_forward.1} parent=19 // pred_fallthru
          _
        // Predicated region
        $region29: #{encoder_decoder_forward.1} parent=19 // pred_check
          %p201 = pneg %p86
        $region30: #{encoder_decoder_forward.1} parent=19 // pred_check_branch
          %203 = sbr.rel (%p201) target = $region32
        $region31: #{encoder_decoder_forward.1} parent=19 // pred_region
          %p204 = scmp.lt.s32.totalorder %s14, 1
          %s205 = scalar_select %p204, %s14, 1
          %s206 = scalar_lea.vmem %s2, %s205
        $region32: #{encoder_decoder_forward.1} parent=19 // pred_fallthru
          _
        // Predicated region
        $region33: #{encoder_decoder_forward.1} parent=19 // pred_check
          %p207 = pneg %p112
        $region34: #{encoder_decoder_forward.1} parent=19 // pred_check_branch
          %209 = sbr.rel (%p207) target = $region36
        $region35: #{encoder_decoder_forward.1} parent=19 // pred_region
          %p210 = scmp.lt.s32.totalorder %s14, 1
          %s211 = scalar_select %p210, %s14, 1
          %s212 = smul.addr %s211, 8
          %s213 = scalar_lea.vmem %s3, %s212
        $region36: #{encoder_decoder_forward.1} parent=19 // pred_fallthru
          _
      $region20: #{encoder_decoder_forward.1} parent=5 // pred_fallthru
        _
      %p214 = scmp.le.s32.totalorder 1, %s14
      %p215 = scmp.lt.s32.totalorder %s14, 3
      %p216 = pnand %p214, %p215
      %p217 = pneg %p216
      // Predicated region
      $region37: #{encoder_decoder_forward.1} parent=5 // pred_check
        _
      $region38: #{encoder_decoder_forward.1} parent=5 // pred_check_branch
        %219 = sbr.rel (%p216) target = $region40
      $region39: #{encoder_decoder_forward.1} parent=5 // pred_region
        %s220 = ssub.s32 %s14, 1
        %p221 = scmp.lt.s32.totalorder %s19, 1
        %s222 = scalar_select %p221, %s19, 1
        %s223 = smul.addr %s222, 8
        %s224 = scalar_lea.vmem %s0, %s223
        %p225 = pneg %p40
        %p226 = pneg %p37
        %p227 = scmp.lt.s32.totalorder %s19, 1
        %s228 = scalar_select %p227, %s19, 1
        %s229 = smul.addr %s228, 8
        %s230 = scalar_lea.vmem %s1, %s229
        %p231 = pneg %p66
        %p232 = pneg %p63
        %p233 = scmp.lt.s32.totalorder %s19, 1
        %s234 = scalar_select %p233, %s19, 1
        %s235 = scalar_lea.vmem %s2, %s234
        %p236 = pneg %p92
        %p237 = pneg %p89
        %p238 = scmp.lt.s32.totalorder %s19, 1
        %s239 = scalar_select %p238, %s19, 1
        %s240 = smul.addr %s239, 8
        %s241 = scalar_lea.vmem %s3, %s240
        %p242 = pneg %p118
        %p243 = pneg %p115
        %p244 = pneg %p139
        %p245 = pneg %p136
        %p246 = pneg %p165
        %p247 = pneg %p162
        %s248 = sand.u32 %s152, 1
        %s249 = scalar_lea.sflag [#allocation3], %s248
        %s250 = sand.u32 %s152, 1
        %s251 = smul.addr %s250, 8
        %s252 = scalar_lea.vmem [#allocation2], %s251
        %p253 = scmp.lt.s32.totalorder %s19, 1
        %s254 = scalar_select %p253, %s19, 1
        %s255 = smul.addr %s254, 8
        %s256 = scalar_lea.vmem %s0, %s255
        %p257 = scmp.lt.s32.totalorder %s19, 1
        %s258 = scalar_select %p257, %s19, 1
        %s259 = smul.addr %s258, 8
        %s260 = scalar_lea.vmem %s1, %s259
        %p261 = scmp.lt.s32.totalorder %s19, 1
        %s262 = scalar_select %p261, %s19, 1
        %s263 = scalar_lea.vmem %s2, %s262
        %p264 = scmp.lt.s32.totalorder %s19, 1
        %s265 = scalar_select %p264, %s19, 1
        %s266 = smul.addr %s265, 8
        %s267 = scalar_lea.vmem %s3, %s266
        %v268 = vld [vmem:[%s263] sm:$0x1]
        %v269 = vsub.f32 %v268, 1.0
        %v270 = vmul.f32 %v269, 1e+09
        %v271 = vld [vmem:[%s267] sm:$0xff]
        %v272 = vsub.f32 %v271, 1.0
        %v273 = vmul.f32 %v272, 1e+09
        %v274 = vld [vmem:[%s256] sm:$0xff]
        %v275 = vld [vmem:[%s4 + $0xc0] sm:$0x1]
        %v276 = vld [vmem:[%s4 + $0xc8] sm:$0x1]
        %vm277 = vcmask 261120
        %v278 = vsel %vm277, %v274, 0.0
        %279 = vadd.xlane.f32.xlu0 %v278
        %v280 = vpop.xlane.xlu0 %279
        %v281 = vrcp.pop 32.0
        %v282 = vmul.f32 %v280, %v281
        %v283 = vsub.f32 %v274, %v282
        %v284 = vmul.f32 %v283, %v283
        %v285 = vsel %vm277, %v284, 0.0
        %286 = vadd.xlane.f32.xlu0 %v285
        %v287 = vpop.xlane.xlu0 %286
        %v288 = vmul.f32 %v287, 0.032258064
        %v289 = vrsqrt.pop %v288
        %v290 = vmul.f32 %v288, %v289
        %vm291 = vcmp.eq.f32.partialorder %v288, inf
        %v292 = vsel %vm291, %v288, %v290
        %vm293 = vcmp.eq.f32.partialorder %v288, 0.0
        %v294 = vand.u32 %v288, 2147483648
        %v295 = vsel %vm293, %v294, %v292
        %v296 = vlaneseq
        %v297 = vshrl.u32 %v296, 7
        %v298 = vsub.s32 0, %v297
        %v299 = vrot.slane %v275, %v298
        %v300 = vmul.f32 %v299, %v283
        %v301 = vadd.f32 %v295, 1e-06
        %v302 = vrcp.pop %v301
        %v303 = vmul.f32 %v300, %v302
        %v304 = vlaneseq
        %v305 = vshrl.u32 %v304, 7
        %v306 = vsub.s32 0, %v305
        %v307 = vrot.slane %v276, %v306
        %v308 = vadd.f32 %v303, %v307
        %v309 = vld [vmem:[%s4] sm:$0xff]
        %v310 = vld [vmem:[%s4 + $0x8] sm:$0xff]
        %v311 = vld [vmem:[%s4 + $0x10] sm:$0xff]
        %v312 = vld [vmem:[%s4 + $0x18] sm:$0xff]
        %v313 = vld [vmem:[%s4 + $0x20] sm:$0x1]
        %v314 = vld [vmem:[%s4 + $0x28] sm:$0xff]
        %v315 = vld [vmem:[%s4 + $0x30] sm:$0xff]
        %v316 = vld [vmem:[%s4 + $0x38] sm:$0xff]
        %v317 = vld [vmem:[%s4 + $0x40] sm:$0xff]
        %v318 = vld [vmem:[%s4 + $0x48] sm:$0x1]
        %v319 = vlaneseq
        %v320 = vshrl.u32 %v319, 7
        %v321 = vsub.s32 0, %v320
        %v322 = vrot.slane %v313, %v321
        %v324 = vsel %vm277, %v308, 0
        %326 = vmatprep.subr.mxu0 0.0
        %327 = vmatpush1.msra.mxu0 %v309
        %328 = vmatprep.subr.mxu0 0.0
        %329 = vmatpush1.msra.mxu0 %v310
        %330 = vmatprep.subr.mxu0 0.0
        %331 = vmatpush1.msra.mxu0 %v311
        %332 = vmatprep.subr.mxu0 0.0
        %333 = vmatpush1.msra.mxu0 %v312
        %334 = vmatprep.subr.mxu0 0.0
        %335 = vmatpush1.msra.mxu0 0.0
        %336 = vmatprep.subr.mxu0 0.0
        %337 = vmatpush1.msra.mxu0 0.0
        %338 = vmatprep.subr.mxu0 0.0
        %339 = vmatpush1.msra.mxu0 0.0
        %340 = vmatprep.subr.mxu0 0.0
        %341 = vmatpush1.msra.mxu0 0.0
        %342 = vmatprep.subr.mxu0 0.0
        %343 = vmatpush1.msra.mxu0 0.0
        %344 = vmatprep.subr.mxu0 0.0
        %345 = vmatpush1.msra.mxu0 0.0
        %346 = vmatprep.subr.mxu0 0.0
        %347 = vmatpush1.msra.mxu0 0.0
        %348 = vmatprep.subr.mxu0 0.0
        %349 = vmatpush1.msra.mxu0 0.0
        %350 = vmatprep.subr.mxu0 0.0
        %351 = vmatpush1.msra.mxu0 0.0
        %352 = vmatprep.subr.mxu0 0.0
        %353 = vmatpush1.msra.mxu0 0.0
        %354 = vmatprep.subr.mxu0 0.0
        %355 = vmatpush1.msra.mxu0 0.0
        %356 = vmatprep.subr.mxu0 0.0
        %357 = vmatpush1.msra.mxu0 0.0
        %358 = vmatprep.subr.mxu0 0.0
        %359 = vmatpush1.msra.mxu0 0.0
        %360 = vmatprep.subr.mxu0 0.0
        %361 = vmatpush1.msra.mxu0 0.0
        %362 = vmatprep.subr.mxu0 0.0
        %363 = vmatpush1.msra.mxu0 0.0
        %364 = vmatprep.subr.mxu0 0.0
        %365 = vmatpush1.msra.mxu0 0.0
        %366 = vmatprep.subr.mxu0 0.0
        %367 = vmatpush1.msra.mxu0 0.0
        %368 = vmatprep.subr.mxu0 0.0
        %369 = vmatpush1.msra.mxu0 0.0
        %370 = vmatprep.subr.mxu0 0.0
        %371 = vmatpush1.msra.mxu0 0.0
        %372 = vmatprep.subr.mxu0 0.0
        %373 = vmatpush1.msra.mxu0 0.0
        %374 = vmatprep.subr.mxu0 0.0
        %375 = vmatpush1.msra.mxu0 0.0
        %376 = vmatprep.subr.mxu0 0.0
        %377 = vmatpush1.msra.mxu0 0.0
        %378 = vmatprep.subr.mxu0 0.0
        %379 = vmatpush1.msra.mxu0 0.0
        %380 = vmatprep.subr.mxu0 0.0
        %381 = vmatpush1.msra.mxu0 0.0
        %382 = vmatprep.subr.mxu0 0.0
        %383 = vmatpush1.msra.mxu0 0.0
        %384 = vmatprep.subr.mxu0 0.0
        %385 = vmatpush1.msra.mxu0 0.0
        %386 = vmatprep.subr.mxu0 0.0
        %387 = vmatpush1.msra.mxu0 0.0
        %388 = vmatprep.subr.mxu0 0.0
        %389 = vmatpush1.msra.mxu0 0.0
        %390 = vmatprep.mubr.f32.mxu0 0.0
        %391 = vmatmul.mubr.f32.gmra.mrb[0].mxu0 %v324
        %v392 = vpop.f32.mrb[0].mxu0
        %v393 = vadd.f32 %v322, %v392
        %v394 = vpop.f32.mrb[0].mxu0
        %395 = vdwg.mxu0
        %v396 = vmul.f32 %v393, 0.35355338
        %398 = vrot.lane.b32.xlu0 %v396, 120
        %v399 = vpop.permute.xlu0 %398
        %400 = vrot.lane.b32.xlu0 %v396, 112
        %v401 = vpop.permute.xlu0 %400
        %402 = vrot.lane.b32.xlu0 %v396, 104
        %v403 = vpop.permute.xlu0 %402
        %405 = vrot.lane.b32.xlu0 %v393, 120
        %v406 = vpop.permute.xlu0 %405
        %407 = vrot.lane.b32.xlu0 %v393, 112
        %v408 = vpop.permute.xlu0 %407
        %409 = vrot.lane.b32.xlu0 %v393, 104
        %v410 = vpop.permute.xlu0 %409
        %v412 = vlaneseq
        %v413 = vshrl.u32 %v412, 7
        %v414 = vsub.s32 0, %v413
        %v415 = vrot.slane %v270, %v414
        %417 = vrot.lane.b32.xlu0 %v393, 96
        %v418 = vpop.permute.xlu0 %417
        %vm419 = vcmask 64512
        %v420 = vsel %vm419, %v396, 0
        %v422 = vsel %vm419, %v418, 0
        %424 = vmatprep.subr.mxu0 0.0
        %425 = vmatpush1.xpose.msra.mxu0 %v422
        %426 = vmatprep.subr.mxu0 0.0
        %427 = vmatpush1.xpose.msra.mxu0 0.0
        %428 = vmatprep.subr.mxu0 0.0
        %429 = vmatpush1.xpose.msra.mxu0 0.0
        %430 = vmatprep.subr.mxu0 0.0
        %431 = vmatpush1.xpose.msra.mxu0 0.0
        %432 = vmatprep.subr.mxu0 0.0
        %433 = vmatpush1.xpose.msra.mxu0 0.0
        %434 = vmatprep.subr.mxu0 0.0
        %435 = vmatpush1.xpose.msra.mxu0 0.0
        %436 = vmatprep.subr.mxu0 0.0
        %437 = vmatpush1.xpose.msra.mxu0 0.0
        %438 = vmatprep.subr.mxu0 0.0
        %439 = vmatpush1.xpose.msra.mxu0 0.0
        %440 = vmatprep.subr.mxu0 0.0
        %441 = vmatpush1.xpose.msra.mxu0 0.0
        %442 = vmatprep.subr.mxu0 0.0
        %443 = vmatpush1.xpose.msra.mxu0 0.0
        %444 = vmatprep.subr.mxu0 0.0
        %445 = vmatpush1.xpose.msra.mxu0 0.0
        %446 = vmatprep.subr.mxu0 0.0
        %447 = vmatpush1.xpose.msra.mxu0 0.0
        %448 = vmatprep.subr.mxu0 0.0
        %449 = vmatpush1.xpose.msra.mxu0 0.0
        %450 = vmatprep.subr.mxu0 0.0
        %451 = vmatpush1.xpose.msra.mxu0 0.0
        %452 = vmatprep.subr.mxu0 0.0
        %453 = vmatpush1.xpose.msra.mxu0 0.0
        %454 = vmatprep.subr.mxu0 0.0
        %455 = vmatpush1.xpose.msra.mxu0 0.0
        %456 = vmatprep.subr.mxu0 0.0
        %457 = vmatpush1.xpose.msra.mxu0 0.0
        %458 = vmatprep.subr.mxu0 0.0
        %459 = vmatpush1.xpose.msra.mxu0 0.0
        %460 = vmatprep.subr.mxu0 0.0
        %461 = vmatpush1.xpose.msra.mxu0 0.0
        %462 = vmatprep.subr.mxu0 0.0
        %463 = vmatpush1.xpose.msra.mxu0 0.0
        %464 = vmatprep.subr.mxu0 0.0
        %465 = vmatpush1.xpose.msra.mxu0 0.0
        %466 = vmatprep.subr.mxu0 0.0
        %467 = vmatpush1.xpose.msra.mxu0 0.0
        %468 = vmatprep.subr.mxu0 0.0
        %469 = vmatpush1.xpose.msra.mxu0 0.0
        %470 = vmatprep.subr.mxu0 0.0
        %471 = vmatpush1.xpose.msra.mxu0 0.0
        %472 = vmatprep.subr.mxu0 0.0
        %473 = vmatpush1.xpose.msra.mxu0 0.0
        %474 = vmatprep.subr.mxu0 0.0
        %475 = vmatpush1.xpose.msra.mxu0 0.0
        %476 = vmatprep.subr.mxu0 0.0
        %477 = vmatpush1.xpose.msra.mxu0 0.0
        %478 = vmatprep.subr.mxu0 0.0
        %479 = vmatpush1.xpose.msra.mxu0 0.0
        %480 = vmatprep.subr.mxu0 0.0
        %481 = vmatpush1.xpose.msra.mxu0 0.0
        %482 = vmatprep.subr.mxu0 0.0
        %483 = vmatpush1.xpose.msra.mxu0 0.0
        %484 = vmatprep.subr.mxu0 0.0
        %485 = vmatpush1.xpose.msra.mxu0 0.0
        %486 = vmatprep.subr.mxu0 0.0
        %487 = vmatpush1.xpose.msra.mxu0 0.0
        %488 = vmatprep.mubr.f32.mxu0 0.0
        %489 = vmatmul.mubr.f32.gmra.mrb[0].mxu0 %v420
        %v490 = vpop.f32.mrb[0].mxu0
        %v491 = vadd.f32 %v415, %v490
        %v492 = vpop.f32.mrb[0].mxu0
        %493 = vdwg.mxu0
        %494 = vrot.lane.b32.xlu0 %v406, 96
        %v495 = vpop.permute.xlu0 %494
        %v496 = vsel %vm419, %v399, 0
        %v498 = vsel %vm419, %v495, 0
        %500 = vmatprep.subr.mxu0 0.0
        %501 = vmatpush1.xpose.msra.mxu0 %v498
        %502 = vmatprep.subr.mxu0 0.0
        %503 = vmatpush1.xpose.msra.mxu0 0.0
        %504 = vmatprep.subr.mxu0 0.0
        %505 = vmatpush1.xpose.msra.mxu0 0.0
        %506 = vmatprep.subr.mxu0 0.0
        %507 = vmatpush1.xpose.msra.mxu0 0.0
        %508 = vmatprep.subr.mxu0 0.0
        %509 = vmatpush1.xpose.msra.mxu0 0.0
        %510 = vmatprep.subr.mxu0 0.0
        %511 = vmatpush1.xpose.msra.mxu0 0.0
        %512 = vmatprep.subr.mxu0 0.0
        %513 = vmatpush1.xpose.msra.mxu0 0.0
        %514 = vmatprep.subr.mxu0 0.0
        %515 = vmatpush1.xpose.msra.mxu0 0.0
        %516 = vmatprep.subr.mxu0 0.0
        %517 = vmatpush1.xpose.msra.mxu0 0.0
        %518 = vmatprep.subr.mxu0 0.0
        %519 = vmatpush1.xpose.msra.mxu0 0.0
        %520 = vmatprep.subr.mxu0 0.0
        %521 = vmatpush1.xpose.msra.mxu0 0.0
        %522 = vmatprep.subr.mxu0 0.0
        %523 = vmatpush1.xpose.msra.mxu0 0.0
        %524 = vmatprep.subr.mxu0 0.0
        %525 = vmatpush1.xpose.msra.mxu0 0.0
        %526 = vmatprep.subr.mxu0 0.0
        %527 = vmatpush1.xpose.msra.mxu0 0.0
        %528 = vmatprep.subr.mxu0 0.0
        %529 = vmatpush1.xpose.msra.mxu0 0.0
        %530 = vmatprep.subr.mxu0 0.0
        %531 = vmatpush1.xpose.msra.mxu0 0.0
        %532 = vmatprep.subr.mxu0 0.0
        %533 = vmatpush1.xpose.msra.mxu0 0.0
        %534 = vmatprep.subr.mxu0 0.0
        %535 = vmatpush1.xpose.msra.mxu0 0.0
        %536 = vmatprep.subr.mxu0 0.0
        %537 = vmatpush1.xpose.msra.mxu0 0.0
        %538 = vmatprep.subr.mxu0 0.0
        %539 = vmatpush1.xpose.msra.mxu0 0.0
        %540 = vmatprep.subr.mxu0 0.0
        %541 = vmatpush1.xpose.msra.mxu0 0.0
        %542 = vmatprep.subr.mxu0 0.0
        %543 = vmatpush1.xpose.msra.mxu0 0.0
        %544 = vmatprep.subr.mxu0 0.0
        %545 = vmatpush1.xpose.msra.mxu0 0.0
        %546 = vmatprep.subr.mxu0 0.0
        %547 = vmatpush1.xpose.msra.mxu0 0.0
        %548 = vmatprep.subr.mxu0 0.0
        %549 = vmatpush1.xpose.msra.mxu0 0.0
        %550 = vmatprep.subr.mxu0 0.0
        %551 = vmatpush1.xpose.msra.mxu0 0.0
        %552 = vmatprep.subr.mxu0 0.0
        %553 = vmatpush1.xpose.msra.mxu0 0.0
        %554 = vmatprep.subr.mxu0 0.0
        %555 = vmatpush1.xpose.msra.mxu0 0.0
        %556 = vmatprep.subr.mxu0 0.0
        %557 = vmatpush1.xpose.msra.mxu0 0.0
        %558 = vmatprep.subr.mxu0 0.0
        %559 = vmatpush1.xpose.msra.mxu0 0.0
        %560 = vmatprep.subr.mxu0 0.0
        %561 = vmatpush1.xpose.msra.mxu0 0.0
        %562 = vmatprep.subr.mxu0 0.0
        %563 = vmatpush1.xpose.msra.mxu0 0.0
        %564 = vmatprep.mubr.f32.mxu0 0.0
        %565 = vmatmul.mubr.f32.gmra.mrb[0].mxu0 %v496
        %v566 = vpop.f32.mrb[0].mxu0
        %v567 = vadd.f32 %v415, %v566
        %v568 = vpop.f32.mrb[0].mxu0
        %569 = vdwg.mxu0
        %570 = vrot.lane.b32.xlu0 %v408, 96
        %v571 = vpop.permute.xlu0 %570
        %v572 = vsel %vm419, %v401, 0
        %v574 = vsel %vm419, %v571, 0
        %576 = vmatprep.subr.mxu0 0.0
        %577 = vmatpush1.xpose.msra.mxu0 %v574
        %578 = vmatprep.subr.mxu0 0.0
        %579 = vmatpush1.xpose.msra.mxu0 0.0
        %580 = vmatprep.subr.mxu0 0.0
        %581 = vmatpush1.xpose.msra.mxu0 0.0
        %582 = vmatprep.subr.mxu0 0.0
        %583 = vmatpush1.xpose.msra.mxu0 0.0
        %584 = vmatprep.subr.mxu0 0.0
        %585 = vmatpush1.xpose.msra.mxu0 0.0
        %586 = vmatprep.subr.mxu0 0.0
        %587 = vmatpush1.xpose.msra.mxu0 0.0
        %588 = vmatprep.subr.mxu0 0.0
        %589 = vmatpush1.xpose.msra.mxu0 0.0
        %590 = vmatprep.subr.mxu0 0.0
        %591 = vmatpush1.xpose.msra.mxu0 0.0
        %592 = vmatprep.subr.mxu0 0.0
        %593 = vmatpush1.xpose.msra.mxu0 0.0
        %594 = vmatprep.subr.mxu0 0.0
        %595 = vmatpush1.xpose.msra.mxu0 0.0
        %596 = vmatprep.subr.mxu0 0.0
        %597 = vmatpush1.xpose.msra.mxu0 0.0
        %598 = vmatprep.subr.mxu0 0.0
        %599 = vmatpush1.xpose.msra.mxu0 0.0
        %600 = vmatprep.subr.mxu0 0.0
        %601 = vmatpush1.xpose.msra.mxu0 0.0
        %602 = vmatprep.subr.mxu0 0.0
        %603 = vmatpush1.xpose.msra.mxu0 0.0
        %604 = vmatprep.subr.mxu0 0.0
        %605 = vmatpush1.xpose.msra.mxu0 0.0
        %606 = vmatprep.subr.mxu0 0.0
        %607 = vmatpush1.xpose.msra.mxu0 0.0
        %608 = vmatprep.subr.mxu0 0.0
        %609 = vmatpush1.xpose.msra.mxu0 0.0
        %610 = vmatprep.subr.mxu0 0.0
        %611 = vmatpush1.xpose.msra.mxu0 0.0
        %612 = vmatprep.subr.mxu0 0.0
        %613 = vmatpush1.xpose.msra.mxu0 0.0
        %614 = vmatprep.subr.mxu0 0.0
        %615 = vmatpush1.xpose.msra.mxu0 0.0
        %616 = vmatprep.subr.mxu0 0.0
        %617 = vmatpush1.xpose.msra.mxu0 0.0
        %618 = vmatprep.subr.mxu0 0.0
        %619 = vmatpush1.xpose.msra.mxu0 0.0
        %620 = vmatprep.subr.mxu0 0.0
        %621 = vmatpush1.xpose.msra.mxu0 0.0
        %622 = vmatprep.subr.mxu0 0.0
        %623 = vmatpush1.xpose.msra.mxu0 0.0
        %624 = vmatprep.subr.mxu0 0.0
        %625 = vmatpush1.xpose.msra.mxu0 0.0
        %626 = vmatprep.subr.mxu0 0.0
        %627 = vmatpush1.xpose.msra.mxu0 0.0
        %628 = vmatprep.subr.mxu0 0.0
        %629 = vmatpush1.xpose.msra.mxu0 0.0
        %630 = vmatprep.subr.mxu0 0.0
        %631 = vmatpush1.xpose.msra.mxu0 0.0
        %632 = vmatprep.subr.mxu0 0.0
        %633 = vmatpush1.xpose.msra.mxu0 0.0
        %634 = vmatprep.subr.mxu0 0.0
        %635 = vmatpush1.xpose.msra.mxu0 0.0
        %636 = vmatprep.subr.mxu0 0.0
        %637 = vmatpush1.xpose.msra.mxu0 0.0
        %638 = vmatprep.subr.mxu0 0.0
        %639 = vmatpush1.xpose.msra.mxu0 0.0
        %640 = vmatprep.mubr.f32.mxu0 0.0
        %641 = vmatmul.mubr.f32.gmra.mrb[0].mxu0 %v572
        %v642 = vpop.f32.mrb[0].mxu0
        %v643 = vadd.f32 %v415, %v642
        %v644 = vpop.f32.mrb[0].mxu0
        %645 = vdwg.mxu0
        %646 = vrot.lane.b32.xlu0 %v410, 96
        %v647 = vpop.permute.xlu0 %646
        %v648 = vsel %vm419, %v403, 0
        %v650 = vsel %vm419, %v647, 0
        %652 = vmatprep.subr.mxu0 0.0
        %653 = vmatpush1.xpose.msra.mxu0 %v650
        %654 = vmatprep.subr.mxu0 0.0
        %655 = vmatpush1.xpose.msra.mxu0 0.0
        %656 = vmatprep.subr.mxu0 0.0
        %657 = vmatpush1.xpose.msra.mxu0 0.0
        %658 = vmatprep.subr.mxu0 0.0
        %659 = vmatpush1.xpose.msra.mxu0 0.0
        %660 = vmatprep.subr.mxu0 0.0
        %661 = vmatpush1.xpose.msra.mxu0 0.0
        %662 = vmatprep.subr.mxu0 0.0
        %663 = vmatpush1.xpose.msra.mxu0 0.0
        %664 = vmatprep.subr.mxu0 0.0
        %665 = vmatpush1.xpose.msra.mxu0 0.0
        %666 = vmatprep.subr.mxu0 0.0
        %667 = vmatpush1.xpose.msra.mxu0 0.0
        %668 = vmatprep.subr.mxu0 0.0
        %669 = vmatpush1.xpose.msra.mxu0 0.0
        %670 = vmatprep.subr.mxu0 0.0
        %671 = vmatpush1.xpose.msra.mxu0 0.0
        %672 = vmatprep.subr.mxu0 0.0
        %673 = vmatpush1.xpose.msra.mxu0 0.0
        %674 = vmatprep.subr.mxu0 0.0
        %675 = vmatpush1.xpose.msra.mxu0 0.0
        %676 = vmatprep.subr.mxu0 0.0
        %677 = vmatpush1.xpose.msra.mxu0 0.0
        %678 = vmatprep.subr.mxu0 0.0
        %679 = vmatpush1.xpose.msra.mxu0 0.0
        %680 = vmatprep.subr.mxu0 0.0
        %681 = vmatpush1.xpose.msra.mxu0 0.0
        %682 = vmatprep.subr.mxu0 0.0
        %683 = vmatpush1.xpose.msra.mxu0 0.0
        %684 = vmatprep.subr.mxu0 0.0
        %685 = vmatpush1.xpose.msra.mxu0 0.0
        %686 = vmatprep.subr.mxu0 0.0
        %687 = vmatpush1.xpose.msra.mxu0 0.0
        %688 = vmatprep.subr.mxu0 0.0
        %689 = vmatpush1.xpose.msra.mxu0 0.0
        %690 = vmatprep.subr.mxu0 0.0
        %691 = vmatpush1.xpose.msra.mxu0 0.0
        %692 = vmatprep.subr.mxu0 0.0
        %693 = vmatpush1.xpose.msra.mxu0 0.0
        %694 = vmatprep.subr.mxu0 0.0
        %695 = vmatpush1.xpose.msra.mxu0 0.0
        %696 = vmatprep.subr.mxu0 0.0
        %697 = vmatpush1.xpose.msra.mxu0 0.0
        %698 = vmatprep.subr.mxu0 0.0
        %699 = vmatpush1.xpose.msra.mxu0 0.0
        %700 = vmatprep.subr.mxu0 0.0
        %701 = vmatpush1.xpose.msra.mxu0 0.0
        %702 = vmatprep.subr.mxu0 0.0
        %703 = vmatpush1.xpose.msra.mxu0 0.0
        %704 = vmatprep.subr.mxu0 0.0
        %705 = vmatpush1.xpose.msra.mxu0 0.0
        %706 = vmatprep.subr.mxu0 0.0
        %707 = vmatpush1.xpose.msra.mxu0 0.0
        %708 = vmatprep.subr.mxu0 0.0
        %709 = vmatpush1.xpose.msra.mxu0 0.0
        %710 = vmatprep.subr.mxu0 0.0
        %711 = vmatpush1.xpose.msra.mxu0 0.0
        %712 = vmatprep.subr.mxu0 0.0
        %713 = vmatpush1.xpose.msra.mxu0 0.0
        %714 = vmatprep.subr.mxu0 0.0
        %715 = vmatpush1.xpose.msra.mxu0 0.0
        %716 = vmatprep.mubr.f32.mxu0 0.0
        %717 = vmatmul.mubr.f32.gmra.mrb[0].mxu0 %v648
        %v718 = vpop.f32.mrb[0].mxu0
        %v719 = vadd.f32 %v415, %v718
        %v720 = vpop.f32.mrb[0].mxu0
        %721 = vdwg.mxu0
        %v722 = vsel %vm419, %v491, -inf
        %723 = vmax.xlane.f32.xlu0 %v722
        %v724 = vpop.xlane.xlu0 %723
        %v725 = vsel %vm419, %v567, -inf
        %726 = vmax.xlane.f32.xlu0 %v725
        %v727 = vpop.xlane.xlu0 %726
        %v728 = vsel %vm419, %v643, -inf
        %729 = vmax.xlane.f32.xlu0 %v728
        %v730 = vpop.xlane.xlu0 %729
        %v731 = vsel %vm419, %v719, -inf
        %732 = vmax.xlane.f32.xlu0 %v731
        %v733 = vpop.xlane.xlu0 %732
        %v734 = vsub.f32 %v491, %v724
        %v735 = vsub.f32 %v567, %v727
        %v736 = vsub.f32 %v643, %v730
        %v737 = vsub.f32 %v719, %v733
        %v738 = vmul.f32 %v734, 1.442695
        %v739 = vpow.pop %v738
        %v740 = vmul.f32 %v735, 1.442695
        %v741 = vpow.pop %v740
        %v742 = vmul.f32 %v736, 1.442695
        %v743 = vpow.pop %v742
        %v744 = vmul.f32 %v737, 1.442695
        %v745 = vpow.pop %v744
        %v746 = vsel %vm419, %v739, 0.0
        %747 = vadd.xlane.f32.xlu0 %v746
        %v748 = vpop.xlane.xlu0 %747
        %v749 = vsel %vm419, %v741, 0.0
        %750 = vadd.xlane.f32.xlu0 %v749
        %v751 = vpop.xlane.xlu0 %750
        %v752 = vsel %vm419, %v743, 0.0
        %753 = vadd.xlane.f32.xlu0 %v752
        %v754 = vpop.xlane.xlu0 %753
        %v755 = vsel %vm419, %v745, 0.0
        %756 = vadd.xlane.f32.xlu0 %v755
        %v757 = vpop.xlane.xlu0 %756
        %v758 = vrcp.pop %v748
        %v759 = vrcp.pop %v751
        %v760 = vrcp.pop %v754
        %v761 = vrcp.pop %v757
        %v762 = vmul.f32 %v739, %v758
        %v763 = vmul.f32 %v741, %v759
        %v764 = vmul.f32 %v743, %v760
        %v765 = vmul.f32 %v745, %v761
        %766 = vrot.lane.b32.xlu0 %v393, 64
        %v767 = vpop.permute.xlu0 %766
        %v770 = vsel %vm419, %v762, 0
        %772 = vmatprep.subr.mxu0 0.0
        %773 = vmatpush1.msra.mxu0 %v767
        %774 = vmatprep.subr.mxu0 0.0
        %775 = vmatpush1.msra.mxu0 0.0
        %776 = vmatprep.subr.mxu0 0.0
        %777 = vmatpush1.msra.mxu0 0.0
        %778 = vmatprep.subr.mxu0 0.0
        %779 = vmatpush1.msra.mxu0 0.0
        %780 = vmatprep.subr.mxu0 0.0
        %781 = vmatpush1.msra.mxu0 0.0
        %782 = vmatprep.subr.mxu0 0.0
        %783 = vmatpush1.msra.mxu0 0.0
        %784 = vmatprep.subr.mxu0 0.0
        %785 = vmatpush1.msra.mxu0 0.0
        %786 = vmatprep.subr.mxu0 0.0
        %787 = vmatpush1.msra.mxu0 0.0
        %788 = vmatprep.subr.mxu0 0.0
        %789 = vmatpush1.msra.mxu0 0.0
        %790 = vmatprep.subr.mxu0 0.0
        %791 = vmatpush1.msra.mxu0 0.0
        %792 = vmatprep.subr.mxu0 0.0
        %793 = vmatpush1.msra.mxu0 0.0
        %794 = vmatprep.subr.mxu0 0.0
        %795 = vmatpush1.msra.mxu0 0.0
        %796 = vmatprep.subr.mxu0 0.0
        %797 = vmatpush1.msra.mxu0 0.0
        %798 = vmatprep.subr.mxu0 0.0
        %799 = vmatpush1.msra.mxu0 0.0
        %800 = vmatprep.subr.mxu0 0.0
        %801 = vmatpush1.msra.mxu0 0.0
        %802 = vmatprep.subr.mxu0 0.0
        %803 = vmatpush1.msra.mxu0 0.0
        %804 = vmatprep.subr.mxu0 0.0
        %805 = vmatpush1.msra.mxu0 0.0
        %806 = vmatprep.subr.mxu0 0.0
        %807 = vmatpush1.msra.mxu0 0.0
        %808 = vmatprep.subr.mxu0 0.0
        %809 = vmatpush1.msra.mxu0 0.0
        %810 = vmatprep.subr.mxu0 0.0
        %811 = vmatpush1.msra.mxu0 0.0
        %812 = vmatprep.subr.mxu0 0.0
        %813 = vmatpush1.msra.mxu0 0.0
        %814 = vmatprep.subr.mxu0 0.0
        %815 = vmatpush1.msra.mxu0 0.0
        %816 = vmatprep.subr.mxu0 0.0
        %817 = vmatpush1.msra.mxu0 0.0
        %818 = vmatprep.subr.mxu0 0.0
        %819 = vmatpush1.msra.mxu0 0.0
        %820 = vmatprep.subr.mxu0 0.0
        %821 = vmatpush1.msra.mxu0 0.0
        %822 = vmatprep.subr.mxu0 0.0
        %823 = vmatpush1.msra.mxu0 0.0
        %824 = vmatprep.subr.mxu0 0.0
        %825 = vmatpush1.msra.mxu0 0.0
        %826 = vmatprep.subr.mxu0 0.0
        %827 = vmatpush1.msra.mxu0 0.0
        %828 = vmatprep.subr.mxu0 0.0
        %829 = vmatpush1.msra.mxu0 0.0
        %830 = vmatprep.subr.mxu0 0.0
        %831 = vmatpush1.msra.mxu0 0.0
        %832 = vmatprep.subr.mxu0 0.0
        %833 = vmatpush1.msra.mxu0 0.0
        %834 = vmatprep.subr.mxu0 0.0
        %835 = vmatpush1.msra.mxu0 0.0
        %836 = vmatprep.mubr.f32.mxu0 0.0
        %837 = vmatmul.mubr.f32.gmra.mrb[0].mxu0 %v770
        %v838 = vpop.f32.mrb[0].mxu0
        %v839 = vadd.f32 0.0, %v838
        %v840 = vpop.f32.mrb[0].mxu0
        %841 = vdwg.mxu0
        %842 = vrot.lane.b32.xlu0 %v406, 64
        %v843 = vpop.permute.xlu0 %842
        %v846 = vsel %vm419, %v763, 0
        %848 = vmatprep.subr.mxu0 0.0
        %849 = vmatpush1.msra.mxu0 %v843
        %850 = vmatprep.subr.mxu0 0.0
        %851 = vmatpush1.msra.mxu0 0.0
        %852 = vmatprep.subr.mxu0 0.0
        %853 = vmatpush1.msra.mxu0 0.0
        %854 = vmatprep.subr.mxu0 0.0
        %855 = vmatpush1.msra.mxu0 0.0
        %856 = vmatprep.subr.mxu0 0.0
        %857 = vmatpush1.msra.mxu0 0.0
        %858 = vmatprep.subr.mxu0 0.0
        %859 = vmatpush1.msra.mxu0 0.0
        %860 = vmatprep.subr.mxu0 0.0
        %861 = vmatpush1.msra.mxu0 0.0
        %862 = vmatprep.subr.mxu0 0.0
        %863 = vmatpush1.msra.mxu0 0.0
        %864 = vmatprep.subr.mxu0 0.0
        %865 = vmatpush1.msra.mxu0 0.0
        %866 = vmatprep.subr.mxu0 0.0
        %867 = vmatpush1.msra.mxu0 0.0
        %868 = vmatprep.subr.mxu0 0.0
        %869 = vmatpush1.msra.mxu0 0.0
        %870 = vmatprep.subr.mxu0 0.0
        %871 = vmatpush1.msra.mxu0 0.0
        %872 = vmatprep.subr.mxu0 0.0
        %873 = vmatpush1.msra.mxu0 0.0
        %874 = vmatprep.subr.mxu0 0.0
        %875 = vmatpush1.msra.mxu0 0.0
        %876 = vmatprep.subr.mxu0 0.0
        %877 = vmatpush1.msra.mxu0 0.0
        %878 = vmatprep.subr.mxu0 0.0
        %879 = vmatpush1.msra.mxu0 0.0
        %880 = vmatprep.subr.mxu0 0.0
        %881 = vmatpush1.msra.mxu0 0.0
        %882 = vmatprep.subr.mxu0 0.0
        %883 = vmatpush1.msra.mxu0 0.0
        %884 = vmatprep.subr.mxu0 0.0
        %885 = vmatpush1.msra.mxu0 0.0
        %886 = vmatprep.subr.mxu0 0.0
        %887 = vmatpush1.msra.mxu0 0.0
        %888 = vmatprep.subr.mxu0 0.0
        %889 = vmatpush1.msra.mxu0 0.0
        %890 = vmatprep.subr.mxu0 0.0
        %891 = vmatpush1.msra.mxu0 0.0
        %892 = vmatprep.subr.mxu0 0.0
        %893 = vmatpush1.msra.mxu0 0.0
        %894 = vmatprep.subr.mxu0 0.0
        %895 = vmatpush1.msra.mxu0 0.0
        %896 = vmatprep.subr.mxu0 0.0
        %897 = vmatpush1.msra.mxu0 0.0
        %898 = vmatprep.subr.mxu0 0.0
        %899 = vmatpush1.msra.mxu0 0.0
        %900 = vmatprep.subr.mxu0 0.0
        %901 = vmatpush1.msra.mxu0 0.0
        %902 = vmatprep.subr.mxu0 0.0
        %903 = vmatpush1.msra.mxu0 0.0
        %904 = vmatprep.subr.mxu0 0.0
        %905 = vmatpush1.msra.mxu0 0.0
        %906 = vmatprep.subr.mxu0 0.0
        %907 = vmatpush1.msra.mxu0 0.0
        %908 = vmatprep.subr.mxu0 0.0
        %909 = vmatpush1.msra.mxu0 0.0
        %910 = vmatprep.subr.mxu0 0.0
        %911 = vmatpush1.msra.mxu0 0.0
        %912 = vmatprep.mubr.f32.mxu0 0.0
        %913 = vmatmul.mubr.f32.gmra.mrb[0].mxu0 %v846
        %v914 = vpop.f32.mrb[0].mxu0
        %v915 = vadd.f32 0.0, %v914
        %v916 = vpop.f32.mrb[0].mxu0
        %917 = vdwg.mxu0
        %918 = vrot.lane.b32.xlu0 %v408, 64
        %v919 = vpop.permute.xlu0 %918
        %v922 = vsel %vm419, %v764, 0
        %924 = vmatprep.subr.mxu0 0.0
        %925 = vmatpush1.msra.mxu0 %v919
        %926 = vmatprep.subr.mxu0 0.0
        %927 = vmatpush1.msra.mxu0 0.0
        %928 = vmatprep.subr.mxu0 0.0
        %929 = vmatpush1.msra.mxu0 0.0
        %930 = vmatprep.subr.mxu0 0.0
        %931 = vmatpush1.msra.mxu0 0.0
        %932 = vmatprep.subr.mxu0 0.0
        %933 = vmatpush1.msra.mxu0 0.0
        %934 = vmatprep.subr.mxu0 0.0
        %935 = vmatpush1.msra.mxu0 0.0
        %936 = vmatprep.subr.mxu0 0.0
        %937 = vmatpush1.msra.mxu0 0.0
        %938 = vmatprep.subr.mxu0 0.0
        %939 = vmatpush1.msra.mxu0 0.0
        %940 = vmatprep.subr.mxu0 0.0
        %941 = vmatpush1.msra.mxu0 0.0
        %942 = vmatprep.subr.mxu0 0.0
        %943 = vmatpush1.msra.mxu0 0.0
        %944 = vmatprep.subr.mxu0 0.0
        %945 = vmatpush1.msra.mxu0 0.0
        %946 = vmatprep.subr.mxu0 0.0
        %947 = vmatpush1.msra.mxu0 0.0
        %948 = vmatprep.subr.mxu0 0.0
        %949 = vmatpush1.msra.mxu0 0.0
        %950 = vmatprep.subr.mxu0 0.0
        %951 = vmatpush1.msra.mxu0 0.0
        %952 = vmatprep.subr.mxu0 0.0
        %953 = vmatpush1.msra.mxu0 0.0
        %954 = vmatprep.subr.mxu0 0.0
        %955 = vmatpush1.msra.mxu0 0.0
        %956 = vmatprep.subr.mxu0 0.0
        %957 = vmatpush1.msra.mxu0 0.0
        %958 = vmatprep.subr.mxu0 0.0
        %959 = vmatpush1.msra.mxu0 0.0
        %960 = vmatprep.subr.mxu0 0.0
        %961 = vmatpush1.msra.mxu0 0.0
        %962 = vmatprep.subr.mxu0 0.0
        %963 = vmatpush1.msra.mxu0 0.0
        %964 = vmatprep.subr.mxu0 0.0
        %965 = vmatpush1.msra.mxu0 0.0
        %966 = vmatprep.subr.mxu0 0.0
        %967 = vmatpush1.msra.mxu0 0.0
        %968 = vmatprep.subr.mxu0 0.0
        %969 = vmatpush1.msra.mxu0 0.0
        %970 = vmatprep.subr.mxu0 0.0
        %971 = vmatpush1.msra.mxu0 0.0
        %972 = vmatprep.subr.mxu0 0.0
        %973 = vmatpush1.msra.mxu0 0.0
        %974 = vmatprep.subr.mxu0 0.0
        %975 = vmatpush1.msra.mxu0 0.0
        %976 = vmatprep.subr.mxu0 0.0
        %977 = vmatpush1.msra.mxu0 0.0
        %978 = vmatprep.subr.mxu0 0.0
        %979 = vmatpush1.msra.mxu0 0.0
        %980 = vmatprep.subr.mxu0 0.0
        %981 = vmatpush1.msra.mxu0 0.0
        %982 = vmatprep.subr.mxu0 0.0
        %983 = vmatpush1.msra.mxu0 0.0
        %984 = vmatprep.subr.mxu0 0.0
        %985 = vmatpush1.msra.mxu0 0.0
        %986 = vmatprep.subr.mxu0 0.0
        %987 = vmatpush1.msra.mxu0 0.0
        %988 = vmatprep.mubr.f32.mxu0 0.0
        %989 = vmatmul.mubr.f32.gmra.mrb[0].mxu0 %v922
        %v990 = vpop.f32.mrb[0].mxu0
        %v991 = vadd.f32 0.0, %v990
        %v992 = vpop.f32.mrb[0].mxu0
        %993 = vdwg.mxu0
        %994 = vrot.lane.b32.xlu0 %v410, 64
        %v995 = vpop.permute.xlu0 %994
        %v998 = vsel %vm419, %v765, 0
        %1000 = vmatprep.subr.mxu0 0.0
        %1001 = vmatpush1.msra.mxu0 %v995
        %1002 = vmatprep.subr.mxu0 0.0
        %1003 = vmatpush1.msra.mxu0 0.0
        %1004 = vmatprep.subr.mxu0 0.0
        %1005 = vmatpush1.msra.mxu0 0.0
        %1006 = vmatprep.subr.mxu0 0.0
        %1007 = vmatpush1.msra.mxu0 0.0
        %1008 = vmatprep.subr.mxu0 0.0
        %1009 = vmatpush1.msra.mxu0 0.0
        %1010 = vmatprep.subr.mxu0 0.0
        %1011 = vmatpush1.msra.mxu0 0.0
        %1012 = vmatprep.subr.mxu0 0.0
        %1013 = vmatpush1.msra.mxu0 0.0
        %1014 = vmatprep.subr.mxu0 0.0
        %1015 = vmatpush1.msra.mxu0 0.0
        %1016 = vmatprep.subr.mxu0 0.0
        %1017 = vmatpush1.msra.mxu0 0.0
        %1018 = vmatprep.subr.mxu0 0.0
        %1019 = vmatpush1.msra.mxu0 0.0
        %1020 = vmatprep.subr.mxu0 0.0
        %1021 = vmatpush1.msra.mxu0 0.0
        %1022 = vmatprep.subr.mxu0 0.0
        %1023 = vmatpush1.msra.mxu0 0.0
        %1024 = vmatprep.subr.mxu0 0.0
        %1025 = vmatpush1.msra.mxu0 0.0
        %1026 = vmatprep.subr.mxu0 0.0
        %1027 = vmatpush1.msra.mxu0 0.0
        %1028 = vmatprep.subr.mxu0 0.0
        %1029 = vmatpush1.msra.mxu0 0.0
        %1030 = vmatprep.subr.mxu0 0.0
        %1031 = vmatpush1.msra.mxu0 0.0
        %1032 = vmatprep.subr.mxu0 0.0
        %1033 = vmatpush1.msra.mxu0 0.0
        %1034 = vmatprep.subr.mxu0 0.0
        %1035 = vmatpush1.msra.mxu0 0.0
        %1036 = vmatprep.subr.mxu0 0.0
        %1037 = vmatpush1.msra.mxu0 0.0
        %1038 = vmatprep.subr.mxu0 0.0
        %1039 = vmatpush1.msra.mxu0 0.0
        %1040 = vmatprep.subr.mxu0 0.0
        %1041 = vmatpush1.msra.mxu0 0.0
        %1042 = vmatprep.subr.mxu0 0.0
        %1043 = vmatpush1.msra.mxu0 0.0
        %1044 = vmatprep.subr.mxu0 0.0
        %1045 = vmatpush1.msra.mxu0 0.0
        %1046 = vmatprep.subr.mxu0 0.0
        %1047 = vmatpush1.msra.mxu0 0.0
        %1048 = vmatprep.subr.mxu0 0.0
        %1049 = vmatpush1.msra.mxu0 0.0
        %1050 = vmatprep.subr.mxu0 0.0
        %1051 = vmatpush1.msra.mxu0 0.0
        %1052 = vmatprep.subr.mxu0 0.0
        %1053 = vmatpush1.msra.mxu0 0.0
        %1054 = vmatprep.subr.mxu0 0.0
        %1055 = vmatpush1.msra.mxu0 0.0
        %1056 = vmatprep.subr.mxu0 0.0
        %1057 = vmatpush1.msra.mxu0 0.0
        %1058 = vmatprep.subr.mxu0 0.0
        %1059 = vmatpush1.msra.mxu0 0.0
        %1060 = vmatprep.subr.mxu0 0.0
        %1061 = vmatpush1.msra.mxu0 0.0
        %1062 = vmatprep.subr.mxu0 0.0
        %1063 = vmatpush1.msra.mxu0 0.0
        %1064 = vmatprep.mubr.f32.mxu0 0.0
        %1065 = vmatmul.mubr.f32.gmra.mrb[0].mxu0 %v998
        %v1066 = vpop.f32.mrb[0].mxu0
        %v1067 = vadd.f32 0.0, %v1066
        %v1068 = vpop.f32.mrb[0].mxu0
        %1069 = vdwg.mxu0
        %1071 = vrot.lane.b32.xlu0 %v915, 8
        %v1072 = vpop.permute.xlu0 %1071
        %1075 = vrot.lane.b32.xlu0 %v991, 16
        %v1076 = vpop.permute.xlu0 %1075
        %1079 = vrot.lane.b32.xlu0 %v1067, 24
        %v1080 = vpop.permute.xlu0 %1079
        %v1082 = vsel %vm419, %v839, %v1072
        %vm1083 = vcmask 130048
        %v1084 = vsel %vm1083, %v1082, %v1076
        %vm1085 = vcmask 195584
        %v1086 = vsel %vm1085, %v1084, %v1080
        %v1087 = vlaneseq
        %v1088 = vshrl.u32 %v1087, 7
        %v1089 = vsub.s32 0, %v1088
        %v1090 = vrot.slane %v318, %v1089
        %v1092 = vsel %vm277, %v1086, 0
        %1094 = vmatprep.subr.mxu0 0.0
        %1095 = vmatpush1.msra.mxu0 %v314
        %1096 = vmatprep.subr.mxu0 0.0
        %1097 = vmatpush1.msra.mxu0 %v315
        %1098 = vmatprep.subr.mxu0 0.0
        %1099 = vmatpush1.msra.mxu0 %v316
        %1100 = vmatprep.subr.mxu0 0.0
        %1101 = vmatpush1.msra.mxu0 %v317
        %1102 = vmatprep.subr.mxu0 0.0
        %1103 = vmatpush1.msra.mxu0 0.0
        %1104 = vmatprep.subr.mxu0 0.0
        %1105 = vmatpush1.msra.mxu0 0.0
        %1106 = vmatprep.subr.mxu0 0.0
        %1107 = vmatpush1.msra.mxu0 0.0
        %1108 = vmatprep.subr.mxu0 0.0
        %1109 = vmatpush1.msra.mxu0 0.0
        %1110 = vmatprep.subr.mxu0 0.0
        %1111 = vmatpush1.msra.mxu0 0.0
        %1112 = vmatprep.subr.mxu0 0.0
        %1113 = vmatpush1.msra.mxu0 0.0
        %1114 = vmatprep.subr.mxu0 0.0
        %1115 = vmatpush1.msra.mxu0 0.0
        %1116 = vmatprep.subr.mxu0 0.0
        %1117 = vmatpush1.msra.mxu0 0.0
        %1118 = vmatprep.subr.mxu0 0.0
        %1119 = vmatpush1.msra.mxu0 0.0
        %1120 = vmatprep.subr.mxu0 0.0
        %1121 = vmatpush1.msra.mxu0 0.0
        %1122 = vmatprep.subr.mxu0 0.0
        %1123 = vmatpush1.msra.mxu0 0.0
        %1124 = vmatprep.subr.mxu0 0.0
        %1125 = vmatpush1.msra.mxu0 0.0
        %1126 = vmatprep.subr.mxu0 0.0
        %1127 = vmatpush1.msra.mxu0 0.0
        %1128 = vmatprep.subr.mxu0 0.0
        %1129 = vmatpush1.msra.mxu0 0.0
        %1130 = vmatprep.subr.mxu0 0.0
        %1131 = vmatpush1.msra.mxu0 0.0
        %1132 = vmatprep.subr.mxu0 0.0
        %1133 = vmatpush1.msra.mxu0 0.0
        %1134 = vmatprep.subr.mxu0 0.0
        %1135 = vmatpush1.msra.mxu0 0.0
        %1136 = vmatprep.subr.mxu0 0.0
        %1137 = vmatpush1.msra.mxu0 0.0
        %1138 = vmatprep.subr.mxu0 0.0
        %1139 = vmatpush1.msra.mxu0 0.0
        %1140 = vmatprep.subr.mxu0 0.0
        %1141 = vmatpush1.msra.mxu0 0.0
        %1142 = vmatprep.subr.mxu0 0.0
        %1143 = vmatpush1.msra.mxu0 0.0
        %1144 = vmatprep.subr.mxu0 0.0
        %1145 = vmatpush1.msra.mxu0 0.0
        %1146 = vmatprep.subr.mxu0 0.0
        %1147 = vmatpush1.msra.mxu0 0.0
        %1148 = vmatprep.subr.mxu0 0.0
        %1149 = vmatpush1.msra.mxu0 0.0
        %1150 = vmatprep.subr.mxu0 0.0
        %1151 = vmatpush1.msra.mxu0 0.0
        %1152 = vmatprep.subr.mxu0 0.0
        %1153 = vmatpush1.msra.mxu0 0.0
        %1154 = vmatprep.subr.mxu0 0.0
        %1155 = vmatpush1.msra.mxu0 0.0
        %1156 = vmatprep.subr.mxu0 0.0
        %1157 = vmatpush1.msra.mxu0 0.0
        %1158 = vmatprep.mubr.f32.mxu0 0.0
        %1159 = vmatmul.mubr.f32.gmra.mrb[0].mxu0 %v1092
        %v1160 = vpop.f32.mrb[0].mxu0
        %v1161 = vadd.f32 %v1090, %v1160
        %v1162 = vpop.f32.mrb[0].mxu0
        %1163 = vdwg.mxu0
        %v1164 = vadd.f32 %v274, %v1161
        %v1165 = vld [vmem:[%s4 + $0xd0] sm:$0x1]
        %v1166 = vld [vmem:[%s4 + $0xd8] sm:$0x1]
        %v1167 = vsel %vm277, %v1164, 0.0
        %1168 = vadd.xlane.f32.xlu0 %v1167
        %v1169 = vpop.xlane.xlu0 %1168
        %v1170 = vmul.f32 %v1169, %v281
        %v1171 = vsub.f32 %v1164, %v1170
        %v1172 = vmul.f32 %v1171, %v1171
        %v1173 = vsel %vm277, %v1172, 0.0
        %1174 = vadd.xlane.f32.xlu0 %v1173
        %v1175 = vpop.xlane.xlu0 %1174
        %v1176 = vmul.f32 %v1175, 0.032258064
        %v1177 = vrsqrt.pop %v1176
        %v1178 = vmul.f32 %v1176, %v1177
        %vm1179 = vcmp.eq.f32.partialorder %v1176, inf
        %v1180 = vsel %vm1179, %v1176, %v1178
        %vm1181 = vcmp.eq.f32.partialorder %v1176, 0.0
        %v1182 = vand.u32 %v1176, 2147483648
        %v1183 = vsel %vm1181, %v1182, %v1180
        %v1184 = vlaneseq
        %v1185 = vshrl.u32 %v1184, 7
        %v1186 = vsub.s32 0, %v1185
        %v1187 = vrot.slane %v1165, %v1186
        %v1188 = vmul.f32 %v1187, %v1171
        %v1189 = vadd.f32 %v1183, 1e-06
        %v1190 = vrcp.pop %v1189
        %v1191 = vmul.f32 %v1188, %v1190
        %v1192 = vlaneseq
        %v1193 = vshrl.u32 %v1192, 7
        %v1194 = vsub.s32 0, %v1193
        %v1195 = vrot.slane %v1166, %v1194
        %v1196 = vadd.f32 %v1191, %v1195
        %v1197 = vld [vmem:[%s4 + $0x50] sm:$0xff]
        %v1198 = vld [vmem:[%s4 + $0x58] sm:$0xff]
        %v1199 = vld [vmem:[%s4 + $0x60] sm:$0xff]
        %v1200 = vld [vmem:[%s4 + $0x68] sm:$0xff]
        %v1201 = vld [vmem:[%s4 + $0x70] sm:$0x1]
        %v1202 = vld [vmem:[%s4 + $0x78] sm:$0xff]
        %v1203 = vld [vmem:[%s4 + $0x80] sm:$0xff]
        %v1204 = vld [vmem:[%s4 + $0x88] sm:$0xff]
        %v1205 = vld [vmem:[%s4 + $0x90] sm:$0xff]
        %v1206 = vld [vmem:[%s4 + $0x98] sm:$0xff]
        %v1207 = vld [vmem:[%s4 + $0xa0] sm:$0xff]
        %v1208 = vld [vmem:[%s4 + $0xa8] sm:$0xff]
        %v1209 = vld [vmem:[%s4 + $0xb0] sm:$0xff]
        %v1210 = vld [vmem:[%s4 + $0xb8] sm:$0x1]
        %v1211 = vlaneseq
        %v1212 = vshrl.u32 %v1211, 7
        %v1213 = vsub.s32 0, %v1212
        %v1214 = vrot.slane %v1201, %v1213
        %v1216 = vsel %vm277, %v1196, 0
        %1218 = vmatprep.subr.mxu0 0.0
        %1219 = vmatpush1.msra.mxu0 %v1197
        %1220 = vmatprep.subr.mxu0 0.0
        %1221 = vmatpush1.msra.mxu0 %v1198
        %1222 = vmatprep.subr.mxu0 0.0
        %1223 = vmatpush1.msra.mxu0 %v1199
        %1224 = vmatprep.subr.mxu0 0.0
        %1225 = vmatpush1.msra.mxu0 %v1200
        %1226 = vmatprep.subr.mxu0 0.0
        %1227 = vmatpush1.msra.mxu0 0.0
        %1228 = vmatprep.subr.mxu0 0.0
        %1229 = vmatpush1.msra.mxu0 0.0
        %1230 = vmatprep.subr.mxu0 0.0
        %1231 = vmatpush1.msra.mxu0 0.0
        %1232 = vmatprep.subr.mxu0 0.0
        %1233 = vmatpush1.msra.mxu0 0.0
        %1234 = vmatprep.subr.mxu0 0.0
        %1235 = vmatpush1.msra.mxu0 0.0
        %1236 = vmatprep.subr.mxu0 0.0
        %1237 = vmatpush1.msra.mxu0 0.0
        %1238 = vmatprep.subr.mxu0 0.0
        %1239 = vmatpush1.msra.mxu0 0.0
        %1240 = vmatprep.subr.mxu0 0.0
        %1241 = vmatpush1.msra.mxu0 0.0
        %1242 = vmatprep.subr.mxu0 0.0
        %1243 = vmatpush1.msra.mxu0 0.0
        %1244 = vmatprep.subr.mxu0 0.0
        %1245 = vmatpush1.msra.mxu0 0.0
        %1246 = vmatprep.subr.mxu0 0.0
        %1247 = vmatpush1.msra.mxu0 0.0
        %1248 = vmatprep.subr.mxu0 0.0
        %1249 = vmatpush1.msra.mxu0 0.0
        %1250 = vmatprep.subr.mxu0 0.0
        %1251 = vmatpush1.msra.mxu0 0.0
        %1252 = vmatprep.subr.mxu0 0.0
        %1253 = vmatpush1.msra.mxu0 0.0
        %1254 = vmatprep.subr.mxu0 0.0
        %1255 = vmatpush1.msra.mxu0 0.0
        %1256 = vmatprep.subr.mxu0 0.0
        %1257 = vmatpush1.msra.mxu0 0.0
        %1258 = vmatprep.subr.mxu0 0.0
        %1259 = vmatpush1.msra.mxu0 0.0
        %1260 = vmatprep.subr.mxu0 0.0
        %1261 = vmatpush1.msra.mxu0 0.0
        %1262 = vmatprep.subr.mxu0 0.0
        %1263 = vmatpush1.msra.mxu0 0.0
        %1264 = vmatprep.subr.mxu0 0.0
        %1265 = vmatpush1.msra.mxu0 0.0
        %1266 = vmatprep.subr.mxu0 0.0
        %1267 = vmatpush1.msra.mxu0 0.0
        %1268 = vmatprep.subr.mxu0 0.0
        %1269 = vmatpush1.msra.mxu0 0.0
        %1270 = vmatprep.subr.mxu0 0.0
        %1271 = vmatpush1.msra.mxu0 0.0
        %1272 = vmatprep.subr.mxu0 0.0
        %1273 = vmatpush1.msra.mxu0 0.0
        %1274 = vmatprep.subr.mxu0 0.0
        %1275 = vmatpush1.msra.mxu0 0.0
        %1276 = vmatprep.subr.mxu0 0.0
        %1277 = vmatpush1.msra.mxu0 0.0
        %1278 = vmatprep.subr.mxu0 0.0
        %1279 = vmatpush1.msra.mxu0 0.0
        %1280 = vmatprep.subr.mxu0 0.0
        %1281 = vmatpush1.msra.mxu0 0.0
        %1282 = vmatprep.mubr.f32.mxu0 0.0
        %1283 = vmatmul.mubr.f32.gmra.mrb[0].mxu0 %v1216
        %v1284 = vpop.f32.mrb[0].mxu0
        %v1285 = vadd.f32 %v1214, %v1284
        %v1286 = vpop.f32.mrb[0].mxu0
        %1287 = vdwg.mxu0
        %v1288 = vmax.f32 %v1285, 0.0
        %v1289 = vlaneseq
        %v1290 = vshrl.u32 %v1289, 7
        %v1291 = vsub.s32 0, %v1290
        %v1292 = vrot.slane %v1210, %v1291
        %vm1293 = vcmask 523264
        %v1295 = vsel %vm1293, %v1288, 0
        %1297 = vmatprep.subr.mxu0 0.0
        %1298 = vmatpush1.msra.mxu0 %v1202
        %1299 = vmatprep.subr.mxu0 0.0
        %1300 = vmatpush1.msra.mxu0 %v1203
        %1301 = vmatprep.subr.mxu0 0.0
        %1302 = vmatpush1.msra.mxu0 %v1204
        %1303 = vmatprep.subr.mxu0 0.0
        %1304 = vmatpush1.msra.mxu0 %v1205
        %1305 = vmatprep.subr.mxu0 0.0
        %1306 = vmatpush1.msra.mxu0 %v1206
        %1307 = vmatprep.subr.mxu0 0.0
        %1308 = vmatpush1.msra.mxu0 %v1207
        %1309 = vmatprep.subr.mxu0 0.0
        %1310 = vmatpush1.msra.mxu0 %v1208
        %1311 = vmatprep.subr.mxu0 0.0
        %1312 = vmatpush1.msra.mxu0 %v1209
        %1313 = vmatprep.subr.mxu0 0.0
        %1314 = vmatpush1.msra.mxu0 0.0
        %1315 = vmatprep.subr.mxu0 0.0
        %1316 = vmatpush1.msra.mxu0 0.0
        %1317 = vmatprep.subr.mxu0 0.0
        %1318 = vmatpush1.msra.mxu0 0.0
        %1319 = vmatprep.subr.mxu0 0.0
        %1320 = vmatpush1.msra.mxu0 0.0
        %1321 = vmatprep.subr.mxu0 0.0
        %1322 = vmatpush1.msra.mxu0 0.0
        %1323 = vmatprep.subr.mxu0 0.0
        %1324 = vmatpush1.msra.mxu0 0.0
        %1325 = vmatprep.subr.mxu0 0.0
        %1326 = vmatpush1.msra.mxu0 0.0
        %1327 = vmatprep.subr.mxu0 0.0
        %1328 = vmatpush1.msra.mxu0 0.0
        %1329 = vmatprep.subr.mxu0 0.0
        %1330 = vmatpush1.msra.mxu0 0.0
        %1331 = vmatprep.subr.mxu0 0.0
        %1332 = vmatpush1.msra.mxu0 0.0
        %1333 = vmatprep.subr.mxu0 0.0
        %1334 = vmatpush1.msra.mxu0 0.0
        %1335 = vmatprep.subr.mxu0 0.0
        %1336 = vmatpush1.msra.mxu0 0.0
        %1337 = vmatprep.subr.mxu0 0.0
        %1338 = vmatpush1.msra.mxu0 0.0
        %1339 = vmatprep.subr.mxu0 0.0
        %1340 = vmatpush1.msra.mxu0 0.0
        %1341 = vmatprep.subr.mxu0 0.0
        %1342 = vmatpush1.msra.mxu0 0.0
        %1343 = vmatprep.subr.mxu0 0.0
        %1344 = vmatpush1.msra.mxu0 0.0
        %1345 = vmatprep.subr.mxu0 0.0
        %1346 = vmatpush1.msra.mxu0 0.0
        %1347 = vmatprep.subr.mxu0 0.0
        %1348 = vmatpush1.msra.mxu0 0.0
        %1349 = vmatprep.subr.mxu0 0.0
        %1350 = vmatpush1.msra.mxu0 0.0
        %1351 = vmatprep.subr.mxu0 0.0
        %1352 = vmatpush1.msra.mxu0 0.0
        %1353 = vmatprep.subr.mxu0 0.0
        %1354 = vmatpush1.msra.mxu0 0.0
        %1355 = vmatprep.subr.mxu0 0.0
        %1356 = vmatpush1.msra.mxu0 0.0
        %1357 = vmatprep.subr.mxu0 0.0
        %1358 = vmatpush1.msra.mxu0 0.0
        %1359 = vmatprep.subr.mxu0 0.0
        %1360 = vmatpush1.msra.mxu0 0.0
        %1361 = vmatprep.mubr.f32.mxu0 0.0
        %1362 = vmatmul.mubr.f32.gmra.mrb[0].mxu0 %v1295
        %v1363 = vpop.f32.mrb[0].mxu0
        %v1364 = vadd.f32 %v1292, %v1363
        %v1365 = vpop.f32.mrb[0].mxu0
        %1366 = vdwg.mxu0
        %v1367 = vadd.f32 %v1164, %v1364
        %v1368 = vld [vmem:[%s4 + $0x1a0] sm:$0x1]
        %v1369 = vld [vmem:[%s4 + $0x1a8] sm:$0x1]
        %v1370 = vsel %vm277, %v1367, 0.0
        %1371 = vadd.xlane.f32.xlu0 %v1370
        %v1372 = vpop.xlane.xlu0 %1371
        %v1373 = vmul.f32 %v1372, %v281
        %v1374 = vsub.f32 %v1367, %v1373
        %v1375 = vmul.f32 %v1374, %v1374
        %v1376 = vsel %vm277, %v1375, 0.0
        %1377 = vadd.xlane.f32.xlu0 %v1376
        %v1378 = vpop.xlane.xlu0 %1377
        %v1379 = vmul.f32 %v1378, 0.032258064
        %v1380 = vrsqrt.pop %v1379
        %v1381 = vmul.f32 %v1379, %v1380
        %vm1382 = vcmp.eq.f32.partialorder %v1379, inf
        %v1383 = vsel %vm1382, %v1379, %v1381
        %vm1384 = vcmp.eq.f32.partialorder %v1379, 0.0
        %v1385 = vand.u32 %v1379, 2147483648
        %v1386 = vsel %vm1384, %v1385, %v1383
        %v1387 = vlaneseq
        %v1388 = vshrl.u32 %v1387, 7
        %v1389 = vsub.s32 0, %v1388
        %v1390 = vrot.slane %v1368, %v1389
        %v1391 = vmul.f32 %v1390, %v1374
        %v1392 = vadd.f32 %v1386, 1e-06
        %v1393 = vrcp.pop %v1392
        %v1394 = vmul.f32 %v1391, %v1393
        %v1395 = vlaneseq
        %v1396 = vshrl.u32 %v1395, 7
        %v1397 = vsub.s32 0, %v1396
        %v1398 = vrot.slane %v1369, %v1397
        %v1399 = vadd.f32 %v1394, %v1398
        %v1400 = vld [vmem:[%s4 + $0xe0] sm:$0xff]
        %v1401 = vld [vmem:[%s4 + $0xe8] sm:$0xff]
        %v1402 = vld [vmem:[%s4 + $0xf0] sm:$0xff]
        %v1403 = vld [vmem:[%s4 + $0xf8] sm:$0xff]
        %v1404 = vld [vmem:[%s4 + $0x100] sm:$0x1]
        %v1405 = vld [vmem:[%s4 + $0x108] sm:$0xff]
        %v1406 = vld [vmem:[%s4 + $0x110] sm:$0xff]
        %v1407 = vld [vmem:[%s4 + $0x118] sm:$0xff]
        %v1408 = vld [vmem:[%s4 + $0x120] sm:$0xff]
        %v1409 = vld [vmem:[%s4 + $0x128] sm:$0x1]
        %v1410 = vlaneseq
        %v1411 = vshrl.u32 %v1410, 7
        %v1412 = vsub.s32 0, %v1411
        %v1413 = vrot.slane %v1404, %v1412
        %v1415 = vsel %vm277, %v1399, 0
        %1417 = vmatprep.subr.mxu0 0.0
        %1418 = vmatpush1.msra.mxu0 %v1400
        %1419 = vmatprep.subr.mxu0 0.0
        %1420 = vmatpush1.msra.mxu0 %v1401
        %1421 = vmatprep.subr.mxu0 0.0
        %1422 = vmatpush1.msra.mxu0 %v1402
        %1423 = vmatprep.subr.mxu0 0.0
        %1424 = vmatpush1.msra.mxu0 %v1403
        %1425 = vmatprep.subr.mxu0 0.0
        %1426 = vmatpush1.msra.mxu0 0.0
        %1427 = vmatprep.subr.mxu0 0.0
        %1428 = vmatpush1.msra.mxu0 0.0
        %1429 = vmatprep.subr.mxu0 0.0
        %1430 = vmatpush1.msra.mxu0 0.0
        %1431 = vmatprep.subr.mxu0 0.0
        %1432 = vmatpush1.msra.mxu0 0.0
        %1433 = vmatprep.subr.mxu0 0.0
        %1434 = vmatpush1.msra.mxu0 0.0
        %1435 = vmatprep.subr.mxu0 0.0
        %1436 = vmatpush1.msra.mxu0 0.0
        %1437 = vmatprep.subr.mxu0 0.0
        %1438 = vmatpush1.msra.mxu0 0.0
        %1439 = vmatprep.subr.mxu0 0.0
        %1440 = vmatpush1.msra.mxu0 0.0
        %1441 = vmatprep.subr.mxu0 0.0
        %1442 = vmatpush1.msra.mxu0 0.0
        %1443 = vmatprep.subr.mxu0 0.0
        %1444 = vmatpush1.msra.mxu0 0.0
        %1445 = vmatprep.subr.mxu0 0.0
        %1446 = vmatpush1.msra.mxu0 0.0
        %1447 = vmatprep.subr.mxu0 0.0
        %1448 = vmatpush1.msra.mxu0 0.0
        %1449 = vmatprep.subr.mxu0 0.0
        %1450 = vmatpush1.msra.mxu0 0.0
        %1451 = vmatprep.subr.mxu0 0.0
        %1452 = vmatpush1.msra.mxu0 0.0
        %1453 = vmatprep.subr.mxu0 0.0
        %1454 = vmatpush1.msra.mxu0 0.0
        %1455 = vmatprep.subr.mxu0 0.0
        %1456 = vmatpush1.msra.mxu0 0.0
        %1457 = vmatprep.subr.mxu0 0.0
        %1458 = vmatpush1.msra.mxu0 0.0
        %1459 = vmatprep.subr.mxu0 0.0
        %1460 = vmatpush1.msra.mxu0 0.0
        %1461 = vmatprep.subr.mxu0 0.0
        %1462 = vmatpush1.msra.mxu0 0.0
        %1463 = vmatprep.subr.mxu0 0.0
        %1464 = vmatpush1.msra.mxu0 0.0
        %1465 = vmatprep.subr.mxu0 0.0
        %1466 = vmatpush1.msra.mxu0 0.0
        %1467 = vmatprep.subr.mxu0 0.0
        %1468 = vmatpush1.msra.mxu0 0.0
        %1469 = vmatprep.subr.mxu0 0.0
        %1470 = vmatpush1.msra.mxu0 0.0
        %1471 = vmatprep.subr.mxu0 0.0
        %1472 = vmatpush1.msra.mxu0 0.0
        %1473 = vmatprep.subr.mxu0 0.0
        %1474 = vmatpush1.msra.mxu0 0.0
        %1475 = vmatprep.subr.mxu0 0.0
        %1476 = vmatpush1.msra.mxu0 0.0
        %1477 = vmatprep.subr.mxu0 0.0
        %1478 = vmatpush1.msra.mxu0 0.0
        %1479 = vmatprep.subr.mxu0 0.0
        %1480 = vmatpush1.msra.mxu0 0.0
        %1481 = vmatprep.mubr.f32.mxu0 0.0
        %1482 = vmatmul.mubr.f32.gmra.mrb[0].mxu0 %v1415
        %v1483 = vpop.f32.mrb[0].mxu0
        %v1484 = vadd.f32 %v1413, %v1483
        %v1485 = vpop.f32.mrb[0].mxu0
        %1486 = vdwg.mxu0
        %v1487 = vmul.f32 %v1484, 0.35355338
        %1489 = vrot.lane.b32.xlu0 %v1487, 120
        %v1490 = vpop.permute.xlu0 %1489
        %1491 = vrot.lane.b32.xlu0 %v1487, 112
        %v1492 = vpop.permute.xlu0 %1491
        %1493 = vrot.lane.b32.xlu0 %v1487, 104
        %v1494 = vpop.permute.xlu0 %1493
        %1496 = vrot.lane.b32.xlu0 %v1484, 120
        %v1497 = vpop.permute.xlu0 %1496
        %1498 = vrot.lane.b32.xlu0 %v1484, 112
        %v1499 = vpop.permute.xlu0 %1498
        %1500 = vrot.lane.b32.xlu0 %v1484, 104
        %v1501 = vpop.permute.xlu0 %1500
        %1502 = vrot.lane.b32.xlu0 %v1484, 96
        %v1503 = vpop.permute.xlu0 %1502
        %v1504 = vsel %vm419, %v1487, 0
        %v1506 = vsel %vm419, %v1503, 0
        %1508 = vmatprep.subr.mxu0 0.0
        %1509 = vmatpush1.xpose.msra.mxu0 %v1506
        %1510 = vmatprep.subr.mxu0 0.0
        %1511 = vmatpush1.xpose.msra.mxu0 0.0
        %1512 = vmatprep.subr.mxu0 0.0
        %1513 = vmatpush1.xpose.msra.mxu0 0.0
        %1514 = vmatprep.subr.mxu0 0.0
        %1515 = vmatpush1.xpose.msra.mxu0 0.0
        %1516 = vmatprep.subr.mxu0 0.0
        %1517 = vmatpush1.xpose.msra.mxu0 0.0
        %1518 = vmatprep.subr.mxu0 0.0
        %1519 = vmatpush1.xpose.msra.mxu0 0.0
        %1520 = vmatprep.subr.mxu0 0.0
        %1521 = vmatpush1.xpose.msra.mxu0 0.0
        %1522 = vmatprep.subr.mxu0 0.0
        %1523 = vmatpush1.xpose.msra.mxu0 0.0
        %1524 = vmatprep.subr.mxu0 0.0
        %1525 = vmatpush1.xpose.msra.mxu0 0.0
        %1526 = vmatprep.subr.mxu0 0.0
        %1527 = vmatpush1.xpose.msra.mxu0 0.0
        %1528 = vmatprep.subr.mxu0 0.0
        %1529 = vmatpush1.xpose.msra.mxu0 0.0
        %1530 = vmatprep.subr.mxu0 0.0
        %1531 = vmatpush1.xpose.msra.mxu0 0.0
        %1532 = vmatprep.subr.mxu0 0.0
        %1533 = vmatpush1.xpose.msra.mxu0 0.0
        %1534 = vmatprep.subr.mxu0 0.0
        %1535 = vmatpush1.xpose.msra.mxu0 0.0
        %1536 = vmatprep.subr.mxu0 0.0
        %1537 = vmatpush1.xpose.msra.mxu0 0.0
        %1538 = vmatprep.subr.mxu0 0.0
        %1539 = vmatpush1.xpose.msra.mxu0 0.0
        %1540 = vmatprep.subr.mxu0 0.0
        %1541 = vmatpush1.xpose.msra.mxu0 0.0
        %1542 = vmatprep.subr.mxu0 0.0
        %1543 = vmatpush1.xpose.msra.mxu0 0.0
        %1544 = vmatprep.subr.mxu0 0.0
        %1545 = vmatpush1.xpose.msra.mxu0 0.0
        %1546 = vmatprep.subr.mxu0 0.0
        %1547 = vmatpush1.xpose.msra.mxu0 0.0
        %1548 = vmatprep.subr.mxu0 0.0
        %1549 = vmatpush1.xpose.msra.mxu0 0.0
        %1550 = vmatprep.subr.mxu0 0.0
        %1551 = vmatpush1.xpose.msra.mxu0 0.0
        %1552 = vmatprep.subr.mxu0 0.0
        %1553 = vmatpush1.xpose.msra.mxu0 0.0
        %1554 = vmatprep.subr.mxu0 0.0
        %1555 = vmatpush1.xpose.msra.mxu0 0.0
        %1556 = vmatprep.subr.mxu0 0.0
        %1557 = vmatpush1.xpose.msra.mxu0 0.0
        %1558 = vmatprep.subr.mxu0 0.0
        %1559 = vmatpush1.xpose.msra.mxu0 0.0
        %1560 = vmatprep.subr.mxu0 0.0
        %1561 = vmatpush1.xpose.msra.mxu0 0.0
        %1562 = vmatprep.subr.mxu0 0.0
        %1563 = vmatpush1.xpose.msra.mxu0 0.0
        %1564 = vmatprep.subr.mxu0 0.0
        %1565 = vmatpush1.xpose.msra.mxu0 0.0
        %1566 = vmatprep.subr.mxu0 0.0
        %1567 = vmatpush1.xpose.msra.mxu0 0.0
        %1568 = vmatprep.subr.mxu0 0.0
        %1569 = vmatpush1.xpose.msra.mxu0 0.0
        %1570 = vmatprep.subr.mxu0 0.0
        %1571 = vmatpush1.xpose.msra.mxu0 0.0
        %1572 = vmatprep.mubr.f32.mxu0 0.0
        %1573 = vmatmul.mubr.f32.gmra.mrb[0].mxu0 %v1504
        %v1574 = vpop.f32.mrb[0].mxu0
        %v1575 = vadd.f32 %v415, %v1574
        %v1576 = vpop.f32.mrb[0].mxu0
        %1577 = vdwg.mxu0
        %1578 = vrot.lane.b32.xlu0 %v1497, 96
        %v1579 = vpop.permute.xlu0 %1578
        %v1580 = vsel %vm419, %v1490, 0
        %v1582 = vsel %vm419, %v1579, 0
        %1584 = vmatprep.subr.mxu0 0.0
        %1585 = vmatpush1.xpose.msra.mxu0 %v1582
        %1586 = vmatprep.subr.mxu0 0.0
        %1587 = vmatpush1.xpose.msra.mxu0 0.0
        %1588 = vmatprep.subr.mxu0 0.0
        %1589 = vmatpush1.xpose.msra.mxu0 0.0
        %1590 = vmatprep.subr.mxu0 0.0
        %1591 = vmatpush1.xpose.msra.mxu0 0.0
        %1592 = vmatprep.subr.mxu0 0.0
        %1593 = vmatpush1.xpose.msra.mxu0 0.0
        %1594 = vmatprep.subr.mxu0 0.0
        %1595 = vmatpush1.xpose.msra.mxu0 0.0
        %1596 = vmatprep.subr.mxu0 0.0
        %1597 = vmatpush1.xpose.msra.mxu0 0.0
        %1598 = vmatprep.subr.mxu0 0.0
        %1599 = vmatpush1.xpose.msra.mxu0 0.0
        %1600 = vmatprep.subr.mxu0 0.0
        %1601 = vmatpush1.xpose.msra.mxu0 0.0
        %1602 = vmatprep.subr.mxu0 0.0
        %1603 = vmatpush1.xpose.msra.mxu0 0.0
        %1604 = vmatprep.subr.mxu0 0.0
        %1605 = vmatpush1.xpose.msra.mxu0 0.0
        %1606 = vmatprep.subr.mxu0 0.0
        %1607 = vmatpush1.xpose.msra.mxu0 0.0
        %1608 = vmatprep.subr.mxu0 0.0
        %1609 = vmatpush1.xpose.msra.mxu0 0.0
        %1610 = vmatprep.subr.mxu0 0.0
        %1611 = vmatpush1.xpose.msra.mxu0 0.0
        %1612 = vmatprep.subr.mxu0 0.0
        %1613 = vmatpush1.xpose.msra.mxu0 0.0
        %1614 = vmatprep.subr.mxu0 0.0
        %1615 = vmatpush1.xpose.msra.mxu0 0.0
        %1616 = vmatprep.subr.mxu0 0.0
        %1617 = vmatpush1.xpose.msra.mxu0 0.0
        %1618 = vmatprep.subr.mxu0 0.0
        %1619 = vmatpush1.xpose.msra.mxu0 0.0
        %1620 = vmatprep.subr.mxu0 0.0
        %1621 = vmatpush1.xpose.msra.mxu0 0.0
        %1622 = vmatprep.subr.mxu0 0.0
        %1623 = vmatpush1.xpose.msra.mxu0 0.0
        %1624 = vmatprep.subr.mxu0 0.0
        %1625 = vmatpush1.xpose.msra.mxu0 0.0
        %1626 = vmatprep.subr.mxu0 0.0
        %1627 = vmatpush1.xpose.msra.mxu0 0.0
        %1628 = vmatprep.subr.mxu0 0.0
        %1629 = vmatpush1.xpose.msra.mxu0 0.0
        %1630 = vmatprep.subr.mxu0 0.0
        %1631 = vmatpush1.xpose.msra.mxu0 0.0
        %1632 = vmatprep.subr.mxu0 0.0
        %1633 = vmatpush1.xpose.msra.mxu0 0.0
        %1634 = vmatprep.subr.mxu0 0.0
        %1635 = vmatpush1.xpose.msra.mxu0 0.0
        %1636 = vmatprep.subr.mxu0 0.0
        %1637 = vmatpush1.xpose.msra.mxu0 0.0
        %1638 = vmatprep.subr.mxu0 0.0
        %1639 = vmatpush1.xpose.msra.mxu0 0.0
        %1640 = vmatprep.subr.mxu0 0.0
        %1641 = vmatpush1.xpose.msra.mxu0 0.0
        %1642 = vmatprep.subr.mxu0 0.0
        %1643 = vmatpush1.xpose.msra.mxu0 0.0
        %1644 = vmatprep.subr.mxu0 0.0
        %1645 = vmatpush1.xpose.msra.mxu0 0.0
        %1646 = vmatprep.subr.mxu0 0.0
        %1647 = vmatpush1.xpose.msra.mxu0 0.0
        %1648 = vmatprep.mubr.f32.mxu0 0.0
        %1649 = vmatmul.mubr.f32.gmra.mrb[0].mxu0 %v1580
        %v1650 = vpop.f32.mrb[0].mxu0
        %v1651 = vadd.f32 %v415, %v1650
        %v1652 = vpop.f32.mrb[0].mxu0
        %1653 = vdwg.mxu0
        %1654 = vrot.lane.b32.xlu0 %v1499, 96
        %v1655 = vpop.permute.xlu0 %1654
        %v1656 = vsel %vm419, %v1492, 0
        %v1658 = vsel %vm419, %v1655, 0
        %1660 = vmatprep.subr.mxu0 0.0
        %1661 = vmatpush1.xpose.msra.mxu0 %v1658
        %1662 = vmatprep.subr.mxu0 0.0
        %1663 = vmatpush1.xpose.msra.mxu0 0.0
        %1664 = vmatprep.subr.mxu0 0.0
        %1665 = vmatpush1.xpose.msra.mxu0 0.0
        %1666 = vmatprep.subr.mxu0 0.0
        %1667 = vmatpush1.xpose.msra.mxu0 0.0
        %1668 = vmatprep.subr.mxu0 0.0
        %1669 = vmatpush1.xpose.msra.mxu0 0.0
        %1670 = vmatprep.subr.mxu0 0.0
        %1671 = vmatpush1.xpose.msra.mxu0 0.0
        %1672 = vmatprep.subr.mxu0 0.0
        %1673 = vmatpush1.xpose.msra.mxu0 0.0
        %1674 = vmatprep.subr.mxu0 0.0
        %1675 = vmatpush1.xpose.msra.mxu0 0.0
        %1676 = vmatprep.subr.mxu0 0.0
        %1677 = vmatpush1.xpose.msra.mxu0 0.0
        %1678 = vmatprep.subr.mxu0 0.0
        %1679 = vmatpush1.xpose.msra.mxu0 0.0
        %1680 = vmatprep.subr.mxu0 0.0
        %1681 = vmatpush1.xpose.msra.mxu0 0.0
        %1682 = vmatprep.subr.mxu0 0.0
        %1683 = vmatpush1.xpose.msra.mxu0 0.0
        %1684 = vmatprep.subr.mxu0 0.0
        %1685 = vmatpush1.xpose.msra.mxu0 0.0
        %1686 = vmatprep.subr.mxu0 0.0
        %1687 = vmatpush1.xpose.msra.mxu0 0.0
        %1688 = vmatprep.subr.mxu0 0.0
        %1689 = vmatpush1.xpose.msra.mxu0 0.0
        %1690 = vmatprep.subr.mxu0 0.0
        %1691 = vmatpush1.xpose.msra.mxu0 0.0
        %1692 = vmatprep.subr.mxu0 0.0
        %1693 = vmatpush1.xpose.msra.mxu0 0.0
        %1694 = vmatprep.subr.mxu0 0.0
        %1695 = vmatpush1.xpose.msra.mxu0 0.0
        %1696 = vmatprep.subr.mxu0 0.0
        %1697 = vmatpush1.xpose.msra.mxu0 0.0
        %1698 = vmatprep.subr.mxu0 0.0
        %1699 = vmatpush1.xpose.msra.mxu0 0.0
        %1700 = vmatprep.subr.mxu0 0.0
        %1701 = vmatpush1.xpose.msra.mxu0 0.0
        %1702 = vmatprep.subr.mxu0 0.0
        %1703 = vmatpush1.xpose.msra.mxu0 0.0
        %1704 = vmatprep.subr.mxu0 0.0
        %1705 = vmatpush1.xpose.msra.mxu0 0.0
        %1706 = vmatprep.subr.mxu0 0.0
        %1707 = vmatpush1.xpose.msra.mxu0 0.0
        %1708 = vmatprep.subr.mxu0 0.0
        %1709 = vmatpush1.xpose.msra.mxu0 0.0
        %1710 = vmatprep.subr.mxu0 0.0
        %1711 = vmatpush1.xpose.msra.mxu0 0.0
        %1712 = vmatprep.subr.mxu0 0.0
        %1713 = vmatpush1.xpose.msra.mxu0 0.0
        %1714 = vmatprep.subr.mxu0 0.0
        %1715 = vmatpush1.xpose.msra.mxu0 0.0
        %1716 = vmatprep.subr.mxu0 0.0
        %1717 = vmatpush1.xpose.msra.mxu0 0.0
        %1718 = vmatprep.subr.mxu0 0.0
        %1719 = vmatpush1.xpose.msra.mxu0 0.0
        %1720 = vmatprep.subr.mxu0 0.0
        %1721 = vmatpush1.xpose.msra.mxu0 0.0
        %1722 = vmatprep.subr.mxu0 0.0
        %1723 = vmatpush1.xpose.msra.mxu0 0.0
        %1724 = vmatprep.mubr.f32.mxu0 0.0
        %1725 = vmatmul.mubr.f32.gmra.mrb[0].mxu0 %v1656
        %v1726 = vpop.f32.mrb[0].mxu0
        %v1727 = vadd.f32 %v415, %v1726
        %v1728 = vpop.f32.mrb[0].mxu0
        %1729 = vdwg.mxu0
        %1730 = vrot.lane.b32.xlu0 %v1501, 96
        %v1731 = vpop.permute.xlu0 %1730
        %v1732 = vsel %vm419, %v1494, 0
        %v1734 = vsel %vm419, %v1731, 0
        %1736 = vmatprep.subr.mxu0 0.0
        %1737 = vmatpush1.xpose.msra.mxu0 %v1734
        %1738 = vmatprep.subr.mxu0 0.0
        %1739 = vmatpush1.xpose.msra.mxu0 0.0
        %1740 = vmatprep.subr.mxu0 0.0
        %1741 = vmatpush1.xpose.msra.mxu0 0.0
        %1742 = vmatprep.subr.mxu0 0.0
        %1743 = vmatpush1.xpose.msra.mxu0 0.0
        %1744 = vmatprep.subr.mxu0 0.0
        %1745 = vmatpush1.xpose.msra.mxu0 0.0
        %1746 = vmatprep.subr.mxu0 0.0
        %1747 = vmatpush1.xpose.msra.mxu0 0.0
        %1748 = vmatprep.subr.mxu0 0.0
        %1749 = vmatpush1.xpose.msra.mxu0 0.0
        %1750 = vmatprep.subr.mxu0 0.0
        %1751 = vmatpush1.xpose.msra.mxu0 0.0
        %1752 = vmatprep.subr.mxu0 0.0
        %1753 = vmatpush1.xpose.msra.mxu0 0.0
        %1754 = vmatprep.subr.mxu0 0.0
        %1755 = vmatpush1.xpose.msra.mxu0 0.0
        %1756 = vmatprep.subr.mxu0 0.0
        %1757 = vmatpush1.xpose.msra.mxu0 0.0
        %1758 = vmatprep.subr.mxu0 0.0
        %1759 = vmatpush1.xpose.msra.mxu0 0.0
        %1760 = vmatprep.subr.mxu0 0.0
        %1761 = vmatpush1.xpose.msra.mxu0 0.0
        %1762 = vmatprep.subr.mxu0 0.0
        %1763 = vmatpush1.xpose.msra.mxu0 0.0
        %1764 = vmatprep.subr.mxu0 0.0
        %1765 = vmatpush1.xpose.msra.mxu0 0.0
        %1766 = vmatprep.subr.mxu0 0.0
        %1767 = vmatpush1.xpose.msra.mxu0 0.0
        %1768 = vmatprep.subr.mxu0 0.0
        %1769 = vmatpush1.xpose.msra.mxu0 0.0
        %1770 = vmatprep.subr.mxu0 0.0
        %1771 = vmatpush1.xpose.msra.mxu0 0.0
        %1772 = vmatprep.subr.mxu0 0.0
        %1773 = vmatpush1.xpose.msra.mxu0 0.0
        %1774 = vmatprep.subr.mxu0 0.0
        %1775 = vmatpush1.xpose.msra.mxu0 0.0
        %1776 = vmatprep.subr.mxu0 0.0
        %1777 = vmatpush1.xpose.msra.mxu0 0.0
        %1778 = vmatprep.subr.mxu0 0.0
        %1779 = vmatpush1.xpose.msra.mxu0 0.0
        %1780 = vmatprep.subr.mxu0 0.0
        %1781 = vmatpush1.xpose.msra.mxu0 0.0
        %1782 = vmatprep.subr.mxu0 0.0
        %1783 = vmatpush1.xpose.msra.mxu0 0.0
        %1784 = vmatprep.subr.mxu0 0.0
        %1785 = vmatpush1.xpose.msra.mxu0 0.0
        %1786 = vmatprep.subr.mxu0 0.0
        %1787 = vmatpush1.xpose.msra.mxu0 0.0
        %1788 = vmatprep.subr.mxu0 0.0
        %1789 = vmatpush1.xpose.msra.mxu0 0.0
        %1790 = vmatprep.subr.mxu0 0.0
        %1791 = vmatpush1.xpose.msra.mxu0 0.0
        %1792 = vmatprep.subr.mxu0 0.0
        %1793 = vmatpush1.xpose.msra.mxu0 0.0
        %1794 = vmatprep.subr.mxu0 0.0
        %1795 = vmatpush1.xpose.msra.mxu0 0.0
        %1796 = vmatprep.subr.mxu0 0.0
        %1797 = vmatpush1.xpose.msra.mxu0 0.0
        %1798 = vmatprep.subr.mxu0 0.0
        %1799 = vmatpush1.xpose.msra.mxu0 0.0
        %1800 = vmatprep.mubr.f32.mxu0 0.0
        %1801 = vmatmul.mubr.f32.gmra.mrb[0].mxu0 %v1732
        %v1802 = vpop.f32.mrb[0].mxu0
        %v1803 = vadd.f32 %v415, %v1802
        %v1804 = vpop.f32.mrb[0].mxu0
        %1805 = vdwg.mxu0
        %v1806 = vsel %vm419, %v1575, -inf
        %1807 = vmax.xlane.f32.xlu0 %v1806
        %v1808 = vpop.xlane.xlu0 %1807
        %v1809 = vsel %vm419, %v1651, -inf
        %1810 = vmax.xlane.f32.xlu0 %v1809
        %v1811 = vpop.xlane.xlu0 %1810
        %v1812 = vsel %vm419, %v1727, -inf
        %1813 = vmax.xlane.f32.xlu0 %v1812
        %v1814 = vpop.xlane.xlu0 %1813
        %v1815 = vsel %vm419, %v1803, -inf
        %1816 = vmax.xlane.f32.xlu0 %v1815
        %v1817 = vpop.xlane.xlu0 %1816
        %v1818 = vsub.f32 %v1575, %v1808
        %v1819 = vsub.f32 %v1651, %v1811
        %v1820 = vsub.f32 %v1727, %v1814
        %v1821 = vsub.f32 %v1803, %v1817
        %v1822 = vmul.f32 %v1818, 1.442695
        %v1823 = vpow.pop %v1822
        %v1824 = vmul.f32 %v1819, 1.442695
        %v1825 = vpow.pop %v1824
        %v1826 = vmul.f32 %v1820, 1.442695
        %v1827 = vpow.pop %v1826
        %v1828 = vmul.f32 %v1821, 1.442695
        %v1829 = vpow.pop %v1828
        %v1830 = vsel %vm419, %v1823, 0.0
        %1831 = vadd.xlane.f32.xlu0 %v1830
        %v1832 = vpop.xlane.xlu0 %1831
        %v1833 = vsel %vm419, %v1825, 0.0
        %1834 = vadd.xlane.f32.xlu0 %v1833
        %v1835 = vpop.xlane.xlu0 %1834
        %v1836 = vsel %vm419, %v1827, 0.0
        %1837 = vadd.xlane.f32.xlu0 %v1836
        %v1838 = vpop.xlane.xlu0 %1837
        %v1839 = vsel %vm419, %v1829, 0.0
        %1840 = vadd.xlane.f32.xlu0 %v1839
        %v1841 = vpop.xlane.xlu0 %1840
        %v1842 = vrcp.pop %v1832
        %v1843 = vrcp.pop %v1835
        %v1844 = vrcp.pop %v1838
        %v1845 = vrcp.pop %v1841
        %v1846 = vmul.f32 %v1823, %v1842
        %v1847 = vmul.f32 %v1825, %v1843
        %v1848 = vmul.f32 %v1827, %v1844
        %v1849 = vmul.f32 %v1829, %v1845
        %1850 = vrot.lane.b32.xlu0 %v1484, 64
        %v1851 = vpop.permute.xlu0 %1850
        %v1854 = vsel %vm419, %v1846, 0
        %1856 = vmatprep.subr.mxu0 0.0
        %1857 = vmatpush1.msra.mxu0 %v1851
        %1858 = vmatprep.subr.mxu0 0.0
        %1859 = vmatpush1.msra.mxu0 0.0
        %1860 = vmatprep.subr.mxu0 0.0
        %1861 = vmatpush1.msra.mxu0 0.0
        %1862 = vmatprep.subr.mxu0 0.0
        %1863 = vmatpush1.msra.mxu0 0.0
        %1864 = vmatprep.subr.mxu0 0.0
        %1865 = vmatpush1.msra.mxu0 0.0
        %1866 = vmatprep.subr.mxu0 0.0
        %1867 = vmatpush1.msra.mxu0 0.0
        %1868 = vmatprep.subr.mxu0 0.0
        %1869 = vmatpush1.msra.mxu0 0.0
        %1870 = vmatprep.subr.mxu0 0.0
        %1871 = vmatpush1.msra.mxu0 0.0
        %1872 = vmatprep.subr.mxu0 0.0
        %1873 = vmatpush1.msra.mxu0 0.0
        %1874 = vmatprep.subr.mxu0 0.0
        %1875 = vmatpush1.msra.mxu0 0.0
        %1876 = vmatprep.subr.mxu0 0.0
        %1877 = vmatpush1.msra.mxu0 0.0
        %1878 = vmatprep.subr.mxu0 0.0
        %1879 = vmatpush1.msra.mxu0 0.0
        %1880 = vmatprep.subr.mxu0 0.0
        %1881 = vmatpush1.msra.mxu0 0.0
        %1882 = vmatprep.subr.mxu0 0.0
        %1883 = vmatpush1.msra.mxu0 0.0
        %1884 = vmatprep.subr.mxu0 0.0
        %1885 = vmatpush1.msra.mxu0 0.0
        %1886 = vmatprep.subr.mxu0 0.0
        %1887 = vmatpush1.msra.mxu0 0.0
        %1888 = vmatprep.subr.mxu0 0.0
        %1889 = vmatpush1.msra.mxu0 0.0
        %1890 = vmatprep.subr.mxu0 0.0
        %1891 = vmatpush1.msra.mxu0 0.0
        %1892 = vmatprep.subr.mxu0 0.0
        %1893 = vmatpush1.msra.mxu0 0.0
        %1894 = vmatprep.subr.mxu0 0.0
        %1895 = vmatpush1.msra.mxu0 0.0
        %1896 = vmatprep.subr.mxu0 0.0
        %1897 = vmatpush1.msra.mxu0 0.0
        %1898 = vmatprep.subr.mxu0 0.0
        %1899 = vmatpush1.msra.mxu0 0.0
        %1900 = vmatprep.subr.mxu0 0.0
        %1901 = vmatpush1.msra.mxu0 0.0
        %1902 = vmatprep.subr.mxu0 0.0
        %1903 = vmatpush1.msra.mxu0 0.0
        %1904 = vmatprep.subr.mxu0 0.0
        %1905 = vmatpush1.msra.mxu0 0.0
        %1906 = vmatprep.subr.mxu0 0.0
        %1907 = vmatpush1.msra.mxu0 0.0
        %1908 = vmatprep.subr.mxu0 0.0
        %1909 = vmatpush1.msra.mxu0 0.0
        %1910 = vmatprep.subr.mxu0 0.0
        %1911 = vmatpush1.msra.mxu0 0.0
        %1912 = vmatprep.subr.mxu0 0.0
        %1913 = vmatpush1.msra.mxu0 0.0
        %1914 = vmatprep.subr.mxu0 0.0
        %1915 = vmatpush1.msra.mxu0 0.0
        %1916 = vmatprep.subr.mxu0 0.0
        %1917 = vmatpush1.msra.mxu0 0.0
        %1918 = vmatprep.subr.mxu0 0.0
        %1919 = vmatpush1.msra.mxu0 0.0
        %1920 = vmatprep.mubr.f32.mxu0 0.0
        %1921 = vmatmul.mubr.f32.gmra.mrb[0].mxu0 %v1854
        %v1922 = vpop.f32.mrb[0].mxu0
        %v1923 = vadd.f32 0.0, %v1922
        %v1924 = vpop.f32.mrb[0].mxu0
        %1925 = vdwg.mxu0
        %1926 = vrot.lane.b32.xlu0 %v1497, 64
        %v1927 = vpop.permute.xlu0 %1926
        %v1930 = vsel %vm419, %v1847, 0
        %1932 = vmatprep.subr.mxu0 0.0
        %1933 = vmatpush1.msra.mxu0 %v1927
        %1934 = vmatprep.subr.mxu0 0.0
        %1935 = vmatpush1.msra.mxu0 0.0
        %1936 = vmatprep.subr.mxu0 0.0
        %1937 = vmatpush1.msra.mxu0 0.0
        %1938 = vmatprep.subr.mxu0 0.0
        %1939 = vmatpush1.msra.mxu0 0.0
        %1940 = vmatprep.subr.mxu0 0.0
        %1941 = vmatpush1.msra.mxu0 0.0
        %1942 = vmatprep.subr.mxu0 0.0
        %1943 = vmatpush1.msra.mxu0 0.0
        %1944 = vmatprep.subr.mxu0 0.0
        %1945 = vmatpush1.msra.mxu0 0.0
        %1946 = vmatprep.subr.mxu0 0.0
        %1947 = vmatpush1.msra.mxu0 0.0
        %1948 = vmatprep.subr.mxu0 0.0
        %1949 = vmatpush1.msra.mxu0 0.0
        %1950 = vmatprep.subr.mxu0 0.0
        %1951 = vmatpush1.msra.mxu0 0.0
        %1952 = vmatprep.subr.mxu0 0.0
        %1953 = vmatpush1.msra.mxu0 0.0
        %1954 = vmatprep.subr.mxu0 0.0
        %1955 = vmatpush1.msra.mxu0 0.0
        %1956 = vmatprep.subr.mxu0 0.0
        %1957 = vmatpush1.msra.mxu0 0.0
        %1958 = vmatprep.subr.mxu0 0.0
        %1959 = vmatpush1.msra.mxu0 0.0
        %1960 = vmatprep.subr.mxu0 0.0
        %1961 = vmatpush1.msra.mxu0 0.0
        %1962 = vmatprep.subr.mxu0 0.0
        %1963 = vmatpush1.msra.mxu0 0.0
        %1964 = vmatprep.subr.mxu0 0.0
        %1965 = vmatpush1.msra.mxu0 0.0
        %1966 = vmatprep.subr.mxu0 0.0
        %1967 = vmatpush1.msra.mxu0 0.0
        %1968 = vmatprep.subr.mxu0 0.0
        %1969 = vmatpush1.msra.mxu0 0.0
        %1970 = vmatprep.subr.mxu0 0.0
        %1971 = vmatpush1.msra.mxu0 0.0
        %1972 = vmatprep.subr.mxu0 0.0
        %1973 = vmatpush1.msra.mxu0 0.0
        %1974 = vmatprep.subr.mxu0 0.0
        %1975 = vmatpush1.msra.mxu0 0.0
        %1976 = vmatprep.subr.mxu0 0.0
        %1977 = vmatpush1.msra.mxu0 0.0
        %1978 = vmatprep.subr.mxu0 0.0
        %1979 = vmatpush1.msra.mxu0 0.0
        %1980 = vmatprep.subr.mxu0 0.0
        %1981 = vmatpush1.msra.mxu0 0.0
        %1982 = vmatprep.subr.mxu0 0.0
        %1983 = vmatpush1.msra.mxu0 0.0
        %1984 = vmatprep.subr.mxu0 0.0
        %1985 = vmatpush1.msra.mxu0 0.0
        %1986 = vmatprep.subr.mxu0 0.0
        %1987 = vmatpush1.msra.mxu0 0.0
        %1988 = vmatprep.subr.mxu0 0.0
        %1989 = vmatpush1.msra.mxu0 0.0
        %1990 = vmatprep.subr.mxu0 0.0
        %1991 = vmatpush1.msra.mxu0 0.0
        %1992 = vmatprep.subr.mxu0 0.0
        %1993 = vmatpush1.msra.mxu0 0.0
        %1994 = vmatprep.subr.mxu0 0.0
        %1995 = vmatpush1.msra.mxu0 0.0
        %1996 = vmatprep.mubr.f32.mxu0 0.0
        %1997 = vmatmul.mubr.f32.gmra.mrb[0].mxu0 %v1930
        %v1998 = vpop.f32.mrb[0].mxu0
        %v1999 = vadd.f32 0.0, %v1998
        %v2000 = vpop.f32.mrb[0].mxu0
        %2001 = vdwg.mxu0
        %2002 = vrot.lane.b32.xlu0 %v1499, 64
        %v2003 = vpop.permute.xlu0 %2002
        %v2006 = vsel %vm419, %v1848, 0
        %2008 = vmatprep.subr.mxu0 0.0
        %2009 = vmatpush1.msra.mxu0 %v2003
        %2010 = vmatprep.subr.mxu0 0.0
        %2011 = vmatpush1.msra.mxu0 0.0
        %2012 = vmatprep.subr.mxu0 0.0
        %2013 = vmatpush1.msra.mxu0 0.0
        %2014 = vmatprep.subr.mxu0 0.0
        %2015 = vmatpush1.msra.mxu0 0.0
        %2016 = vmatprep.subr.mxu0 0.0
        %2017 = vmatpush1.msra.mxu0 0.0
        %2018 = vmatprep.subr.mxu0 0.0
        %2019 = vmatpush1.msra.mxu0 0.0
        %2020 = vmatprep.subr.mxu0 0.0
        %2021 = vmatpush1.msra.mxu0 0.0
        %2022 = vmatprep.subr.mxu0 0.0
        %2023 = vmatpush1.msra.mxu0 0.0
        %2024 = vmatprep.subr.mxu0 0.0
        %2025 = vmatpush1.msra.mxu0 0.0
        %2026 = vmatprep.subr.mxu0 0.0
        %2027 = vmatpush1.msra.mxu0 0.0
        %2028 = vmatprep.subr.mxu0 0.0
        %2029 = vmatpush1.msra.mxu0 0.0
        %2030 = vmatprep.subr.mxu0 0.0
        %2031 = vmatpush1.msra.mxu0 0.0
        %2032 = vmatprep.subr.mxu0 0.0
        %2033 = vmatpush1.msra.mxu0 0.0
        %2034 = vmatprep.subr.mxu0 0.0
        %2035 = vmatpush1.msra.mxu0 0.0
        %2036 = vmatprep.subr.mxu0 0.0
        %2037 = vmatpush1.msra.mxu0 0.0
        %2038 = vmatprep.subr.mxu0 0.0
        %2039 = vmatpush1.msra.mxu0 0.0
        %2040 = vmatprep.subr.mxu0 0.0
        %2041 = vmatpush1.msra.mxu0 0.0
        %2042 = vmatprep.subr.mxu0 0.0
        %2043 = vmatpush1.msra.mxu0 0.0
        %2044 = vmatprep.subr.mxu0 0.0
        %2045 = vmatpush1.msra.mxu0 0.0
        %2046 = vmatprep.subr.mxu0 0.0
        %2047 = vmatpush1.msra.mxu0 0.0
        %2048 = vmatprep.subr.mxu0 0.0
        %2049 = vmatpush1.msra.mxu0 0.0
        %2050 = vmatprep.subr.mxu0 0.0
        %2051 = vmatpush1.msra.mxu0 0.0
        %2052 = vmatprep.subr.mxu0 0.0
        %2053 = vmatpush1.msra.mxu0 0.0
        %2054 = vmatprep.subr.mxu0 0.0
        %2055 = vmatpush1.msra.mxu0 0.0
        %2056 = vmatprep.subr.mxu0 0.0
        %2057 = vmatpush1.msra.mxu0 0.0
        %2058 = vmatprep.subr.mxu0 0.0
        %2059 = vmatpush1.msra.mxu0 0.0
        %2060 = vmatprep.subr.mxu0 0.0
        %2061 = vmatpush1.msra.mxu0 0.0
        %2062 = vmatprep.subr.mxu0 0.0
        %2063 = vmatpush1.msra.mxu0 0.0
        %2064 = vmatprep.subr.mxu0 0.0
        %2065 = vmatpush1.msra.mxu0 0.0
        %2066 = vmatprep.subr.mxu0 0.0
        %2067 = vmatpush1.msra.mxu0 0.0
        %2068 = vmatprep.subr.mxu0 0.0
        %2069 = vmatpush1.msra.mxu0 0.0
        %2070 = vmatprep.subr.mxu0 0.0
        %2071 = vmatpush1.msra.mxu0 0.0
        %2072 = vmatprep.mubr.f32.mxu0 0.0
        %2073 = vmatmul.mubr.f32.gmra.mrb[0].mxu0 %v2006
        %v2074 = vpop.f32.mrb[0].mxu0
        %v2075 = vadd.f32 0.0, %v2074
        %v2076 = vpop.f32.mrb[0].mxu0
        %2077 = vdwg.mxu0
        %2078 = vrot.lane.b32.xlu0 %v1501, 64
        %v2079 = vpop.permute.xlu0 %2078
        %v2082 = vsel %vm419, %v1849, 0
        %2084 = vmatprep.subr.mxu0 0.0
        %2085 = vmatpush1.msra.mxu0 %v2079
        %2086 = vmatprep.subr.mxu0 0.0
        %2087 = vmatpush1.msra.mxu0 0.0
        %2088 = vmatprep.subr.mxu0 0.0
        %2089 = vmatpush1.msra.mxu0 0.0
        %2090 = vmatprep.subr.mxu0 0.0
        %2091 = vmatpush1.msra.mxu0 0.0
        %2092 = vmatprep.subr.mxu0 0.0
        %2093 = vmatpush1.msra.mxu0 0.0
        %2094 = vmatprep.subr.mxu0 0.0
        %2095 = vmatpush1.msra.mxu0 0.0
        %2096 = vmatprep.subr.mxu0 0.0
        %2097 = vmatpush1.msra.mxu0 0.0
        %2098 = vmatprep.subr.mxu0 0.0
        %2099 = vmatpush1.msra.mxu0 0.0
        %2100 = vmatprep.subr.mxu0 0.0
        %2101 = vmatpush1.msra.mxu0 0.0
        %2102 = vmatprep.subr.mxu0 0.0
        %2103 = vmatpush1.msra.mxu0 0.0
        %2104 = vmatprep.subr.mxu0 0.0
        %2105 = vmatpush1.msra.mxu0 0.0
        %2106 = vmatprep.subr.mxu0 0.0
        %2107 = vmatpush1.msra.mxu0 0.0
        %2108 = vmatprep.subr.mxu0 0.0
        %2109 = vmatpush1.msra.mxu0 0.0
        %2110 = vmatprep.subr.mxu0 0.0
        %2111 = vmatpush1.msra.mxu0 0.0
        %2112 = vmatprep.subr.mxu0 0.0
        %2113 = vmatpush1.msra.mxu0 0.0
        %2114 = vmatprep.subr.mxu0 0.0
        %2115 = vmatpush1.msra.mxu0 0.0
        %2116 = vmatprep.subr.mxu0 0.0
        %2117 = vmatpush1.msra.mxu0 0.0
        %2118 = vmatprep.subr.mxu0 0.0
        %2119 = vmatpush1.msra.mxu0 0.0
        %2120 = vmatprep.subr.mxu0 0.0
        %2121 = vmatpush1.msra.mxu0 0.0
        %2122 = vmatprep.subr.mxu0 0.0
        %2123 = vmatpush1.msra.mxu0 0.0
        %2124 = vmatprep.subr.mxu0 0.0
        %2125 = vmatpush1.msra.mxu0 0.0
        %2126 = vmatprep.subr.mxu0 0.0
        %2127 = vmatpush1.msra.mxu0 0.0
        %2128 = vmatprep.subr.mxu0 0.0
        %2129 = vmatpush1.msra.mxu0 0.0
        %2130 = vmatprep.subr.mxu0 0.0
        %2131 = vmatpush1.msra.mxu0 0.0
        %2132 = vmatprep.subr.mxu0 0.0
        %2133 = vmatpush1.msra.mxu0 0.0
        %2134 = vmatprep.subr.mxu0 0.0
        %2135 = vmatpush1.msra.mxu0 0.0
        %2136 = vmatprep.subr.mxu0 0.0
        %2137 = vmatpush1.msra.mxu0 0.0
        %2138 = vmatprep.subr.mxu0 0.0
        %2139 = vmatpush1.msra.mxu0 0.0
        %2140 = vmatprep.subr.mxu0 0.0
        %2141 = vmatpush1.msra.mxu0 0.0
        %2142 = vmatprep.subr.mxu0 0.0
        %2143 = vmatpush1.msra.mxu0 0.0
        %2144 = vmatprep.subr.mxu0 0.0
        %2145 = vmatpush1.msra.mxu0 0.0
        %2146 = vmatprep.subr.mxu0 0.0
        %2147 = vmatpush1.msra.mxu0 0.0
        %2148 = vmatprep.mubr.f32.mxu0 0.0
        %2149 = vmatmul.mubr.f32.gmra.mrb[0].mxu0 %v2082
        %v2150 = vpop.f32.mrb[0].mxu0
        %v2151 = vadd.f32 0.0, %v2150
        %v2152 = vpop.f32.mrb[0].mxu0
        %2153 = vdwg.mxu0
        %2155 = vrot.lane.b32.xlu0 %v1999, 8
        %v2156 = vpop.permute.xlu0 %2155
        %2159 = vrot.lane.b32.xlu0 %v2075, 16
        %v2160 = vpop.permute.xlu0 %2159
        %2163 = vrot.lane.b32.xlu0 %v2151, 24
        %v2164 = vpop.permute.xlu0 %2163
        %v2166 = vsel %vm419, %v1923, %v2156
        %v2167 = vsel %vm1083, %v2166, %v2160
        %v2168 = vsel %vm1085, %v2167, %v2164
        %v2169 = vlaneseq
        %v2170 = vshrl.u32 %v2169, 7
        %v2171 = vsub.s32 0, %v2170
        %v2172 = vrot.slane %v1409, %v2171
        %v2174 = vsel %vm277, %v2168, 0
        %2176 = vmatprep.subr.mxu0 0.0
        %2177 = vmatpush1.msra.mxu0 %v1405
        %2178 = vmatprep.subr.mxu0 0.0
        %2179 = vmatpush1.msra.mxu0 %v1406
        %2180 = vmatprep.subr.mxu0 0.0
        %2181 = vmatpush1.msra.mxu0 %v1407
        %2182 = vmatprep.subr.mxu0 0.0
        %2183 = vmatpush1.msra.mxu0 %v1408
        %2184 = vmatprep.subr.mxu0 0.0
        %2185 = vmatpush1.msra.mxu0 0.0
        %2186 = vmatprep.subr.mxu0 0.0
        %2187 = vmatpush1.msra.mxu0 0.0
        %2188 = vmatprep.subr.mxu0 0.0
        %2189 = vmatpush1.msra.mxu0 0.0
        %2190 = vmatprep.subr.mxu0 0.0
        %2191 = vmatpush1.msra.mxu0 0.0
        %2192 = vmatprep.subr.mxu0 0.0
        %2193 = vmatpush1.msra.mxu0 0.0
        %2194 = vmatprep.subr.mxu0 0.0
        %2195 = vmatpush1.msra.mxu0 0.0
        %2196 = vmatprep.subr.mxu0 0.0
        %2197 = vmatpush1.msra.mxu0 0.0
        %2198 = vmatprep.subr.mxu0 0.0
        %2199 = vmatpush1.msra.mxu0 0.0
        %2200 = vmatprep.subr.mxu0 0.0
        %2201 = vmatpush1.msra.mxu0 0.0
        %2202 = vmatprep.subr.mxu0 0.0
        %2203 = vmatpush1.msra.mxu0 0.0
        %2204 = vmatprep.subr.mxu0 0.0
        %2205 = vmatpush1.msra.mxu0 0.0
        %2206 = vmatprep.subr.mxu0 0.0
        %2207 = vmatpush1.msra.mxu0 0.0
        %2208 = vmatprep.subr.mxu0 0.0
        %2209 = vmatpush1.msra.mxu0 0.0
        %2210 = vmatprep.subr.mxu0 0.0
        %2211 = vmatpush1.msra.mxu0 0.0
        %2212 = vmatprep.subr.mxu0 0.0
        %2213 = vmatpush1.msra.mxu0 0.0
        %2214 = vmatprep.subr.mxu0 0.0
        %2215 = vmatpush1.msra.mxu0 0.0
        %2216 = vmatprep.subr.mxu0 0.0
        %2217 = vmatpush1.msra.mxu0 0.0
        %2218 = vmatprep.subr.mxu0 0.0
        %2219 = vmatpush1.msra.mxu0 0.0
        %2220 = vmatprep.subr.mxu0 0.0
        %2221 = vmatpush1.msra.mxu0 0.0
        %2222 = vmatprep.subr.mxu0 0.0
        %2223 = vmatpush1.msra.mxu0 0.0
        %2224 = vmatprep.subr.mxu0 0.0
        %2225 = vmatpush1.msra.mxu0 0.0
        %2226 = vmatprep.subr.mxu0 0.0
        %2227 = vmatpush1.msra.mxu0 0.0
        %2228 = vmatprep.subr.mxu0 0.0
        %2229 = vmatpush1.msra.mxu0 0.0
        %2230 = vmatprep.subr.mxu0 0.0
        %2231 = vmatpush1.msra.mxu0 0.0
        %2232 = vmatprep.subr.mxu0 0.0
        %2233 = vmatpush1.msra.mxu0 0.0
        %2234 = vmatprep.subr.mxu0 0.0
        %2235 = vmatpush1.msra.mxu0 0.0
        %2236 = vmatprep.subr.mxu0 0.0
        %2237 = vmatpush1.msra.mxu0 0.0
        %2238 = vmatprep.subr.mxu0 0.0
        %2239 = vmatpush1.msra.mxu0 0.0
        %2240 = vmatprep.mubr.f32.mxu0 0.0
        %2241 = vmatmul.mubr.f32.gmra.mrb[0].mxu0 %v2174
        %v2242 = vpop.f32.mrb[0].mxu0
        %v2243 = vadd.f32 %v2172, %v2242
        %v2244 = vpop.f32.mrb[0].mxu0
        %2245 = vdwg.mxu0
        %v2246 = vadd.f32 %v1367, %v2243
        %v2247 = vld [vmem:[%s4 + $0x1b0] sm:$0x1]
        %v2248 = vld [vmem:[%s4 + $0x1b8] sm:$0x1]
        %v2249 = vsel %vm277, %v2246, 0.0
        %2250 = vadd.xlane.f32.xlu0 %v2249
        %v2251 = vpop.xlane.xlu0 %2250
        %v2252 = vmul.f32 %v2251, %v281
        %v2253 = vsub.f32 %v2246, %v2252
        %v2254 = vmul.f32 %v2253, %v2253
        %v2255 = vsel %vm277, %v2254, 0.0
        %2256 = vadd.xlane.f32.xlu0 %v2255
        %v2257 = vpop.xlane.xlu0 %2256
        %v2258 = vmul.f32 %v2257, 0.032258064
        %v2259 = vrsqrt.pop %v2258
        %v2260 = vmul.f32 %v2258, %v2259
        %vm2261 = vcmp.eq.f32.partialorder %v2258, inf
        %v2262 = vsel %vm2261, %v2258, %v2260
        %vm2263 = vcmp.eq.f32.partialorder %v2258, 0.0
        %v2264 = vand.u32 %v2258, 2147483648
        %v2265 = vsel %vm2263, %v2264, %v2262
        %v2266 = vlaneseq
        %v2267 = vshrl.u32 %v2266, 7
        %v2268 = vsub.s32 0, %v2267
        %v2269 = vrot.slane %v2247, %v2268
        %v2270 = vmul.f32 %v2269, %v2253
        %v2271 = vadd.f32 %v2265, 1e-06
        %v2272 = vrcp.pop %v2271
        %v2273 = vmul.f32 %v2270, %v2272
        %v2274 = vlaneseq
        %v2275 = vshrl.u32 %v2274, 7
        %v2276 = vsub.s32 0, %v2275
        %v2277 = vrot.slane %v2248, %v2276
        %v2278 = vadd.f32 %v2273, %v2277
        %v2279 = vld [vmem:[%s4 + $0x130] sm:$0xff]
        %v2280 = vld [vmem:[%s4 + $0x138] sm:$0xff]
        %v2281 = vld [vmem:[%s4 + $0x140] sm:$0xff]
        %v2282 = vld [vmem:[%s4 + $0x148] sm:$0xff]
        %v2283 = vld [vmem:[%s4 + $0x150] sm:$0x1]
        %v2284 = vld [vmem:[%s4 + $0x158] sm:$0xff]
        %v2285 = vld [vmem:[%s4 + $0x160] sm:$0xff]
        %v2286 = vld [vmem:[%s4 + $0x168] sm:$0xff]
        %v2287 = vld [vmem:[%s4 + $0x170] sm:$0xff]
        %v2288 = vld [vmem:[%s4 + $0x178] sm:$0xff]
        %v2289 = vld [vmem:[%s4 + $0x180] sm:$0xff]
        %v2290 = vld [vmem:[%s4 + $0x188] sm:$0xff]
        %v2291 = vld [vmem:[%s4 + $0x190] sm:$0xff]
        %v2292 = vld [vmem:[%s4 + $0x198] sm:$0x1]
        %v2293 = vlaneseq
        %v2294 = vshrl.u32 %v2293, 7
        %v2295 = vsub.s32 0, %v2294
        %v2296 = vrot.slane %v2283, %v2295
        %v2298 = vsel %vm277, %v2278, 0
        %2300 = vmatprep.subr.mxu0 0.0
        %2301 = vmatpush1.msra.mxu0 %v2279
        %2302 = vmatprep.subr.mxu0 0.0
        %2303 = vmatpush1.msra.mxu0 %v2280
        %2304 = vmatprep.subr.mxu0 0.0
        %2305 = vmatpush1.msra.mxu0 %v2281
        %2306 = vmatprep.subr.mxu0 0.0
        %2307 = vmatpush1.msra.mxu0 %v2282
        %2308 = vmatprep.subr.mxu0 0.0
        %2309 = vmatpush1.msra.mxu0 0.0
        %2310 = vmatprep.subr.mxu0 0.0
        %2311 = vmatpush1.msra.mxu0 0.0
        %2312 = vmatprep.subr.mxu0 0.0
        %2313 = vmatpush1.msra.mxu0 0.0
        %2314 = vmatprep.subr.mxu0 0.0
        %2315 = vmatpush1.msra.mxu0 0.0
        %2316 = vmatprep.subr.mxu0 0.0
        %2317 = vmatpush1.msra.mxu0 0.0
        %2318 = vmatprep.subr.mxu0 0.0
        %2319 = vmatpush1.msra.mxu0 0.0
        %2320 = vmatprep.subr.mxu0 0.0
        %2321 = vmatpush1.msra.mxu0 0.0
        %2322 = vmatprep.subr.mxu0 0.0
        %2323 = vmatpush1.msra.mxu0 0.0
        %2324 = vmatprep.subr.mxu0 0.0
        %2325 = vmatpush1.msra.mxu0 0.0
        %2326 = vmatprep.subr.mxu0 0.0
        %2327 = vmatpush1.msra.mxu0 0.0
        %2328 = vmatprep.subr.mxu0 0.0
        %2329 = vmatpush1.msra.mxu0 0.0
        %2330 = vmatprep.subr.mxu0 0.0
        %2331 = vmatpush1.msra.mxu0 0.0
        %2332 = vmatprep.subr.mxu0 0.0
        %2333 = vmatpush1.msra.mxu0 0.0
        %2334 = vmatprep.subr.mxu0 0.0
        %2335 = vmatpush1.msra.mxu0 0.0
        %2336 = vmatprep.subr.mxu0 0.0
        %2337 = vmatpush1.msra.mxu0 0.0
        %2338 = vmatprep.subr.mxu0 0.0
        %2339 = vmatpush1.msra.mxu0 0.0
        %2340 = vmatprep.subr.mxu0 0.0
        %2341 = vmatpush1.msra.mxu0 0.0
        %2342 = vmatprep.subr.mxu0 0.0
        %2343 = vmatpush1.msra.mxu0 0.0
        %2344 = vmatprep.subr.mxu0 0.0
        %2345 = vmatpush1.msra.mxu0 0.0
        %2346 = vmatprep.subr.mxu0 0.0
        %2347 = vmatpush1.msra.mxu0 0.0
        %2348 = vmatprep.subr.mxu0 0.0
        %2349 = vmatpush1.msra.mxu0 0.0
        %2350 = vmatprep.subr.mxu0 0.0
        %2351 = vmatpush1.msra.mxu0 0.0
        %2352 = vmatprep.subr.mxu0 0.0
        %2353 = vmatpush1.msra.mxu0 0.0
        %2354 = vmatprep.subr.mxu0 0.0
        %2355 = vmatpush1.msra.mxu0 0.0
        %2356 = vmatprep.subr.mxu0 0.0
        %2357 = vmatpush1.msra.mxu0 0.0
        %2358 = vmatprep.subr.mxu0 0.0
        %2359 = vmatpush1.msra.mxu0 0.0
        %2360 = vmatprep.subr.mxu0 0.0
        %2361 = vmatpush1.msra.mxu0 0.0
        %2362 = vmatprep.subr.mxu0 0.0
        %2363 = vmatpush1.msra.mxu0 0.0
        %2364 = vmatprep.mubr.f32.mxu0 0.0
        %2365 = vmatmul.mubr.f32.gmra.mrb[0].mxu0 %v2298
        %v2366 = vpop.f32.mrb[0].mxu0
        %v2367 = vadd.f32 %v2296, %v2366
        %v2368 = vpop.f32.mrb[0].mxu0
        %2369 = vdwg.mxu0
        %v2370 = vmax.f32 %v2367, 0.0
        %v2371 = vlaneseq
        %v2372 = vshrl.u32 %v2371, 7
        %v2373 = vsub.s32 0, %v2372
        %v2374 = vrot.slane %v2292, %v2373
        %v2376 = vsel %vm1293, %v2370, 0
        %2378 = vmatprep.subr.mxu0 0.0
        %2379 = vmatpush1.msra.mxu0 %v2284
        %2380 = vmatprep.subr.mxu0 0.0
        %2381 = vmatpush1.msra.mxu0 %v2285
        %2382 = vmatprep.subr.mxu0 0.0
        %2383 = vmatpush1.msra.mxu0 %v2286
        %2384 = vmatprep.subr.mxu0 0.0
        %2385 = vmatpush1.msra.mxu0 %v2287
        %2386 = vmatprep.subr.mxu0 0.0
        %2387 = vmatpush1.msra.mxu0 %v2288
        %2388 = vmatprep.subr.mxu0 0.0
        %2389 = vmatpush1.msra.mxu0 %v2289
        %2390 = vmatprep.subr.mxu0 0.0
        %2391 = vmatpush1.msra.mxu0 %v2290
        %2392 = vmatprep.subr.mxu0 0.0
        %2393 = vmatpush1.msra.mxu0 %v2291
        %2394 = vmatprep.subr.mxu0 0.0
        %2395 = vmatpush1.msra.mxu0 0.0
        %2396 = vmatprep.subr.mxu0 0.0
        %2397 = vmatpush1.msra.mxu0 0.0
        %2398 = vmatprep.subr.mxu0 0.0
        %2399 = vmatpush1.msra.mxu0 0.0
        %2400 = vmatprep.subr.mxu0 0.0
        %2401 = vmatpush1.msra.mxu0 0.0
        %2402 = vmatprep.subr.mxu0 0.0
        %2403 = vmatpush1.msra.mxu0 0.0
        %2404 = vmatprep.subr.mxu0 0.0
        %2405 = vmatpush1.msra.mxu0 0.0
        %2406 = vmatprep.subr.mxu0 0.0
        %2407 = vmatpush1.msra.mxu0 0.0
        %2408 = vmatprep.subr.mxu0 0.0
        %2409 = vmatpush1.msra.mxu0 0.0
        %2410 = vmatprep.subr.mxu0 0.0
        %2411 = vmatpush1.msra.mxu0 0.0
        %2412 = vmatprep.subr.mxu0 0.0
        %2413 = vmatpush1.msra.mxu0 0.0
        %2414 = vmatprep.subr.mxu0 0.0
        %2415 = vmatpush1.msra.mxu0 0.0
        %2416 = vmatprep.subr.mxu0 0.0
        %2417 = vmatpush1.msra.mxu0 0.0
        %2418 = vmatprep.subr.mxu0 0.0
        %2419 = vmatpush1.msra.mxu0 0.0
        %2420 = vmatprep.subr.mxu0 0.0
        %2421 = vmatpush1.msra.mxu0 0.0
        %2422 = vmatprep.subr.mxu0 0.0
        %2423 = vmatpush1.msra.mxu0 0.0
        %2424 = vmatprep.subr.mxu0 0.0
        %2425 = vmatpush1.msra.mxu0 0.0
        %2426 = vmatprep.subr.mxu0 0.0
        %2427 = vmatpush1.msra.mxu0 0.0
        %2428 = vmatprep.subr.mxu0 0.0
        %2429 = vmatpush1.msra.mxu0 0.0
        %2430 = vmatprep.subr.mxu0 0.0
        %2431 = vmatpush1.msra.mxu0 0.0
        %2432 = vmatprep.subr.mxu0 0.0
        %2433 = vmatpush1.msra.mxu0 0.0
        %2434 = vmatprep.subr.mxu0 0.0
        %2435 = vmatpush1.msra.mxu0 0.0
        %2436 = vmatprep.subr.mxu0 0.0
        %2437 = vmatpush1.msra.mxu0 0.0
        %2438 = vmatprep.subr.mxu0 0.0
        %2439 = vmatpush1.msra.mxu0 0.0
        %2440 = vmatprep.subr.mxu0 0.0
        %2441 = vmatpush1.msra.mxu0 0.0
        %2442 = vmatprep.mubr.f32.mxu0 0.0
        %2443 = vmatmul.mubr.f32.gmra.mrb[0].mxu0 %v2376
        %v2444 = vpop.f32.mrb[0].mxu0
        %v2445 = vadd.f32 %v2374, %v2444
        %v2446 = vpop.f32.mrb[0].mxu0
        %2447 = vdwg.mxu0
        %v2448 = vadd.f32 %v2246, %v2445
        %v2449 = vld [vmem:[%s4 + $0x440] sm:$0x1]
        %v2450 = vld [vmem:[%s4 + $0x448] sm:$0x1]
        %v2451 = vsel %vm277, %v2448, 0.0
        %2452 = vadd.xlane.f32.xlu0 %v2451
        %v2453 = vpop.xlane.xlu0 %2452
        %v2454 = vmul.f32 %v2453, %v281
        %v2455 = vsub.f32 %v2448, %v2454
        %v2456 = vmul.f32 %v2455, %v2455
        %v2457 = vsel %vm277, %v2456, 0.0
        %2458 = vadd.xlane.f32.xlu0 %v2457
        %v2459 = vpop.xlane.xlu0 %2458
        %v2460 = vmul.f32 %v2459, 0.032258064
        %v2461 = vrsqrt.pop %v2460
        %v2462 = vmul.f32 %v2460, %v2461
        %vm2463 = vcmp.eq.f32.partialorder %v2460, inf
        %v2464 = vsel %vm2463, %v2460, %v2462
        %vm2465 = vcmp.eq.f32.partialorder %v2460, 0.0
        %v2466 = vand.u32 %v2460, 2147483648
        %v2467 = vsel %vm2465, %v2466, %v2464
        %v2468 = vlaneseq
        %v2469 = vshrl.u32 %v2468, 7
        %v2470 = vsub.s32 0, %v2469
        %v2471 = vrot.slane %v2449, %v2470
        %v2472 = vmul.f32 %v2471, %v2455
        %v2473 = vadd.f32 %v2467, 1e-06
        %v2474 = vrcp.pop %v2473
        %v2475 = vmul.f32 %v2472, %v2474
        %v2476 = vlaneseq
        %v2477 = vshrl.u32 %v2476, 7
        %v2478 = vsub.s32 0, %v2477
        %v2479 = vrot.slane %v2450, %v2478
        %v2480 = vadd.f32 %v2475, %v2479
        %v2481 = vld [vmem:[%s260] sm:$0xff]
        %v2482 = vld [vmem:[%s4 + $0x2d0] sm:$0x1]
        %v2483 = vld [vmem:[%s4 + $0x2d8] sm:$0x1]
        %v2484 = vsel %vm277, %v2481, 0.0
        %2485 = vadd.xlane.f32.xlu0 %v2484
        %v2486 = vpop.xlane.xlu0 %2485
        %v2487 = vmul.f32 %v2486, %v281
        %v2488 = vsub.f32 %v2481, %v2487
        %v2489 = vmul.f32 %v2488, %v2488
        %v2490 = vsel %vm277, %v2489, 0.0
        %2491 = vadd.xlane.f32.xlu0 %v2490
        %v2492 = vpop.xlane.xlu0 %2491
        %v2493 = vmul.f32 %v2492, 0.032258064
        %v2494 = vrsqrt.pop %v2493
        %v2495 = vmul.f32 %v2493, %v2494
        %vm2496 = vcmp.eq.f32.partialorder %v2493, inf
        %v2497 = vsel %vm2496, %v2493, %v2495
        %vm2498 = vcmp.eq.f32.partialorder %v2493, 0.0
        %v2499 = vand.u32 %v2493, 2147483648
        %v2500 = vsel %vm2498, %v2499, %v2497
        %v2501 = vlaneseq
        %v2502 = vshrl.u32 %v2501, 7
        %v2503 = vsub.s32 0, %v2502
        %v2504 = vrot.slane %v2482, %v2503
        %v2505 = vmul.f32 %v2504, %v2488
        %v2506 = vadd.f32 %v2500, 1e-06
        %v2507 = vrcp.pop %v2506
        %v2508 = vmul.f32 %v2505, %v2507
        %v2509 = vlaneseq
        %v2510 = vshrl.u32 %v2509, 7
        %v2511 = vsub.s32 0, %v2510
        %v2512 = vrot.slane %v2483, %v2511
        %v2513 = vadd.f32 %v2508, %v2512
        %v2514 = vld [vmem:[%s4 + $0x1c0] sm:$0xff]
        %v2515 = vld [vmem:[%s4 + $0x1c8] sm:$0xff]
        %v2516 = vld [vmem:[%s4 + $0x1d0] sm:$0xff]
        %v2517 = vld [vmem:[%s4 + $0x1d8] sm:$0xff]
        %v2518 = vld [vmem:[%s4 + $0x1e0] sm:$0x1]
        %v2519 = vld [vmem:[%s4 + $0x1e8] sm:$0xff]
        %v2520 = vld [vmem:[%s4 + $0x1f0] sm:$0xff]
        %v2521 = vld [vmem:[%s4 + $0x1f8] sm:$0xff]
        %v2522 = vld [vmem:[%s4 + $0x200] sm:$0xff]
        %v2523 = vld [vmem:[%s4 + $0x208] sm:$0x1]
        %v2524 = vlaneseq
        %v2525 = vshrl.u32 %v2524, 7
        %v2526 = vsub.s32 0, %v2525
        %v2527 = vrot.slane %v2518, %v2526
        %v2529 = vsel %vm277, %v2513, 0
        %2531 = vmatprep.subr.mxu0 0.0
        %2532 = vmatpush1.msra.mxu0 %v2514
        %2533 = vmatprep.subr.mxu0 0.0
        %2534 = vmatpush1.msra.mxu0 %v2515
        %2535 = vmatprep.subr.mxu0 0.0
        %2536 = vmatpush1.msra.mxu0 %v2516
        %2537 = vmatprep.subr.mxu0 0.0
        %2538 = vmatpush1.msra.mxu0 %v2517
        %2539 = vmatprep.subr.mxu0 0.0
        %2540 = vmatpush1.msra.mxu0 0.0
        %2541 = vmatprep.subr.mxu0 0.0
        %2542 = vmatpush1.msra.mxu0 0.0
        %2543 = vmatprep.subr.mxu0 0.0
        %2544 = vmatpush1.msra.mxu0 0.0
        %2545 = vmatprep.subr.mxu0 0.0
        %2546 = vmatpush1.msra.mxu0 0.0
        %2547 = vmatprep.subr.mxu0 0.0
        %2548 = vmatpush1.msra.mxu0 0.0
        %2549 = vmatprep.subr.mxu0 0.0
        %2550 = vmatpush1.msra.mxu0 0.0
        %2551 = vmatprep.subr.mxu0 0.0
        %2552 = vmatpush1.msra.mxu0 0.0
        %2553 = vmatprep.subr.mxu0 0.0
        %2554 = vmatpush1.msra.mxu0 0.0
        %2555 = vmatprep.subr.mxu0 0.0
        %2556 = vmatpush1.msra.mxu0 0.0
        %2557 = vmatprep.subr.mxu0 0.0
        %2558 = vmatpush1.msra.mxu0 0.0
        %2559 = vmatprep.subr.mxu0 0.0
        %2560 = vmatpush1.msra.mxu0 0.0
        %2561 = vmatprep.subr.mxu0 0.0
        %2562 = vmatpush1.msra.mxu0 0.0
        %2563 = vmatprep.subr.mxu0 0.0
        %2564 = vmatpush1.msra.mxu0 0.0
        %2565 = vmatprep.subr.mxu0 0.0
        %2566 = vmatpush1.msra.mxu0 0.0
        %2567 = vmatprep.subr.mxu0 0.0
        %2568 = vmatpush1.msra.mxu0 0.0
        %2569 = vmatprep.subr.mxu0 0.0
        %2570 = vmatpush1.msra.mxu0 0.0
        %2571 = vmatprep.subr.mxu0 0.0
        %2572 = vmatpush1.msra.mxu0 0.0
        %2573 = vmatprep.subr.mxu0 0.0
        %2574 = vmatpush1.msra.mxu0 0.0
        %2575 = vmatprep.subr.mxu0 0.0
        %2576 = vmatpush1.msra.mxu0 0.0
        %2577 = vmatprep.subr.mxu0 0.0
        %2578 = vmatpush1.msra.mxu0 0.0
        %2579 = vmatprep.subr.mxu0 0.0
        %2580 = vmatpush1.msra.mxu0 0.0
        %2581 = vmatprep.subr.mxu0 0.0
        %2582 = vmatpush1.msra.mxu0 0.0
        %2583 = vmatprep.subr.mxu0 0.0
        %2584 = vmatpush1.msra.mxu0 0.0
        %2585 = vmatprep.subr.mxu0 0.0
        %2586 = vmatpush1.msra.mxu0 0.0
        %2587 = vmatprep.subr.mxu0 0.0
        %2588 = vmatpush1.msra.mxu0 0.0
        %2589 = vmatprep.subr.mxu0 0.0
        %2590 = vmatpush1.msra.mxu0 0.0
        %2591 = vmatprep.subr.mxu0 0.0
        %2592 = vmatpush1.msra.mxu0 0.0
        %2593 = vmatprep.subr.mxu0 0.0
        %2594 = vmatpush1.msra.mxu0 0.0
        %2595 = vmatprep.mubr.f32.mxu0 0.0
        %2596 = vmatmul.mubr.f32.gmra.mrb[0].mxu0 %v2529
        %v2597 = vpop.f32.mrb[0].mxu0
        %v2598 = vadd.f32 %v2527, %v2597
        %v2599 = vpop.f32.mrb[0].mxu0
        %2600 = vdwg.mxu0
        %v2601 = vmul.f32 %v2598, 0.35355338
        %2603 = vrot.lane.b32.xlu0 %v2601, 120
        %v2604 = vpop.permute.xlu0 %2603
        %2605 = vrot.lane.b32.xlu0 %v2601, 112
        %v2606 = vpop.permute.xlu0 %2605
        %2607 = vrot.lane.b32.xlu0 %v2601, 104
        %v2608 = vpop.permute.xlu0 %2607
        %2610 = vrot.lane.b32.xlu0 %v2598, 120
        %v2611 = vpop.permute.xlu0 %2610
        %2612 = vrot.lane.b32.xlu0 %v2598, 112
        %v2613 = vpop.permute.xlu0 %2612
        %2614 = vrot.lane.b32.xlu0 %v2598, 104
        %v2615 = vpop.permute.xlu0 %2614
        %2616 = vrot.lane.b32.xlu0 %v2598, 96
        %v2617 = vpop.permute.xlu0 %2616
        %v2618 = vsel %vm419, %v2601, 0
        %v2620 = vsel %vm419, %v2617, 0
        %2622 = vmatprep.subr.mxu0 0.0
        %2623 = vmatpush1.xpose.msra.mxu0 %v2620
        %2624 = vmatprep.subr.mxu0 0.0
        %2625 = vmatpush1.xpose.msra.mxu0 0.0
        %2626 = vmatprep.subr.mxu0 0.0
        %2627 = vmatpush1.xpose.msra.mxu0 0.0
        %2628 = vmatprep.subr.mxu0 0.0
        %2629 = vmatpush1.xpose.msra.mxu0 0.0
        %2630 = vmatprep.subr.mxu0 0.0
        %2631 = vmatpush1.xpose.msra.mxu0 0.0
        %2632 = vmatprep.subr.mxu0 0.0
        %2633 = vmatpush1.xpose.msra.mxu0 0.0
        %2634 = vmatprep.subr.mxu0 0.0
        %2635 = vmatpush1.xpose.msra.mxu0 0.0
        %2636 = vmatprep.subr.mxu0 0.0
        %2637 = vmatpush1.xpose.msra.mxu0 0.0
        %2638 = vmatprep.subr.mxu0 0.0
        %2639 = vmatpush1.xpose.msra.mxu0 0.0
        %2640 = vmatprep.subr.mxu0 0.0
        %2641 = vmatpush1.xpose.msra.mxu0 0.0
        %2642 = vmatprep.subr.mxu0 0.0
        %2643 = vmatpush1.xpose.msra.mxu0 0.0
        %2644 = vmatprep.subr.mxu0 0.0
        %2645 = vmatpush1.xpose.msra.mxu0 0.0
        %2646 = vmatprep.subr.mxu0 0.0
        %2647 = vmatpush1.xpose.msra.mxu0 0.0
        %2648 = vmatprep.subr.mxu0 0.0
        %2649 = vmatpush1.xpose.msra.mxu0 0.0
        %2650 = vmatprep.subr.mxu0 0.0
        %2651 = vmatpush1.xpose.msra.mxu0 0.0
        %2652 = vmatprep.subr.mxu0 0.0
        %2653 = vmatpush1.xpose.msra.mxu0 0.0
        %2654 = vmatprep.subr.mxu0 0.0
        %2655 = vmatpush1.xpose.msra.mxu0 0.0
        %2656 = vmatprep.subr.mxu0 0.0
        %2657 = vmatpush1.xpose.msra.mxu0 0.0
        %2658 = vmatprep.subr.mxu0 0.0
        %2659 = vmatpush1.xpose.msra.mxu0 0.0
        %2660 = vmatprep.subr.mxu0 0.0
        %2661 = vmatpush1.xpose.msra.mxu0 0.0
        %2662 = vmatprep.subr.mxu0 0.0
        %2663 = vmatpush1.xpose.msra.mxu0 0.0
        %2664 = vmatprep.subr.mxu0 0.0
        %2665 = vmatpush1.xpose.msra.mxu0 0.0
        %2666 = vmatprep.subr.mxu0 0.0
        %2667 = vmatpush1.xpose.msra.mxu0 0.0
        %2668 = vmatprep.subr.mxu0 0.0
        %2669 = vmatpush1.xpose.msra.mxu0 0.0
        %2670 = vmatprep.subr.mxu0 0.0
        %2671 = vmatpush1.xpose.msra.mxu0 0.0
        %2672 = vmatprep.subr.mxu0 0.0
        %2673 = vmatpush1.xpose.msra.mxu0 0.0
        %2674 = vmatprep.subr.mxu0 0.0
        %2675 = vmatpush1.xpose.msra.mxu0 0.0
        %2676 = vmatprep.subr.mxu0 0.0
        %2677 = vmatpush1.xpose.msra.mxu0 0.0
        %2678 = vmatprep.subr.mxu0 0.0
        %2679 = vmatpush1.xpose.msra.mxu0 0.0
        %2680 = vmatprep.subr.mxu0 0.0
        %2681 = vmatpush1.xpose.msra.mxu0 0.0
        %2682 = vmatprep.subr.mxu0 0.0
        %2683 = vmatpush1.xpose.msra.mxu0 0.0
        %2684 = vmatprep.subr.mxu0 0.0
        %2685 = vmatpush1.xpose.msra.mxu0 0.0
        %2686 = vmatprep.mubr.f32.mxu0 0.0
        %2687 = vmatmul.mubr.f32.gmra.mrb[0].mxu0 %v2618
        %v2688 = vpop.f32.mrb[0].mxu0
        %v2689 = vadd.f32 %v273, %v2688
        %v2690 = vpop.f32.mrb[0].mxu0
        %2691 = vdwg.mxu0
        %2692 = vrot.lane.b32.xlu0 %v2611, 96
        %v2693 = vpop.permute.xlu0 %2692
        %v2694 = vsel %vm419, %v2604, 0
        %v2696 = vsel %vm419, %v2693, 0
        %2698 = vmatprep.subr.mxu0 0.0
        %2699 = vmatpush1.xpose.msra.mxu0 %v2696
        %2700 = vmatprep.subr.mxu0 0.0
        %2701 = vmatpush1.xpose.msra.mxu0 0.0
        %2702 = vmatprep.subr.mxu0 0.0
        %2703 = vmatpush1.xpose.msra.mxu0 0.0
        %2704 = vmatprep.subr.mxu0 0.0
        %2705 = vmatpush1.xpose.msra.mxu0 0.0
        %2706 = vmatprep.subr.mxu0 0.0
        %2707 = vmatpush1.xpose.msra.mxu0 0.0
        %2708 = vmatprep.subr.mxu0 0.0
        %2709 = vmatpush1.xpose.msra.mxu0 0.0
        %2710 = vmatprep.subr.mxu0 0.0
        %2711 = vmatpush1.xpose.msra.mxu0 0.0
        %2712 = vmatprep.subr.mxu0 0.0
        %2713 = vmatpush1.xpose.msra.mxu0 0.0
        %2714 = vmatprep.subr.mxu0 0.0
        %2715 = vmatpush1.xpose.msra.mxu0 0.0
        %2716 = vmatprep.subr.mxu0 0.0
        %2717 = vmatpush1.xpose.msra.mxu0 0.0
        %2718 = vmatprep.subr.mxu0 0.0
        %2719 = vmatpush1.xpose.msra.mxu0 0.0
        %2720 = vmatprep.subr.mxu0 0.0
        %2721 = vmatpush1.xpose.msra.mxu0 0.0
        %2722 = vmatprep.subr.mxu0 0.0
        %2723 = vmatpush1.xpose.msra.mxu0 0.0
        %2724 = vmatprep.subr.mxu0 0.0
        %2725 = vmatpush1.xpose.msra.mxu0 0.0
        %2726 = vmatprep.subr.mxu0 0.0
        %2727 = vmatpush1.xpose.msra.mxu0 0.0
        %2728 = vmatprep.subr.mxu0 0.0
        %2729 = vmatpush1.xpose.msra.mxu0 0.0
        %2730 = vmatprep.subr.mxu0 0.0
        %2731 = vmatpush1.xpose.msra.mxu0 0.0
        %2732 = vmatprep.subr.mxu0 0.0
        %2733 = vmatpush1.xpose.msra.mxu0 0.0
        %2734 = vmatprep.subr.mxu0 0.0
        %2735 = vmatpush1.xpose.msra.mxu0 0.0
        %2736 = vmatprep.subr.mxu0 0.0
        %2737 = vmatpush1.xpose.msra.mxu0 0.0
        %2738 = vmatprep.subr.mxu0 0.0
        %2739 = vmatpush1.xpose.msra.mxu0 0.0
        %2740 = vmatprep.subr.mxu0 0.0
        %2741 = vmatpush1.xpose.msra.mxu0 0.0
        %2742 = vmatprep.subr.mxu0 0.0
        %2743 = vmatpush1.xpose.msra.mxu0 0.0
        %2744 = vmatprep.subr.mxu0 0.0
        %2745 = vmatpush1.xpose.msra.mxu0 0.0
        %2746 = vmatprep.subr.mxu0 0.0
        %2747 = vmatpush1.xpose.msra.mxu0 0.0
        %2748 = vmatprep.subr.mxu0 0.0
        %2749 = vmatpush1.xpose.msra.mxu0 0.0
        %2750 = vmatprep.subr.mxu0 0.0
        %2751 = vmatpush1.xpose.msra.mxu0 0.0
        %2752 = vmatprep.subr.mxu0 0.0
        %2753 = vmatpush1.xpose.msra.mxu0 0.0
        %2754 = vmatprep.subr.mxu0 0.0
        %2755 = vmatpush1.xpose.msra.mxu0 0.0
        %2756 = vmatprep.subr.mxu0 0.0
        %2757 = vmatpush1.xpose.msra.mxu0 0.0
        %2758 = vmatprep.subr.mxu0 0.0
        %2759 = vmatpush1.xpose.msra.mxu0 0.0
        %2760 = vmatprep.subr.mxu0 0.0
        %2761 = vmatpush1.xpose.msra.mxu0 0.0
        %2762 = vmatprep.mubr.f32.mxu0 0.0
        %2763 = vmatmul.mubr.f32.gmra.mrb[0].mxu0 %v2694
        %v2764 = vpop.f32.mrb[0].mxu0
        %v2765 = vadd.f32 %v273, %v2764
        %v2766 = vpop.f32.mrb[0].mxu0
        %2767 = vdwg.mxu0
        %2768 = vrot.lane.b32.xlu0 %v2613, 96
        %v2769 = vpop.permute.xlu0 %2768
        %v2770 = vsel %vm419, %v2606, 0
        %v2772 = vsel %vm419, %v2769, 0
        %2774 = vmatprep.subr.mxu0 0.0
        %2775 = vmatpush1.xpose.msra.mxu0 %v2772
        %2776 = vmatprep.subr.mxu0 0.0
        %2777 = vmatpush1.xpose.msra.mxu0 0.0
        %2778 = vmatprep.subr.mxu0 0.0
        %2779 = vmatpush1.xpose.msra.mxu0 0.0
        %2780 = vmatprep.subr.mxu0 0.0
        %2781 = vmatpush1.xpose.msra.mxu0 0.0
        %2782 = vmatprep.subr.mxu0 0.0
        %2783 = vmatpush1.xpose.msra.mxu0 0.0
        %2784 = vmatprep.subr.mxu0 0.0
        %2785 = vmatpush1.xpose.msra.mxu0 0.0
        %2786 = vmatprep.subr.mxu0 0.0
        %2787 = vmatpush1.xpose.msra.mxu0 0.0
        %2788 = vmatprep.subr.mxu0 0.0
        %2789 = vmatpush1.xpose.msra.mxu0 0.0
        %2790 = vmatprep.subr.mxu0 0.0
        %2791 = vmatpush1.xpose.msra.mxu0 0.0
        %2792 = vmatprep.subr.mxu0 0.0
        %2793 = vmatpush1.xpose.msra.mxu0 0.0
        %2794 = vmatprep.subr.mxu0 0.0
        %2795 = vmatpush1.xpose.msra.mxu0 0.0
        %2796 = vmatprep.subr.mxu0 0.0
        %2797 = vmatpush1.xpose.msra.mxu0 0.0
        %2798 = vmatprep.subr.mxu0 0.0
        %2799 = vmatpush1.xpose.msra.mxu0 0.0
        %2800 = vmatprep.subr.mxu0 0.0
        %2801 = vmatpush1.xpose.msra.mxu0 0.0
        %2802 = vmatprep.subr.mxu0 0.0
        %2803 = vmatpush1.xpose.msra.mxu0 0.0
        %2804 = vmatprep.subr.mxu0 0.0
        %2805 = vmatpush1.xpose.msra.mxu0 0.0
        %2806 = vmatprep.subr.mxu0 0.0
        %2807 = vmatpush1.xpose.msra.mxu0 0.0
        %2808 = vmatprep.subr.mxu0 0.0
        %2809 = vmatpush1.xpose.msra.mxu0 0.0
        %2810 = vmatprep.subr.mxu0 0.0
        %2811 = vmatpush1.xpose.msra.mxu0 0.0
        %2812 = vmatprep.subr.mxu0 0.0
        %2813 = vmatpush1.xpose.msra.mxu0 0.0
        %2814 = vmatprep.subr.mxu0 0.0
        %2815 = vmatpush1.xpose.msra.mxu0 0.0
        %2816 = vmatprep.subr.mxu0 0.0
        %2817 = vmatpush1.xpose.msra.mxu0 0.0
        %2818 = vmatprep.subr.mxu0 0.0
        %2819 = vmatpush1.xpose.msra.mxu0 0.0
        %2820 = vmatprep.subr.mxu0 0.0
        %2821 = vmatpush1.xpose.msra.mxu0 0.0
        %2822 = vmatprep.subr.mxu0 0.0
        %2823 = vmatpush1.xpose.msra.mxu0 0.0
        %2824 = vmatprep.subr.mxu0 0.0
        %2825 = vmatpush1.xpose.msra.mxu0 0.0
        %2826 = vmatprep.subr.mxu0 0.0
        %2827 = vmatpush1.xpose.msra.mxu0 0.0
        %2828 = vmatprep.subr.mxu0 0.0
        %2829 = vmatpush1.xpose.msra.mxu0 0.0
        %2830 = vmatprep.subr.mxu0 0.0
        %2831 = vmatpush1.xpose.msra.mxu0 0.0
        %2832 = vmatprep.subr.mxu0 0.0
        %2833 = vmatpush1.xpose.msra.mxu0 0.0
        %2834 = vmatprep.subr.mxu0 0.0
        %2835 = vmatpush1.xpose.msra.mxu0 0.0
        %2836 = vmatprep.subr.mxu0 0.0
        %2837 = vmatpush1.xpose.msra.mxu0 0.0
        %2838 = vmatprep.mubr.f32.mxu0 0.0
        %2839 = vmatmul.mubr.f32.gmra.mrb[0].mxu0 %v2770
        %v2840 = vpop.f32.mrb[0].mxu0
        %v2841 = vadd.f32 %v273, %v2840
        %v2842 = vpop.f32.mrb[0].mxu0
        %2843 = vdwg.mxu0
        %2844 = vrot.lane.b32.xlu0 %v2615, 96
        %v2845 = vpop.permute.xlu0 %2844
        %v2846 = vsel %vm419, %v2608, 0
        %v2848 = vsel %vm419, %v2845, 0
        %2850 = vmatprep.subr.mxu0 0.0
        %2851 = vmatpush1.xpose.msra.mxu0 %v2848
        %2852 = vmatprep.subr.mxu0 0.0
        %2853 = vmatpush1.xpose.msra.mxu0 0.0
        %2854 = vmatprep.subr.mxu0 0.0
        %2855 = vmatpush1.xpose.msra.mxu0 0.0
        %2856 = vmatprep.subr.mxu0 0.0
        %2857 = vmatpush1.xpose.msra.mxu0 0.0
        %2858 = vmatprep.subr.mxu0 0.0
        %2859 = vmatpush1.xpose.msra.mxu0 0.0
        %2860 = vmatprep.subr.mxu0 0.0
        %2861 = vmatpush1.xpose.msra.mxu0 0.0
        %2862 = vmatprep.subr.mxu0 0.0
        %2863 = vmatpush1.xpose.msra.mxu0 0.0
        %2864 = vmatprep.subr.mxu0 0.0
        %2865 = vmatpush1.xpose.msra.mxu0 0.0
        %2866 = vmatprep.subr.mxu0 0.0
        %2867 = vmatpush1.xpose.msra.mxu0 0.0
        %2868 = vmatprep.subr.mxu0 0.0
        %2869 = vmatpush1.xpose.msra.mxu0 0.0
        %2870 = vmatprep.subr.mxu0 0.0
        %2871 = vmatpush1.xpose.msra.mxu0 0.0
        %2872 = vmatprep.subr.mxu0 0.0
        %2873 = vmatpush1.xpose.msra.mxu0 0.0
        %2874 = vmatprep.subr.mxu0 0.0
        %2875 = vmatpush1.xpose.msra.mxu0 0.0
        %2876 = vmatprep.subr.mxu0 0.0
        %2877 = vmatpush1.xpose.msra.mxu0 0.0
        %2878 = vmatprep.subr.mxu0 0.0
        %2879 = vmatpush1.xpose.msra.mxu0 0.0
        %2880 = vmatprep.subr.mxu0 0.0
        %2881 = vmatpush1.xpose.msra.mxu0 0.0
        %2882 = vmatprep.subr.mxu0 0.0
        %2883 = vmatpush1.xpose.msra.mxu0 0.0
        %2884 = vmatprep.subr.mxu0 0.0
        %2885 = vmatpush1.xpose.msra.mxu0 0.0
        %2886 = vmatprep.subr.mxu0 0.0
        %2887 = vmatpush1.xpose.msra.mxu0 0.0
        %2888 = vmatprep.subr.mxu0 0.0
        %2889 = vmatpush1.xpose.msra.mxu0 0.0
        %2890 = vmatprep.subr.mxu0 0.0
        %2891 = vmatpush1.xpose.msra.mxu0 0.0
        %2892 = vmatprep.subr.mxu0 0.0
        %2893 = vmatpush1.xpose.msra.mxu0 0.0
        %2894 = vmatprep.subr.mxu0 0.0
        %2895 = vmatpush1.xpose.msra.mxu0 0.0
        %2896 = vmatprep.subr.mxu0 0.0
        %2897 = vmatpush1.xpose.msra.mxu0 0.0
        %2898 = vmatprep.subr.mxu0 0.0
        %2899 = vmatpush1.xpose.msra.mxu0 0.0
        %2900 = vmatprep.subr.mxu0 0.0
        %2901 = vmatpush1.xpose.msra.mxu0 0.0
        %2902 = vmatprep.subr.mxu0 0.0
        %2903 = vmatpush1.xpose.msra.mxu0 0.0
        %2904 = vmatprep.subr.mxu0 0.0
        %2905 = vmatpush1.xpose.msra.mxu0 0.0
        %2906 = vmatprep.subr.mxu0 0.0
        %2907 = vmatpush1.xpose.msra.mxu0 0.0
        %2908 = vmatprep.subr.mxu0 0.0
        %2909 = vmatpush1.xpose.msra.mxu0 0.0
        %2910 = vmatprep.subr.mxu0 0.0
        %2911 = vmatpush1.xpose.msra.mxu0 0.0
        %2912 = vmatprep.subr.mxu0 0.0
        %2913 = vmatpush1.xpose.msra.mxu0 0.0
        %2914 = vmatprep.mubr.f32.mxu0 0.0
        %2915 = vmatmul.mubr.f32.gmra.mrb[0].mxu0 %v2846
        %v2916 = vpop.f32.mrb[0].mxu0
        %v2917 = vadd.f32 %v273, %v2916
        %v2918 = vpop.f32.mrb[0].mxu0
        %2919 = vdwg.mxu0
        %v2920 = vsel %vm419, %v2689, -inf
        %2921 = vmax.xlane.f32.xlu0 %v2920
        %v2922 = vpop.xlane.xlu0 %2921
        %v2923 = vsel %vm419, %v2765, -inf
        %2924 = vmax.xlane.f32.xlu0 %v2923
        %v2925 = vpop.xlane.xlu0 %2924
        %v2926 = vsel %vm419, %v2841, -inf
        %2927 = vmax.xlane.f32.xlu0 %v2926
        %v2928 = vpop.xlane.xlu0 %2927
        %v2929 = vsel %vm419, %v2917, -inf
        %2930 = vmax.xlane.f32.xlu0 %v2929
        %v2931 = vpop.xlane.xlu0 %2930
        %v2932 = vsub.f32 %v2689, %v2922
        %v2933 = vsub.f32 %v2765, %v2925
        %v2934 = vsub.f32 %v2841, %v2928
        %v2935 = vsub.f32 %v2917, %v2931
        %v2936 = vmul.f32 %v2932, 1.442695
        %v2937 = vpow.pop %v2936
        %v2938 = vmul.f32 %v2933, 1.442695
        %v2939 = vpow.pop %v2938
        %v2940 = vmul.f32 %v2934, 1.442695
        %v2941 = vpow.pop %v2940
        %v2942 = vmul.f32 %v2935, 1.442695
        %v2943 = vpow.pop %v2942
        %v2944 = vsel %vm419, %v2937, 0.0
        %2945 = vadd.xlane.f32.xlu0 %v2944
        %v2946 = vpop.xlane.xlu0 %2945
        %v2947 = vsel %vm419, %v2939, 0.0
        %2948 = vadd.xlane.f32.xlu0 %v2947
        %v2949 = vpop.xlane.xlu0 %2948
        %v2950 = vsel %vm419, %v2941, 0.0
        %2951 = vadd.xlane.f32.xlu0 %v2950
        %v2952 = vpop.xlane.xlu0 %2951
        %v2953 = vsel %vm419, %v2943, 0.0
        %2954 = vadd.xlane.f32.xlu0 %v2953
        %v2955 = vpop.xlane.xlu0 %2954
        %v2956 = vrcp.pop %v2946
        %v2957 = vrcp.pop %v2949
        %v2958 = vrcp.pop %v2952
        %v2959 = vrcp.pop %v2955
        %v2960 = vmul.f32 %v2937, %v2956
        %v2961 = vmul.f32 %v2939, %v2957
        %v2962 = vmul.f32 %v2941, %v2958
        %v2963 = vmul.f32 %v2943, %v2959
        %2964 = vrot.lane.b32.xlu0 %v2598, 64
        %v2965 = vpop.permute.xlu0 %2964
        %v2968 = vsel %vm419, %v2960, 0
        %2970 = vmatprep.subr.mxu0 0.0
        %2971 = vmatpush1.msra.mxu0 %v2965
        %2972 = vmatprep.subr.mxu0 0.0
        %2973 = vmatpush1.msra.mxu0 0.0
        %2974 = vmatprep.subr.mxu0 0.0
        %2975 = vmatpush1.msra.mxu0 0.0
        %2976 = vmatprep.subr.mxu0 0.0
        %2977 = vmatpush1.msra.mxu0 0.0
        %2978 = vmatprep.subr.mxu0 0.0
        %2979 = vmatpush1.msra.mxu0 0.0
        %2980 = vmatprep.subr.mxu0 0.0
        %2981 = vmatpush1.msra.mxu0 0.0
        %2982 = vmatprep.subr.mxu0 0.0
        %2983 = vmatpush1.msra.mxu0 0.0
        %2984 = vmatprep.subr.mxu0 0.0
        %2985 = vmatpush1.msra.mxu0 0.0
        %2986 = vmatprep.subr.mxu0 0.0
        %2987 = vmatpush1.msra.mxu0 0.0
        %2988 = vmatprep.subr.mxu0 0.0
        %2989 = vmatpush1.msra.mxu0 0.0
        %2990 = vmatprep.subr.mxu0 0.0
        %2991 = vmatpush1.msra.mxu0 0.0
        %2992 = vmatprep.subr.mxu0 0.0
        %2993 = vmatpush1.msra.mxu0 0.0
        %2994 = vmatprep.subr.mxu0 0.0
        %2995 = vmatpush1.msra.mxu0 0.0
        %2996 = vmatprep.subr.mxu0 0.0
        %2997 = vmatpush1.msra.mxu0 0.0
        %2998 = vmatprep.subr.mxu0 0.0
        %2999 = vmatpush1.msra.mxu0 0.0
        %3000 = vmatprep.subr.mxu0 0.0
        %3001 = vmatpush1.msra.mxu0 0.0
        %3002 = vmatprep.subr.mxu0 0.0
        %3003 = vmatpush1.msra.mxu0 0.0
        %3004 = vmatprep.subr.mxu0 0.0
        %3005 = vmatpush1.msra.mxu0 0.0
        %3006 = vmatprep.subr.mxu0 0.0
        %3007 = vmatpush1.msra.mxu0 0.0
        %3008 = vmatprep.subr.mxu0 0.0
        %3009 = vmatpush1.msra.mxu0 0.0
        %3010 = vmatprep.subr.mxu0 0.0
        %3011 = vmatpush1.msra.mxu0 0.0
        %3012 = vmatprep.subr.mxu0 0.0
        %3013 = vmatpush1.msra.mxu0 0.0
        %3014 = vmatprep.subr.mxu0 0.0
        %3015 = vmatpush1.msra.mxu0 0.0
        %3016 = vmatprep.subr.mxu0 0.0
        %3017 = vmatpush1.msra.mxu0 0.0
        %3018 = vmatprep.subr.mxu0 0.0
        %3019 = vmatpush1.msra.mxu0 0.0
        %3020 = vmatprep.subr.mxu0 0.0
        %3021 = vmatpush1.msra.mxu0 0.0
        %3022 = vmatprep.subr.mxu0 0.0
        %3023 = vmatpush1.msra.mxu0 0.0
        %3024 = vmatprep.subr.mxu0 0.0
        %3025 = vmatpush1.msra.mxu0 0.0
        %3026 = vmatprep.subr.mxu0 0.0
        %3027 = vmatpush1.msra.mxu0 0.0
        %3028 = vmatprep.subr.mxu0 0.0
        %3029 = vmatpush1.msra.mxu0 0.0
        %3030 = vmatprep.subr.mxu0 0.0
        %3031 = vmatpush1.msra.mxu0 0.0
        %3032 = vmatprep.subr.mxu0 0.0
        %3033 = vmatpush1.msra.mxu0 0.0
        %3034 = vmatprep.mubr.f32.mxu0 0.0
        %3035 = vmatmul.mubr.f32.gmra.mrb[0].mxu0 %v2968
        %v3036 = vpop.f32.mrb[0].mxu0
        %v3037 = vadd.f32 0.0, %v3036
        %v3038 = vpop.f32.mrb[0].mxu0
        %3039 = vdwg.mxu0
        %3040 = vrot.lane.b32.xlu0 %v2611, 64
        %v3041 = vpop.permute.xlu0 %3040
        %v3044 = vsel %vm419, %v2961, 0
        %3046 = vmatprep.subr.mxu0 0.0
        %3047 = vmatpush1.msra.mxu0 %v3041
        %3048 = vmatprep.subr.mxu0 0.0
        %3049 = vmatpush1.msra.mxu0 0.0
        %3050 = vmatprep.subr.mxu0 0.0
        %3051 = vmatpush1.msra.mxu0 0.0
        %3052 = vmatprep.subr.mxu0 0.0
        %3053 = vmatpush1.msra.mxu0 0.0
        %3054 = vmatprep.subr.mxu0 0.0
        %3055 = vmatpush1.msra.mxu0 0.0
        %3056 = vmatprep.subr.mxu0 0.0
        %3057 = vmatpush1.msra.mxu0 0.0
        %3058 = vmatprep.subr.mxu0 0.0
        %3059 = vmatpush1.msra.mxu0 0.0
        %3060 = vmatprep.subr.mxu0 0.0
        %3061 = vmatpush1.msra.mxu0 0.0
        %3062 = vmatprep.subr.mxu0 0.0
        %3063 = vmatpush1.msra.mxu0 0.0
        %3064 = vmatprep.subr.mxu0 0.0
        %3065 = vmatpush1.msra.mxu0 0.0
        %3066 = vmatprep.subr.mxu0 0.0
        %3067 = vmatpush1.msra.mxu0 0.0
        %3068 = vmatprep.subr.mxu0 0.0
        %3069 = vmatpush1.msra.mxu0 0.0
        %3070 = vmatprep.subr.mxu0 0.0
        %3071 = vmatpush1.msra.mxu0 0.0
        %3072 = vmatprep.subr.mxu0 0.0
        %3073 = vmatpush1.msra.mxu0 0.0
        %3074 = vmatprep.subr.mxu0 0.0
        %3075 = vmatpush1.msra.mxu0 0.0
        %3076 = vmatprep.subr.mxu0 0.0
        %3077 = vmatpush1.msra.mxu0 0.0
        %3078 = vmatprep.subr.mxu0 0.0
        %3079 = vmatpush1.msra.mxu0 0.0
        %3080 = vmatprep.subr.mxu0 0.0
        %3081 = vmatpush1.msra.mxu0 0.0
        %3082 = vmatprep.subr.mxu0 0.0
        %3083 = vmatpush1.msra.mxu0 0.0
        %3084 = vmatprep.subr.mxu0 0.0
        %3085 = vmatpush1.msra.mxu0 0.0
        %3086 = vmatprep.subr.mxu0 0.0
        %3087 = vmatpush1.msra.mxu0 0.0
        %3088 = vmatprep.subr.mxu0 0.0
        %3089 = vmatpush1.msra.mxu0 0.0
        %3090 = vmatprep.subr.mxu0 0.0
        %3091 = vmatpush1.msra.mxu0 0.0
        %3092 = vmatprep.subr.mxu0 0.0
        %3093 = vmatpush1.msra.mxu0 0.0
        %3094 = vmatprep.subr.mxu0 0.0
        %3095 = vmatpush1.msra.mxu0 0.0
        %3096 = vmatprep.subr.mxu0 0.0
        %3097 = vmatpush1.msra.mxu0 0.0
        %3098 = vmatprep.subr.mxu0 0.0
        %3099 = vmatpush1.msra.mxu0 0.0
        %3100 = vmatprep.subr.mxu0 0.0
        %3101 = vmatpush1.msra.mxu0 0.0
        %3102 = vmatprep.subr.mxu0 0.0
        %3103 = vmatpush1.msra.mxu0 0.0
        %3104 = vmatprep.subr.mxu0 0.0
        %3105 = vmatpush1.msra.mxu0 0.0
        %3106 = vmatprep.subr.mxu0 0.0
        %3107 = vmatpush1.msra.mxu0 0.0
        %3108 = vmatprep.subr.mxu0 0.0
        %3109 = vmatpush1.msra.mxu0 0.0
        %3110 = vmatprep.mubr.f32.mxu0 0.0
        %3111 = vmatmul.mubr.f32.gmra.mrb[0].mxu0 %v3044
        %v3112 = vpop.f32.mrb[0].mxu0
        %v3113 = vadd.f32 0.0, %v3112
        %v3114 = vpop.f32.mrb[0].mxu0
        %3115 = vdwg.mxu0
        %3116 = vrot.lane.b32.xlu0 %v2613, 64
        %v3117 = vpop.permute.xlu0 %3116
        %v3120 = vsel %vm419, %v2962, 0
        %3122 = vmatprep.subr.mxu0 0.0
        %3123 = vmatpush1.msra.mxu0 %v3117
        %3124 = vmatprep.subr.mxu0 0.0
        %3125 = vmatpush1.msra.mxu0 0.0
        %3126 = vmatprep.subr.mxu0 0.0
        %3127 = vmatpush1.msra.mxu0 0.0
        %3128 = vmatprep.subr.mxu0 0.0
        %3129 = vmatpush1.msra.mxu0 0.0
        %3130 = vmatprep.subr.mxu0 0.0
        %3131 = vmatpush1.msra.mxu0 0.0
        %3132 = vmatprep.subr.mxu0 0.0
        %3133 = vmatpush1.msra.mxu0 0.0
        %3134 = vmatprep.subr.mxu0 0.0
        %3135 = vmatpush1.msra.mxu0 0.0
        %3136 = vmatprep.subr.mxu0 0.0
        %3137 = vmatpush1.msra.mxu0 0.0
        %3138 = vmatprep.subr.mxu0 0.0
        %3139 = vmatpush1.msra.mxu0 0.0
        %3140 = vmatprep.subr.mxu0 0.0
        %3141 = vmatpush1.msra.mxu0 0.0
        %3142 = vmatprep.subr.mxu0 0.0
        %3143 = vmatpush1.msra.mxu0 0.0
        %3144 = vmatprep.subr.mxu0 0.0
        %3145 = vmatpush1.msra.mxu0 0.0
        %3146 = vmatprep.subr.mxu0 0.0
        %3147 = vmatpush1.msra.mxu0 0.0
        %3148 = vmatprep.subr.mxu0 0.0
        %3149 = vmatpush1.msra.mxu0 0.0
        %3150 = vmatprep.subr.mxu0 0.0
        %3151 = vmatpush1.msra.mxu0 0.0
        %3152 = vmatprep.subr.mxu0 0.0
        %3153 = vmatpush1.msra.mxu0 0.0
        %3154 = vmatprep.subr.mxu0 0.0
        %3155 = vmatpush1.msra.mxu0 0.0
        %3156 = vmatprep.subr.mxu0 0.0
        %3157 = vmatpush1.msra.mxu0 0.0
        %3158 = vmatprep.subr.mxu0 0.0
        %3159 = vmatpush1.msra.mxu0 0.0
        %3160 = vmatprep.subr.mxu0 0.0
        %3161 = vmatpush1.msra.mxu0 0.0
        %3162 = vmatprep.subr.mxu0 0.0
        %3163 = vmatpush1.msra.mxu0 0.0
        %3164 = vmatprep.subr.mxu0 0.0
        %3165 = vmatpush1.msra.mxu0 0.0
        %3166 = vmatprep.subr.mxu0 0.0
        %3167 = vmatpush1.msra.mxu0 0.0
        %3168 = vmatprep.subr.mxu0 0.0
        %3169 = vmatpush1.msra.mxu0 0.0
        %3170 = vmatprep.subr.mxu0 0.0
        %3171 = vmatpush1.msra.mxu0 0.0
        %3172 = vmatprep.subr.mxu0 0.0
        %3173 = vmatpush1.msra.mxu0 0.0
        %3174 = vmatprep.subr.mxu0 0.0
        %3175 = vmatpush1.msra.mxu0 0.0
        %3176 = vmatprep.subr.mxu0 0.0
        %3177 = vmatpush1.msra.mxu0 0.0
        %3178 = vmatprep.subr.mxu0 0.0
        %3179 = vmatpush1.msra.mxu0 0.0
        %3180 = vmatprep.subr.mxu0 0.0
        %3181 = vmatpush1.msra.mxu0 0.0
        %3182 = vmatprep.subr.mxu0 0.0
        %3183 = vmatpush1.msra.mxu0 0.0
        %3184 = vmatprep.subr.mxu0 0.0
        %3185 = vmatpush1.msra.mxu0 0.0
        %3186 = vmatprep.mubr.f32.mxu0 0.0
        %3187 = vmatmul.mubr.f32.gmra.mrb[0].mxu0 %v3120
        %v3188 = vpop.f32.mrb[0].mxu0
        %v3189 = vadd.f32 0.0, %v3188
        %v3190 = vpop.f32.mrb[0].mxu0
        %3191 = vdwg.mxu0
        %3192 = vrot.lane.b32.xlu0 %v2615, 64
        %v3193 = vpop.permute.xlu0 %3192
        %v3196 = vsel %vm419, %v2963, 0
        %3198 = vmatprep.subr.mxu0 0.0
        %3199 = vmatpush1.msra.mxu0 %v3193
        %3200 = vmatprep.subr.mxu0 0.0
        %3201 = vmatpush1.msra.mxu0 0.0
        %3202 = vmatprep.subr.mxu0 0.0
        %3203 = vmatpush1.msra.mxu0 0.0
        %3204 = vmatprep.subr.mxu0 0.0
        %3205 = vmatpush1.msra.mxu0 0.0
        %3206 = vmatprep.subr.mxu0 0.0
        %3207 = vmatpush1.msra.mxu0 0.0
        %3208 = vmatprep.subr.mxu0 0.0
        %3209 = vmatpush1.msra.mxu0 0.0
        %3210 = vmatprep.subr.mxu0 0.0
        %3211 = vmatpush1.msra.mxu0 0.0
        %3212 = vmatprep.subr.mxu0 0.0
        %3213 = vmatpush1.msra.mxu0 0.0
        %3214 = vmatprep.subr.mxu0 0.0
        %3215 = vmatpush1.msra.mxu0 0.0
        %3216 = vmatprep.subr.mxu0 0.0
        %3217 = vmatpush1.msra.mxu0 0.0
        %3218 = vmatprep.subr.mxu0 0.0
        %3219 = vmatpush1.msra.mxu0 0.0
        %3220 = vmatprep.subr.mxu0 0.0
        %3221 = vmatpush1.msra.mxu0 0.0
        %3222 = vmatprep.subr.mxu0 0.0
        %3223 = vmatpush1.msra.mxu0 0.0
        %3224 = vmatprep.subr.mxu0 0.0
        %3225 = vmatpush1.msra.mxu0 0.0
        %3226 = vmatprep.subr.mxu0 0.0
        %3227 = vmatpush1.msra.mxu0 0.0
        %3228 = vmatprep.subr.mxu0 0.0
        %3229 = vmatpush1.msra.mxu0 0.0
        %3230 = vmatprep.subr.mxu0 0.0
        %3231 = vmatpush1.msra.mxu0 0.0
        %3232 = vmatprep.subr.mxu0 0.0
        %3233 = vmatpush1.msra.mxu0 0.0
        %3234 = vmatprep.subr.mxu0 0.0
        %3235 = vmatpush1.msra.mxu0 0.0
        %3236 = vmatprep.subr.mxu0 0.0
        %3237 = vmatpush1.msra.mxu0 0.0
        %3238 = vmatprep.subr.mxu0 0.0
        %3239 = vmatpush1.msra.mxu0 0.0
        %3240 = vmatprep.subr.mxu0 0.0
        %3241 = vmatpush1.msra.mxu0 0.0
        %3242 = vmatprep.subr.mxu0 0.0
        %3243 = vmatpush1.msra.mxu0 0.0
        %3244 = vmatprep.subr.mxu0 0.0
        %3245 = vmatpush1.msra.mxu0 0.0
        %3246 = vmatprep.subr.mxu0 0.0
        %3247 = vmatpush1.msra.mxu0 0.0
        %3248 = vmatprep.subr.mxu0 0.0
        %3249 = vmatpush1.msra.mxu0 0.0
        %3250 = vmatprep.subr.mxu0 0.0
        %3251 = vmatpush1.msra.mxu0 0.0
        %3252 = vmatprep.subr.mxu0 0.0
        %3253 = vmatpush1.msra.mxu0 0.0
        %3254 = vmatprep.subr.mxu0 0.0
        %3255 = vmatpush1.msra.mxu0 0.0
        %3256 = vmatprep.subr.mxu0 0.0
        %3257 = vmatpush1.msra.mxu0 0.0
        %3258 = vmatprep.subr.mxu0 0.0
        %3259 = vmatpush1.msra.mxu0 0.0
        %3260 = vmatprep.subr.mxu0 0.0
        %3261 = vmatpush1.msra.mxu0 0.0
        %3262 = vmatprep.mubr.f32.mxu0 0.0
        %3263 = vmatmul.mubr.f32.gmra.mrb[0].mxu0 %v3196
        %v3264 = vpop.f32.mrb[0].mxu0
        %v3265 = vadd.f32 0.0, %v3264
        %v3266 = vpop.f32.mrb[0].mxu0
        %3267 = vdwg.mxu0
        %3269 = vrot.lane.b32.xlu0 %v3113, 8
        %v3270 = vpop.permute.xlu0 %3269
        %3273 = vrot.lane.b32.xlu0 %v3189, 16
        %v3274 = vpop.permute.xlu0 %3273
        %3277 = vrot.lane.b32.xlu0 %v3265, 24
        %v3278 = vpop.permute.xlu0 %3277
        %v3280 = vsel %vm419, %v3037, %v3270
        %v3281 = vsel %vm1083, %v3280, %v3274
        %v3282 = vsel %vm1085, %v3281, %v3278
        %v3283 = vlaneseq
        %v3284 = vshrl.u32 %v3283, 7
        %v3285 = vsub.s32 0, %v3284
        %v3286 = vrot.slane %v2523, %v3285
        %v3288 = vsel %vm277, %v3282, 0
        %3290 = vmatprep.subr.mxu0 0.0
        %3291 = vmatpush1.msra.mxu0 %v2519
        %3292 = vmatprep.subr.mxu0 0.0
        %3293 = vmatpush1.msra.mxu0 %v2520
        %3294 = vmatprep.subr.mxu0 0.0
        %3295 = vmatpush1.msra.mxu0 %v2521
        %3296 = vmatprep.subr.mxu0 0.0
        %3297 = vmatpush1.msra.mxu0 %v2522
        %3298 = vmatprep.subr.mxu0 0.0
        %3299 = vmatpush1.msra.mxu0 0.0
        %3300 = vmatprep.subr.mxu0 0.0
        %3301 = vmatpush1.msra.mxu0 0.0
        %3302 = vmatprep.subr.mxu0 0.0
        %3303 = vmatpush1.msra.mxu0 0.0
        %3304 = vmatprep.subr.mxu0 0.0
        %3305 = vmatpush1.msra.mxu0 0.0
        %3306 = vmatprep.subr.mxu0 0.0
        %3307 = vmatpush1.msra.mxu0 0.0
        %3308 = vmatprep.subr.mxu0 0.0
        %3309 = vmatpush1.msra.mxu0 0.0
        %3310 = vmatprep.subr.mxu0 0.0
        %3311 = vmatpush1.msra.mxu0 0.0
        %3312 = vmatprep.subr.mxu0 0.0
        %3313 = vmatpush1.msra.mxu0 0.0
        %3314 = vmatprep.subr.mxu0 0.0
        %3315 = vmatpush1.msra.mxu0 0.0
        %3316 = vmatprep.subr.mxu0 0.0
        %3317 = vmatpush1.msra.mxu0 0.0
        %3318 = vmatprep.subr.mxu0 0.0
        %3319 = vmatpush1.msra.mxu0 0.0
        %3320 = vmatprep.subr.mxu0 0.0
        %3321 = vmatpush1.msra.mxu0 0.0
        %3322 = vmatprep.subr.mxu0 0.0
        %3323 = vmatpush1.msra.mxu0 0.0
        %3324 = vmatprep.subr.mxu0 0.0
        %3325 = vmatpush1.msra.mxu0 0.0
        %3326 = vmatprep.subr.mxu0 0.0
        %3327 = vmatpush1.msra.mxu0 0.0
        %3328 = vmatprep.subr.mxu0 0.0
        %3329 = vmatpush1.msra.mxu0 0.0
        %3330 = vmatprep.subr.mxu0 0.0
        %3331 = vmatpush1.msra.mxu0 0.0
        %3332 = vmatprep.subr.mxu0 0.0
        %3333 = vmatpush1.msra.mxu0 0.0
        %3334 = vmatprep.subr.mxu0 0.0
        %3335 = vmatpush1.msra.mxu0 0.0
        %3336 = vmatprep.subr.mxu0 0.0
        %3337 = vmatpush1.msra.mxu0 0.0
        %3338 = vmatprep.subr.mxu0 0.0
        %3339 = vmatpush1.msra.mxu0 0.0
        %3340 = vmatprep.subr.mxu0 0.0
        %3341 = vmatpush1.msra.mxu0 0.0
        %3342 = vmatprep.subr.mxu0 0.0
        %3343 = vmatpush1.msra.mxu0 0.0
        %3344 = vmatprep.subr.mxu0 0.0
        %3345 = vmatpush1.msra.mxu0 0.0
        %3346 = vmatprep.subr.mxu0 0.0
        %3347 = vmatpush1.msra.mxu0 0.0
        %3348 = vmatprep.subr.mxu0 0.0
        %3349 = vmatpush1.msra.mxu0 0.0
        %3350 = vmatprep.subr.mxu0 0.0
        %3351 = vmatpush1.msra.mxu0 0.0
        %3352 = vmatprep.subr.mxu0 0.0
        %3353 = vmatpush1.msra.mxu0 0.0
        %3354 = vmatprep.mubr.f32.mxu0 0.0
        %3355 = vmatmul.mubr.f32.gmra.mrb[0].mxu0 %v3288
        %v3356 = vpop.f32.mrb[0].mxu0
        %v3357 = vadd.f32 %v3286, %v3356
        %v3358 = vpop.f32.mrb[0].mxu0
        %3359 = vdwg.mxu0
        %v3360 = vadd.f32 %v2481, %v3357
        %v3361 = vld [vmem:[%s4 + $0x2e0] sm:$0x1]
        %v3362 = vld [vmem:[%s4 + $0x2e8] sm:$0x1]
        %v3363 = vsel %vm277, %v3360, 0.0
        %3364 = vadd.xlane.f32.xlu0 %v3363
        %v3365 = vpop.xlane.xlu0 %3364
        %v3366 = vmul.f32 %v3365, %v281
        %v3367 = vsub.f32 %v3360, %v3366
        %v3368 = vmul.f32 %v3367, %v3367
        %v3369 = vsel %vm277, %v3368, 0.0
        %3370 = vadd.xlane.f32.xlu0 %v3369
        %v3371 = vpop.xlane.xlu0 %3370
        %v3372 = vmul.f32 %v3371, 0.032258064
        %v3373 = vrsqrt.pop %v3372
        %v3374 = vmul.f32 %v3372, %v3373
        %vm3375 = vcmp.eq.f32.partialorder %v3372, inf
        %v3376 = vsel %vm3375, %v3372, %v3374
        %vm3377 = vcmp.eq.f32.partialorder %v3372, 0.0
        %v3378 = vand.u32 %v3372, 2147483648
        %v3379 = vsel %vm3377, %v3378, %v3376
        %v3380 = vlaneseq
        %v3381 = vshrl.u32 %v3380, 7
        %v3382 = vsub.s32 0, %v3381
        %v3383 = vrot.slane %v3361, %v3382
        %v3384 = vmul.f32 %v3383, %v3367
        %v3385 = vadd.f32 %v3379, 1e-06
        %v3386 = vrcp.pop %v3385
        %v3387 = vmul.f32 %v3384, %v3386
        %v3388 = vlaneseq
        %v3389 = vshrl.u32 %v3388, 7
        %v3390 = vsub.s32 0, %v3389
        %v3391 = vrot.slane %v3362, %v3390
        %v3392 = vadd.f32 %v3387, %v3391
        %v3393 = vld [vmem:[%s4 + $0x210] sm:$0xff]
        %v3394 = vld [vmem:[%s4 + $0x218] sm:$0xff]
        %v3395 = vld [vmem:[%s4 + $0x220] sm:$0xff]
        %v3396 = vld [vmem:[%s4 + $0x228] sm:$0xff]
        %v3397 = vld [vmem:[%s4 + $0x230] sm:$0x1]
        %v3398 = vld [vmem:[%s4 + $0x238] sm:$0xff]
        %v3399 = vld [vmem:[%s4 + $0x240] sm:$0xff]
        %v3400 = vld [vmem:[%s4 + $0x248] sm:$0xff]
        %v3401 = vld [vmem:[%s4 + $0x250] sm:$0xff]
        %v3402 = vld [vmem:[%s4 + $0x258] sm:$0x1]
        %v3403 = vlaneseq
        %v3404 = vshrl.u32 %v3403, 7
        %v3405 = vsub.s32 0, %v3404
        %v3406 = vrot.slane %v3397, %v3405
        %v3408 = vsel %vm277, %v3392, 0
        %3410 = vmatprep.subr.mxu0 0.0
        %3411 = vmatpush1.msra.mxu0 %v3393
        %3412 = vmatprep.subr.mxu0 0.0
        %3413 = vmatpush1.msra.mxu0 %v3394
        %3414 = vmatprep.subr.mxu0 0.0
        %3415 = vmatpush1.msra.mxu0 %v3395
        %3416 = vmatprep.subr.mxu0 0.0
        %3417 = vmatpush1.msra.mxu0 %v3396
        %3418 = vmatprep.subr.mxu0 0.0
        %3419 = vmatpush1.msra.mxu0 0.0
        %3420 = vmatprep.subr.mxu0 0.0
        %3421 = vmatpush1.msra.mxu0 0.0
        %3422 = vmatprep.subr.mxu0 0.0
        %3423 = vmatpush1.msra.mxu0 0.0
        %3424 = vmatprep.subr.mxu0 0.0
        %3425 = vmatpush1.msra.mxu0 0.0
        %3426 = vmatprep.subr.mxu0 0.0
        %3427 = vmatpush1.msra.mxu0 0.0
        %3428 = vmatprep.subr.mxu0 0.0
        %3429 = vmatpush1.msra.mxu0 0.0
        %3430 = vmatprep.subr.mxu0 0.0
        %3431 = vmatpush1.msra.mxu0 0.0
        %3432 = vmatprep.subr.mxu0 0.0
        %3433 = vmatpush1.msra.mxu0 0.0
        %3434 = vmatprep.subr.mxu0 0.0
        %3435 = vmatpush1.msra.mxu0 0.0
        %3436 = vmatprep.subr.mxu0 0.0
        %3437 = vmatpush1.msra.mxu0 0.0
        %3438 = vmatprep.subr.mxu0 0.0
        %3439 = vmatpush1.msra.mxu0 0.0
        %3440 = vmatprep.subr.mxu0 0.0
        %3441 = vmatpush1.msra.mxu0 0.0
        %3442 = vmatprep.subr.mxu0 0.0
        %3443 = vmatpush1.msra.mxu0 0.0
        %3444 = vmatprep.subr.mxu0 0.0
        %3445 = vmatpush1.msra.mxu0 0.0
        %3446 = vmatprep.subr.mxu0 0.0
        %3447 = vmatpush1.msra.mxu0 0.0
        %3448 = vmatprep.subr.mxu0 0.0
        %3449 = vmatpush1.msra.mxu0 0.0
        %3450 = vmatprep.subr.mxu0 0.0
        %3451 = vmatpush1.msra.mxu0 0.0
        %3452 = vmatprep.subr.mxu0 0.0
        %3453 = vmatpush1.msra.mxu0 0.0
        %3454 = vmatprep.subr.mxu0 0.0
        %3455 = vmatpush1.msra.mxu0 0.0
        %3456 = vmatprep.subr.mxu0 0.0
        %3457 = vmatpush1.msra.mxu0 0.0
        %3458 = vmatprep.subr.mxu0 0.0
        %3459 = vmatpush1.msra.mxu0 0.0
        %3460 = vmatprep.subr.mxu0 0.0
        %3461 = vmatpush1.msra.mxu0 0.0
        %3462 = vmatprep.subr.mxu0 0.0
        %3463 = vmatpush1.msra.mxu0 0.0
        %3464 = vmatprep.subr.mxu0 0.0
        %3465 = vmatpush1.msra.mxu0 0.0
        %3466 = vmatprep.subr.mxu0 0.0
        %3467 = vmatpush1.msra.mxu0 0.0
        %3468 = vmatprep.subr.mxu0 0.0
        %3469 = vmatpush1.msra.mxu0 0.0
        %3470 = vmatprep.subr.mxu0 0.0
        %3471 = vmatpush1.msra.mxu0 0.0
        %3472 = vmatprep.subr.mxu0 0.0
        %3473 = vmatpush1.msra.mxu0 0.0
        %3474 = vmatprep.mubr.f32.mxu0 0.0
        %3475 = vmatmul.mubr.f32.gmra.mrb[0].mxu0 %v3408
        %v3476 = vpop.f32.mrb[0].mxu0
        %v3477 = vadd.f32 %v3406, %v3476
        %v3478 = vpop.f32.mrb[0].mxu0
        %3479 = vdwg.mxu0
        %v3480 = vmul.f32 %v3477, 0.35355338
        %3485 = vrot.lane.b32.xlu0 %v3393, 96
        %v3486 = vpop.permute.xlu0 %3485
        %3487 = vrot.lane.b32.xlu0 %v3394, 96
        %v3488 = vpop.permute.xlu0 %3487
        %3489 = vrot.lane.b32.xlu0 %v3395, 96
        %v3490 = vpop.permute.xlu0 %3489
        %3491 = vrot.lane.b32.xlu0 %v3396, 96
        %v3492 = vpop.permute.xlu0 %3491
        %3498 = vrot.lane.b32.xlu0 %v3406, 96
        %v3499 = vpop.permute.xlu0 %3498
        %v3502 = vsel %vm277, %v2480, 0
        %3504 = vmatprep.subr.mxu0 0.0
        %3505 = vmatpush1.msra.mxu0 %v3486
        %3506 = vmatprep.subr.mxu0 0.0
        %3507 = vmatpush1.msra.mxu0 %v3488
        %3508 = vmatprep.subr.mxu0 0.0
        %3509 = vmatpush1.msra.mxu0 %v3490
        %3510 = vmatprep.subr.mxu0 0.0
        %3511 = vmatpush1.msra.mxu0 %v3492
        %3512 = vmatprep.subr.mxu0 0.0
        %3513 = vmatpush1.msra.mxu0 0.0
        %3514 = vmatprep.subr.mxu0 0.0
        %3515 = vmatpush1.msra.mxu0 0.0
        %3516 = vmatprep.subr.mxu0 0.0
        %3517 = vmatpush1.msra.mxu0 0.0
        %3518 = vmatprep.subr.mxu0 0.0
        %3519 = vmatpush1.msra.mxu0 0.0
        %3520 = vmatprep.subr.mxu0 0.0
        %3521 = vmatpush1.msra.mxu0 0.0
        %3522 = vmatprep.subr.mxu0 0.0
        %3523 = vmatpush1.msra.mxu0 0.0
        %3524 = vmatprep.subr.mxu0 0.0
        %3525 = vmatpush1.msra.mxu0 0.0
        %3526 = vmatprep.subr.mxu0 0.0
        %3527 = vmatpush1.msra.mxu0 0.0
        %3528 = vmatprep.subr.mxu0 0.0
        %3529 = vmatpush1.msra.mxu0 0.0
        %3530 = vmatprep.subr.mxu0 0.0
        %3531 = vmatpush1.msra.mxu0 0.0
        %3532 = vmatprep.subr.mxu0 0.0
        %3533 = vmatpush1.msra.mxu0 0.0
        %3534 = vmatprep.subr.mxu0 0.0
        %3535 = vmatpush1.msra.mxu0 0.0
        %3536 = vmatprep.subr.mxu0 0.0
        %3537 = vmatpush1.msra.mxu0 0.0
        %3538 = vmatprep.subr.mxu0 0.0
        %3539 = vmatpush1.msra.mxu0 0.0
        %3540 = vmatprep.subr.mxu0 0.0
        %3541 = vmatpush1.msra.mxu0 0.0
        %3542 = vmatprep.subr.mxu0 0.0
        %3543 = vmatpush1.msra.mxu0 0.0
        %3544 = vmatprep.subr.mxu0 0.0
        %3545 = vmatpush1.msra.mxu0 0.0
        %3546 = vmatprep.subr.mxu0 0.0
        %3547 = vmatpush1.msra.mxu0 0.0
        %3548 = vmatprep.subr.mxu0 0.0
        %3549 = vmatpush1.msra.mxu0 0.0
        %3550 = vmatprep.subr.mxu0 0.0
        %3551 = vmatpush1.msra.mxu0 0.0
        %3552 = vmatprep.subr.mxu0 0.0
        %3553 = vmatpush1.msra.mxu0 0.0
        %3554 = vmatprep.subr.mxu0 0.0
        %3555 = vmatpush1.msra.mxu0 0.0
        %3556 = vmatprep.subr.mxu0 0.0
        %3557 = vmatpush1.msra.mxu0 0.0
        %3558 = vmatprep.subr.mxu0 0.0
        %3559 = vmatpush1.msra.mxu0 0.0
        %3560 = vmatprep.subr.mxu0 0.0
        %3561 = vmatpush1.msra.mxu0 0.0
        %3562 = vmatprep.subr.mxu0 0.0
        %3563 = vmatpush1.msra.mxu0 0.0
        %3564 = vmatprep.subr.mxu0 0.0
        %3565 = vmatpush1.msra.mxu0 0.0
        %3566 = vmatprep.subr.mxu0 0.0
        %3567 = vmatpush1.msra.mxu0 0.0
        %3568 = vmatprep.mubr.f32.mxu0 0.0
        %3569 = vmatmul.mubr.f32.gmra.mrb[0].mxu0 %v3502
        %v3570 = vpop.f32.mrb[0].mxu0
        %v3571 = vadd.f32 %v3499, %v3570
        %v3572 = vpop.f32.mrb[0].mxu0
        %3573 = vdwg.mxu0
        %3575 = vrot.lane.b32.xlu0 %v3480, 120
        %v3576 = vpop.permute.xlu0 %3575
        %3577 = vrot.lane.b32.xlu0 %v3480, 112
        %v3578 = vpop.permute.xlu0 %3577
        %3579 = vrot.lane.b32.xlu0 %v3480, 104
        %v3580 = vpop.permute.xlu0 %3579
        %3582 = vrot.lane.b32.xlu0 %v3571, 120
        %v3583 = vpop.permute.xlu0 %3582
        %3584 = vrot.lane.b32.xlu0 %v3571, 112
        %v3585 = vpop.permute.xlu0 %3584
        %3586 = vrot.lane.b32.xlu0 %v3571, 104
        %v3587 = vpop.permute.xlu0 %3586
        %v3588 = vsel %vm419, %v3480, 0
        %v3590 = vsel %vm419, %v3571, 0
        %3592 = vmatprep.subr.mxu0 0.0
        %3593 = vmatpush1.xpose.msra.mxu0 %v3590
        %3594 = vmatprep.subr.mxu0 0.0
        %3595 = vmatpush1.xpose.msra.mxu0 0.0
        %3596 = vmatprep.subr.mxu0 0.0
        %3597 = vmatpush1.xpose.msra.mxu0 0.0
        %3598 = vmatprep.subr.mxu0 0.0
        %3599 = vmatpush1.xpose.msra.mxu0 0.0
        %3600 = vmatprep.subr.mxu0 0.0
        %3601 = vmatpush1.xpose.msra.mxu0 0.0
        %3602 = vmatprep.subr.mxu0 0.0
        %3603 = vmatpush1.xpose.msra.mxu0 0.0
        %3604 = vmatprep.subr.mxu0 0.0
        %3605 = vmatpush1.xpose.msra.mxu0 0.0
        %3606 = vmatprep.subr.mxu0 0.0
        %3607 = vmatpush1.xpose.msra.mxu0 0.0
        %3608 = vmatprep.subr.mxu0 0.0
        %3609 = vmatpush1.xpose.msra.mxu0 0.0
        %3610 = vmatprep.subr.mxu0 0.0
        %3611 = vmatpush1.xpose.msra.mxu0 0.0
        %3612 = vmatprep.subr.mxu0 0.0
        %3613 = vmatpush1.xpose.msra.mxu0 0.0
        %3614 = vmatprep.subr.mxu0 0.0
        %3615 = vmatpush1.xpose.msra.mxu0 0.0
        %3616 = vmatprep.subr.mxu0 0.0
        %3617 = vmatpush1.xpose.msra.mxu0 0.0
        %3618 = vmatprep.subr.mxu0 0.0
        %3619 = vmatpush1.xpose.msra.mxu0 0.0
        %3620 = vmatprep.subr.mxu0 0.0
        %3621 = vmatpush1.xpose.msra.mxu0 0.0
        %3622 = vmatprep.subr.mxu0 0.0
        %3623 = vmatpush1.xpose.msra.mxu0 0.0
        %3624 = vmatprep.subr.mxu0 0.0
        %3625 = vmatpush1.xpose.msra.mxu0 0.0
        %3626 = vmatprep.subr.mxu0 0.0
        %3627 = vmatpush1.xpose.msra.mxu0 0.0
        %3628 = vmatprep.subr.mxu0 0.0
        %3629 = vmatpush1.xpose.msra.mxu0 0.0
        %3630 = vmatprep.subr.mxu0 0.0
        %3631 = vmatpush1.xpose.msra.mxu0 0.0
        %3632 = vmatprep.subr.mxu0 0.0
        %3633 = vmatpush1.xpose.msra.mxu0 0.0
        %3634 = vmatprep.subr.mxu0 0.0
        %3635 = vmatpush1.xpose.msra.mxu0 0.0
        %3636 = vmatprep.subr.mxu0 0.0
        %3637 = vmatpush1.xpose.msra.mxu0 0.0
        %3638 = vmatprep.subr.mxu0 0.0
        %3639 = vmatpush1.xpose.msra.mxu0 0.0
        %3640 = vmatprep.subr.mxu0 0.0
        %3641 = vmatpush1.xpose.msra.mxu0 0.0
        %3642 = vmatprep.subr.mxu0 0.0
        %3643 = vmatpush1.xpose.msra.mxu0 0.0
        %3644 = vmatprep.subr.mxu0 0.0
        %3645 = vmatpush1.xpose.msra.mxu0 0.0
        %3646 = vmatprep.subr.mxu0 0.0
        %3647 = vmatpush1.xpose.msra.mxu0 0.0
        %3648 = vmatprep.subr.mxu0 0.0
        %3649 = vmatpush1.xpose.msra.mxu0 0.0
        %3650 = vmatprep.subr.mxu0 0.0
        %3651 = vmatpush1.xpose.msra.mxu0 0.0
        %3652 = vmatprep.subr.mxu0 0.0
        %3653 = vmatpush1.xpose.msra.mxu0 0.0
        %3654 = vmatprep.subr.mxu0 0.0
        %3655 = vmatpush1.xpose.msra.mxu0 0.0
        %3656 = vmatprep.mubr.f32.mxu0 0.0
        %3657 = vmatmul.mubr.f32.gmra.mrb[0].mxu0 %v3588
        %v3658 = vpop.f32.mrb[0].mxu0
        %v3659 = vadd.f32 %v415, %v3658
        %v3660 = vpop.f32.mrb[0].mxu0
        %3661 = vdwg.mxu0
        %v3662 = vsel %vm419, %v3576, 0
        %v3664 = vsel %vm419, %v3583, 0
        %3666 = vmatprep.subr.mxu0 0.0
        %3667 = vmatpush1.xpose.msra.mxu0 %v3664
        %3668 = vmatprep.subr.mxu0 0.0
        %3669 = vmatpush1.xpose.msra.mxu0 0.0
        %3670 = vmatprep.subr.mxu0 0.0
        %3671 = vmatpush1.xpose.msra.mxu0 0.0
        %3672 = vmatprep.subr.mxu0 0.0
        %3673 = vmatpush1.xpose.msra.mxu0 0.0
        %3674 = vmatprep.subr.mxu0 0.0
        %3675 = vmatpush1.xpose.msra.mxu0 0.0
        %3676 = vmatprep.subr.mxu0 0.0
        %3677 = vmatpush1.xpose.msra.mxu0 0.0
        %3678 = vmatprep.subr.mxu0 0.0
        %3679 = vmatpush1.xpose.msra.mxu0 0.0
        %3680 = vmatprep.subr.mxu0 0.0
        %3681 = vmatpush1.xpose.msra.mxu0 0.0
        %3682 = vmatprep.subr.mxu0 0.0
        %3683 = vmatpush1.xpose.msra.mxu0 0.0
        %3684 = vmatprep.subr.mxu0 0.0
        %3685 = vmatpush1.xpose.msra.mxu0 0.0
        %3686 = vmatprep.subr.mxu0 0.0
        %3687 = vmatpush1.xpose.msra.mxu0 0.0
        %3688 = vmatprep.subr.mxu0 0.0
        %3689 = vmatpush1.xpose.msra.mxu0 0.0
        %3690 = vmatprep.subr.mxu0 0.0
        %3691 = vmatpush1.xpose.msra.mxu0 0.0
        %3692 = vmatprep.subr.mxu0 0.0
        %3693 = vmatpush1.xpose.msra.mxu0 0.0
        %3694 = vmatprep.subr.mxu0 0.0
        %3695 = vmatpush1.xpose.msra.mxu0 0.0
        %3696 = vmatprep.subr.mxu0 0.0
        %3697 = vmatpush1.xpose.msra.mxu0 0.0
        %3698 = vmatprep.subr.mxu0 0.0
        %3699 = vmatpush1.xpose.msra.mxu0 0.0
        %3700 = vmatprep.subr.mxu0 0.0
        %3701 = vmatpush1.xpose.msra.mxu0 0.0
        %3702 = vmatprep.subr.mxu0 0.0
        %3703 = vmatpush1.xpose.msra.mxu0 0.0
        %3704 = vmatprep.subr.mxu0 0.0
        %3705 = vmatpush1.xpose.msra.mxu0 0.0
        %3706 = vmatprep.subr.mxu0 0.0
        %3707 = vmatpush1.xpose.msra.mxu0 0.0
        %3708 = vmatprep.subr.mxu0 0.0
        %3709 = vmatpush1.xpose.msra.mxu0 0.0
        %3710 = vmatprep.subr.mxu0 0.0
        %3711 = vmatpush1.xpose.msra.mxu0 0.0
        %3712 = vmatprep.subr.mxu0 0.0
        %3713 = vmatpush1.xpose.msra.mxu0 0.0
        %3714 = vmatprep.subr.mxu0 0.0
        %3715 = vmatpush1.xpose.msra.mxu0 0.0
        %3716 = vmatprep.subr.mxu0 0.0
        %3717 = vmatpush1.xpose.msra.mxu0 0.0
        %3718 = vmatprep.subr.mxu0 0.0
        %3719 = vmatpush1.xpose.msra.mxu0 0.0
        %3720 = vmatprep.subr.mxu0 0.0
        %3721 = vmatpush1.xpose.msra.mxu0 0.0
        %3722 = vmatprep.subr.mxu0 0.0
        %3723 = vmatpush1.xpose.msra.mxu0 0.0
        %3724 = vmatprep.subr.mxu0 0.0
        %3725 = vmatpush1.xpose.msra.mxu0 0.0
        %3726 = vmatprep.subr.mxu0 0.0
        %3727 = vmatpush1.xpose.msra.mxu0 0.0
        %3728 = vmatprep.subr.mxu0 0.0
        %3729 = vmatpush1.xpose.msra.mxu0 0.0
        %3730 = vmatprep.mubr.f32.mxu0 0.0
        %3731 = vmatmul.mubr.f32.gmra.mrb[0].mxu0 %v3662
        %v3732 = vpop.f32.mrb[0].mxu0
        %v3733 = vadd.f32 %v415, %v3732
        %v3734 = vpop.f32.mrb[0].mxu0
        %3735 = vdwg.mxu0
        %v3736 = vsel %vm419, %v3578, 0
        %v3738 = vsel %vm419, %v3585, 0
        %3740 = vmatprep.subr.mxu0 0.0
        %3741 = vmatpush1.xpose.msra.mxu0 %v3738
        %3742 = vmatprep.subr.mxu0 0.0
        %3743 = vmatpush1.xpose.msra.mxu0 0.0
        %3744 = vmatprep.subr.mxu0 0.0
        %3745 = vmatpush1.xpose.msra.mxu0 0.0
        %3746 = vmatprep.subr.mxu0 0.0
        %3747 = vmatpush1.xpose.msra.mxu0 0.0
        %3748 = vmatprep.subr.mxu0 0.0
        %3749 = vmatpush1.xpose.msra.mxu0 0.0
        %3750 = vmatprep.subr.mxu0 0.0
        %3751 = vmatpush1.xpose.msra.mxu0 0.0
        %3752 = vmatprep.subr.mxu0 0.0
        %3753 = vmatpush1.xpose.msra.mxu0 0.0
        %3754 = vmatprep.subr.mxu0 0.0
        %3755 = vmatpush1.xpose.msra.mxu0 0.0
        %3756 = vmatprep.subr.mxu0 0.0
        %3757 = vmatpush1.xpose.msra.mxu0 0.0
        %3758 = vmatprep.subr.mxu0 0.0
        %3759 = vmatpush1.xpose.msra.mxu0 0.0
        %3760 = vmatprep.subr.mxu0 0.0
        %3761 = vmatpush1.xpose.msra.mxu0 0.0
        %3762 = vmatprep.subr.mxu0 0.0
        %3763 = vmatpush1.xpose.msra.mxu0 0.0
        %3764 = vmatprep.subr.mxu0 0.0
        %3765 = vmatpush1.xpose.msra.mxu0 0.0
        %3766 = vmatprep.subr.mxu0 0.0
        %3767 = vmatpush1.xpose.msra.mxu0 0.0
        %3768 = vmatprep.subr.mxu0 0.0
        %3769 = vmatpush1.xpose.msra.mxu0 0.0
        %3770 = vmatprep.subr.mxu0 0.0
        %3771 = vmatpush1.xpose.msra.mxu0 0.0
        %3772 = vmatprep.subr.mxu0 0.0
        %3773 = vmatpush1.xpose.msra.mxu0 0.0
        %3774 = vmatprep.subr.mxu0 0.0
        %3775 = vmatpush1.xpose.msra.mxu0 0.0
        %3776 = vmatprep.subr.mxu0 0.0
        %3777 = vmatpush1.xpose.msra.mxu0 0.0
        %3778 = vmatprep.subr.mxu0 0.0
        %3779 = vmatpush1.xpose.msra.mxu0 0.0
        %3780 = vmatprep.subr.mxu0 0.0
        %3781 = vmatpush1.xpose.msra.mxu0 0.0
        %3782 = vmatprep.subr.mxu0 0.0
        %3783 = vmatpush1.xpose.msra.mxu0 0.0
        %3784 = vmatprep.subr.mxu0 0.0
        %3785 = vmatpush1.xpose.msra.mxu0 0.0
        %3786 = vmatprep.subr.mxu0 0.0
        %3787 = vmatpush1.xpose.msra.mxu0 0.0
        %3788 = vmatprep.subr.mxu0 0.0
        %3789 = vmatpush1.xpose.msra.mxu0 0.0
        %3790 = vmatprep.subr.mxu0 0.0
        %3791 = vmatpush1.xpose.msra.mxu0 0.0
        %3792 = vmatprep.subr.mxu0 0.0
        %3793 = vmatpush1.xpose.msra.mxu0 0.0
        %3794 = vmatprep.subr.mxu0 0.0
        %3795 = vmatpush1.xpose.msra.mxu0 0.0
        %3796 = vmatprep.subr.mxu0 0.0
        %3797 = vmatpush1.xpose.msra.mxu0 0.0
        %3798 = vmatprep.subr.mxu0 0.0
        %3799 = vmatpush1.xpose.msra.mxu0 0.0
        %3800 = vmatprep.subr.mxu0 0.0
        %3801 = vmatpush1.xpose.msra.mxu0 0.0
        %3802 = vmatprep.subr.mxu0 0.0
        %3803 = vmatpush1.xpose.msra.mxu0 0.0
        %3804 = vmatprep.mubr.f32.mxu0 0.0
        %3805 = vmatmul.mubr.f32.gmra.mrb[0].mxu0 %v3736
        %v3806 = vpop.f32.mrb[0].mxu0
        %v3807 = vadd.f32 %v415, %v3806
        %v3808 = vpop.f32.mrb[0].mxu0
        %3809 = vdwg.mxu0
        %v3810 = vsel %vm419, %v3580, 0
        %v3812 = vsel %vm419, %v3587, 0
        %3814 = vmatprep.subr.mxu0 0.0
        %3815 = vmatpush1.xpose.msra.mxu0 %v3812
        %3816 = vmatprep.subr.mxu0 0.0
        %3817 = vmatpush1.xpose.msra.mxu0 0.0
        %3818 = vmatprep.subr.mxu0 0.0
        %3819 = vmatpush1.xpose.msra.mxu0 0.0
        %3820 = vmatprep.subr.mxu0 0.0
        %3821 = vmatpush1.xpose.msra.mxu0 0.0
        %3822 = vmatprep.subr.mxu0 0.0
        %3823 = vmatpush1.xpose.msra.mxu0 0.0
        %3824 = vmatprep.subr.mxu0 0.0
        %3825 = vmatpush1.xpose.msra.mxu0 0.0
        %3826 = vmatprep.subr.mxu0 0.0
        %3827 = vmatpush1.xpose.msra.mxu0 0.0
        %3828 = vmatprep.subr.mxu0 0.0
        %3829 = vmatpush1.xpose.msra.mxu0 0.0
        %3830 = vmatprep.subr.mxu0 0.0
        %3831 = vmatpush1.xpose.msra.mxu0 0.0
        %3832 = vmatprep.subr.mxu0 0.0
        %3833 = vmatpush1.xpose.msra.mxu0 0.0
        %3834 = vmatprep.subr.mxu0 0.0
        %3835 = vmatpush1.xpose.msra.mxu0 0.0
        %3836 = vmatprep.subr.mxu0 0.0
        %3837 = vmatpush1.xpose.msra.mxu0 0.0
        %3838 = vmatprep.subr.mxu0 0.0
        %3839 = vmatpush1.xpose.msra.mxu0 0.0
        %3840 = vmatprep.subr.mxu0 0.0
        %3841 = vmatpush1.xpose.msra.mxu0 0.0
        %3842 = vmatprep.subr.mxu0 0.0
        %3843 = vmatpush1.xpose.msra.mxu0 0.0
        %3844 = vmatprep.subr.mxu0 0.0
        %3845 = vmatpush1.xpose.msra.mxu0 0.0
        %3846 = vmatprep.subr.mxu0 0.0
        %3847 = vmatpush1.xpose.msra.mxu0 0.0
        %3848 = vmatprep.subr.mxu0 0.0
        %3849 = vmatpush1.xpose.msra.mxu0 0.0
        %3850 = vmatprep.subr.mxu0 0.0
        %3851 = vmatpush1.xpose.msra.mxu0 0.0
        %3852 = vmatprep.subr.mxu0 0.0
        %3853 = vmatpush1.xpose.msra.mxu0 0.0
        %3854 = vmatprep.subr.mxu0 0.0
        %3855 = vmatpush1.xpose.msra.mxu0 0.0
        %3856 = vmatprep.subr.mxu0 0.0
        %3857 = vmatpush1.xpose.msra.mxu0 0.0
        %3858 = vmatprep.subr.mxu0 0.0
        %3859 = vmatpush1.xpose.msra.mxu0 0.0
        %3860 = vmatprep.subr.mxu0 0.0
        %3861 = vmatpush1.xpose.msra.mxu0 0.0
        %3862 = vmatprep.subr.mxu0 0.0
        %3863 = vmatpush1.xpose.msra.mxu0 0.0
        %3864 = vmatprep.subr.mxu0 0.0
        %3865 = vmatpush1.xpose.msra.mxu0 0.0
        %3866 = vmatprep.subr.mxu0 0.0
        %3867 = vmatpush1.xpose.msra.mxu0 0.0
        %3868 = vmatprep.subr.mxu0 0.0
        %3869 = vmatpush1.xpose.msra.mxu0 0.0
        %3870 = vmatprep.subr.mxu0 0.0
        %3871 = vmatpush1.xpose.msra.mxu0 0.0
        %3872 = vmatprep.subr.mxu0 0.0
        %3873 = vmatpush1.xpose.msra.mxu0 0.0
        %3874 = vmatprep.subr.mxu0 0.0
        %3875 = vmatpush1.xpose.msra.mxu0 0.0
        %3876 = vmatprep.subr.mxu0 0.0
        %3877 = vmatpush1.xpose.msra.mxu0 0.0
        %3878 = vmatprep.mubr.f32.mxu0 0.0
        %3879 = vmatmul.mubr.f32.gmra.mrb[0].mxu0 %v3810
        %v3880 = vpop.f32.mrb[0].mxu0
        %v3881 = vadd.f32 %v415, %v3880
        %v3882 = vpop.f32.mrb[0].mxu0
        %3883 = vdwg.mxu0
        %v3884 = vsel %vm419, %v3659, -inf
        %3885 = vmax.xlane.f32.xlu0 %v3884
        %v3886 = vpop.xlane.xlu0 %3885
        %v3887 = vsel %vm419, %v3733, -inf
        %3888 = vmax.xlane.f32.xlu0 %v3887
        %v3889 = vpop.xlane.xlu0 %3888
        %v3890 = vsel %vm419, %v3807, -inf
        %3891 = vmax.xlane.f32.xlu0 %v3890
        %v3892 = vpop.xlane.xlu0 %3891
        %v3893 = vsel %vm419, %v3881, -inf
        %3894 = vmax.xlane.f32.xlu0 %v3893
        %v3895 = vpop.xlane.xlu0 %3894
        %v3896 = vsub.f32 %v3659, %v3886
        %v3897 = vsub.f32 %v3733, %v3889
        %v3898 = vsub.f32 %v3807, %v3892
        %v3899 = vsub.f32 %v3881, %v3895
        %v3900 = vmul.f32 %v3896, 1.442695
        %v3901 = vpow.pop %v3900
        %v3902 = vmul.f32 %v3897, 1.442695
        %v3903 = vpow.pop %v3902
        %v3904 = vmul.f32 %v3898, 1.442695
        %v3905 = vpow.pop %v3904
        %v3906 = vmul.f32 %v3899, 1.442695
        %v3907 = vpow.pop %v3906
        %v3908 = vsel %vm419, %v3901, 0.0
        %3909 = vadd.xlane.f32.xlu0 %v3908
        %v3910 = vpop.xlane.xlu0 %3909
        %v3911 = vsel %vm419, %v3903, 0.0
        %3912 = vadd.xlane.f32.xlu0 %v3911
        %v3913 = vpop.xlane.xlu0 %3912
        %v3914 = vsel %vm419, %v3905, 0.0
        %3915 = vadd.xlane.f32.xlu0 %v3914
        %v3916 = vpop.xlane.xlu0 %3915
        %v3917 = vsel %vm419, %v3907, 0.0
        %3918 = vadd.xlane.f32.xlu0 %v3917
        %v3919 = vpop.xlane.xlu0 %3918
        %v3920 = vrcp.pop %v3910
        %v3921 = vrcp.pop %v3913
        %v3922 = vrcp.pop %v3916
        %v3923 = vrcp.pop %v3919
        %v3924 = vmul.f32 %v3901, %v3920
        %v3925 = vmul.f32 %v3903, %v3921
        %v3926 = vmul.f32 %v3905, %v3922
        %v3927 = vmul.f32 %v3907, %v3923
        %3928 = vrot.lane.b32.xlu0 %v3571, 96
        %v3929 = vpop.permute.xlu0 %3928
        %v3932 = vsel %vm419, %v3924, 0
        %3934 = vmatprep.subr.mxu0 0.0
        %3935 = vmatpush1.msra.mxu0 %v3929
        %3936 = vmatprep.subr.mxu0 0.0
        %3937 = vmatpush1.msra.mxu0 0.0
        %3938 = vmatprep.subr.mxu0 0.0
        %3939 = vmatpush1.msra.mxu0 0.0
        %3940 = vmatprep.subr.mxu0 0.0
        %3941 = vmatpush1.msra.mxu0 0.0
        %3942 = vmatprep.subr.mxu0 0.0
        %3943 = vmatpush1.msra.mxu0 0.0
        %3944 = vmatprep.subr.mxu0 0.0
        %3945 = vmatpush1.msra.mxu0 0.0
        %3946 = vmatprep.subr.mxu0 0.0
        %3947 = vmatpush1.msra.mxu0 0.0
        %3948 = vmatprep.subr.mxu0 0.0
        %3949 = vmatpush1.msra.mxu0 0.0
        %3950 = vmatprep.subr.mxu0 0.0
        %3951 = vmatpush1.msra.mxu0 0.0
        %3952 = vmatprep.subr.mxu0 0.0
        %3953 = vmatpush1.msra.mxu0 0.0
        %3954 = vmatprep.subr.mxu0 0.0
        %3955 = vmatpush1.msra.mxu0 0.0
        %3956 = vmatprep.subr.mxu0 0.0
        %3957 = vmatpush1.msra.mxu0 0.0
        %3958 = vmatprep.subr.mxu0 0.0
        %3959 = vmatpush1.msra.mxu0 0.0
        %3960 = vmatprep.subr.mxu0 0.0
        %3961 = vmatpush1.msra.mxu0 0.0
        %3962 = vmatprep.subr.mxu0 0.0
        %3963 = vmatpush1.msra.mxu0 0.0
        %3964 = vmatprep.subr.mxu0 0.0
        %3965 = vmatpush1.msra.mxu0 0.0
        %3966 = vmatprep.subr.mxu0 0.0
        %3967 = vmatpush1.msra.mxu0 0.0
        %3968 = vmatprep.subr.mxu0 0.0
        %3969 = vmatpush1.msra.mxu0 0.0
        %3970 = vmatprep.subr.mxu0 0.0
        %3971 = vmatpush1.msra.mxu0 0.0
        %3972 = vmatprep.subr.mxu0 0.0
        %3973 = vmatpush1.msra.mxu0 0.0
        %3974 = vmatprep.subr.mxu0 0.0
        %3975 = vmatpush1.msra.mxu0 0.0
        %3976 = vmatprep.subr.mxu0 0.0
        %3977 = vmatpush1.msra.mxu0 0.0
        %3978 = vmatprep.subr.mxu0 0.0
        %3979 = vmatpush1.msra.mxu0 0.0
        %3980 = vmatprep.subr.mxu0 0.0
        %3981 = vmatpush1.msra.mxu0 0.0
        %3982 = vmatprep.subr.mxu0 0.0
        %3983 = vmatpush1.msra.mxu0 0.0
        %3984 = vmatprep.subr.mxu0 0.0
        %3985 = vmatpush1.msra.mxu0 0.0
        %3986 = vmatprep.subr.mxu0 0.0
        %3987 = vmatpush1.msra.mxu0 0.0
        %3988 = vmatprep.subr.mxu0 0.0
        %3989 = vmatpush1.msra.mxu0 0.0
        %3990 = vmatprep.subr.mxu0 0.0
        %3991 = vmatpush1.msra.mxu0 0.0
        %3992 = vmatprep.subr.mxu0 0.0
        %3993 = vmatpush1.msra.mxu0 0.0
        %3994 = vmatprep.subr.mxu0 0.0
        %3995 = vmatpush1.msra.mxu0 0.0
        %3996 = vmatprep.subr.mxu0 0.0
        %3997 = vmatpush1.msra.mxu0 0.0
        %3998 = vmatprep.mubr.f32.mxu0 0.0
        %3999 = vmatmul.mubr.f32.gmra.mrb[0].mxu0 %v3932
        %v4000 = vpop.f32.mrb[0].mxu0
        %v4001 = vadd.f32 0.0, %v4000
        %v4002 = vpop.f32.mrb[0].mxu0
        %4003 = vdwg.mxu0
        %4004 = vrot.lane.b32.xlu0 %v3583, 96
        %v4005 = vpop.permute.xlu0 %4004
        %v4008 = vsel %vm419, %v3925, 0
        %4010 = vmatprep.subr.mxu0 0.0
        %4011 = vmatpush1.msra.mxu0 %v4005
        %4012 = vmatprep.subr.mxu0 0.0
        %4013 = vmatpush1.msra.mxu0 0.0
        %4014 = vmatprep.subr.mxu0 0.0
        %4015 = vmatpush1.msra.mxu0 0.0
        %4016 = vmatprep.subr.mxu0 0.0
        %4017 = vmatpush1.msra.mxu0 0.0
        %4018 = vmatprep.subr.mxu0 0.0
        %4019 = vmatpush1.msra.mxu0 0.0
        %4020 = vmatprep.subr.mxu0 0.0
        %4021 = vmatpush1.msra.mxu0 0.0
        %4022 = vmatprep.subr.mxu0 0.0
        %4023 = vmatpush1.msra.mxu0 0.0
        %4024 = vmatprep.subr.mxu0 0.0
        %4025 = vmatpush1.msra.mxu0 0.0
        %4026 = vmatprep.subr.mxu0 0.0
        %4027 = vmatpush1.msra.mxu0 0.0
        %4028 = vmatprep.subr.mxu0 0.0
        %4029 = vmatpush1.msra.mxu0 0.0
        %4030 = vmatprep.subr.mxu0 0.0
        %4031 = vmatpush1.msra.mxu0 0.0
        %4032 = vmatprep.subr.mxu0 0.0
        %4033 = vmatpush1.msra.mxu0 0.0
        %4034 = vmatprep.subr.mxu0 0.0
        %4035 = vmatpush1.msra.mxu0 0.0
        %4036 = vmatprep.subr.mxu0 0.0
        %4037 = vmatpush1.msra.mxu0 0.0
        %4038 = vmatprep.subr.mxu0 0.0
        %4039 = vmatpush1.msra.mxu0 0.0
        %4040 = vmatprep.subr.mxu0 0.0
        %4041 = vmatpush1.msra.mxu0 0.0
        %4042 = vmatprep.subr.mxu0 0.0
        %4043 = vmatpush1.msra.mxu0 0.0
        %4044 = vmatprep.subr.mxu0 0.0
        %4045 = vmatpush1.msra.mxu0 0.0
        %4046 = vmatprep.subr.mxu0 0.0
        %4047 = vmatpush1.msra.mxu0 0.0
        %4048 = vmatprep.subr.mxu0 0.0
        %4049 = vmatpush1.msra.mxu0 0.0
        %4050 = vmatprep.subr.mxu0 0.0
        %4051 = vmatpush1.msra.mxu0 0.0
        %4052 = vmatprep.subr.mxu0 0.0
        %4053 = vmatpush1.msra.mxu0 0.0
        %4054 = vmatprep.subr.mxu0 0.0
        %4055 = vmatpush1.msra.mxu0 0.0
        %4056 = vmatprep.subr.mxu0 0.0
        %4057 = vmatpush1.msra.mxu0 0.0
        %4058 = vmatprep.subr.mxu0 0.0
        %4059 = vmatpush1.msra.mxu0 0.0
        %4060 = vmatprep.subr.mxu0 0.0
        %4061 = vmatpush1.msra.mxu0 0.0
        %4062 = vmatprep.subr.mxu0 0.0
        %4063 = vmatpush1.msra.mxu0 0.0
        %4064 = vmatprep.subr.mxu0 0.0
        %4065 = vmatpush1.msra.mxu0 0.0
        %4066 = vmatprep.subr.mxu0 0.0
        %4067 = vmatpush1.msra.mxu0 0.0
        %4068 = vmatprep.subr.mxu0 0.0
        %4069 = vmatpush1.msra.mxu0 0.0
        %4070 = vmatprep.subr.mxu0 0.0
        %4071 = vmatpush1.msra.mxu0 0.0
        %4072 = vmatprep.subr.mxu0 0.0
        %4073 = vmatpush1.msra.mxu0 0.0
        %4074 = vmatprep.mubr.f32.mxu0 0.0
        %4075 = vmatmul.mubr.f32.gmra.mrb[0].mxu0 %v4008
        %v4076 = vpop.f32.mrb[0].mxu0
        %v4077 = vadd.f32 0.0, %v4076
        %v4078 = vpop.f32.mrb[0].mxu0
        %4079 = vdwg.mxu0
        %4080 = vrot.lane.b32.xlu0 %v3585, 96
        %v4081 = vpop.permute.xlu0 %4080
        %v4084 = vsel %vm419, %v3926, 0
        %4086 = vmatprep.subr.mxu0 0.0
        %4087 = vmatpush1.msra.mxu0 %v4081
        %4088 = vmatprep.subr.mxu0 0.0
        %4089 = vmatpush1.msra.mxu0 0.0
        %4090 = vmatprep.subr.mxu0 0.0
        %4091 = vmatpush1.msra.mxu0 0.0
        %4092 = vmatprep.subr.mxu0 0.0
        %4093 = vmatpush1.msra.mxu0 0.0
        %4094 = vmatprep.subr.mxu0 0.0
        %4095 = vmatpush1.msra.mxu0 0.0
        %4096 = vmatprep.subr.mxu0 0.0
        %4097 = vmatpush1.msra.mxu0 0.0
        %4098 = vmatprep.subr.mxu0 0.0
        %4099 = vmatpush1.msra.mxu0 0.0
        %4100 = vmatprep.subr.mxu0 0.0
        %4101 = vmatpush1.msra.mxu0 0.0
        %4102 = vmatprep.subr.mxu0 0.0
        %4103 = vmatpush1.msra.mxu0 0.0
        %4104 = vmatprep.subr.mxu0 0.0
        %4105 = vmatpush1.msra.mxu0 0.0
        %4106 = vmatprep.subr.mxu0 0.0
        %4107 = vmatpush1.msra.mxu0 0.0
        %4108 = vmatprep.subr.mxu0 0.0
        %4109 = vmatpush1.msra.mxu0 0.0
        %4110 = vmatprep.subr.mxu0 0.0
        %4111 = vmatpush1.msra.mxu0 0.0
        %4112 = vmatprep.subr.mxu0 0.0
        %4113 = vmatpush1.msra.mxu0 0.0
        %4114 = vmatprep.subr.mxu0 0.0
        %4115 = vmatpush1.msra.mxu0 0.0
        %4116 = vmatprep.subr.mxu0 0.0
        %4117 = vmatpush1.msra.mxu0 0.0
        %4118 = vmatprep.subr.mxu0 0.0
        %4119 = vmatpush1.msra.mxu0 0.0
        %4120 = vmatprep.subr.mxu0 0.0
        %4121 = vmatpush1.msra.mxu0 0.0
        %4122 = vmatprep.subr.mxu0 0.0
        %4123 = vmatpush1.msra.mxu0 0.0
        %4124 = vmatprep.subr.mxu0 0.0
        %4125 = vmatpush1.msra.mxu0 0.0
        %4126 = vmatprep.subr.mxu0 0.0
        %4127 = vmatpush1.msra.mxu0 0.0
        %4128 = vmatprep.subr.mxu0 0.0
        %4129 = vmatpush1.msra.mxu0 0.0
        %4130 = vmatprep.subr.mxu0 0.0
        %4131 = vmatpush1.msra.mxu0 0.0
        %4132 = vmatprep.subr.mxu0 0.0
        %4133 = vmatpush1.msra.mxu0 0.0
        %4134 = vmatprep.subr.mxu0 0.0
        %4135 = vmatpush1.msra.mxu0 0.0
        %4136 = vmatprep.subr.mxu0 0.0
        %4137 = vmatpush1.msra.mxu0 0.0
        %4138 = vmatprep.subr.mxu0 0.0
        %4139 = vmatpush1.msra.mxu0 0.0
        %4140 = vmatprep.subr.mxu0 0.0
        %4141 = vmatpush1.msra.mxu0 0.0
        %4142 = vmatprep.subr.mxu0 0.0
        %4143 = vmatpush1.msra.mxu0 0.0
        %4144 = vmatprep.subr.mxu0 0.0
        %4145 = vmatpush1.msra.mxu0 0.0
        %4146 = vmatprep.subr.mxu0 0.0
        %4147 = vmatpush1.msra.mxu0 0.0
        %4148 = vmatprep.subr.mxu0 0.0
        %4149 = vmatpush1.msra.mxu0 0.0
        %4150 = vmatprep.mubr.f32.mxu0 0.0
        %4151 = vmatmul.mubr.f32.gmra.mrb[0].mxu0 %v4084
        %v4152 = vpop.f32.mrb[0].mxu0
        %v4153 = vadd.f32 0.0, %v4152
        %v4154 = vpop.f32.mrb[0].mxu0
        %4155 = vdwg.mxu0
        %4156 = vrot.lane.b32.xlu0 %v3587, 96
        %v4157 = vpop.permute.xlu0 %4156
        %v4160 = vsel %vm419, %v3927, 0
        %4162 = vmatprep.subr.mxu0 0.0
        %4163 = vmatpush1.msra.mxu0 %v4157
        %4164 = vmatprep.subr.mxu0 0.0
        %4165 = vmatpush1.msra.mxu0 0.0
        %4166 = vmatprep.subr.mxu0 0.0
        %4167 = vmatpush1.msra.mxu0 0.0
        %4168 = vmatprep.subr.mxu0 0.0
        %4169 = vmatpush1.msra.mxu0 0.0
        %4170 = vmatprep.subr.mxu0 0.0
        %4171 = vmatpush1.msra.mxu0 0.0
        %4172 = vmatprep.subr.mxu0 0.0
        %4173 = vmatpush1.msra.mxu0 0.0
        %4174 = vmatprep.subr.mxu0 0.0
        %4175 = vmatpush1.msra.mxu0 0.0
        %4176 = vmatprep.subr.mxu0 0.0
        %4177 = vmatpush1.msra.mxu0 0.0
        %4178 = vmatprep.subr.mxu0 0.0
        %4179 = vmatpush1.msra.mxu0 0.0
        %4180 = vmatprep.subr.mxu0 0.0
        %4181 = vmatpush1.msra.mxu0 0.0
        %4182 = vmatprep.subr.mxu0 0.0
        %4183 = vmatpush1.msra.mxu0 0.0
        %4184 = vmatprep.subr.mxu0 0.0
        %4185 = vmatpush1.msra.mxu0 0.0
        %4186 = vmatprep.subr.mxu0 0.0
        %4187 = vmatpush1.msra.mxu0 0.0
        %4188 = vmatprep.subr.mxu0 0.0
        %4189 = vmatpush1.msra.mxu0 0.0
        %4190 = vmatprep.subr.mxu0 0.0
        %4191 = vmatpush1.msra.mxu0 0.0
        %4192 = vmatprep.subr.mxu0 0.0
        %4193 = vmatpush1.msra.mxu0 0.0
        %4194 = vmatprep.subr.mxu0 0.0
        %4195 = vmatpush1.msra.mxu0 0.0
        %4196 = vmatprep.subr.mxu0 0.0
        %4197 = vmatpush1.msra.mxu0 0.0
        %4198 = vmatprep.subr.mxu0 0.0
        %4199 = vmatpush1.msra.mxu0 0.0
        %4200 = vmatprep.subr.mxu0 0.0
        %4201 = vmatpush1.msra.mxu0 0.0
        %4202 = vmatprep.subr.mxu0 0.0
        %4203 = vmatpush1.msra.mxu0 0.0
        %4204 = vmatprep.subr.mxu0 0.0
        %4205 = vmatpush1.msra.mxu0 0.0
        %4206 = vmatprep.subr.mxu0 0.0
        %4207 = vmatpush1.msra.mxu0 0.0
        %4208 = vmatprep.subr.mxu0 0.0
        %4209 = vmatpush1.msra.mxu0 0.0
        %4210 = vmatprep.subr.mxu0 0.0
        %4211 = vmatpush1.msra.mxu0 0.0
        %4212 = vmatprep.subr.mxu0 0.0
        %4213 = vmatpush1.msra.mxu0 0.0
        %4214 = vmatprep.subr.mxu0 0.0
        %4215 = vmatpush1.msra.mxu0 0.0
        %4216 = vmatprep.subr.mxu0 0.0
        %4217 = vmatpush1.msra.mxu0 0.0
        %4218 = vmatprep.subr.mxu0 0.0
        %4219 = vmatpush1.msra.mxu0 0.0
        %4220 = vmatprep.subr.mxu0 0.0
        %4221 = vmatpush1.msra.mxu0 0.0
        %4222 = vmatprep.subr.mxu0 0.0
        %4223 = vmatpush1.msra.mxu0 0.0
        %4224 = vmatprep.subr.mxu0 0.0
        %4225 = vmatpush1.msra.mxu0 0.0
        %4226 = vmatprep.mubr.f32.mxu0 0.0
        %4227 = vmatmul.mubr.f32.gmra.mrb[0].mxu0 %v4160
        %v4228 = vpop.f32.mrb[0].mxu0
        %v4229 = vadd.f32 0.0, %v4228
        %v4230 = vpop.f32.mrb[0].mxu0
        %4231 = vdwg.mxu0
        %4233 = vrot.lane.b32.xlu0 %v4077, 8
        %v4234 = vpop.permute.xlu0 %4233
        %4237 = vrot.lane.b32.xlu0 %v4153, 16
        %v4238 = vpop.permute.xlu0 %4237
        %4241 = vrot.lane.b32.xlu0 %v4229, 24
        %v4242 = vpop.permute.xlu0 %4241
        %v4244 = vsel %vm419, %v4001, %v4234
        %v4245 = vsel %vm1083, %v4244, %v4238
        %v4246 = vsel %vm1085, %v4245, %v4242
        %v4247 = vlaneseq
        %v4248 = vshrl.u32 %v4247, 7
        %v4249 = vsub.s32 0, %v4248
        %v4250 = vrot.slane %v3402, %v4249
        %v4252 = vsel %vm277, %v4246, 0
        %4254 = vmatprep.subr.mxu0 0.0
        %4255 = vmatpush1.msra.mxu0 %v3398
        %4256 = vmatprep.subr.mxu0 0.0
        %4257 = vmatpush1.msra.mxu0 %v3399
        %4258 = vmatprep.subr.mxu0 0.0
        %4259 = vmatpush1.msra.mxu0 %v3400
        %4260 = vmatprep.subr.mxu0 0.0
        %4261 = vmatpush1.msra.mxu0 %v3401
        %4262 = vmatprep.subr.mxu0 0.0
        %4263 = vmatpush1.msra.mxu0 0.0
        %4264 = vmatprep.subr.mxu0 0.0
        %4265 = vmatpush1.msra.mxu0 0.0
        %4266 = vmatprep.subr.mxu0 0.0
        %4267 = vmatpush1.msra.mxu0 0.0
        %4268 = vmatprep.subr.mxu0 0.0
        %4269 = vmatpush1.msra.mxu0 0.0
        %4270 = vmatprep.subr.mxu0 0.0
        %4271 = vmatpush1.msra.mxu0 0.0
        %4272 = vmatprep.subr.mxu0 0.0
        %4273 = vmatpush1.msra.mxu0 0.0
        %4274 = vmatprep.subr.mxu0 0.0
        %4275 = vmatpush1.msra.mxu0 0.0
        %4276 = vmatprep.subr.mxu0 0.0
        %4277 = vmatpush1.msra.mxu0 0.0
        %4278 = vmatprep.subr.mxu0 0.0
        %4279 = vmatpush1.msra.mxu0 0.0
        %4280 = vmatprep.subr.mxu0 0.0
        %4281 = vmatpush1.msra.mxu0 0.0
        %4282 = vmatprep.subr.mxu0 0.0
        %4283 = vmatpush1.msra.mxu0 0.0
        %4284 = vmatprep.subr.mxu0 0.0
        %4285 = vmatpush1.msra.mxu0 0.0
        %4286 = vmatprep.subr.mxu0 0.0
        %4287 = vmatpush1.msra.mxu0 0.0
        %4288 = vmatprep.subr.mxu0 0.0
        %4289 = vmatpush1.msra.mxu0 0.0
        %4290 = vmatprep.subr.mxu0 0.0
        %4291 = vmatpush1.msra.mxu0 0.0
        %4292 = vmatprep.subr.mxu0 0.0
        %4293 = vmatpush1.msra.mxu0 0.0
        %4294 = vmatprep.subr.mxu0 0.0
        %4295 = vmatpush1.msra.mxu0 0.0
        %4296 = vmatprep.subr.mxu0 0.0
        %4297 = vmatpush1.msra.mxu0 0.0
        %4298 = vmatprep.subr.mxu0 0.0
        %4299 = vmatpush1.msra.mxu0 0.0
        %4300 = vmatprep.subr.mxu0 0.0
        %4301 = vmatpush1.msra.mxu0 0.0
        %4302 = vmatprep.subr.mxu0 0.0
        %4303 = vmatpush1.msra.mxu0 0.0
        %4304 = vmatprep.subr.mxu0 0.0
        %4305 = vmatpush1.msra.mxu0 0.0
        %4306 = vmatprep.subr.mxu0 0.0
        %4307 = vmatpush1.msra.mxu0 0.0
        %4308 = vmatprep.subr.mxu0 0.0
        %4309 = vmatpush1.msra.mxu0 0.0
        %4310 = vmatprep.subr.mxu0 0.0
        %4311 = vmatpush1.msra.mxu0 0.0
        %4312 = vmatprep.subr.mxu0 0.0
        %4313 = vmatpush1.msra.mxu0 0.0
        %4314 = vmatprep.subr.mxu0 0.0
        %4315 = vmatpush1.msra.mxu0 0.0
        %4316 = vmatprep.subr.mxu0 0.0
        %4317 = vmatpush1.msra.mxu0 0.0
        %4318 = vmatprep.mubr.f32.mxu0 0.0
        %4319 = vmatmul.mubr.f32.gmra.mrb[0].mxu0 %v4252
        %v4320 = vpop.f32.mrb[0].mxu0
        %v4321 = vadd.f32 %v4250, %v4320
        %v4322 = vpop.f32.mrb[0].mxu0
        %4323 = vdwg.mxu0
        %v4324 = vadd.f32 %v3360, %v4321
        %v4325 = vld [vmem:[%s4 + $0x2f0] sm:$0x1]
        %v4326 = vld [vmem:[%s4 + $0x2f8] sm:$0x1]
        %v4327 = vsel %vm277, %v4324, 0.0
        %4328 = vadd.xlane.f32.xlu0 %v4327
        %v4329 = vpop.xlane.xlu0 %4328
        %v4330 = vmul.f32 %v4329, %v281
        %v4331 = vsub.f32 %v4324, %v4330
        %v4332 = vmul.f32 %v4331, %v4331
        %v4333 = vsel %vm277, %v4332, 0.0
        %4334 = vadd.xlane.f32.xlu0 %v4333
        %v4335 = vpop.xlane.xlu0 %4334
        %v4336 = vmul.f32 %v4335, 0.032258064
        %v4337 = vrsqrt.pop %v4336
        %v4338 = vmul.f32 %v4336, %v4337
        %vm4339 = vcmp.eq.f32.partialorder %v4336, inf
        %v4340 = vsel %vm4339, %v4336, %v4338
        %vm4341 = vcmp.eq.f32.partialorder %v4336, 0.0
        %v4342 = vand.u32 %v4336, 2147483648
        %v4343 = vsel %vm4341, %v4342, %v4340
        %v4344 = vlaneseq
        %v4345 = vshrl.u32 %v4344, 7
        %v4346 = vsub.s32 0, %v4345
        %v4347 = vrot.slane %v4325, %v4346
        %v4348 = vmul.f32 %v4347, %v4331
        %v4349 = vadd.f32 %v4343, 1e-06
        %v4350 = vrcp.pop %v4349
        %v4351 = vmul.f32 %v4348, %v4350
        %v4352 = vlaneseq
        %v4353 = vshrl.u32 %v4352, 7
        %v4354 = vsub.s32 0, %v4353
        %v4355 = vrot.slane %v4326, %v4354
        %v4356 = vadd.f32 %v4351, %v4355
        %v4357 = vld [vmem:[%s4 + $0x260] sm:$0xff]
        %v4358 = vld [vmem:[%s4 + $0x268] sm:$0xff]
        %v4359 = vld [vmem:[%s4 + $0x270] sm:$0xff]
        %v4360 = vld [vmem:[%s4 + $0x278] sm:$0xff]
        %v4361 = vld [vmem:[%s4 + $0x280] sm:$0x1]
        %v4362 = vld [vmem:[%s4 + $0x288] sm:$0xff]
        %v4363 = vld [vmem:[%s4 + $0x290] sm:$0xff]
        %v4364 = vld [vmem:[%s4 + $0x298] sm:$0xff]
        %v4365 = vld [vmem:[%s4 + $0x2a0] sm:$0xff]
        %v4366 = vld [vmem:[%s4 + $0x2a8] sm:$0xff]
        %v4367 = vld [vmem:[%s4 + $0x2b0] sm:$0xff]
        %v4368 = vld [vmem:[%s4 + $0x2b8] sm:$0xff]
        %v4369 = vld [vmem:[%s4 + $0x2c0] sm:$0xff]
        %v4370 = vld [vmem:[%s4 + $0x2c8] sm:$0x1]
        %v4371 = vlaneseq
        %v4372 = vshrl.u32 %v4371, 7
        %v4373 = vsub.s32 0, %v4372
        %v4374 = vrot.slane %v4361, %v4373
        %v4376 = vsel %vm277, %v4356, 0
        %4378 = vmatprep.subr.mxu0 0.0
        %4379 = vmatpush1.msra.mxu0 %v4357
        %4380 = vmatprep.subr.mxu0 0.0
        %4381 = vmatpush1.msra.mxu0 %v4358
        %4382 = vmatprep.subr.mxu0 0.0
        %4383 = vmatpush1.msra.mxu0 %v4359
        %4384 = vmatprep.subr.mxu0 0.0
        %4385 = vmatpush1.msra.mxu0 %v4360
        %4386 = vmatprep.subr.mxu0 0.0
        %4387 = vmatpush1.msra.mxu0 0.0
        %4388 = vmatprep.subr.mxu0 0.0
        %4389 = vmatpush1.msra.mxu0 0.0
        %4390 = vmatprep.subr.mxu0 0.0
        %4391 = vmatpush1.msra.mxu0 0.0
        %4392 = vmatprep.subr.mxu0 0.0
        %4393 = vmatpush1.msra.mxu0 0.0
        %4394 = vmatprep.subr.mxu0 0.0
        %4395 = vmatpush1.msra.mxu0 0.0
        %4396 = vmatprep.subr.mxu0 0.0
        %4397 = vmatpush1.msra.mxu0 0.0
        %4398 = vmatprep.subr.mxu0 0.0
        %4399 = vmatpush1.msra.mxu0 0.0
        %4400 = vmatprep.subr.mxu0 0.0
        %4401 = vmatpush1.msra.mxu0 0.0
        %4402 = vmatprep.subr.mxu0 0.0
        %4403 = vmatpush1.msra.mxu0 0.0
        %4404 = vmatprep.subr.mxu0 0.0
        %4405 = vmatpush1.msra.mxu0 0.0
        %4406 = vmatprep.subr.mxu0 0.0
        %4407 = vmatpush1.msra.mxu0 0.0
        %4408 = vmatprep.subr.mxu0 0.0
        %4409 = vmatpush1.msra.mxu0 0.0
        %4410 = vmatprep.subr.mxu0 0.0
        %4411 = vmatpush1.msra.mxu0 0.0
        %4412 = vmatprep.subr.mxu0 0.0
        %4413 = vmatpush1.msra.mxu0 0.0
        %4414 = vmatprep.subr.mxu0 0.0
        %4415 = vmatpush1.msra.mxu0 0.0
        %4416 = vmatprep.subr.mxu0 0.0
        %4417 = vmatpush1.msra.mxu0 0.0
        %4418 = vmatprep.subr.mxu0 0.0
        %4419 = vmatpush1.msra.mxu0 0.0
        %4420 = vmatprep.subr.mxu0 0.0
        %4421 = vmatpush1.msra.mxu0 0.0
        %4422 = vmatprep.subr.mxu0 0.0
        %4423 = vmatpush1.msra.mxu0 0.0
        %4424 = vmatprep.subr.mxu0 0.0
        %4425 = vmatpush1.msra.mxu0 0.0
        %4426 = vmatprep.subr.mxu0 0.0
        %4427 = vmatpush1.msra.mxu0 0.0
        %4428 = vmatprep.subr.mxu0 0.0
        %4429 = vmatpush1.msra.mxu0 0.0
        %4430 = vmatprep.subr.mxu0 0.0
        %4431 = vmatpush1.msra.mxu0 0.0
        %4432 = vmatprep.subr.mxu0 0.0
        %4433 = vmatpush1.msra.mxu0 0.0
        %4434 = vmatprep.subr.mxu0 0.0
        %4435 = vmatpush1.msra.mxu0 0.0
        %4436 = vmatprep.subr.mxu0 0.0
        %4437 = vmatpush1.msra.mxu0 0.0
        %4438 = vmatprep.subr.mxu0 0.0
        %4439 = vmatpush1.msra.mxu0 0.0
        %4440 = vmatprep.subr.mxu0 0.0
        %4441 = vmatpush1.msra.mxu0 0.0
        %4442 = vmatprep.mubr.f32.mxu0 0.0
        %4443 = vmatmul.mubr.f32.gmra.mrb[0].mxu0 %v4376
        %v4444 = vpop.f32.mrb[0].mxu0
        %v4445 = vadd.f32 %v4374, %v4444
        %v4446 = vpop.f32.mrb[0].mxu0
        %4447 = vdwg.mxu0
        %v4448 = vmax.f32 %v4445, 0.0
        %v4449 = vlaneseq
        %v4450 = vshrl.u32 %v4449, 7
        %v4451 = vsub.s32 0, %v4450
        %v4452 = vrot.slane %v4370, %v4451
        %v4454 = vsel %vm1293, %v4448, 0
        %4456 = vmatprep.subr.mxu0 0.0
        %4457 = vmatpush1.msra.mxu0 %v4362
        %4458 = vmatprep.subr.mxu0 0.0
        %4459 = vmatpush1.msra.mxu0 %v4363
        %4460 = vmatprep.subr.mxu0 0.0
        %4461 = vmatpush1.msra.mxu0 %v4364
        %4462 = vmatprep.subr.mxu0 0.0
        %4463 = vmatpush1.msra.mxu0 %v4365
        %4464 = vmatprep.subr.mxu0 0.0
        %4465 = vmatpush1.msra.mxu0 %v4366
        %4466 = vmatprep.subr.mxu0 0.0
        %4467 = vmatpush1.msra.mxu0 %v4367
        %4468 = vmatprep.subr.mxu0 0.0
        %4469 = vmatpush1.msra.mxu0 %v4368
        %4470 = vmatprep.subr.mxu0 0.0
        %4471 = vmatpush1.msra.mxu0 %v4369
        %4472 = vmatprep.subr.mxu0 0.0
        %4473 = vmatpush1.msra.mxu0 0.0
        %4474 = vmatprep.subr.mxu0 0.0
        %4475 = vmatpush1.msra.mxu0 0.0
        %4476 = vmatprep.subr.mxu0 0.0
        %4477 = vmatpush1.msra.mxu0 0.0
        %4478 = vmatprep.subr.mxu0 0.0
        %4479 = vmatpush1.msra.mxu0 0.0
        %4480 = vmatprep.subr.mxu0 0.0
        %4481 = vmatpush1.msra.mxu0 0.0
        %4482 = vmatprep.subr.mxu0 0.0
        %4483 = vmatpush1.msra.mxu0 0.0
        %4484 = vmatprep.subr.mxu0 0.0
        %4485 = vmatpush1.msra.mxu0 0.0
        %4486 = vmatprep.subr.mxu0 0.0
        %4487 = vmatpush1.msra.mxu0 0.0
        %4488 = vmatprep.subr.mxu0 0.0
        %4489 = vmatpush1.msra.mxu0 0.0
        %4490 = vmatprep.subr.mxu0 0.0
        %4491 = vmatpush1.msra.mxu0 0.0
        %4492 = vmatprep.subr.mxu0 0.0
        %4493 = vmatpush1.msra.mxu0 0.0
        %4494 = vmatprep.subr.mxu0 0.0
        %4495 = vmatpush1.msra.mxu0 0.0
        %4496 = vmatprep.subr.mxu0 0.0
        %4497 = vmatpush1.msra.mxu0 0.0
        %4498 = vmatprep.subr.mxu0 0.0
        %4499 = vmatpush1.msra.mxu0 0.0
        %4500 = vmatprep.subr.mxu0 0.0
        %4501 = vmatpush1.msra.mxu0 0.0
        %4502 = vmatprep.subr.mxu0 0.0
        %4503 = vmatpush1.msra.mxu0 0.0
        %4504 = vmatprep.subr.mxu0 0.0
        %4505 = vmatpush1.msra.mxu0 0.0
        %4506 = vmatprep.subr.mxu0 0.0
        %4507 = vmatpush1.msra.mxu0 0.0
        %4508 = vmatprep.subr.mxu0 0.0
        %4509 = vmatpush1.msra.mxu0 0.0
        %4510 = vmatprep.subr.mxu0 0.0
        %4511 = vmatpush1.msra.mxu0 0.0
        %4512 = vmatprep.subr.mxu0 0.0
        %4513 = vmatpush1.msra.mxu0 0.0
        %4514 = vmatprep.subr.mxu0 0.0
        %4515 = vmatpush1.msra.mxu0 0.0
        %4516 = vmatprep.subr.mxu0 0.0
        %4517 = vmatpush1.msra.mxu0 0.0
        %4518 = vmatprep.subr.mxu0 0.0
        %4519 = vmatpush1.msra.mxu0 0.0
        %4520 = vmatprep.mubr.f32.mxu0 0.0
        %4521 = vmatmul.mubr.f32.gmra.mrb[0].mxu0 %v4454
        %v4522 = vpop.f32.mrb[0].mxu0
        %v4523 = vadd.f32 %v4452, %v4522
        %v4524 = vpop.f32.mrb[0].mxu0
        %4525 = vdwg.mxu0
        %v4526 = vadd.f32 %v4324, %v4523
        %v4527 = vld [vmem:[%s4 + $0x410] sm:$0x1]
        %v4528 = vld [vmem:[%s4 + $0x418] sm:$0x1]
        %v4529 = vsel %vm277, %v4526, 0.0
        %4530 = vadd.xlane.f32.xlu0 %v4529
        %v4531 = vpop.xlane.xlu0 %4530
        %v4532 = vmul.f32 %v4531, %v281
        %v4533 = vsub.f32 %v4526, %v4532
        %v4534 = vmul.f32 %v4533, %v4533
        %v4535 = vsel %vm277, %v4534, 0.0
        %4536 = vadd.xlane.f32.xlu0 %v4535
        %v4537 = vpop.xlane.xlu0 %4536
        %v4538 = vmul.f32 %v4537, 0.032258064
        %v4539 = vrsqrt.pop %v4538
        %v4540 = vmul.f32 %v4538, %v4539
        %vm4541 = vcmp.eq.f32.partialorder %v4538, inf
        %v4542 = vsel %vm4541, %v4538, %v4540
        %vm4543 = vcmp.eq.f32.partialorder %v4538, 0.0
        %v4544 = vand.u32 %v4538, 2147483648
        %v4545 = vsel %vm4543, %v4544, %v4542
        %v4546 = vlaneseq
        %v4547 = vshrl.u32 %v4546, 7
        %v4548 = vsub.s32 0, %v4547
        %v4549 = vrot.slane %v4527, %v4548
        %v4550 = vmul.f32 %v4549, %v4533
        %v4551 = vadd.f32 %v4545, 1e-06
        %v4552 = vrcp.pop %v4551
        %v4553 = vmul.f32 %v4550, %v4552
        %v4554 = vlaneseq
        %v4555 = vshrl.u32 %v4554, 7
        %v4556 = vsub.s32 0, %v4555
        %v4557 = vrot.slane %v4528, %v4556
        %v4558 = vadd.f32 %v4553, %v4557
        %v4559 = vld [vmem:[%s4 + $0x300] sm:$0xff]
        %v4560 = vld [vmem:[%s4 + $0x308] sm:$0xff]
        %v4561 = vld [vmem:[%s4 + $0x310] sm:$0xff]
        %v4562 = vld [vmem:[%s4 + $0x318] sm:$0xff]
        %v4563 = vld [vmem:[%s4 + $0x320] sm:$0x1]
        %v4564 = vld [vmem:[%s4 + $0x328] sm:$0xff]
        %v4565 = vld [vmem:[%s4 + $0x330] sm:$0xff]
        %v4566 = vld [vmem:[%s4 + $0x338] sm:$0xff]
        %v4567 = vld [vmem:[%s4 + $0x340] sm:$0xff]
        %v4568 = vld [vmem:[%s4 + $0x348] sm:$0x1]
        %v4569 = vlaneseq
        %v4570 = vshrl.u32 %v4569, 7
        %v4571 = vsub.s32 0, %v4570
        %v4572 = vrot.slane %v4563, %v4571
        %v4574 = vsel %vm277, %v4558, 0
        %4576 = vmatprep.subr.mxu0 0.0
        %4577 = vmatpush1.msra.mxu0 %v4559
        %4578 = vmatprep.subr.mxu0 0.0
        %4579 = vmatpush1.msra.mxu0 %v4560
        %4580 = vmatprep.subr.mxu0 0.0
        %4581 = vmatpush1.msra.mxu0 %v4561
        %4582 = vmatprep.subr.mxu0 0.0
        %4583 = vmatpush1.msra.mxu0 %v4562
        %4584 = vmatprep.subr.mxu0 0.0
        %4585 = vmatpush1.msra.mxu0 0.0
        %4586 = vmatprep.subr.mxu0 0.0
        %4587 = vmatpush1.msra.mxu0 0.0
        %4588 = vmatprep.subr.mxu0 0.0
        %4589 = vmatpush1.msra.mxu0 0.0
        %4590 = vmatprep.subr.mxu0 0.0
        %4591 = vmatpush1.msra.mxu0 0.0
        %4592 = vmatprep.subr.mxu0 0.0
        %4593 = vmatpush1.msra.mxu0 0.0
        %4594 = vmatprep.subr.mxu0 0.0
        %4595 = vmatpush1.msra.mxu0 0.0
        %4596 = vmatprep.subr.mxu0 0.0
        %4597 = vmatpush1.msra.mxu0 0.0
        %4598 = vmatprep.subr.mxu0 0.0
        %4599 = vmatpush1.msra.mxu0 0.0
        %4600 = vmatprep.subr.mxu0 0.0
        %4601 = vmatpush1.msra.mxu0 0.0
        %4602 = vmatprep.subr.mxu0 0.0
        %4603 = vmatpush1.msra.mxu0 0.0
        %4604 = vmatprep.subr.mxu0 0.0
        %4605 = vmatpush1.msra.mxu0 0.0
        %4606 = vmatprep.subr.mxu0 0.0
        %4607 = vmatpush1.msra.mxu0 0.0
        %4608 = vmatprep.subr.mxu0 0.0
        %4609 = vmatpush1.msra.mxu0 0.0
        %4610 = vmatprep.subr.mxu0 0.0
        %4611 = vmatpush1.msra.mxu0 0.0
        %4612 = vmatprep.subr.mxu0 0.0
        %4613 = vmatpush1.msra.mxu0 0.0
        %4614 = vmatprep.subr.mxu0 0.0
        %4615 = vmatpush1.msra.mxu0 0.0
        %4616 = vmatprep.subr.mxu0 0.0
        %4617 = vmatpush1.msra.mxu0 0.0
        %4618 = vmatprep.subr.mxu0 0.0
        %4619 = vmatpush1.msra.mxu0 0.0
        %4620 = vmatprep.subr.mxu0 0.0
        %4621 = vmatpush1.msra.mxu0 0.0
        %4622 = vmatprep.subr.mxu0 0.0
        %4623 = vmatpush1.msra.mxu0 0.0
        %4624 = vmatprep.subr.mxu0 0.0
        %4625 = vmatpush1.msra.mxu0 0.0
        %4626 = vmatprep.subr.mxu0 0.0
        %4627 = vmatpush1.msra.mxu0 0.0
        %4628 = vmatprep.subr.mxu0 0.0
        %4629 = vmatpush1.msra.mxu0 0.0
        %4630 = vmatprep.subr.mxu0 0.0
        %4631 = vmatpush1.msra.mxu0 0.0
        %4632 = vmatprep.subr.mxu0 0.0
        %4633 = vmatpush1.msra.mxu0 0.0
        %4634 = vmatprep.subr.mxu0 0.0
        %4635 = vmatpush1.msra.mxu0 0.0
        %4636 = vmatprep.subr.mxu0 0.0
        %4637 = vmatpush1.msra.mxu0 0.0
        %4638 = vmatprep.subr.mxu0 0.0
        %4639 = vmatpush1.msra.mxu0 0.0
        %4640 = vmatprep.mubr.f32.mxu0 0.0
        %4641 = vmatmul.mubr.f32.gmra.mrb[0].mxu0 %v4574
        %v4642 = vpop.f32.mrb[0].mxu0
        %v4643 = vadd.f32 %v4572, %v4642
        %v4644 = vpop.f32.mrb[0].mxu0
        %4645 = vdwg.mxu0
        %v4646 = vmul.f32 %v4643, 0.35355338
        %4648 = vrot.lane.b32.xlu0 %v4646, 120
        %v4649 = vpop.permute.xlu0 %4648
        %4650 = vrot.lane.b32.xlu0 %v4646, 112
        %v4651 = vpop.permute.xlu0 %4650
        %4652 = vrot.lane.b32.xlu0 %v4646, 104
        %v4653 = vpop.permute.xlu0 %4652
        %4655 = vrot.lane.b32.xlu0 %v4643, 120
        %v4656 = vpop.permute.xlu0 %4655
        %4657 = vrot.lane.b32.xlu0 %v4643, 112
        %v4658 = vpop.permute.xlu0 %4657
        %4659 = vrot.lane.b32.xlu0 %v4643, 104
        %v4660 = vpop.permute.xlu0 %4659
        %4661 = vrot.lane.b32.xlu0 %v4643, 96
        %v4662 = vpop.permute.xlu0 %4661
        %v4663 = vsel %vm419, %v4646, 0
        %v4665 = vsel %vm419, %v4662, 0
        %4667 = vmatprep.subr.mxu0 0.0
        %4668 = vmatpush1.xpose.msra.mxu0 %v4665
        %4669 = vmatprep.subr.mxu0 0.0
        %4670 = vmatpush1.xpose.msra.mxu0 0.0
        %4671 = vmatprep.subr.mxu0 0.0
        %4672 = vmatpush1.xpose.msra.mxu0 0.0
        %4673 = vmatprep.subr.mxu0 0.0
        %4674 = vmatpush1.xpose.msra.mxu0 0.0
        %4675 = vmatprep.subr.mxu0 0.0
        %4676 = vmatpush1.xpose.msra.mxu0 0.0
        %4677 = vmatprep.subr.mxu0 0.0
        %4678 = vmatpush1.xpose.msra.mxu0 0.0
        %4679 = vmatprep.subr.mxu0 0.0
        %4680 = vmatpush1.xpose.msra.mxu0 0.0
        %4681 = vmatprep.subr.mxu0 0.0
        %4682 = vmatpush1.xpose.msra.mxu0 0.0
        %4683 = vmatprep.subr.mxu0 0.0
        %4684 = vmatpush1.xpose.msra.mxu0 0.0
        %4685 = vmatprep.subr.mxu0 0.0
        %4686 = vmatpush1.xpose.msra.mxu0 0.0
        %4687 = vmatprep.subr.mxu0 0.0
        %4688 = vmatpush1.xpose.msra.mxu0 0.0
        %4689 = vmatprep.subr.mxu0 0.0
        %4690 = vmatpush1.xpose.msra.mxu0 0.0
        %4691 = vmatprep.subr.mxu0 0.0
        %4692 = vmatpush1.xpose.msra.mxu0 0.0
        %4693 = vmatprep.subr.mxu0 0.0
        %4694 = vmatpush1.xpose.msra.mxu0 0.0
        %4695 = vmatprep.subr.mxu0 0.0
        %4696 = vmatpush1.xpose.msra.mxu0 0.0
        %4697 = vmatprep.subr.mxu0 0.0
        %4698 = vmatpush1.xpose.msra.mxu0 0.0
        %4699 = vmatprep.subr.mxu0 0.0
        %4700 = vmatpush1.xpose.msra.mxu0 0.0
        %4701 = vmatprep.subr.mxu0 0.0
        %4702 = vmatpush1.xpose.msra.mxu0 0.0
        %4703 = vmatprep.subr.mxu0 0.0
        %4704 = vmatpush1.xpose.msra.mxu0 0.0
        %4705 = vmatprep.subr.mxu0 0.0
        %4706 = vmatpush1.xpose.msra.mxu0 0.0
        %4707 = vmatprep.subr.mxu0 0.0
        %4708 = vmatpush1.xpose.msra.mxu0 0.0
        %4709 = vmatprep.subr.mxu0 0.0
        %4710 = vmatpush1.xpose.msra.mxu0 0.0
        %4711 = vmatprep.subr.mxu0 0.0
        %4712 = vmatpush1.xpose.msra.mxu0 0.0
        %4713 = vmatprep.subr.mxu0 0.0
        %4714 = vmatpush1.xpose.msra.mxu0 0.0
        %4715 = vmatprep.subr.mxu0 0.0
        %4716 = vmatpush1.xpose.msra.mxu0 0.0
        %4717 = vmatprep.subr.mxu0 0.0
        %4718 = vmatpush1.xpose.msra.mxu0 0.0
        %4719 = vmatprep.subr.mxu0 0.0
        %4720 = vmatpush1.xpose.msra.mxu0 0.0
        %4721 = vmatprep.subr.mxu0 0.0
        %4722 = vmatpush1.xpose.msra.mxu0 0.0
        %4723 = vmatprep.subr.mxu0 0.0
        %4724 = vmatpush1.xpose.msra.mxu0 0.0
        %4725 = vmatprep.subr.mxu0 0.0
        %4726 = vmatpush1.xpose.msra.mxu0 0.0
        %4727 = vmatprep.subr.mxu0 0.0
        %4728 = vmatpush1.xpose.msra.mxu0 0.0
        %4729 = vmatprep.subr.mxu0 0.0
        %4730 = vmatpush1.xpose.msra.mxu0 0.0
        %4731 = vmatprep.mubr.f32.mxu0 0.0
        %4732 = vmatmul.mubr.f32.gmra.mrb[0].mxu0 %v4663
        %v4733 = vpop.f32.mrb[0].mxu0
        %v4734 = vadd.f32 %v273, %v4733
        %v4735 = vpop.f32.mrb[0].mxu0
        %4736 = vdwg.mxu0
        %4737 = vrot.lane.b32.xlu0 %v4656, 96
        %v4738 = vpop.permute.xlu0 %4737
        %v4739 = vsel %vm419, %v4649, 0
        %v4741 = vsel %vm419, %v4738, 0
        %4743 = vmatprep.subr.mxu0 0.0
        %4744 = vmatpush1.xpose.msra.mxu0 %v4741
        %4745 = vmatprep.subr.mxu0 0.0
        %4746 = vmatpush1.xpose.msra.mxu0 0.0
        %4747 = vmatprep.subr.mxu0 0.0
        %4748 = vmatpush1.xpose.msra.mxu0 0.0
        %4749 = vmatprep.subr.mxu0 0.0
        %4750 = vmatpush1.xpose.msra.mxu0 0.0
        %4751 = vmatprep.subr.mxu0 0.0
        %4752 = vmatpush1.xpose.msra.mxu0 0.0
        %4753 = vmatprep.subr.mxu0 0.0
        %4754 = vmatpush1.xpose.msra.mxu0 0.0
        %4755 = vmatprep.subr.mxu0 0.0
        %4756 = vmatpush1.xpose.msra.mxu0 0.0
        %4757 = vmatprep.subr.mxu0 0.0
        %4758 = vmatpush1.xpose.msra.mxu0 0.0
        %4759 = vmatprep.subr.mxu0 0.0
        %4760 = vmatpush1.xpose.msra.mxu0 0.0
        %4761 = vmatprep.subr.mxu0 0.0
        %4762 = vmatpush1.xpose.msra.mxu0 0.0
        %4763 = vmatprep.subr.mxu0 0.0
        %4764 = vmatpush1.xpose.msra.mxu0 0.0
        %4765 = vmatprep.subr.mxu0 0.0
        %4766 = vmatpush1.xpose.msra.mxu0 0.0
        %4767 = vmatprep.subr.mxu0 0.0
        %4768 = vmatpush1.xpose.msra.mxu0 0.0
        %4769 = vmatprep.subr.mxu0 0.0
        %4770 = vmatpush1.xpose.msra.mxu0 0.0
        %4771 = vmatprep.subr.mxu0 0.0
        %4772 = vmatpush1.xpose.msra.mxu0 0.0
        %4773 = vmatprep.subr.mxu0 0.0
        %4774 = vmatpush1.xpose.msra.mxu0 0.0
        %4775 = vmatprep.subr.mxu0 0.0
        %4776 = vmatpush1.xpose.msra.mxu0 0.0
        %4777 = vmatprep.subr.mxu0 0.0
        %4778 = vmatpush1.xpose.msra.mxu0 0.0
        %4779 = vmatprep.subr.mxu0 0.0
        %4780 = vmatpush1.xpose.msra.mxu0 0.0
        %4781 = vmatprep.subr.mxu0 0.0
        %4782 = vmatpush1.xpose.msra.mxu0 0.0
        %4783 = vmatprep.subr.mxu0 0.0
        %4784 = vmatpush1.xpose.msra.mxu0 0.0
        %4785 = vmatprep.subr.mxu0 0.0
        %4786 = vmatpush1.xpose.msra.mxu0 0.0
        %4787 = vmatprep.subr.mxu0 0.0
        %4788 = vmatpush1.xpose.msra.mxu0 0.0
        %4789 = vmatprep.subr.mxu0 0.0
        %4790 = vmatpush1.xpose.msra.mxu0 0.0
        %4791 = vmatprep.subr.mxu0 0.0
        %4792 = vmatpush1.xpose.msra.mxu0 0.0
        %4793 = vmatprep.subr.mxu0 0.0
        %4794 = vmatpush1.xpose.msra.mxu0 0.0
        %4795 = vmatprep.subr.mxu0 0.0
        %4796 = vmatpush1.xpose.msra.mxu0 0.0
        %4797 = vmatprep.subr.mxu0 0.0
        %4798 = vmatpush1.xpose.msra.mxu0 0.0
        %4799 = vmatprep.subr.mxu0 0.0
        %4800 = vmatpush1.xpose.msra.mxu0 0.0
        %4801 = vmatprep.subr.mxu0 0.0
        %4802 = vmatpush1.xpose.msra.mxu0 0.0
        %4803 = vmatprep.subr.mxu0 0.0
        %4804 = vmatpush1.xpose.msra.mxu0 0.0
        %4805 = vmatprep.subr.mxu0 0.0
        %4806 = vmatpush1.xpose.msra.mxu0 0.0
        %4807 = vmatprep.mubr.f32.mxu0 0.0
        %4808 = vmatmul.mubr.f32.gmra.mrb[0].mxu0 %v4739
        %v4809 = vpop.f32.mrb[0].mxu0
        %v4810 = vadd.f32 %v273, %v4809
        %v4811 = vpop.f32.mrb[0].mxu0
        %4812 = vdwg.mxu0
        %4813 = vrot.lane.b32.xlu0 %v4658, 96
        %v4814 = vpop.permute.xlu0 %4813
        %v4815 = vsel %vm419, %v4651, 0
        %v4817 = vsel %vm419, %v4814, 0
        %4819 = vmatprep.subr.mxu0 0.0
        %4820 = vmatpush1.xpose.msra.mxu0 %v4817
        %4821 = vmatprep.subr.mxu0 0.0
        %4822 = vmatpush1.xpose.msra.mxu0 0.0
        %4823 = vmatprep.subr.mxu0 0.0
        %4824 = vmatpush1.xpose.msra.mxu0 0.0
        %4825 = vmatprep.subr.mxu0 0.0
        %4826 = vmatpush1.xpose.msra.mxu0 0.0
        %4827 = vmatprep.subr.mxu0 0.0
        %4828 = vmatpush1.xpose.msra.mxu0 0.0
        %4829 = vmatprep.subr.mxu0 0.0
        %4830 = vmatpush1.xpose.msra.mxu0 0.0
        %4831 = vmatprep.subr.mxu0 0.0
        %4832 = vmatpush1.xpose.msra.mxu0 0.0
        %4833 = vmatprep.subr.mxu0 0.0
        %4834 = vmatpush1.xpose.msra.mxu0 0.0
        %4835 = vmatprep.subr.mxu0 0.0
        %4836 = vmatpush1.xpose.msra.mxu0 0.0
        %4837 = vmatprep.subr.mxu0 0.0
        %4838 = vmatpush1.xpose.msra.mxu0 0.0
        %4839 = vmatprep.subr.mxu0 0.0
        %4840 = vmatpush1.xpose.msra.mxu0 0.0
        %4841 = vmatprep.subr.mxu0 0.0
        %4842 = vmatpush1.xpose.msra.mxu0 0.0
        %4843 = vmatprep.subr.mxu0 0.0
        %4844 = vmatpush1.xpose.msra.mxu0 0.0
        %4845 = vmatprep.subr.mxu0 0.0
        %4846 = vmatpush1.xpose.msra.mxu0 0.0
        %4847 = vmatprep.subr.mxu0 0.0
        %4848 = vmatpush1.xpose.msra.mxu0 0.0
        %4849 = vmatprep.subr.mxu0 0.0
        %4850 = vmatpush1.xpose.msra.mxu0 0.0
        %4851 = vmatprep.subr.mxu0 0.0
        %4852 = vmatpush1.xpose.msra.mxu0 0.0
        %4853 = vmatprep.subr.mxu0 0.0
        %4854 = vmatpush1.xpose.msra.mxu0 0.0
        %4855 = vmatprep.subr.mxu0 0.0
        %4856 = vmatpush1.xpose.msra.mxu0 0.0
        %4857 = vmatprep.subr.mxu0 0.0
        %4858 = vmatpush1.xpose.msra.mxu0 0.0
        %4859 = vmatprep.subr.mxu0 0.0
        %4860 = vmatpush1.xpose.msra.mxu0 0.0
        %4861 = vmatprep.subr.mxu0 0.0
        %4862 = vmatpush1.xpose.msra.mxu0 0.0
        %4863 = vmatprep.subr.mxu0 0.0
        %4864 = vmatpush1.xpose.msra.mxu0 0.0
        %4865 = vmatprep.subr.mxu0 0.0
        %4866 = vmatpush1.xpose.msra.mxu0 0.0
        %4867 = vmatprep.subr.mxu0 0.0
        %4868 = vmatpush1.xpose.msra.mxu0 0.0
        %4869 = vmatprep.subr.mxu0 0.0
        %4870 = vmatpush1.xpose.msra.mxu0 0.0
        %4871 = vmatprep.subr.mxu0 0.0
        %4872 = vmatpush1.xpose.msra.mxu0 0.0
        %4873 = vmatprep.subr.mxu0 0.0
        %4874 = vmatpush1.xpose.msra.mxu0 0.0
        %4875 = vmatprep.subr.mxu0 0.0
        %4876 = vmatpush1.xpose.msra.mxu0 0.0
        %4877 = vmatprep.subr.mxu0 0.0
        %4878 = vmatpush1.xpose.msra.mxu0 0.0
        %4879 = vmatprep.subr.mxu0 0.0
        %4880 = vmatpush1.xpose.msra.mxu0 0.0
        %4881 = vmatprep.subr.mxu0 0.0
        %4882 = vmatpush1.xpose.msra.mxu0 0.0
        %4883 = vmatprep.mubr.f32.mxu0 0.0
        %4884 = vmatmul.mubr.f32.gmra.mrb[0].mxu0 %v4815
        %v4885 = vpop.f32.mrb[0].mxu0
        %v4886 = vadd.f32 %v273, %v4885
        %v4887 = vpop.f32.mrb[0].mxu0
        %4888 = vdwg.mxu0
        %4889 = vrot.lane.b32.xlu0 %v4660, 96
        %v4890 = vpop.permute.xlu0 %4889
        %v4891 = vsel %vm419, %v4653, 0
        %v4893 = vsel %vm419, %v4890, 0
        %4895 = vmatprep.subr.mxu0 0.0
        %4896 = vmatpush1.xpose.msra.mxu0 %v4893
        %4897 = vmatprep.subr.mxu0 0.0
        %4898 = vmatpush1.xpose.msra.mxu0 0.0
        %4899 = vmatprep.subr.mxu0 0.0
        %4900 = vmatpush1.xpose.msra.mxu0 0.0
        %4901 = vmatprep.subr.mxu0 0.0
        %4902 = vmatpush1.xpose.msra.mxu0 0.0
        %4903 = vmatprep.subr.mxu0 0.0
        %4904 = vmatpush1.xpose.msra.mxu0 0.0
        %4905 = vmatprep.subr.mxu0 0.0
        %4906 = vmatpush1.xpose.msra.mxu0 0.0
        %4907 = vmatprep.subr.mxu0 0.0
        %4908 = vmatpush1.xpose.msra.mxu0 0.0
        %4909 = vmatprep.subr.mxu0 0.0
        %4910 = vmatpush1.xpose.msra.mxu0 0.0
        %4911 = vmatprep.subr.mxu0 0.0
        %4912 = vmatpush1.xpose.msra.mxu0 0.0
        %4913 = vmatprep.subr.mxu0 0.0
        %4914 = vmatpush1.xpose.msra.mxu0 0.0
        %4915 = vmatprep.subr.mxu0 0.0
        %4916 = vmatpush1.xpose.msra.mxu0 0.0
        %4917 = vmatprep.subr.mxu0 0.0
        %4918 = vmatpush1.xpose.msra.mxu0 0.0
        %4919 = vmatprep.subr.mxu0 0.0
        %4920 = vmatpush1.xpose.msra.mxu0 0.0
        %4921 = vmatprep.subr.mxu0 0.0
        %4922 = vmatpush1.xpose.msra.mxu0 0.0
        %4923 = vmatprep.subr.mxu0 0.0
        %4924 = vmatpush1.xpose.msra.mxu0 0.0
        %4925 = vmatprep.subr.mxu0 0.0
        %4926 = vmatpush1.xpose.msra.mxu0 0.0
        %4927 = vmatprep.subr.mxu0 0.0
        %4928 = vmatpush1.xpose.msra.mxu0 0.0
        %4929 = vmatprep.subr.mxu0 0.0
        %4930 = vmatpush1.xpose.msra.mxu0 0.0
        %4931 = vmatprep.subr.mxu0 0.0
        %4932 = vmatpush1.xpose.msra.mxu0 0.0
        %4933 = vmatprep.subr.mxu0 0.0
        %4934 = vmatpush1.xpose.msra.mxu0 0.0
        %4935 = vmatprep.subr.mxu0 0.0
        %4936 = vmatpush1.xpose.msra.mxu0 0.0
        %4937 = vmatprep.subr.mxu0 0.0
        %4938 = vmatpush1.xpose.msra.mxu0 0.0
        %4939 = vmatprep.subr.mxu0 0.0
        %4940 = vmatpush1.xpose.msra.mxu0 0.0
        %4941 = vmatprep.subr.mxu0 0.0
        %4942 = vmatpush1.xpose.msra.mxu0 0.0
        %4943 = vmatprep.subr.mxu0 0.0
        %4944 = vmatpush1.xpose.msra.mxu0 0.0
        %4945 = vmatprep.subr.mxu0 0.0
        %4946 = vmatpush1.xpose.msra.mxu0 0.0
        %4947 = vmatprep.subr.mxu0 0.0
        %4948 = vmatpush1.xpose.msra.mxu0 0.0
        %4949 = vmatprep.subr.mxu0 0.0
        %4950 = vmatpush1.xpose.msra.mxu0 0.0
        %4951 = vmatprep.subr.mxu0 0.0
        %4952 = vmatpush1.xpose.msra.mxu0 0.0
        %4953 = vmatprep.subr.mxu0 0.0
        %4954 = vmatpush1.xpose.msra.mxu0 0.0
        %4955 = vmatprep.subr.mxu0 0.0
        %4956 = vmatpush1.xpose.msra.mxu0 0.0
        %4957 = vmatprep.subr.mxu0 0.0
        %4958 = vmatpush1.xpose.msra.mxu0 0.0
        %4959 = vmatprep.mubr.f32.mxu0 0.0
        %4960 = vmatmul.mubr.f32.gmra.mrb[0].mxu0 %v4891
        %v4961 = vpop.f32.mrb[0].mxu0
        %v4962 = vadd.f32 %v273, %v4961
        %v4963 = vpop.f32.mrb[0].mxu0
        %4964 = vdwg.mxu0
        %v4965 = vsel %vm419, %v4734, -inf
        %4966 = vmax.xlane.f32.xlu0 %v4965
        %v4967 = vpop.xlane.xlu0 %4966
        %v4968 = vsel %vm419, %v4810, -inf
        %4969 = vmax.xlane.f32.xlu0 %v4968
        %v4970 = vpop.xlane.xlu0 %4969
        %v4971 = vsel %vm419, %v4886, -inf
        %4972 = vmax.xlane.f32.xlu0 %v4971
        %v4973 = vpop.xlane.xlu0 %4972
        %v4974 = vsel %vm419, %v4962, -inf
        %4975 = vmax.xlane.f32.xlu0 %v4974
        %v4976 = vpop.xlane.xlu0 %4975
        %v4977 = vsub.f32 %v4734, %v4967
        %v4978 = vsub.f32 %v4810, %v4970
        %v4979 = vsub.f32 %v4886, %v4973
        %v4980 = vsub.f32 %v4962, %v4976
        %v4981 = vmul.f32 %v4977, 1.442695
        %v4982 = vpow.pop %v4981
        %v4983 = vmul.f32 %v4978, 1.442695
        %v4984 = vpow.pop %v4983
        %v4985 = vmul.f32 %v4979, 1.442695
        %v4986 = vpow.pop %v4985
        %v4987 = vmul.f32 %v4980, 1.442695
        %v4988 = vpow.pop %v4987
        %v4989 = vsel %vm419, %v4982, 0.0
        %4990 = vadd.xlane.f32.xlu0 %v4989
        %v4991 = vpop.xlane.xlu0 %4990
        %v4992 = vsel %vm419, %v4984, 0.0
        %4993 = vadd.xlane.f32.xlu0 %v4992
        %v4994 = vpop.xlane.xlu0 %4993
        %v4995 = vsel %vm419, %v4986, 0.0
        %4996 = vadd.xlane.f32.xlu0 %v4995
        %v4997 = vpop.xlane.xlu0 %4996
        %v4998 = vsel %vm419, %v4988, 0.0
        %4999 = vadd.xlane.f32.xlu0 %v4998
        %v5000 = vpop.xlane.xlu0 %4999
        %v5001 = vrcp.pop %v4991
        %v5002 = vrcp.pop %v4994
        %v5003 = vrcp.pop %v4997
        %v5004 = vrcp.pop %v5000
        %v5005 = vmul.f32 %v4982, %v5001
        %v5006 = vmul.f32 %v4984, %v5002
        %v5007 = vmul.f32 %v4986, %v5003
        %v5008 = vmul.f32 %v4988, %v5004
        %5009 = vrot.lane.b32.xlu0 %v4643, 64
        %v5010 = vpop.permute.xlu0 %5009
        %v5013 = vsel %vm419, %v5005, 0
        %5015 = vmatprep.subr.mxu0 0.0
        %5016 = vmatpush1.msra.mxu0 %v5010
        %5017 = vmatprep.subr.mxu0 0.0
        %5018 = vmatpush1.msra.mxu0 0.0
        %5019 = vmatprep.subr.mxu0 0.0
        %5020 = vmatpush1.msra.mxu0 0.0
        %5021 = vmatprep.subr.mxu0 0.0
        %5022 = vmatpush1.msra.mxu0 0.0
        %5023 = vmatprep.subr.mxu0 0.0
        %5024 = vmatpush1.msra.mxu0 0.0
        %5025 = vmatprep.subr.mxu0 0.0
        %5026 = vmatpush1.msra.mxu0 0.0
        %5027 = vmatprep.subr.mxu0 0.0
        %5028 = vmatpush1.msra.mxu0 0.0
        %5029 = vmatprep.subr.mxu0 0.0
        %5030 = vmatpush1.msra.mxu0 0.0
        %5031 = vmatprep.subr.mxu0 0.0
        %5032 = vmatpush1.msra.mxu0 0.0
        %5033 = vmatprep.subr.mxu0 0.0
        %5034 = vmatpush1.msra.mxu0 0.0
        %5035 = vmatprep.subr.mxu0 0.0
        %5036 = vmatpush1.msra.mxu0 0.0
        %5037 = vmatprep.subr.mxu0 0.0
        %5038 = vmatpush1.msra.mxu0 0.0
        %5039 = vmatprep.subr.mxu0 0.0
        %5040 = vmatpush1.msra.mxu0 0.0
        %5041 = vmatprep.subr.mxu0 0.0
        %5042 = vmatpush1.msra.mxu0 0.0
        %5043 = vmatprep.subr.mxu0 0.0
        %5044 = vmatpush1.msra.mxu0 0.0
        %5045 = vmatprep.subr.mxu0 0.0
        %5046 = vmatpush1.msra.mxu0 0.0
        %5047 = vmatprep.subr.mxu0 0.0
        %5048 = vmatpush1.msra.mxu0 0.0
        %5049 = vmatprep.subr.mxu0 0.0
        %5050 = vmatpush1.msra.mxu0 0.0
        %5051 = vmatprep.subr.mxu0 0.0
        %5052 = vmatpush1.msra.mxu0 0.0
        %5053 = vmatprep.subr.mxu0 0.0
        %5054 = vmatpush1.msra.mxu0 0.0
        %5055 = vmatprep.subr.mxu0 0.0
        %5056 = vmatpush1.msra.mxu0 0.0
        %5057 = vmatprep.subr.mxu0 0.0
        %5058 = vmatpush1.msra.mxu0 0.0
        %5059 = vmatprep.subr.mxu0 0.0
        %5060 = vmatpush1.msra.mxu0 0.0
        %5061 = vmatprep.subr.mxu0 0.0
        %5062 = vmatpush1.msra.mxu0 0.0
        %5063 = vmatprep.subr.mxu0 0.0
        %5064 = vmatpush1.msra.mxu0 0.0
        %5065 = vmatprep.subr.mxu0 0.0
        %5066 = vmatpush1.msra.mxu0 0.0
        %5067 = vmatprep.subr.mxu0 0.0
        %5068 = vmatpush1.msra.mxu0 0.0
        %5069 = vmatprep.subr.mxu0 0.0
        %5070 = vmatpush1.msra.mxu0 0.0
        %5071 = vmatprep.subr.mxu0 0.0
        %5072 = vmatpush1.msra.mxu0 0.0
        %5073 = vmatprep.subr.mxu0 0.0
        %5074 = vmatpush1.msra.mxu0 0.0
        %5075 = vmatprep.subr.mxu0 0.0
        %5076 = vmatpush1.msra.mxu0 0.0
        %5077 = vmatprep.subr.mxu0 0.0
        %5078 = vmatpush1.msra.mxu0 0.0
        %5079 = vmatprep.mubr.f32.mxu0 0.0
        %5080 = vmatmul.mubr.f32.gmra.mrb[0].mxu0 %v5013
        %v5081 = vpop.f32.mrb[0].mxu0
        %v5082 = vadd.f32 0.0, %v5081
        %v5083 = vpop.f32.mrb[0].mxu0
        %5084 = vdwg.mxu0
        %5085 = vrot.lane.b32.xlu0 %v4656, 64
        %v5086 = vpop.permute.xlu0 %5085
        %v5089 = vsel %vm419, %v5006, 0
        %5091 = vmatprep.subr.mxu0 0.0
        %5092 = vmatpush1.msra.mxu0 %v5086
        %5093 = vmatprep.subr.mxu0 0.0
        %5094 = vmatpush1.msra.mxu0 0.0
        %5095 = vmatprep.subr.mxu0 0.0
        %5096 = vmatpush1.msra.mxu0 0.0
        %5097 = vmatprep.subr.mxu0 0.0
        %5098 = vmatpush1.msra.mxu0 0.0
        %5099 = vmatprep.subr.mxu0 0.0
        %5100 = vmatpush1.msra.mxu0 0.0
        %5101 = vmatprep.subr.mxu0 0.0
        %5102 = vmatpush1.msra.mxu0 0.0
        %5103 = vmatprep.subr.mxu0 0.0
        %5104 = vmatpush1.msra.mxu0 0.0
        %5105 = vmatprep.subr.mxu0 0.0
        %5106 = vmatpush1.msra.mxu0 0.0
        %5107 = vmatprep.subr.mxu0 0.0
        %5108 = vmatpush1.msra.mxu0 0.0
        %5109 = vmatprep.subr.mxu0 0.0
        %5110 = vmatpush1.msra.mxu0 0.0
        %5111 = vmatprep.subr.mxu0 0.0
        %5112 = vmatpush1.msra.mxu0 0.0
        %5113 = vmatprep.subr.mxu0 0.0
        %5114 = vmatpush1.msra.mxu0 0.0
        %5115 = vmatprep.subr.mxu0 0.0
        %5116 = vmatpush1.msra.mxu0 0.0
        %5117 = vmatprep.subr.mxu0 0.0
        %5118 = vmatpush1.msra.mxu0 0.0
        %5119 = vmatprep.subr.mxu0 0.0
        %5120 = vmatpush1.msra.mxu0 0.0
        %5121 = vmatprep.subr.mxu0 0.0
        %5122 = vmatpush1.msra.mxu0 0.0
        %5123 = vmatprep.subr.mxu0 0.0
        %5124 = vmatpush1.msra.mxu0 0.0
        %5125 = vmatprep.subr.mxu0 0.0
        %5126 = vmatpush1.msra.mxu0 0.0
        %5127 = vmatprep.subr.mxu0 0.0
        %5128 = vmatpush1.msra.mxu0 0.0
        %5129 = vmatprep.subr.mxu0 0.0
        %5130 = vmatpush1.msra.mxu0 0.0
        %5131 = vmatprep.subr.mxu0 0.0
        %5132 = vmatpush1.msra.mxu0 0.0
        %5133 = vmatprep.subr.mxu0 0.0
        %5134 = vmatpush1.msra.mxu0 0.0
        %5135 = vmatprep.subr.mxu0 0.0
        %5136 = vmatpush1.msra.mxu0 0.0
        %5137 = vmatprep.subr.mxu0 0.0
        %5138 = vmatpush1.msra.mxu0 0.0
        %5139 = vmatprep.subr.mxu0 0.0
        %5140 = vmatpush1.msra.mxu0 0.0
        %5141 = vmatprep.subr.mxu0 0.0
        %5142 = vmatpush1.msra.mxu0 0.0
        %5143 = vmatprep.subr.mxu0 0.0
        %5144 = vmatpush1.msra.mxu0 0.0
        %5145 = vmatprep.subr.mxu0 0.0
        %5146 = vmatpush1.msra.mxu0 0.0
        %5147 = vmatprep.subr.mxu0 0.0
        %5148 = vmatpush1.msra.mxu0 0.0
        %5149 = vmatprep.subr.mxu0 0.0
        %5150 = vmatpush1.msra.mxu0 0.0
        %5151 = vmatprep.subr.mxu0 0.0
        %5152 = vmatpush1.msra.mxu0 0.0
        %5153 = vmatprep.subr.mxu0 0.0
        %5154 = vmatpush1.msra.mxu0 0.0
        %5155 = vmatprep.mubr.f32.mxu0 0.0
        %5156 = vmatmul.mubr.f32.gmra.mrb[0].mxu0 %v5089
        %v5157 = vpop.f32.mrb[0].mxu0
        %v5158 = vadd.f32 0.0, %v5157
        %v5159 = vpop.f32.mrb[0].mxu0
        %5160 = vdwg.mxu0
        %5161 = vrot.lane.b32.xlu0 %v4658, 64
        %v5162 = vpop.permute.xlu0 %5161
        %v5165 = vsel %vm419, %v5007, 0
        %5167 = vmatprep.subr.mxu0 0.0
        %5168 = vmatpush1.msra.mxu0 %v5162
        %5169 = vmatprep.subr.mxu0 0.0
        %5170 = vmatpush1.msra.mxu0 0.0
        %5171 = vmatprep.subr.mxu0 0.0
        %5172 = vmatpush1.msra.mxu0 0.0
        %5173 = vmatprep.subr.mxu0 0.0
        %5174 = vmatpush1.msra.mxu0 0.0
        %5175 = vmatprep.subr.mxu0 0.0
        %5176 = vmatpush1.msra.mxu0 0.0
        %5177 = vmatprep.subr.mxu0 0.0
        %5178 = vmatpush1.msra.mxu0 0.0
        %5179 = vmatprep.subr.mxu0 0.0
        %5180 = vmatpush1.msra.mxu0 0.0
        %5181 = vmatprep.subr.mxu0 0.0
        %5182 = vmatpush1.msra.mxu0 0.0
        %5183 = vmatprep.subr.mxu0 0.0
        %5184 = vmatpush1.msra.mxu0 0.0
        %5185 = vmatprep.subr.mxu0 0.0
        %5186 = vmatpush1.msra.mxu0 0.0
        %5187 = vmatprep.subr.mxu0 0.0
        %5188 = vmatpush1.msra.mxu0 0.0
        %5189 = vmatprep.subr.mxu0 0.0
        %5190 = vmatpush1.msra.mxu0 0.0
        %5191 = vmatprep.subr.mxu0 0.0
        %5192 = vmatpush1.msra.mxu0 0.0
        %5193 = vmatprep.subr.mxu0 0.0
        %5194 = vmatpush1.msra.mxu0 0.0
        %5195 = vmatprep.subr.mxu0 0.0
        %5196 = vmatpush1.msra.mxu0 0.0
        %5197 = vmatprep.subr.mxu0 0.0
        %5198 = vmatpush1.msra.mxu0 0.0
        %5199 = vmatprep.subr.mxu0 0.0
        %5200 = vmatpush1.msra.mxu0 0.0
        %5201 = vmatprep.subr.mxu0 0.0
        %5202 = vmatpush1.msra.mxu0 0.0
        %5203 = vmatprep.subr.mxu0 0.0
        %5204 = vmatpush1.msra.mxu0 0.0
        %5205 = vmatprep.subr.mxu0 0.0
        %5206 = vmatpush1.msra.mxu0 0.0
        %5207 = vmatprep.subr.mxu0 0.0
        %5208 = vmatpush1.msra.mxu0 0.0
        %5209 = vmatprep.subr.mxu0 0.0
        %5210 = vmatpush1.msra.mxu0 0.0
        %5211 = vmatprep.subr.mxu0 0.0
        %5212 = vmatpush1.msra.mxu0 0.0
        %5213 = vmatprep.subr.mxu0 0.0
        %5214 = vmatpush1.msra.mxu0 0.0
        %5215 = vmatprep.subr.mxu0 0.0
        %5216 = vmatpush1.msra.mxu0 0.0
        %5217 = vmatprep.subr.mxu0 0.0
        %5218 = vmatpush1.msra.mxu0 0.0
        %5219 = vmatprep.subr.mxu0 0.0
        %5220 = vmatpush1.msra.mxu0 0.0
        %5221 = vmatprep.subr.mxu0 0.0
        %5222 = vmatpush1.msra.mxu0 0.0
        %5223 = vmatprep.subr.mxu0 0.0
        %5224 = vmatpush1.msra.mxu0 0.0
        %5225 = vmatprep.subr.mxu0 0.0
        %5226 = vmatpush1.msra.mxu0 0.0
        %5227 = vmatprep.subr.mxu0 0.0
        %5228 = vmatpush1.msra.mxu0 0.0
        %5229 = vmatprep.subr.mxu0 0.0
        %5230 = vmatpush1.msra.mxu0 0.0
        %5231 = vmatprep.mubr.f32.mxu0 0.0
        %5232 = vmatmul.mubr.f32.gmra.mrb[0].mxu0 %v5165
        %v5233 = vpop.f32.mrb[0].mxu0
        %v5234 = vadd.f32 0.0, %v5233
        %v5235 = vpop.f32.mrb[0].mxu0
        %5236 = vdwg.mxu0
        %5237 = vrot.lane.b32.xlu0 %v4660, 64
        %v5238 = vpop.permute.xlu0 %5237
        %v5241 = vsel %vm419, %v5008, 0
        %5243 = vmatprep.subr.mxu0 0.0
        %5244 = vmatpush1.msra.mxu0 %v5238
        %5245 = vmatprep.subr.mxu0 0.0
        %5246 = vmatpush1.msra.mxu0 0.0
        %5247 = vmatprep.subr.mxu0 0.0
        %5248 = vmatpush1.msra.mxu0 0.0
        %5249 = vmatprep.subr.mxu0 0.0
        %5250 = vmatpush1.msra.mxu0 0.0
        %5251 = vmatprep.subr.mxu0 0.0
        %5252 = vmatpush1.msra.mxu0 0.0
        %5253 = vmatprep.subr.mxu0 0.0
        %5254 = vmatpush1.msra.mxu0 0.0
        %5255 = vmatprep.subr.mxu0 0.0
        %5256 = vmatpush1.msra.mxu0 0.0
        %5257 = vmatprep.subr.mxu0 0.0
        %5258 = vmatpush1.msra.mxu0 0.0
        %5259 = vmatprep.subr.mxu0 0.0
        %5260 = vmatpush1.msra.mxu0 0.0
        %5261 = vmatprep.subr.mxu0 0.0
        %5262 = vmatpush1.msra.mxu0 0.0
        %5263 = vmatprep.subr.mxu0 0.0
        %5264 = vmatpush1.msra.mxu0 0.0
        %5265 = vmatprep.subr.mxu0 0.0
        %5266 = vmatpush1.msra.mxu0 0.0
        %5267 = vmatprep.subr.mxu0 0.0
        %5268 = vmatpush1.msra.mxu0 0.0
        %5269 = vmatprep.subr.mxu0 0.0
        %5270 = vmatpush1.msra.mxu0 0.0
        %5271 = vmatprep.subr.mxu0 0.0
        %5272 = vmatpush1.msra.mxu0 0.0
        %5273 = vmatprep.subr.mxu0 0.0
        %5274 = vmatpush1.msra.mxu0 0.0
        %5275 = vmatprep.subr.mxu0 0.0
        %5276 = vmatpush1.msra.mxu0 0.0
        %5277 = vmatprep.subr.mxu0 0.0
        %5278 = vmatpush1.msra.mxu0 0.0
        %5279 = vmatprep.subr.mxu0 0.0
        %5280 = vmatpush1.msra.mxu0 0.0
        %5281 = vmatprep.subr.mxu0 0.0
        %5282 = vmatpush1.msra.mxu0 0.0
        %5283 = vmatprep.subr.mxu0 0.0
        %5284 = vmatpush1.msra.mxu0 0.0
        %5285 = vmatprep.subr.mxu0 0.0
        %5286 = vmatpush1.msra.mxu0 0.0
        %5287 = vmatprep.subr.mxu0 0.0
        %5288 = vmatpush1.msra.mxu0 0.0
        %5289 = vmatprep.subr.mxu0 0.0
        %5290 = vmatpush1.msra.mxu0 0.0
        %5291 = vmatprep.subr.mxu0 0.0
        %5292 = vmatpush1.msra.mxu0 0.0
        %5293 = vmatprep.subr.mxu0 0.0
        %5294 = vmatpush1.msra.mxu0 0.0
        %5295 = vmatprep.subr.mxu0 0.0
        %5296 = vmatpush1.msra.mxu0 0.0
        %5297 = vmatprep.subr.mxu0 0.0
        %5298 = vmatpush1.msra.mxu0 0.0
        %5299 = vmatprep.subr.mxu0 0.0
        %5300 = vmatpush1.msra.mxu0 0.0
        %5301 = vmatprep.subr.mxu0 0.0
        %5302 = vmatpush1.msra.mxu0 0.0
        %5303 = vmatprep.subr.mxu0 0.0
        %5304 = vmatpush1.msra.mxu0 0.0
        %5305 = vmatprep.subr.mxu0 0.0
        %5306 = vmatpush1.msra.mxu0 0.0
        %5307 = vmatprep.mubr.f32.mxu0 0.0
        %5308 = vmatmul.mubr.f32.gmra.mrb[0].mxu0 %v5241
        %v5309 = vpop.f32.mrb[0].mxu0
        %v5310 = vadd.f32 0.0, %v5309
        %v5311 = vpop.f32.mrb[0].mxu0
        %5312 = vdwg.mxu0
        %5314 = vrot.lane.b32.xlu0 %v5158, 8
        %v5315 = vpop.permute.xlu0 %5314
        %5318 = vrot.lane.b32.xlu0 %v5234, 16
        %v5319 = vpop.permute.xlu0 %5318
        %5322 = vrot.lane.b32.xlu0 %v5310, 24
        %v5323 = vpop.permute.xlu0 %5322
        %v5325 = vsel %vm419, %v5082, %v5315
        %v5326 = vsel %vm1083, %v5325, %v5319
        %v5327 = vsel %vm1085, %v5326, %v5323
        %v5328 = vlaneseq
        %v5329 = vshrl.u32 %v5328, 7
        %v5330 = vsub.s32 0, %v5329
        %v5331 = vrot.slane %v4568, %v5330
        %v5333 = vsel %vm277, %v5327, 0
        %5335 = vmatprep.subr.mxu0 0.0
        %5336 = vmatpush1.msra.mxu0 %v4564
        %5337 = vmatprep.subr.mxu0 0.0
        %5338 = vmatpush1.msra.mxu0 %v4565
        %5339 = vmatprep.subr.mxu0 0.0
        %5340 = vmatpush1.msra.mxu0 %v4566
        %5341 = vmatprep.subr.mxu0 0.0
        %5342 = vmatpush1.msra.mxu0 %v4567
        %5343 = vmatprep.subr.mxu0 0.0
        %5344 = vmatpush1.msra.mxu0 0.0
        %5345 = vmatprep.subr.mxu0 0.0
        %5346 = vmatpush1.msra.mxu0 0.0
        %5347 = vmatprep.subr.mxu0 0.0
        %5348 = vmatpush1.msra.mxu0 0.0
        %5349 = vmatprep.subr.mxu0 0.0
        %5350 = vmatpush1.msra.mxu0 0.0
        %5351 = vmatprep.subr.mxu0 0.0
        %5352 = vmatpush1.msra.mxu0 0.0
        %5353 = vmatprep.subr.mxu0 0.0
        %5354 = vmatpush1.msra.mxu0 0.0
        %5355 = vmatprep.subr.mxu0 0.0
        %5356 = vmatpush1.msra.mxu0 0.0
        %5357 = vmatprep.subr.mxu0 0.0
        %5358 = vmatpush1.msra.mxu0 0.0
        %5359 = vmatprep.subr.mxu0 0.0
        %5360 = vmatpush1.msra.mxu0 0.0
        %5361 = vmatprep.subr.mxu0 0.0
        %5362 = vmatpush1.msra.mxu0 0.0
        %5363 = vmatprep.subr.mxu0 0.0
        %5364 = vmatpush1.msra.mxu0 0.0
        %5365 = vmatprep.subr.mxu0 0.0
        %5366 = vmatpush1.msra.mxu0 0.0
        %5367 = vmatprep.subr.mxu0 0.0
        %5368 = vmatpush1.msra.mxu0 0.0
        %5369 = vmatprep.subr.mxu0 0.0
        %5370 = vmatpush1.msra.mxu0 0.0
        %5371 = vmatprep.subr.mxu0 0.0
        %5372 = vmatpush1.msra.mxu0 0.0
        %5373 = vmatprep.subr.mxu0 0.0
        %5374 = vmatpush1.msra.mxu0 0.0
        %5375 = vmatprep.subr.mxu0 0.0
        %5376 = vmatpush1.msra.mxu0 0.0
        %5377 = vmatprep.subr.mxu0 0.0
        %5378 = vmatpush1.msra.mxu0 0.0
        %5379 = vmatprep.subr.mxu0 0.0
        %5380 = vmatpush1.msra.mxu0 0.0
        %5381 = vmatprep.subr.mxu0 0.0
        %5382 = vmatpush1.msra.mxu0 0.0
        %5383 = vmatprep.subr.mxu0 0.0
        %5384 = vmatpush1.msra.mxu0 0.0
        %5385 = vmatprep.subr.mxu0 0.0
        %5386 = vmatpush1.msra.mxu0 0.0
        %5387 = vmatprep.subr.mxu0 0.0
        %5388 = vmatpush1.msra.mxu0 0.0
        %5389 = vmatprep.subr.mxu0 0.0
        %5390 = vmatpush1.msra.mxu0 0.0
        %5391 = vmatprep.subr.mxu0 0.0
        %5392 = vmatpush1.msra.mxu0 0.0
        %5393 = vmatprep.subr.mxu0 0.0
        %5394 = vmatpush1.msra.mxu0 0.0
        %5395 = vmatprep.subr.mxu0 0.0
        %5396 = vmatpush1.msra.mxu0 0.0
        %5397 = vmatprep.subr.mxu0 0.0
        %5398 = vmatpush1.msra.mxu0 0.0
        %5399 = vmatprep.mubr.f32.mxu0 0.0
        %5400 = vmatmul.mubr.f32.gmra.mrb[0].mxu0 %v5333
        %v5401 = vpop.f32.mrb[0].mxu0
        %v5402 = vadd.f32 %v5331, %v5401
        %v5403 = vpop.f32.mrb[0].mxu0
        %5404 = vdwg.mxu0
        %v5405 = vadd.f32 %v4526, %v5402
        %v5406 = vld [vmem:[%s4 + $0x420] sm:$0x1]
        %v5407 = vld [vmem:[%s4 + $0x428] sm:$0x1]
        %v5408 = vsel %vm277, %v5405, 0.0
        %5409 = vadd.xlane.f32.xlu0 %v5408
        %v5410 = vpop.xlane.xlu0 %5409
        %v5411 = vmul.f32 %v5410, %v281
        %v5412 = vsub.f32 %v5405, %v5411
        %v5413 = vmul.f32 %v5412, %v5412
        %v5414 = vsel %vm277, %v5413, 0.0
        %5415 = vadd.xlane.f32.xlu0 %v5414
        %v5416 = vpop.xlane.xlu0 %5415
        %v5417 = vmul.f32 %v5416, 0.032258064
        %v5418 = vrsqrt.pop %v5417
        %v5419 = vmul.f32 %v5417, %v5418
        %vm5420 = vcmp.eq.f32.partialorder %v5417, inf
        %v5421 = vsel %vm5420, %v5417, %v5419
        %vm5422 = vcmp.eq.f32.partialorder %v5417, 0.0
        %v5423 = vand.u32 %v5417, 2147483648
        %v5424 = vsel %vm5422, %v5423, %v5421
        %v5425 = vlaneseq
        %v5426 = vshrl.u32 %v5425, 7
        %v5427 = vsub.s32 0, %v5426
        %v5428 = vrot.slane %v5406, %v5427
        %v5429 = vmul.f32 %v5428, %v5412
        %v5430 = vadd.f32 %v5424, 1e-06
        %v5431 = vrcp.pop %v5430
        %v5432 = vmul.f32 %v5429, %v5431
        %v5433 = vlaneseq
        %v5434 = vshrl.u32 %v5433, 7
        %v5435 = vsub.s32 0, %v5434
        %v5436 = vrot.slane %v5407, %v5435
        %v5437 = vadd.f32 %v5432, %v5436
        %v5438 = vld [vmem:[%s4 + $0x350] sm:$0xff]
        %v5439 = vld [vmem:[%s4 + $0x358] sm:$0xff]
        %v5440 = vld [vmem:[%s4 + $0x360] sm:$0xff]
        %v5441 = vld [vmem:[%s4 + $0x368] sm:$0xff]
        %v5442 = vld [vmem:[%s4 + $0x370] sm:$0x1]
        %v5443 = vld [vmem:[%s4 + $0x378] sm:$0xff]
        %v5444 = vld [vmem:[%s4 + $0x380] sm:$0xff]
        %v5445 = vld [vmem:[%s4 + $0x388] sm:$0xff]
        %v5446 = vld [vmem:[%s4 + $0x390] sm:$0xff]
        %v5447 = vld [vmem:[%s4 + $0x398] sm:$0x1]
        %v5448 = vlaneseq
        %v5449 = vshrl.u32 %v5448, 7
        %v5450 = vsub.s32 0, %v5449
        %v5451 = vrot.slane %v5442, %v5450
        %v5453 = vsel %vm277, %v5437, 0
        %5455 = vmatprep.subr.mxu0 0.0
        %5456 = vmatpush1.msra.mxu0 %v5438
        %5457 = vmatprep.subr.mxu0 0.0
        %5458 = vmatpush1.msra.mxu0 %v5439
        %5459 = vmatprep.subr.mxu0 0.0
        %5460 = vmatpush1.msra.mxu0 %v5440
        %5461 = vmatprep.subr.mxu0 0.0
        %5462 = vmatpush1.msra.mxu0 %v5441
        %5463 = vmatprep.subr.mxu0 0.0
        %5464 = vmatpush1.msra.mxu0 0.0
        %5465 = vmatprep.subr.mxu0 0.0
        %5466 = vmatpush1.msra.mxu0 0.0
        %5467 = vmatprep.subr.mxu0 0.0
        %5468 = vmatpush1.msra.mxu0 0.0
        %5469 = vmatprep.subr.mxu0 0.0
        %5470 = vmatpush1.msra.mxu0 0.0
        %5471 = vmatprep.subr.mxu0 0.0
        %5472 = vmatpush1.msra.mxu0 0.0
        %5473 = vmatprep.subr.mxu0 0.0
        %5474 = vmatpush1.msra.mxu0 0.0
        %5475 = vmatprep.subr.mxu0 0.0
        %5476 = vmatpush1.msra.mxu0 0.0
        %5477 = vmatprep.subr.mxu0 0.0
        %5478 = vmatpush1.msra.mxu0 0.0
        %5479 = vmatprep.subr.mxu0 0.0
        %5480 = vmatpush1.msra.mxu0 0.0
        %5481 = vmatprep.subr.mxu0 0.0
        %5482 = vmatpush1.msra.mxu0 0.0
        %5483 = vmatprep.subr.mxu0 0.0
        %5484 = vmatpush1.msra.mxu0 0.0
        %5485 = vmatprep.subr.mxu0 0.0
        %5486 = vmatpush1.msra.mxu0 0.0
        %5487 = vmatprep.subr.mxu0 0.0
        %5488 = vmatpush1.msra.mxu0 0.0
        %5489 = vmatprep.subr.mxu0 0.0
        %5490 = vmatpush1.msra.mxu0 0.0
        %5491 = vmatprep.subr.mxu0 0.0
        %5492 = vmatpush1.msra.mxu0 0.0
        %5493 = vmatprep.subr.mxu0 0.0
        %5494 = vmatpush1.msra.mxu0 0.0
        %5495 = vmatprep.subr.mxu0 0.0
        %5496 = vmatpush1.msra.mxu0 0.0
        %5497 = vmatprep.subr.mxu0 0.0
        %5498 = vmatpush1.msra.mxu0 0.0
        %5499 = vmatprep.subr.mxu0 0.0
        %5500 = vmatpush1.msra.mxu0 0.0
        %5501 = vmatprep.subr.mxu0 0.0
        %5502 = vmatpush1.msra.mxu0 0.0
        %5503 = vmatprep.subr.mxu0 0.0
        %5504 = vmatpush1.msra.mxu0 0.0
        %5505 = vmatprep.subr.mxu0 0.0
        %5506 = vmatpush1.msra.mxu0 0.0
        %5507 = vmatprep.subr.mxu0 0.0
        %5508 = vmatpush1.msra.mxu0 0.0
        %5509 = vmatprep.subr.mxu0 0.0
        %5510 = vmatpush1.msra.mxu0 0.0
        %5511 = vmatprep.subr.mxu0 0.0
        %5512 = vmatpush1.msra.mxu0 0.0
        %5513 = vmatprep.subr.mxu0 0.0
        %5514 = vmatpush1.msra.mxu0 0.0
        %5515 = vmatprep.subr.mxu0 0.0
        %5516 = vmatpush1.msra.mxu0 0.0
        %5517 = vmatprep.subr.mxu0 0.0
        %5518 = vmatpush1.msra.mxu0 0.0
        %5519 = vmatprep.mubr.f32.mxu0 0.0
        %5520 = vmatmul.mubr.f32.gmra.mrb[0].mxu0 %v5453
        %v5521 = vpop.f32.mrb[0].mxu0
        %v5522 = vadd.f32 %v5451, %v5521
        %v5523 = vpop.f32.mrb[0].mxu0
        %5524 = vdwg.mxu0
        %v5525 = vmul.f32 %v5522, 0.35355338
        %5530 = vrot.lane.b32.xlu0 %v5438, 96
        %v5531 = vpop.permute.xlu0 %5530
        %5532 = vrot.lane.b32.xlu0 %v5439, 96
        %v5533 = vpop.permute.xlu0 %5532
        %5534 = vrot.lane.b32.xlu0 %v5440, 96
        %v5535 = vpop.permute.xlu0 %5534
        %5536 = vrot.lane.b32.xlu0 %v5441, 96
        %v5537 = vpop.permute.xlu0 %5536
        %5543 = vrot.lane.b32.xlu0 %v5451, 96
        %v5544 = vpop.permute.xlu0 %5543
        %5546 = vmatprep.subr.mxu0 0.0
        %5547 = vmatpush1.msra.mxu0 %v5531
        %5548 = vmatprep.subr.mxu0 0.0
        %5549 = vmatpush1.msra.mxu0 %v5533
        %5550 = vmatprep.subr.mxu0 0.0
        %5551 = vmatpush1.msra.mxu0 %v5535
        %5552 = vmatprep.subr.mxu0 0.0
        %5553 = vmatpush1.msra.mxu0 %v5537
        %5554 = vmatprep.subr.mxu0 0.0
        %5555 = vmatpush1.msra.mxu0 0.0
        %5556 = vmatprep.subr.mxu0 0.0
        %5557 = vmatpush1.msra.mxu0 0.0
        %5558 = vmatprep.subr.mxu0 0.0
        %5559 = vmatpush1.msra.mxu0 0.0
        %5560 = vmatprep.subr.mxu0 0.0
        %5561 = vmatpush1.msra.mxu0 0.0
        %5562 = vmatprep.subr.mxu0 0.0
        %5563 = vmatpush1.msra.mxu0 0.0
        %5564 = vmatprep.subr.mxu0 0.0
        %5565 = vmatpush1.msra.mxu0 0.0
        %5566 = vmatprep.subr.mxu0 0.0
        %5567 = vmatpush1.msra.mxu0 0.0
        %5568 = vmatprep.subr.mxu0 0.0
        %5569 = vmatpush1.msra.mxu0 0.0
        %5570 = vmatprep.subr.mxu0 0.0
        %5571 = vmatpush1.msra.mxu0 0.0
        %5572 = vmatprep.subr.mxu0 0.0
        %5573 = vmatpush1.msra.mxu0 0.0
        %5574 = vmatprep.subr.mxu0 0.0
        %5575 = vmatpush1.msra.mxu0 0.0
        %5576 = vmatprep.subr.mxu0 0.0
        %5577 = vmatpush1.msra.mxu0 0.0
        %5578 = vmatprep.subr.mxu0 0.0
        %5579 = vmatpush1.msra.mxu0 0.0
        %5580 = vmatprep.subr.mxu0 0.0
        %5581 = vmatpush1.msra.mxu0 0.0
        %5582 = vmatprep.subr.mxu0 0.0
        %5583 = vmatpush1.msra.mxu0 0.0
        %5584 = vmatprep.subr.mxu0 0.0
        %5585 = vmatpush1.msra.mxu0 0.0
        %5586 = vmatprep.subr.mxu0 0.0
        %5587 = vmatpush1.msra.mxu0 0.0
        %5588 = vmatprep.subr.mxu0 0.0
        %5589 = vmatpush1.msra.mxu0 0.0
        %5590 = vmatprep.subr.mxu0 0.0
        %5591 = vmatpush1.msra.mxu0 0.0
        %5592 = vmatprep.subr.mxu0 0.0
        %5593 = vmatpush1.msra.mxu0 0.0
        %5594 = vmatprep.subr.mxu0 0.0
        %5595 = vmatpush1.msra.mxu0 0.0
        %5596 = vmatprep.subr.mxu0 0.0
        %5597 = vmatpush1.msra.mxu0 0.0
        %5598 = vmatprep.subr.mxu0 0.0
        %5599 = vmatpush1.msra.mxu0 0.0
        %5600 = vmatprep.subr.mxu0 0.0
        %5601 = vmatpush1.msra.mxu0 0.0
        %5602 = vmatprep.subr.mxu0 0.0
        %5603 = vmatpush1.msra.mxu0 0.0
        %5604 = vmatprep.subr.mxu0 0.0
        %5605 = vmatpush1.msra.mxu0 0.0
        %5606 = vmatprep.subr.mxu0 0.0
        %5607 = vmatpush1.msra.mxu0 0.0
        %5608 = vmatprep.subr.mxu0 0.0
        %5609 = vmatpush1.msra.mxu0 0.0
        %5610 = vmatprep.mubr.f32.mxu0 0.0
        %5611 = vmatmul.mubr.f32.gmra.mrb[0].mxu0 %v3502
        %v5612 = vpop.f32.mrb[0].mxu0
        %v5613 = vadd.f32 %v5544, %v5612
        %v5614 = vpop.f32.mrb[0].mxu0
        %5615 = vdwg.mxu0
        %5617 = vrot.lane.b32.xlu0 %v5525, 120
        %v5618 = vpop.permute.xlu0 %5617
        %5619 = vrot.lane.b32.xlu0 %v5525, 112
        %v5620 = vpop.permute.xlu0 %5619
        %5621 = vrot.lane.b32.xlu0 %v5525, 104
        %v5622 = vpop.permute.xlu0 %5621
        %5624 = vrot.lane.b32.xlu0 %v5613, 120
        %v5625 = vpop.permute.xlu0 %5624
        %5626 = vrot.lane.b32.xlu0 %v5613, 112
        %v5627 = vpop.permute.xlu0 %5626
        %5628 = vrot.lane.b32.xlu0 %v5613, 104
        %v5629 = vpop.permute.xlu0 %5628
        %v5630 = vsel %vm419, %v5525, 0
        %v5632 = vsel %vm419, %v5613, 0
        %5634 = vmatprep.subr.mxu0 0.0
        %5635 = vmatpush1.xpose.msra.mxu0 %v5632
        %5636 = vmatprep.subr.mxu0 0.0
        %5637 = vmatpush1.xpose.msra.mxu0 0.0
        %5638 = vmatprep.subr.mxu0 0.0
        %5639 = vmatpush1.xpose.msra.mxu0 0.0
        %5640 = vmatprep.subr.mxu0 0.0
        %5641 = vmatpush1.xpose.msra.mxu0 0.0
        %5642 = vmatprep.subr.mxu0 0.0
        %5643 = vmatpush1.xpose.msra.mxu0 0.0
        %5644 = vmatprep.subr.mxu0 0.0
        %5645 = vmatpush1.xpose.msra.mxu0 0.0
        %5646 = vmatprep.subr.mxu0 0.0
        %5647 = vmatpush1.xpose.msra.mxu0 0.0
        %5648 = vmatprep.subr.mxu0 0.0
        %5649 = vmatpush1.xpose.msra.mxu0 0.0
        %5650 = vmatprep.subr.mxu0 0.0
        %5651 = vmatpush1.xpose.msra.mxu0 0.0
        %5652 = vmatprep.subr.mxu0 0.0
        %5653 = vmatpush1.xpose.msra.mxu0 0.0
        %5654 = vmatprep.subr.mxu0 0.0
        %5655 = vmatpush1.xpose.msra.mxu0 0.0
        %5656 = vmatprep.subr.mxu0 0.0
        %5657 = vmatpush1.xpose.msra.mxu0 0.0
        %5658 = vmatprep.subr.mxu0 0.0
        %5659 = vmatpush1.xpose.msra.mxu0 0.0
        %5660 = vmatprep.subr.mxu0 0.0
        %5661 = vmatpush1.xpose.msra.mxu0 0.0
        %5662 = vmatprep.subr.mxu0 0.0
        %5663 = vmatpush1.xpose.msra.mxu0 0.0
        %5664 = vmatprep.subr.mxu0 0.0
        %5665 = vmatpush1.xpose.msra.mxu0 0.0
        %5666 = vmatprep.subr.mxu0 0.0
        %5667 = vmatpush1.xpose.msra.mxu0 0.0
        %5668 = vmatprep.subr.mxu0 0.0
        %5669 = vmatpush1.xpose.msra.mxu0 0.0
        %5670 = vmatprep.subr.mxu0 0.0
        %5671 = vmatpush1.xpose.msra.mxu0 0.0
        %5672 = vmatprep.subr.mxu0 0.0
        %5673 = vmatpush1.xpose.msra.mxu0 0.0
        %5674 = vmatprep.subr.mxu0 0.0
        %5675 = vmatpush1.xpose.msra.mxu0 0.0
        %5676 = vmatprep.subr.mxu0 0.0
        %5677 = vmatpush1.xpose.msra.mxu0 0.0
        %5678 = vmatprep.subr.mxu0 0.0
        %5679 = vmatpush1.xpose.msra.mxu0 0.0
        %5680 = vmatprep.subr.mxu0 0.0
        %5681 = vmatpush1.xpose.msra.mxu0 0.0
        %5682 = vmatprep.subr.mxu0 0.0
        %5683 = vmatpush1.xpose.msra.mxu0 0.0
        %5684 = vmatprep.subr.mxu0 0.0
        %5685 = vmatpush1.xpose.msra.mxu0 0.0
        %5686 = vmatprep.subr.mxu0 0.0
        %5687 = vmatpush1.xpose.msra.mxu0 0.0
        %5688 = vmatprep.subr.mxu0 0.0
        %5689 = vmatpush1.xpose.msra.mxu0 0.0
        %5690 = vmatprep.subr.mxu0 0.0
        %5691 = vmatpush1.xpose.msra.mxu0 0.0
        %5692 = vmatprep.subr.mxu0 0.0
        %5693 = vmatpush1.xpose.msra.mxu0 0.0
        %5694 = vmatprep.subr.mxu0 0.0
        %5695 = vmatpush1.xpose.msra.mxu0 0.0
        %5696 = vmatprep.subr.mxu0 0.0
        %5697 = vmatpush1.xpose.msra.mxu0 0.0
        %5698 = vmatprep.mubr.f32.mxu0 0.0
        %5699 = vmatmul.mubr.f32.gmra.mrb[0].mxu0 %v5630
        %v5700 = vpop.f32.mrb[0].mxu0
        %v5701 = vadd.f32 %v415, %v5700
        %v5702 = vpop.f32.mrb[0].mxu0
        %5703 = vdwg.mxu0
        %v5704 = vsel %vm419, %v5618, 0
        %v5706 = vsel %vm419, %v5625, 0
        %5708 = vmatprep.subr.mxu0 0.0
        %5709 = vmatpush1.xpose.msra.mxu0 %v5706
        %5710 = vmatprep.subr.mxu0 0.0
        %5711 = vmatpush1.xpose.msra.mxu0 0.0
        %5712 = vmatprep.subr.mxu0 0.0
        %5713 = vmatpush1.xpose.msra.mxu0 0.0
        %5714 = vmatprep.subr.mxu0 0.0
        %5715 = vmatpush1.xpose.msra.mxu0 0.0
        %5716 = vmatprep.subr.mxu0 0.0
        %5717 = vmatpush1.xpose.msra.mxu0 0.0
        %5718 = vmatprep.subr.mxu0 0.0
        %5719 = vmatpush1.xpose.msra.mxu0 0.0
        %5720 = vmatprep.subr.mxu0 0.0
        %5721 = vmatpush1.xpose.msra.mxu0 0.0
        %5722 = vmatprep.subr.mxu0 0.0
        %5723 = vmatpush1.xpose.msra.mxu0 0.0
        %5724 = vmatprep.subr.mxu0 0.0
        %5725 = vmatpush1.xpose.msra.mxu0 0.0
        %5726 = vmatprep.subr.mxu0 0.0
        %5727 = vmatpush1.xpose.msra.mxu0 0.0
        %5728 = vmatprep.subr.mxu0 0.0
        %5729 = vmatpush1.xpose.msra.mxu0 0.0
        %5730 = vmatprep.subr.mxu0 0.0
        %5731 = vmatpush1.xpose.msra.mxu0 0.0
        %5732 = vmatprep.subr.mxu0 0.0
        %5733 = vmatpush1.xpose.msra.mxu0 0.0
        %5734 = vmatprep.subr.mxu0 0.0
        %5735 = vmatpush1.xpose.msra.mxu0 0.0
        %5736 = vmatprep.subr.mxu0 0.0
        %5737 = vmatpush1.xpose.msra.mxu0 0.0
        %5738 = vmatprep.subr.mxu0 0.0
        %5739 = vmatpush1.xpose.msra.mxu0 0.0
        %5740 = vmatprep.subr.mxu0 0.0
        %5741 = vmatpush1.xpose.msra.mxu0 0.0
        %5742 = vmatprep.subr.mxu0 0.0
        %5743 = vmatpush1.xpose.msra.mxu0 0.0
        %5744 = vmatprep.subr.mxu0 0.0
        %5745 = vmatpush1.xpose.msra.mxu0 0.0
        %5746 = vmatprep.subr.mxu0 0.0
        %5747 = vmatpush1.xpose.msra.mxu0 0.0
        %5748 = vmatprep.subr.mxu0 0.0
        %5749 = vmatpush1.xpose.msra.mxu0 0.0
        %5750 = vmatprep.subr.mxu0 0.0
        %5751 = vmatpush1.xpose.msra.mxu0 0.0
        %5752 = vmatprep.subr.mxu0 0.0
        %5753 = vmatpush1.xpose.msra.mxu0 0.0
        %5754 = vmatprep.subr.mxu0 0.0
        %5755 = vmatpush1.xpose.msra.mxu0 0.0
        %5756 = vmatprep.subr.mxu0 0.0
        %5757 = vmatpush1.xpose.msra.mxu0 0.0
        %5758 = vmatprep.subr.mxu0 0.0
        %5759 = vmatpush1.xpose.msra.mxu0 0.0
        %5760 = vmatprep.subr.mxu0 0.0
        %5761 = vmatpush1.xpose.msra.mxu0 0.0
        %5762 = vmatprep.subr.mxu0 0.0
        %5763 = vmatpush1.xpose.msra.mxu0 0.0
        %5764 = vmatprep.subr.mxu0 0.0
        %5765 = vmatpush1.xpose.msra.mxu0 0.0
        %5766 = vmatprep.subr.mxu0 0.0
        %5767 = vmatpush1.xpose.msra.mxu0 0.0
        %5768 = vmatprep.subr.mxu0 0.0
        %5769 = vmatpush1.xpose.msra.mxu0 0.0
        %5770 = vmatprep.subr.mxu0 0.0
        %5771 = vmatpush1.xpose.msra.mxu0 0.0
        %5772 = vmatprep.mubr.f32.mxu0 0.0
        %5773 = vmatmul.mubr.f32.gmra.mrb[0].mxu0 %v5704
        %v5774 = vpop.f32.mrb[0].mxu0
        %v5775 = vadd.f32 %v415, %v5774
        %v5776 = vpop.f32.mrb[0].mxu0
        %5777 = vdwg.mxu0
        %v5778 = vsel %vm419, %v5620, 0
        %v5780 = vsel %vm419, %v5627, 0
        %5782 = vmatprep.subr.mxu0 0.0
        %5783 = vmatpush1.xpose.msra.mxu0 %v5780
        %5784 = vmatprep.subr.mxu0 0.0
        %5785 = vmatpush1.xpose.msra.mxu0 0.0
        %5786 = vmatprep.subr.mxu0 0.0
        %5787 = vmatpush1.xpose.msra.mxu0 0.0
        %5788 = vmatprep.subr.mxu0 0.0
        %5789 = vmatpush1.xpose.msra.mxu0 0.0
        %5790 = vmatprep.subr.mxu0 0.0
        %5791 = vmatpush1.xpose.msra.mxu0 0.0
        %5792 = vmatprep.subr.mxu0 0.0
        %5793 = vmatpush1.xpose.msra.mxu0 0.0
        %5794 = vmatprep.subr.mxu0 0.0
        %5795 = vmatpush1.xpose.msra.mxu0 0.0
        %5796 = vmatprep.subr.mxu0 0.0
        %5797 = vmatpush1.xpose.msra.mxu0 0.0
        %5798 = vmatprep.subr.mxu0 0.0
        %5799 = vmatpush1.xpose.msra.mxu0 0.0
        %5800 = vmatprep.subr.mxu0 0.0
        %5801 = vmatpush1.xpose.msra.mxu0 0.0
        %5802 = vmatprep.subr.mxu0 0.0
        %5803 = vmatpush1.xpose.msra.mxu0 0.0
        %5804 = vmatprep.subr.mxu0 0.0
        %5805 = vmatpush1.xpose.msra.mxu0 0.0
        %5806 = vmatprep.subr.mxu0 0.0
        %5807 = vmatpush1.xpose.msra.mxu0 0.0
        %5808 = vmatprep.subr.mxu0 0.0
        %5809 = vmatpush1.xpose.msra.mxu0 0.0
        %5810 = vmatprep.subr.mxu0 0.0
        %5811 = vmatpush1.xpose.msra.mxu0 0.0
        %5812 = vmatprep.subr.mxu0 0.0
        %5813 = vmatpush1.xpose.msra.mxu0 0.0
        %5814 = vmatprep.subr.mxu0 0.0
        %5815 = vmatpush1.xpose.msra.mxu0 0.0
        %5816 = vmatprep.subr.mxu0 0.0
        %5817 = vmatpush1.xpose.msra.mxu0 0.0
        %5818 = vmatprep.subr.mxu0 0.0
        %5819 = vmatpush1.xpose.msra.mxu0 0.0
        %5820 = vmatprep.subr.mxu0 0.0
        %5821 = vmatpush1.xpose.msra.mxu0 0.0
        %5822 = vmatprep.subr.mxu0 0.0
        %5823 = vmatpush1.xpose.msra.mxu0 0.0
        %5824 = vmatprep.subr.mxu0 0.0
        %5825 = vmatpush1.xpose.msra.mxu0 0.0
        %5826 = vmatprep.subr.mxu0 0.0
        %5827 = vmatpush1.xpose.msra.mxu0 0.0
        %5828 = vmatprep.subr.mxu0 0.0
        %5829 = vmatpush1.xpose.msra.mxu0 0.0
        %5830 = vmatprep.subr.mxu0 0.0
        %5831 = vmatpush1.xpose.msra.mxu0 0.0
        %5832 = vmatprep.subr.mxu0 0.0
        %5833 = vmatpush1.xpose.msra.mxu0 0.0
        %5834 = vmatprep.subr.mxu0 0.0
        %5835 = vmatpush1.xpose.msra.mxu0 0.0
        %5836 = vmatprep.subr.mxu0 0.0
        %5837 = vmatpush1.xpose.msra.mxu0 0.0
        %5838 = vmatprep.subr.mxu0 0.0
        %5839 = vmatpush1.xpose.msra.mxu0 0.0
        %5840 = vmatprep.subr.mxu0 0.0
        %5841 = vmatpush1.xpose.msra.mxu0 0.0
        %5842 = vmatprep.subr.mxu0 0.0
        %5843 = vmatpush1.xpose.msra.mxu0 0.0
        %5844 = vmatprep.subr.mxu0 0.0
        %5845 = vmatpush1.xpose.msra.mxu0 0.0
        %5846 = vmatprep.mubr.f32.mxu0 0.0
        %5847 = vmatmul.mubr.f32.gmra.mrb[0].mxu0 %v5778
        %v5848 = vpop.f32.mrb[0].mxu0
        %v5849 = vadd.f32 %v415, %v5848
        %v5850 = vpop.f32.mrb[0].mxu0
        %5851 = vdwg.mxu0
        %v5852 = vsel %vm419, %v5622, 0
        %v5854 = vsel %vm419, %v5629, 0
        %5856 = vmatprep.subr.mxu0 0.0
        %5857 = vmatpush1.xpose.msra.mxu0 %v5854
        %5858 = vmatprep.subr.mxu0 0.0
        %5859 = vmatpush1.xpose.msra.mxu0 0.0
        %5860 = vmatprep.subr.mxu0 0.0
        %5861 = vmatpush1.xpose.msra.mxu0 0.0
        %5862 = vmatprep.subr.mxu0 0.0
        %5863 = vmatpush1.xpose.msra.mxu0 0.0
        %5864 = vmatprep.subr.mxu0 0.0
        %5865 = vmatpush1.xpose.msra.mxu0 0.0
        %5866 = vmatprep.subr.mxu0 0.0
        %5867 = vmatpush1.xpose.msra.mxu0 0.0
        %5868 = vmatprep.subr.mxu0 0.0
        %5869 = vmatpush1.xpose.msra.mxu0 0.0
        %5870 = vmatprep.subr.mxu0 0.0
        %5871 = vmatpush1.xpose.msra.mxu0 0.0
        %5872 = vmatprep.subr.mxu0 0.0
        %5873 = vmatpush1.xpose.msra.mxu0 0.0
        %5874 = vmatprep.subr.mxu0 0.0
        %5875 = vmatpush1.xpose.msra.mxu0 0.0
        %5876 = vmatprep.subr.mxu0 0.0
        %5877 = vmatpush1.xpose.msra.mxu0 0.0
        %5878 = vmatprep.subr.mxu0 0.0
        %5879 = vmatpush1.xpose.msra.mxu0 0.0
        %5880 = vmatprep.subr.mxu0 0.0
        %5881 = vmatpush1.xpose.msra.mxu0 0.0
        %5882 = vmatprep.subr.mxu0 0.0
        %5883 = vmatpush1.xpose.msra.mxu0 0.0
        %5884 = vmatprep.subr.mxu0 0.0
        %5885 = vmatpush1.xpose.msra.mxu0 0.0
        %5886 = vmatprep.subr.mxu0 0.0
        %5887 = vmatpush1.xpose.msra.mxu0 0.0
        %5888 = vmatprep.subr.mxu0 0.0
        %5889 = vmatpush1.xpose.msra.mxu0 0.0
        %5890 = vmatprep.subr.mxu0 0.0
        %5891 = vmatpush1.xpose.msra.mxu0 0.0
        %5892 = vmatprep.subr.mxu0 0.0
        %5893 = vmatpush1.xpose.msra.mxu0 0.0
        %5894 = vmatprep.subr.mxu0 0.0
        %5895 = vmatpush1.xpose.msra.mxu0 0.0
        %5896 = vmatprep.subr.mxu0 0.0
        %5897 = vmatpush1.xpose.msra.mxu0 0.0
        %5898 = vmatprep.subr.mxu0 0.0
        %5899 = vmatpush1.xpose.msra.mxu0 0.0
        %5900 = vmatprep.subr.mxu0 0.0
        %5901 = vmatpush1.xpose.msra.mxu0 0.0
        %5902 = vmatprep.subr.mxu0 0.0
        %5903 = vmatpush1.xpose.msra.mxu0 0.0
        %5904 = vmatprep.subr.mxu0 0.0
        %5905 = vmatpush1.xpose.msra.mxu0 0.0
        %5906 = vmatprep.subr.mxu0 0.0
        %5907 = vmatpush1.xpose.msra.mxu0 0.0
        %5908 = vmatprep.subr.mxu0 0.0
        %5909 = vmatpush1.xpose.msra.mxu0 0.0
        %5910 = vmatprep.subr.mxu0 0.0
        %5911 = vmatpush1.xpose.msra.mxu0 0.0
        %5912 = vmatprep.subr.mxu0 0.0
        %5913 = vmatpush1.xpose.msra.mxu0 0.0
        %5914 = vmatprep.subr.mxu0 0.0
        %5915 = vmatpush1.xpose.msra.mxu0 0.0
        %5916 = vmatprep.subr.mxu0 0.0
        %5917 = vmatpush1.xpose.msra.mxu0 0.0
        %5918 = vmatprep.subr.mxu0 0.0
        %5919 = vmatpush1.xpose.msra.mxu0 0.0
        %5920 = vmatprep.mubr.f32.mxu0 0.0
        %5921 = vmatmul.mubr.f32.gmra.mrb[0].mxu0 %v5852
        %v5922 = vpop.f32.mrb[0].mxu0
        %v5923 = vadd.f32 %v415, %v5922
        %v5924 = vpop.f32.mrb[0].mxu0
        %5925 = vdwg.mxu0
        %v5926 = vsel %vm419, %v5701, -inf
        %5927 = vmax.xlane.f32.xlu0 %v5926
        %v5928 = vpop.xlane.xlu0 %5927
        %v5929 = vsel %vm419, %v5775, -inf
        %5930 = vmax.xlane.f32.xlu0 %v5929
        %v5931 = vpop.xlane.xlu0 %5930
        %v5932 = vsel %vm419, %v5849, -inf
        %5933 = vmax.xlane.f32.xlu0 %v5932
        %v5934 = vpop.xlane.xlu0 %5933
        %v5935 = vsel %vm419, %v5923, -inf
        %5936 = vmax.xlane.f32.xlu0 %v5935
        %v5937 = vpop.xlane.xlu0 %5936
        %v5938 = vsub.f32 %v5701, %v5928
        %v5939 = vsub.f32 %v5775, %v5931
        %v5940 = vsub.f32 %v5849, %v5934
        %v5941 = vsub.f32 %v5923, %v5937
        %v5942 = vmul.f32 %v5938, 1.442695
        %v5943 = vpow.pop %v5942
        %v5944 = vmul.f32 %v5939, 1.442695
        %v5945 = vpow.pop %v5944
        %v5946 = vmul.f32 %v5940, 1.442695
        %v5947 = vpow.pop %v5946
        %v5948 = vmul.f32 %v5941, 1.442695
        %v5949 = vpow.pop %v5948
        %v5950 = vsel %vm419, %v5943, 0.0
        %5951 = vadd.xlane.f32.xlu0 %v5950
        %v5952 = vpop.xlane.xlu0 %5951
        %v5953 = vsel %vm419, %v5945, 0.0
        %5954 = vadd.xlane.f32.xlu0 %v5953
        %v5955 = vpop.xlane.xlu0 %5954
        %v5956 = vsel %vm419, %v5947, 0.0
        %5957 = vadd.xlane.f32.xlu0 %v5956
        %v5958 = vpop.xlane.xlu0 %5957
        %v5959 = vsel %vm419, %v5949, 0.0
        %5960 = vadd.xlane.f32.xlu0 %v5959
        %v5961 = vpop.xlane.xlu0 %5960
        %v5962 = vrcp.pop %v5952
        %v5963 = vrcp.pop %v5955
        %v5964 = vrcp.pop %v5958
        %v5965 = vrcp.pop %v5961
        %v5966 = vmul.f32 %v5943, %v5962
        %v5967 = vmul.f32 %v5945, %v5963
        %v5968 = vmul.f32 %v5947, %v5964
        %v5969 = vmul.f32 %v5949, %v5965
        %5970 = vrot.lane.b32.xlu0 %v5613, 96
        %v5971 = vpop.permute.xlu0 %5970
        %v5974 = vsel %vm419, %v5966, 0
        %5976 = vmatprep.subr.mxu0 0.0
        %5977 = vmatpush1.msra.mxu0 %v5971
        %5978 = vmatprep.subr.mxu0 0.0
        %5979 = vmatpush1.msra.mxu0 0.0
        %5980 = vmatprep.subr.mxu0 0.0
        %5981 = vmatpush1.msra.mxu0 0.0
        %5982 = vmatprep.subr.mxu0 0.0
        %5983 = vmatpush1.msra.mxu0 0.0
        %5984 = vmatprep.subr.mxu0 0.0
        %5985 = vmatpush1.msra.mxu0 0.0
        %5986 = vmatprep.subr.mxu0 0.0
        %5987 = vmatpush1.msra.mxu0 0.0
        %5988 = vmatprep.subr.mxu0 0.0
        %5989 = vmatpush1.msra.mxu0 0.0
        %5990 = vmatprep.subr.mxu0 0.0
        %5991 = vmatpush1.msra.mxu0 0.0
        %5992 = vmatprep.subr.mxu0 0.0
        %5993 = vmatpush1.msra.mxu0 0.0
        %5994 = vmatprep.subr.mxu0 0.0
        %5995 = vmatpush1.msra.mxu0 0.0
        %5996 = vmatprep.subr.mxu0 0.0
        %5997 = vmatpush1.msra.mxu0 0.0
        %5998 = vmatprep.subr.mxu0 0.0
        %5999 = vmatpush1.msra.mxu0 0.0
        %6000 = vmatprep.subr.mxu0 0.0
        %6001 = vmatpush1.msra.mxu0 0.0
        %6002 = vmatprep.subr.mxu0 0.0
        %6003 = vmatpush1.msra.mxu0 0.0
        %6004 = vmatprep.subr.mxu0 0.0
        %6005 = vmatpush1.msra.mxu0 0.0
        %6006 = vmatprep.subr.mxu0 0.0
        %6007 = vmatpush1.msra.mxu0 0.0
        %6008 = vmatprep.subr.mxu0 0.0
        %6009 = vmatpush1.msra.mxu0 0.0
        %6010 = vmatprep.subr.mxu0 0.0
        %6011 = vmatpush1.msra.mxu0 0.0
        %6012 = vmatprep.subr.mxu0 0.0
        %6013 = vmatpush1.msra.mxu0 0.0
        %6014 = vmatprep.subr.mxu0 0.0
        %6015 = vmatpush1.msra.mxu0 0.0
        %6016 = vmatprep.subr.mxu0 0.0
        %6017 = vmatpush1.msra.mxu0 0.0
        %6018 = vmatprep.subr.mxu0 0.0
        %6019 = vmatpush1.msra.mxu0 0.0
        %6020 = vmatprep.subr.mxu0 0.0
        %6021 = vmatpush1.msra.mxu0 0.0
        %6022 = vmatprep.subr.mxu0 0.0
        %6023 = vmatpush1.msra.mxu0 0.0
        %6024 = vmatprep.subr.mxu0 0.0
        %6025 = vmatpush1.msra.mxu0 0.0
        %6026 = vmatprep.subr.mxu0 0.0
        %6027 = vmatpush1.msra.mxu0 0.0
        %6028 = vmatprep.subr.mxu0 0.0
        %6029 = vmatpush1.msra.mxu0 0.0
        %6030 = vmatprep.subr.mxu0 0.0
        %6031 = vmatpush1.msra.mxu0 0.0
        %6032 = vmatprep.subr.mxu0 0.0
        %6033 = vmatpush1.msra.mxu0 0.0
        %6034 = vmatprep.subr.mxu0 0.0
        %6035 = vmatpush1.msra.mxu0 0.0
        %6036 = vmatprep.subr.mxu0 0.0
        %6037 = vmatpush1.msra.mxu0 0.0
        %6038 = vmatprep.subr.mxu0 0.0
        %6039 = vmatpush1.msra.mxu0 0.0
        %6040 = vmatprep.mubr.f32.mxu0 0.0
        %6041 = vmatmul.mubr.f32.gmra.mrb[0].mxu0 %v5974
        %v6042 = vpop.f32.mrb[0].mxu0
        %v6043 = vadd.f32 0.0, %v6042
        %v6044 = vpop.f32.mrb[0].mxu0
        %6045 = vdwg.mxu0
        %6046 = vrot.lane.b32.xlu0 %v5625, 96
        %v6047 = vpop.permute.xlu0 %6046
        %v6050 = vsel %vm419, %v5967, 0
        %6052 = vmatprep.subr.mxu0 0.0
        %6053 = vmatpush1.msra.mxu0 %v6047
        %6054 = vmatprep.subr.mxu0 0.0
        %6055 = vmatpush1.msra.mxu0 0.0
        %6056 = vmatprep.subr.mxu0 0.0
        %6057 = vmatpush1.msra.mxu0 0.0
        %6058 = vmatprep.subr.mxu0 0.0
        %6059 = vmatpush1.msra.mxu0 0.0
        %6060 = vmatprep.subr.mxu0 0.0
        %6061 = vmatpush1.msra.mxu0 0.0
        %6062 = vmatprep.subr.mxu0 0.0
        %6063 = vmatpush1.msra.mxu0 0.0
        %6064 = vmatprep.subr.mxu0 0.0
        %6065 = vmatpush1.msra.mxu0 0.0
        %6066 = vmatprep.subr.mxu0 0.0
        %6067 = vmatpush1.msra.mxu0 0.0
        %6068 = vmatprep.subr.mxu0 0.0
        %6069 = vmatpush1.msra.mxu0 0.0
        %6070 = vmatprep.subr.mxu0 0.0
        %6071 = vmatpush1.msra.mxu0 0.0
        %6072 = vmatprep.subr.mxu0 0.0
        %6073 = vmatpush1.msra.mxu0 0.0
        %6074 = vmatprep.subr.mxu0 0.0
        %6075 = vmatpush1.msra.mxu0 0.0
        %6076 = vmatprep.subr.mxu0 0.0
        %6077 = vmatpush1.msra.mxu0 0.0
        %6078 = vmatprep.subr.mxu0 0.0
        %6079 = vmatpush1.msra.mxu0 0.0
        %6080 = vmatprep.subr.mxu0 0.0
        %6081 = vmatpush1.msra.mxu0 0.0
        %6082 = vmatprep.subr.mxu0 0.0
        %6083 = vmatpush1.msra.mxu0 0.0
        %6084 = vmatprep.subr.mxu0 0.0
        %6085 = vmatpush1.msra.mxu0 0.0
        %6086 = vmatprep.subr.mxu0 0.0
        %6087 = vmatpush1.msra.mxu0 0.0
        %6088 = vmatprep.subr.mxu0 0.0
        %6089 = vmatpush1.msra.mxu0 0.0
        %6090 = vmatprep.subr.mxu0 0.0
        %6091 = vmatpush1.msra.mxu0 0.0
        %6092 = vmatprep.subr.mxu0 0.0
        %6093 = vmatpush1.msra.mxu0 0.0
        %6094 = vmatprep.subr.mxu0 0.0
        %6095 = vmatpush1.msra.mxu0 0.0
        %6096 = vmatprep.subr.mxu0 0.0
        %6097 = vmatpush1.msra.mxu0 0.0
        %6098 = vmatprep.subr.mxu0 0.0
        %6099 = vmatpush1.msra.mxu0 0.0
        %6100 = vmatprep.subr.mxu0 0.0
        %6101 = vmatpush1.msra.mxu0 0.0
        %6102 = vmatprep.subr.mxu0 0.0
        %6103 = vmatpush1.msra.mxu0 0.0
        %6104 = vmatprep.subr.mxu0 0.0
        %6105 = vmatpush1.msra.mxu0 0.0
        %6106 = vmatprep.subr.mxu0 0.0
        %6107 = vmatpush1.msra.mxu0 0.0
        %6108 = vmatprep.subr.mxu0 0.0
        %6109 = vmatpush1.msra.mxu0 0.0
        %6110 = vmatprep.subr.mxu0 0.0
        %6111 = vmatpush1.msra.mxu0 0.0
        %6112 = vmatprep.subr.mxu0 0.0
        %6113 = vmatpush1.msra.mxu0 0.0
        %6114 = vmatprep.subr.mxu0 0.0
        %6115 = vmatpush1.msra.mxu0 0.0
        %6116 = vmatprep.mubr.f32.mxu0 0.0
        %6117 = vmatmul.mubr.f32.gmra.mrb[0].mxu0 %v6050
        %v6118 = vpop.f32.mrb[0].mxu0
        %v6119 = vadd.f32 0.0, %v6118
        %v6120 = vpop.f32.mrb[0].mxu0
        %6121 = vdwg.mxu0
        %6122 = vrot.lane.b32.xlu0 %v5627, 96
        %v6123 = vpop.permute.xlu0 %6122
        %v6126 = vsel %vm419, %v5968, 0
        %6128 = vmatprep.subr.mxu0 0.0
        %6129 = vmatpush1.msra.mxu0 %v6123
        %6130 = vmatprep.subr.mxu0 0.0
        %6131 = vmatpush1.msra.mxu0 0.0
        %6132 = vmatprep.subr.mxu0 0.0
        %6133 = vmatpush1.msra.mxu0 0.0
        %6134 = vmatprep.subr.mxu0 0.0
        %6135 = vmatpush1.msra.mxu0 0.0
        %6136 = vmatprep.subr.mxu0 0.0
        %6137 = vmatpush1.msra.mxu0 0.0
        %6138 = vmatprep.subr.mxu0 0.0
        %6139 = vmatpush1.msra.mxu0 0.0
        %6140 = vmatprep.subr.mxu0 0.0
        %6141 = vmatpush1.msra.mxu0 0.0
        %6142 = vmatprep.subr.mxu0 0.0
        %6143 = vmatpush1.msra.mxu0 0.0
        %6144 = vmatprep.subr.mxu0 0.0
        %6145 = vmatpush1.msra.mxu0 0.0
        %6146 = vmatprep.subr.mxu0 0.0
        %6147 = vmatpush1.msra.mxu0 0.0
        %6148 = vmatprep.subr.mxu0 0.0
        %6149 = vmatpush1.msra.mxu0 0.0
        %6150 = vmatprep.subr.mxu0 0.0
        %6151 = vmatpush1.msra.mxu0 0.0
        %6152 = vmatprep.subr.mxu0 0.0
        %6153 = vmatpush1.msra.mxu0 0.0
        %6154 = vmatprep.subr.mxu0 0.0
        %6155 = vmatpush1.msra.mxu0 0.0
        %6156 = vmatprep.subr.mxu0 0.0
        %6157 = vmatpush1.msra.mxu0 0.0
        %6158 = vmatprep.subr.mxu0 0.0
        %6159 = vmatpush1.msra.mxu0 0.0
        %6160 = vmatprep.subr.mxu0 0.0
        %6161 = vmatpush1.msra.mxu0 0.0
        %6162 = vmatprep.subr.mxu0 0.0
        %6163 = vmatpush1.msra.mxu0 0.0
        %6164 = vmatprep.subr.mxu0 0.0
        %6165 = vmatpush1.msra.mxu0 0.0
        %6166 = vmatprep.subr.mxu0 0.0
        %6167 = vmatpush1.msra.mxu0 0.0
        %6168 = vmatprep.subr.mxu0 0.0
        %6169 = vmatpush1.msra.mxu0 0.0
        %6170 = vmatprep.subr.mxu0 0.0
        %6171 = vmatpush1.msra.mxu0 0.0
        %6172 = vmatprep.subr.mxu0 0.0
        %6173 = vmatpush1.msra.mxu0 0.0
        %6174 = vmatprep.subr.mxu0 0.0
        %6175 = vmatpush1.msra.mxu0 0.0
        %6176 = vmatprep.subr.mxu0 0.0
        %6177 = vmatpush1.msra.mxu0 0.0
        %6178 = vmatprep.subr.mxu0 0.0
        %6179 = vmatpush1.msra.mxu0 0.0
        %6180 = vmatprep.subr.mxu0 0.0
        %6181 = vmatpush1.msra.mxu0 0.0
        %6182 = vmatprep.subr.mxu0 0.0
        %6183 = vmatpush1.msra.mxu0 0.0
        %6184 = vmatprep.subr.mxu0 0.0
        %6185 = vmatpush1.msra.mxu0 0.0
        %6186 = vmatprep.subr.mxu0 0.0
        %6187 = vmatpush1.msra.mxu0 0.0
        %6188 = vmatprep.subr.mxu0 0.0
        %6189 = vmatpush1.msra.mxu0 0.0
        %6190 = vmatprep.subr.mxu0 0.0
        %6191 = vmatpush1.msra.mxu0 0.0
        %6192 = vmatprep.mubr.f32.mxu0 0.0
        %6193 = vmatmul.mubr.f32.gmra.mrb[0].mxu0 %v6126
        %v6194 = vpop.f32.mrb[0].mxu0
        %v6195 = vadd.f32 0.0, %v6194
        %v6196 = vpop.f32.mrb[0].mxu0
        %6197 = vdwg.mxu0
        %6198 = vrot.lane.b32.xlu0 %v5629, 96
        %v6199 = vpop.permute.xlu0 %6198
        %v6202 = vsel %vm419, %v5969, 0
        %6204 = vmatprep.subr.mxu0 0.0
        %6205 = vmatpush1.msra.mxu0 %v6199
        %6206 = vmatprep.subr.mxu0 0.0
        %6207 = vmatpush1.msra.mxu0 0.0
        %6208 = vmatprep.subr.mxu0 0.0
        %6209 = vmatpush1.msra.mxu0 0.0
        %6210 = vmatprep.subr.mxu0 0.0
        %6211 = vmatpush1.msra.mxu0 0.0
        %6212 = vmatprep.subr.mxu0 0.0
        %6213 = vmatpush1.msra.mxu0 0.0
        %6214 = vmatprep.subr.mxu0 0.0
        %6215 = vmatpush1.msra.mxu0 0.0
        %6216 = vmatprep.subr.mxu0 0.0
        %6217 = vmatpush1.msra.mxu0 0.0
        %6218 = vmatprep.subr.mxu0 0.0
        %6219 = vmatpush1.msra.mxu0 0.0
        %6220 = vmatprep.subr.mxu0 0.0
        %6221 = vmatpush1.msra.mxu0 0.0
        %6222 = vmatprep.subr.mxu0 0.0
        %6223 = vmatpush1.msra.mxu0 0.0
        %6224 = vmatprep.subr.mxu0 0.0
        %6225 = vmatpush1.msra.mxu0 0.0
        %6226 = vmatprep.subr.mxu0 0.0
        %6227 = vmatpush1.msra.mxu0 0.0
        %6228 = vmatprep.subr.mxu0 0.0
        %6229 = vmatpush1.msra.mxu0 0.0
        %6230 = vmatprep.subr.mxu0 0.0
        %6231 = vmatpush1.msra.mxu0 0.0
        %6232 = vmatprep.subr.mxu0 0.0
        %6233 = vmatpush1.msra.mxu0 0.0
        %6234 = vmatprep.subr.mxu0 0.0
        %6235 = vmatpush1.msra.mxu0 0.0
        %6236 = vmatprep.subr.mxu0 0.0
        %6237 = vmatpush1.msra.mxu0 0.0
        %6238 = vmatprep.subr.mxu0 0.0
        %6239 = vmatpush1.msra.mxu0 0.0
        %6240 = vmatprep.subr.mxu0 0.0
        %6241 = vmatpush1.msra.mxu0 0.0
        %6242 = vmatprep.subr.mxu0 0.0
        %6243 = vmatpush1.msra.mxu0 0.0
        %6244 = vmatprep.subr.mxu0 0.0
        %6245 = vmatpush1.msra.mxu0 0.0
        %6246 = vmatprep.subr.mxu0 0.0
        %6247 = vmatpush1.msra.mxu0 0.0
        %6248 = vmatprep.subr.mxu0 0.0
        %6249 = vmatpush1.msra.mxu0 0.0
        %6250 = vmatprep.subr.mxu0 0.0
        %6251 = vmatpush1.msra.mxu0 0.0
        %6252 = vmatprep.subr.mxu0 0.0
        %6253 = vmatpush1.msra.mxu0 0.0
        %6254 = vmatprep.subr.mxu0 0.0
        %6255 = vmatpush1.msra.mxu0 0.0
        %6256 = vmatprep.subr.mxu0 0.0
        %6257 = vmatpush1.msra.mxu0 0.0
        %6258 = vmatprep.subr.mxu0 0.0
        %6259 = vmatpush1.msra.mxu0 0.0
        %6260 = vmatprep.subr.mxu0 0.0
        %6261 = vmatpush1.msra.mxu0 0.0
        %6262 = vmatprep.subr.mxu0 0.0
        %6263 = vmatpush1.msra.mxu0 0.0
        %6264 = vmatprep.subr.mxu0 0.0
        %6265 = vmatpush1.msra.mxu0 0.0
        %6266 = vmatprep.subr.mxu0 0.0
        %6267 = vmatpush1.msra.mxu0 0.0
        %6268 = vmatprep.mubr.f32.mxu0 0.0
        %6269 = vmatmul.mubr.f32.gmra.mrb[0].mxu0 %v6202
        %v6270 = vpop.f32.mrb[0].mxu0
        %v6271 = vadd.f32 0.0, %v6270
        %v6272 = vpop.f32.mrb[0].mxu0
        %6273 = vdwg.mxu0
        %6275 = vrot.lane.b32.xlu0 %v6119, 8
        %v6276 = vpop.permute.xlu0 %6275
        %6279 = vrot.lane.b32.xlu0 %v6195, 16
        %v6280 = vpop.permute.xlu0 %6279
        %6283 = vrot.lane.b32.xlu0 %v6271, 24
        %v6284 = vpop.permute.xlu0 %6283
        %v6286 = vsel %vm419, %v6043, %v6276
        %v6287 = vsel %vm1083, %v6286, %v6280
        %v6288 = vsel %vm1085, %v6287, %v6284
        %v6289 = vlaneseq
        %v6290 = vshrl.u32 %v6289, 7
        %v6291 = vsub.s32 0, %v6290
        %v6292 = vrot.slane %v5447, %v6291
        %v6294 = vsel %vm277, %v6288, 0
        %6296 = vmatprep.subr.mxu0 0.0
        %6297 = vmatpush1.msra.mxu0 %v5443
        %6298 = vmatprep.subr.mxu0 0.0
        %6299 = vmatpush1.msra.mxu0 %v5444
        %6300 = vmatprep.subr.mxu0 0.0
        %6301 = vmatpush1.msra.mxu0 %v5445
        %6302 = vmatprep.subr.mxu0 0.0
        %6303 = vmatpush1.msra.mxu0 %v5446
        %6304 = vmatprep.subr.mxu0 0.0
        %6305 = vmatpush1.msra.mxu0 0.0
        %6306 = vmatprep.subr.mxu0 0.0
        %6307 = vmatpush1.msra.mxu0 0.0
        %6308 = vmatprep.subr.mxu0 0.0
        %6309 = vmatpush1.msra.mxu0 0.0
        %6310 = vmatprep.subr.mxu0 0.0
        %6311 = vmatpush1.msra.mxu0 0.0
        %6312 = vmatprep.subr.mxu0 0.0
        %6313 = vmatpush1.msra.mxu0 0.0
        %6314 = vmatprep.subr.mxu0 0.0
        %6315 = vmatpush1.msra.mxu0 0.0
        %6316 = vmatprep.subr.mxu0 0.0
        %6317 = vmatpush1.msra.mxu0 0.0
        %6318 = vmatprep.subr.mxu0 0.0
        %6319 = vmatpush1.msra.mxu0 0.0
        %6320 = vmatprep.subr.mxu0 0.0
        %6321 = vmatpush1.msra.mxu0 0.0
        %6322 = vmatprep.subr.mxu0 0.0
        %6323 = vmatpush1.msra.mxu0 0.0
        %6324 = vmatprep.subr.mxu0 0.0
        %6325 = vmatpush1.msra.mxu0 0.0
        %6326 = vmatprep.subr.mxu0 0.0
        %6327 = vmatpush1.msra.mxu0 0.0
        %6328 = vmatprep.subr.mxu0 0.0
        %6329 = vmatpush1.msra.mxu0 0.0
        %6330 = vmatprep.subr.mxu0 0.0
        %6331 = vmatpush1.msra.mxu0 0.0
        %6332 = vmatprep.subr.mxu0 0.0
        %6333 = vmatpush1.msra.mxu0 0.0
        %6334 = vmatprep.subr.mxu0 0.0
        %6335 = vmatpush1.msra.mxu0 0.0
        %6336 = vmatprep.subr.mxu0 0.0
        %6337 = vmatpush1.msra.mxu0 0.0
        %6338 = vmatprep.subr.mxu0 0.0
        %6339 = vmatpush1.msra.mxu0 0.0
        %6340 = vmatprep.subr.mxu0 0.0
        %6341 = vmatpush1.msra.mxu0 0.0
        %6342 = vmatprep.subr.mxu0 0.0
        %6343 = vmatpush1.msra.mxu0 0.0
        %6344 = vmatprep.subr.mxu0 0.0
        %6345 = vmatpush1.msra.mxu0 0.0
        %6346 = vmatprep.subr.mxu0 0.0
        %6347 = vmatpush1.msra.mxu0 0.0
        %6348 = vmatprep.subr.mxu0 0.0
        %6349 = vmatpush1.msra.mxu0 0.0
        %6350 = vmatprep.subr.mxu0 0.0
        %6351 = vmatpush1.msra.mxu0 0.0
        %6352 = vmatprep.subr.mxu0 0.0
        %6353 = vmatpush1.msra.mxu0 0.0
        %6354 = vmatprep.subr.mxu0 0.0
        %6355 = vmatpush1.msra.mxu0 0.0
        %6356 = vmatprep.subr.mxu0 0.0
        %6357 = vmatpush1.msra.mxu0 0.0
        %6358 = vmatprep.subr.mxu0 0.0
        %6359 = vmatpush1.msra.mxu0 0.0
        %6360 = vmatprep.mubr.f32.mxu0 0.0
        %6361 = vmatmul.mubr.f32.gmra.mrb[0].mxu0 %v6294
        %v6362 = vpop.f32.mrb[0].mxu0
        %v6363 = vadd.f32 %v6292, %v6362
        %v6364 = vpop.f32.mrb[0].mxu0
        %6365 = vdwg.mxu0
        %v6366 = vadd.f32 %v5405, %v6363
        %v6367 = vld [vmem:[%s4 + $0x430] sm:$0x1]
        %v6368 = vld [vmem:[%s4 + $0x438] sm:$0x1]
        %v6369 = vsel %vm277, %v6366, 0.0
        %6370 = vadd.xlane.f32.xlu0 %v6369
        %v6371 = vpop.xlane.xlu0 %6370
        %v6372 = vmul.f32 %v6371, %v281
        %v6373 = vsub.f32 %v6366, %v6372
        %v6374 = vmul.f32 %v6373, %v6373
        %v6375 = vsel %vm277, %v6374, 0.0
        %6376 = vadd.xlane.f32.xlu0 %v6375
        %v6377 = vpop.xlane.xlu0 %6376
        %v6378 = vmul.f32 %v6377, 0.032258064
        %v6379 = vrsqrt.pop %v6378
        %v6380 = vmul.f32 %v6378, %v6379
        %vm6381 = vcmp.eq.f32.partialorder %v6378, inf
        %v6382 = vsel %vm6381, %v6378, %v6380
        %vm6383 = vcmp.eq.f32.partialorder %v6378, 0.0
        %v6384 = vand.u32 %v6378, 2147483648
        %v6385 = vsel %vm6383, %v6384, %v6382
        %v6386 = vlaneseq
        %v6387 = vshrl.u32 %v6386, 7
        %v6388 = vsub.s32 0, %v6387
        %v6389 = vrot.slane %v6367, %v6388
        %v6390 = vmul.f32 %v6389, %v6373
        %v6391 = vadd.f32 %v6385, 1e-06
        %v6392 = vrcp.pop %v6391
        %v6393 = vmul.f32 %v6390, %v6392
        %v6394 = vlaneseq
        %v6395 = vshrl.u32 %v6394, 7
        %v6396 = vsub.s32 0, %v6395
        %v6397 = vrot.slane %v6368, %v6396
        %v6398 = vadd.f32 %v6393, %v6397
        %v6399 = vld [vmem:[%s4 + $0x3a0] sm:$0xff]
        %v6400 = vld [vmem:[%s4 + $0x3a8] sm:$0xff]
        %v6401 = vld [vmem:[%s4 + $0x3b0] sm:$0xff]
        %v6402 = vld [vmem:[%s4 + $0x3b8] sm:$0xff]
        %v6403 = vld [vmem:[%s4 + $0x3c0] sm:$0x1]
        %v6404 = vld [vmem:[%s4 + $0x3c8] sm:$0xff]
        %v6405 = vld [vmem:[%s4 + $0x3d0] sm:$0xff]
        %v6406 = vld [vmem:[%s4 + $0x3d8] sm:$0xff]
        %v6407 = vld [vmem:[%s4 + $0x3e0] sm:$0xff]
        %v6408 = vld [vmem:[%s4 + $0x3e8] sm:$0xff]
        %v6409 = vld [vmem:[%s4 + $0x3f0] sm:$0xff]
        %v6410 = vld [vmem:[%s4 + $0x3f8] sm:$0xff]
        %v6411 = vld [vmem:[%s4 + $0x400] sm:$0xff]
        %v6412 = vld [vmem:[%s4 + $0x408] sm:$0x1]
        %v6413 = vlaneseq
        %v6414 = vshrl.u32 %v6413, 7
        %v6415 = vsub.s32 0, %v6414
        %v6416 = vrot.slane %v6403, %v6415
        %v6418 = vsel %vm277, %v6398, 0
        %6420 = vmatprep.subr.mxu0 0.0
        %6421 = vmatpush1.msra.mxu0 %v6399
        %6422 = vmatprep.subr.mxu0 0.0
        %6423 = vmatpush1.msra.mxu0 %v6400
        %6424 = vmatprep.subr.mxu0 0.0
        %6425 = vmatpush1.msra.mxu0 %v6401
        %6426 = vmatprep.subr.mxu0 0.0
        %6427 = vmatpush1.msra.mxu0 %v6402
        %6428 = vmatprep.subr.mxu0 0.0
        %6429 = vmatpush1.msra.mxu0 0.0
        %6430 = vmatprep.subr.mxu0 0.0
        %6431 = vmatpush1.msra.mxu0 0.0
        %6432 = vmatprep.subr.mxu0 0.0
        %6433 = vmatpush1.msra.mxu0 0.0
        %6434 = vmatprep.subr.mxu0 0.0
        %6435 = vmatpush1.msra.mxu0 0.0
        %6436 = vmatprep.subr.mxu0 0.0
        %6437 = vmatpush1.msra.mxu0 0.0
        %6438 = vmatprep.subr.mxu0 0.0
        %6439 = vmatpush1.msra.mxu0 0.0
        %6440 = vmatprep.subr.mxu0 0.0
        %6441 = vmatpush1.msra.mxu0 0.0
        %6442 = vmatprep.subr.mxu0 0.0
        %6443 = vmatpush1.msra.mxu0 0.0
        %6444 = vmatprep.subr.mxu0 0.0
        %6445 = vmatpush1.msra.mxu0 0.0
        %6446 = vmatprep.subr.mxu0 0.0
        %6447 = vmatpush1.msra.mxu0 0.0
        %6448 = vmatprep.subr.mxu0 0.0
        %6449 = vmatpush1.msra.mxu0 0.0
        %6450 = vmatprep.subr.mxu0 0.0
        %6451 = vmatpush1.msra.mxu0 0.0
        %6452 = vmatprep.subr.mxu0 0.0
        %6453 = vmatpush1.msra.mxu0 0.0
        %6454 = vmatprep.subr.mxu0 0.0
        %6455 = vmatpush1.msra.mxu0 0.0
        %6456 = vmatprep.subr.mxu0 0.0
        %6457 = vmatpush1.msra.mxu0 0.0
        %6458 = vmatprep.subr.mxu0 0.0
        %6459 = vmatpush1.msra.mxu0 0.0
        %6460 = vmatprep.subr.mxu0 0.0
        %6461 = vmatpush1.msra.mxu0 0.0
        %6462 = vmatprep.subr.mxu0 0.0
        %6463 = vmatpush1.msra.mxu0 0.0
        %6464 = vmatprep.subr.mxu0 0.0
        %6465 = vmatpush1.msra.mxu0 0.0
        %6466 = vmatprep.subr.mxu0 0.0
        %6467 = vmatpush1.msra.mxu0 0.0
        %6468 = vmatprep.subr.mxu0 0.0
        %6469 = vmatpush1.msra.mxu0 0.0
        %6470 = vmatprep.subr.mxu0 0.0
        %6471 = vmatpush1.msra.mxu0 0.0
        %6472 = vmatprep.subr.mxu0 0.0
        %6473 = vmatpush1.msra.mxu0 0.0
        %6474 = vmatprep.subr.mxu0 0.0
        %6475 = vmatpush1.msra.mxu0 0.0
        %6476 = vmatprep.subr.mxu0 0.0
        %6477 = vmatpush1.msra.mxu0 0.0
        %6478 = vmatprep.subr.mxu0 0.0
        %6479 = vmatpush1.msra.mxu0 0.0
        %6480 = vmatprep.subr.mxu0 0.0
        %6481 = vmatpush1.msra.mxu0 0.0
        %6482 = vmatprep.subr.mxu0 0.0
        %6483 = vmatpush1.msra.mxu0 0.0
        %6484 = vmatprep.mubr.f32.mxu0 0.0
        %6485 = vmatmul.mubr.f32.gmra.mrb[0].mxu0 %v6418
        %v6486 = vpop.f32.mrb[0].mxu0
        %v6487 = vadd.f32 %v6416, %v6486
        %v6488 = vpop.f32.mrb[0].mxu0
        %6489 = vdwg.mxu0
        %v6490 = vmax.f32 %v6487, 0.0
        %v6491 = vlaneseq
        %v6492 = vshrl.u32 %v6491, 7
        %v6493 = vsub.s32 0, %v6492
        %v6494 = vrot.slane %v6412, %v6493
        %v6496 = vsel %vm1293, %v6490, 0
        %6498 = vmatprep.subr.mxu0 0.0
        %6499 = vmatpush1.msra.mxu0 %v6404
        %6500 = vmatprep.subr.mxu0 0.0
        %6501 = vmatpush1.msra.mxu0 %v6405
        %6502 = vmatprep.subr.mxu0 0.0
        %6503 = vmatpush1.msra.mxu0 %v6406
        %6504 = vmatprep.subr.mxu0 0.0
        %6505 = vmatpush1.msra.mxu0 %v6407
        %6506 = vmatprep.subr.mxu0 0.0
        %6507 = vmatpush1.msra.mxu0 %v6408
        %6508 = vmatprep.subr.mxu0 0.0
        %6509 = vmatpush1.msra.mxu0 %v6409
        %6510 = vmatprep.subr.mxu0 0.0
        %6511 = vmatpush1.msra.mxu0 %v6410
        %6512 = vmatprep.subr.mxu0 0.0
        %6513 = vmatpush1.msra.mxu0 %v6411
        %6514 = vmatprep.subr.mxu0 0.0
        %6515 = vmatpush1.msra.mxu0 0.0
        %6516 = vmatprep.subr.mxu0 0.0
        %6517 = vmatpush1.msra.mxu0 0.0
        %6518 = vmatprep.subr.mxu0 0.0
        %6519 = vmatpush1.msra.mxu0 0.0
        %6520 = vmatprep.subr.mxu0 0.0
        %6521 = vmatpush1.msra.mxu0 0.0
        %6522 = vmatprep.subr.mxu0 0.0
        %6523 = vmatpush1.msra.mxu0 0.0
        %6524 = vmatprep.subr.mxu0 0.0
        %6525 = vmatpush1.msra.mxu0 0.0
        %6526 = vmatprep.subr.mxu0 0.0
        %6527 = vmatpush1.msra.mxu0 0.0
        %6528 = vmatprep.subr.mxu0 0.0
        %6529 = vmatpush1.msra.mxu0 0.0
        %6530 = vmatprep.subr.mxu0 0.0
        %6531 = vmatpush1.msra.mxu0 0.0
        %6532 = vmatprep.subr.mxu0 0.0
        %6533 = vmatpush1.msra.mxu0 0.0
        %6534 = vmatprep.subr.mxu0 0.0
        %6535 = vmatpush1.msra.mxu0 0.0
        %6536 = vmatprep.subr.mxu0 0.0
        %6537 = vmatpush1.msra.mxu0 0.0
        %6538 = vmatprep.subr.mxu0 0.0
        %6539 = vmatpush1.msra.mxu0 0.0
        %6540 = vmatprep.subr.mxu0 0.0
        %6541 = vmatpush1.msra.mxu0 0.0
        %6542 = vmatprep.subr.mxu0 0.0
        %6543 = vmatpush1.msra.mxu0 0.0
        %6544 = vmatprep.subr.mxu0 0.0
        %6545 = vmatpush1.msra.mxu0 0.0
        %6546 = vmatprep.subr.mxu0 0.0
        %6547 = vmatpush1.msra.mxu0 0.0
        %6548 = vmatprep.subr.mxu0 0.0
        %6549 = vmatpush1.msra.mxu0 0.0
        %6550 = vmatprep.subr.mxu0 0.0
        %6551 = vmatpush1.msra.mxu0 0.0
        %6552 = vmatprep.subr.mxu0 0.0
        %6553 = vmatpush1.msra.mxu0 0.0
        %6554 = vmatprep.subr.mxu0 0.0
        %6555 = vmatpush1.msra.mxu0 0.0
        %6556 = vmatprep.subr.mxu0 0.0
        %6557 = vmatpush1.msra.mxu0 0.0
        %6558 = vmatprep.subr.mxu0 0.0
        %6559 = vmatpush1.msra.mxu0 0.0
        %6560 = vmatprep.subr.mxu0 0.0
        %6561 = vmatpush1.msra.mxu0 0.0
        %6562 = vmatprep.mubr.f32.mxu0 0.0
        %6563 = vmatmul.mubr.f32.gmra.mrb[0].mxu0 %v6496
        %v6564 = vpop.f32.mrb[0].mxu0
        %v6565 = vadd.f32 %v6494, %v6564
        %v6566 = vpop.f32.mrb[0].mxu0
        %6567 = vdwg.mxu0
        %v6568 = vadd.f32 %v6366, %v6565
        %v6569 = vld [vmem:[%s4 + $0x450] sm:$0x1]
        %v6570 = vld [vmem:[%s4 + $0x458] sm:$0x1]
        %v6571 = vsel %vm277, %v6568, 0.0
        %6572 = vadd.xlane.f32.xlu0 %v6571
        %v6573 = vpop.xlane.xlu0 %6572
        %v6574 = vmul.f32 %v6573, %v281
        %v6575 = vsub.f32 %v6568, %v6574
        %v6576 = vmul.f32 %v6575, %v6575
        %v6577 = vsel %vm277, %v6576, 0.0
        %6578 = vadd.xlane.f32.xlu0 %v6577
        %v6579 = vpop.xlane.xlu0 %6578
        %v6580 = vmul.f32 %v6579, 0.032258064
        %v6581 = vrsqrt.pop %v6580
        %v6582 = vmul.f32 %v6580, %v6581
        %vm6583 = vcmp.eq.f32.partialorder %v6580, inf
        %v6584 = vsel %vm6583, %v6580, %v6582
        %vm6585 = vcmp.eq.f32.partialorder %v6580, 0.0
        %v6586 = vand.u32 %v6580, 2147483648
        %v6587 = vsel %vm6585, %v6586, %v6584
        %v6588 = vlaneseq
        %v6589 = vshrl.u32 %v6588, 7
        %v6590 = vsub.s32 0, %v6589
        %v6591 = vrot.slane %v6569, %v6590
        %v6592 = vmul.f32 %v6591, %v6575
        %v6593 = vadd.f32 %v6587, 1e-06
        %v6594 = vrcp.pop %v6593
        %v6595 = vmul.f32 %v6592, %v6594
        %v6596 = vlaneseq
        %v6597 = vshrl.u32 %v6596, 7
        %v6598 = vsub.s32 0, %v6597
        %v6599 = vrot.slane %v6570, %v6598
        %v6600 = vadd.f32 %v6595, %v6599
        %6601 = vst.msk [vmem:[%s252] sm:$0xff] %vm277, %v6600
        %s6602 = sand.u32 %s152, 1
        %s6603 = scalar_lea.sflag [#allocation3], %s6602
        %s6604 = sand.u32 %s152, 1
        %s6605 = smul.addr %s6604, 8
        %s6606 = scalar_lea.vmem [#allocation2], %s6605
        // Predicated region
        $region41: #{encoder_decoder_forward.1} parent=39 // pred_check
          %p6607 = pneg %p162
        $region42: #{encoder_decoder_forward.1} parent=39 // pred_check_branch
          %6609 = sbr.rel (%p6607) target = $region44
        $region43: #{encoder_decoder_forward.1} parent=39 // pred_region
          %s6611 = ssub.s32 128, 128
          %6612 = vsyncadd %s6603, %s6611
          %s6613 = smul.addr %s19, 128
          %s6614 = scalar_lea.hbm %s5, %s6613
          %s6616 = sshll.u32 %s6606, 4
          %s6617 = int_to_ptr.vmem [resolvable:$true] %s6616
          %6619 = dma.vmem_to_hbm [thread:$0]  %s6617, 128, %s6614, %s6603
        $region44: #{encoder_decoder_forward.1} parent=39 // pred_fallthru
          _
      $region40: #{encoder_decoder_forward.1} parent=5 // pred_fallthru
        _
      %p6620 = scmp.le.s32.totalorder 2, %s14
      // Predicated region
      $region45: #{encoder_decoder_forward.1} parent=5 // pred_check
        %p6621 = pneg %p6620
      $region46: #{encoder_decoder_forward.1} parent=5 // pred_check_branch
        %6623 = sbr.rel (%p6621) target = $region48
      $region47: #{encoder_decoder_forward.1} parent=5 // pred_region
        %s6624 = ssub.s32 %s14, 2
        // Predicated region
        $region49: #{encoder_decoder_forward.1} parent=47 // pred_check
          %p6625 = pneg %p168
        $region50: #{encoder_decoder_forward.1} parent=47 // pred_check_branch
          %6627 = sbr.rel (%p6625) target = $region52
        $region51: #{encoder_decoder_forward.1} parent=47 // pred_region
          %s6628 = sand.u32 %s153, 1
          %s6629 = scalar_lea.sflag [#allocation3], %s6628
          %s6630 = sand.u32 %s153, 1
          %s6631 = smul.addr %s6630, 8
          %s6632 = scalar_lea.vmem [#allocation2], %s6631
          %6633 = dma.done %s6629, 128
        $region52: #{encoder_decoder_forward.1} parent=47 // pred_fallthru
          _
      $region48: #{encoder_decoder_forward.1} parent=5 // pred_fallthru
        _
    $region6: #{encoder_decoder_forward.1} parent=1 // loop_footer
      %s18 = sadd.s32 1, %s14
    $region7: #{encoder_decoder_forward.1} parent=1 // loop_footer_branch
      %13 = sbr.rel target = $region3
    $region8: #{encoder_decoder_forward.1} parent=1 // loop_exit
      _
    %6634 = vsyncpa [#allocation3], 1
    %s6635 = scalar_lea.sflag [#allocation3], 1
    %6636 = vsyncpa %s6635, 1

</llo_original>
